<compile_context>
chip_gen: v7x
topology: tpu7x:2x2x1
jax: 0.10.0
libtpu: 0.0.40
codegen_flags: <defaults>
</compile_context>

<pallas_src>
import functools
import math

import jax
import jax.numpy as jnp
from jax.experimental import pallas as pl
from jax.experimental.pallas import tpu as pltpu

BN_EPS = 1e-5
LANE = 128
_PAD = 16                          # bf16 sublane packing = 16 rows -> aligned scratch stores
VMEM_LIMIT = 48 * 1024 * 1024      # below v7x physical 64 MiB; plenty of headroom on v5e/v6e

# TODO(synk): real xresnet1d101 uses stem (32,32,64), stage widths (64,128,256,512),
#             layers (3,4,23,3); scaled down here so the synthetic script runs fast.
#             The fused Pallas block kernels are structurally identical.
STEM_SIZES = (8, 8, 16)
LAYERS = (1, 1, 1, 1)
WIDTHS = (16, 16, 32, 32)
EXPANSION = 4
KS = 3
N_CLASSES = 30
IN_CHANNELS = 12  # 12-lead ECG-style 1D input


def _cpad(c):
    return (c + LANE - 1) // LANE * LANE


def _const_spec(shape):
    n = len(shape)
    return pl.BlockSpec(shape, lambda b: (0,) * n)


# ---------------------------------------------------------------------------
# In-kernel helpers (BN epilogue, zero-padded shift scratch for ks=3 taps)
# ---------------------------------------------------------------------------
def _bn_act(acc, s_ref, b_ref, relu):
    acc = acc * s_ref[...] + b_ref[...]
    if relu:
        acc = jnp.maximum(acc, 0.0)
    return acc


def _shift_store(pad_ref, val, l):
    """Zero the scratch, then store `val` (l rows) at the packing-aligned offset _PAD."""
    pad_ref[...] = jnp.zeros(pad_ref.shape, pad_ref.dtype)
    pad_ref[_PAD:_PAD + l, :] = val


def _tap(pad_ref, k, l):
    """l-row window corresponding to h[t - 1 + k] (k = 0,1,2), zero outside the sequence."""
    return pad_ref[_PAD - 1 + k:_PAD - 1 + k + l, :]


def _conv3_from_pad(pad_ref, w_ref, l):
    acc = jnp.dot(_tap(pad_ref, 0, l), w_ref[0], preferred_element_type=jnp.float32)
    acc = acc + jnp.dot(_tap(pad_ref, 1, l), w_ref[1], preferred_element_type=jnp.float32)
    acc = acc + jnp.dot(_tap(pad_ref, 2, l), w_ref[2], preferred_element_type=jnp.float32)
    return acc


# ---------------------------------------------------------------------------
# Kernel 1: fused stem — three ks=3 conv+BN+ReLU (strides 2,1,1) in a single call.
#           Input arrives as (B, L/2, 2*Cin): even row ‖ odd row on the lane axis.
# ---------------------------------------------------------------------------
def _stem_kernel(x_ref, w0_ref, s0_ref, b0_ref, w1_ref, s1_ref, b1_ref,
                 w2_ref, s2_ref, b2_ref, o_ref, xo_pad, h_pad_a, h_pad_b,
                 *, cin, l2):
    f32 = jnp.float32
    xe = x_ref[:, 0:cin]           # x[2t]
    xo = x_ref[:, cin:2 * cin]     # x[2t+1]
    # conv0: ks=3, stride=2, pad=1 -> out[t] = W0.x[2t-1] + W1.x[2t] + W2.x[2t+1]
    _shift_store(xo_pad, xo, l2)
    acc = jnp.dot(_tap(xo_pad, 0, l2), w0_ref[0], preferred_element_type=f32)
    acc = acc + jnp.dot(xe, w0_ref[1], preferred_element_type=f32)
    acc = acc + jnp.dot(xo, w0_ref[2], preferred_element_type=f32)
    h = _bn_act(acc, s0_ref, b0_ref, True).astype(jnp.bfloat16)
    # conv1: ks=3, stride=1, pad=1
    _shift_store(h_pad_a, h, l2)
    h = _bn_act(_conv3_from_pad(h_pad_a, w1_ref, l2), s1_ref, b1_ref, True).astype(jnp.bfloat16)
    # conv2: ks=3, stride=1, pad=1
    _shift_store(h_pad_b, h, l2)
    h = _bn_act(_conv3_from_pad(h_pad_b, w2_ref, l2), s2_ref, b2_ref, True)
    o_ref[...] = h.astype(o_ref.dtype)


def stem_forward(x, stem_p):
    B, L, cin = x.shape
    assert L % 2 == 0, "TODO(synk): odd input lengths need an explicit tail element"
    l2 = L // 2
    c0 = stem_p[0]['w'].shape[-1]
    c1 = stem_p[1]['w'].shape[-1]
    c2 = stem_p[2]['w'].shape[-1]
    xr = x.reshape(B, l2, 2 * cin)     # free row-major reshape (metadata only)
    p0, p1, p2 = stem_p
    return pl.pallas_call(
        functools.partial(_stem_kernel, cin=cin, l2=l2),
        out_shape=jax.ShapeDtypeStruct((B, l2, c2), jnp.bfloat16),
        grid=(B,),
        in_specs=[pl.BlockSpec((None, l2, 2 * cin), lambda b: (b, 0, 0)),
                  _const_spec((3, cin, c0)), _const_spec((1, c0)), _const_spec((1, c0)),
                  _const_spec((3, c0, c1)), _const_spec((1, c1)), _const_spec((1, c1)),
                  _const_spec((3, c1, c2)), _const_spec((1, c2)), _const_spec((1, c2))],
        out_specs=pl.BlockSpec((None, l2, c2), lambda b: (b, 0, 0)),
        scratch_shapes=[pltpu.VMEM((_PAD + l2 + 8, cin), jnp.bfloat16),
                        pltpu.VMEM((_PAD + l2 + 8, c0), jnp.bfloat16),
                        pltpu.VMEM((_PAD + l2 + 8, c1), jnp.bfloat16)],
        compiler_params=pltpu.CompilerParams(
            dimension_semantics=("parallel",), vmem_limit_bytes=VMEM_LIMIT),
    )(xr, p0['w'], p0['scale'], p0['bias'],
      p1['w'], p1['scale'], p1['bias'],
      p2['w'], p2['scale'], p2['bias'])


# ---------------------------------------------------------------------------
# Kernel 2: MaxPool1d(kernel=3, stride=2, padding=1).  Even/odd handled in-kernel
#           via the free (B, L/2, 2C) reshape; zero pad is safe (inputs are post-ReLU).
# ---------------------------------------------------------------------------
def _maxpool_kernel(x_ref, o_ref, xo_pad, *, c, l4):
    xe = x_ref[:, 0:c]             # x[2t]
    xo = x_ref[:, c:2 * c]         # x[2t+1]
    _shift_store(xo_pad, xo, l4)
    m = jnp.maximum(_tap(xo_pad, 0, l4), xe)   # max(x[2t-1], x[2t])
    m = jnp.maximum(m, xo)                     # ..., x[2t+1]
    o_ref[...] = m.astype(o_ref.dtype)


def maxpool1d_k3s2p1(x):
    B, L, c = x.shape
    assert L % 2 == 0
    l4 = L // 2
    xr = x.reshape(B, l4, 2 * c)
    return pl.pallas_call(
        functools.partial(_maxpool_kernel, c=c, l4=l4),
        out_shape=jax.ShapeDtypeStruct((B, l4, c), x.dtype),
        grid=(B,),
        in_specs=[pl.BlockSpec((None, l4, 2 * c), lambda b: (b, 0, 0))],
        out_specs=pl.BlockSpec((None, l4, c), lambda b: (b, 0, 0)),
        scratch_shapes=[pltpu.VMEM((_PAD + l4 + 8, c), x.dtype)],
        compiler_params=pltpu.CompilerParams(
            dimension_semantics=("parallel",), vmem_limit_bytes=VMEM_LIMIT),
    )(xr)


# ---------------------------------------------------------------------------
# Kernel 3: fused bottleneck residual block (whole block = one pallas_call).
#   conv1(1x1)+BN+ReLU -> conv2(ks3,stride)+BN+ReLU -> conv3(1x1)+BN
#   identity: [AvgPool1d(2,2) if stride 2] -> [1x1 idconv+BN if ni!=nf]
#   out = ReLU(conv-path + identity)
# ---------------------------------------------------------------------------
def _block_s1_kernel(x_ref, w1_ref, s1_ref, b1_ref, w2_ref, s2_ref, b2_ref,
                     w3_ref, s3_ref, b3_ref, *rest, l, has_id):
    if has_id:
        wid_ref, sid_ref, bid_ref, o_ref, h_pad = rest
    else:
        o_ref, h_pad = rest
    f32 = jnp.float32
    x = x_ref[...]
    h1 = _bn_act(jnp.dot(x, w1_ref[...], preferred_element_type=f32),
                 s1_ref, b1_ref, True).astype(jnp.bfloat16)
    _shift_store(h_pad, h1, l)
    h2 = _bn_act(_conv3_from_pad(h_pad, w2_ref, l), s2_ref, b2_ref, True).astype(jnp.bfloat16)
    h3 = _bn_act(jnp.dot(h2, w3_ref[...], preferred_element_type=f32), s3_ref, b3_ref, False)
    if has_id:
        idt = _bn_act(jnp.dot(x, wid_ref[...], preferred_element_type=f32),
                      sid_ref, bid_ref, False)
    else:
        idt = x.astype(f32)
    o_ref[...] = jnp.maximum(h3 + idt, 0.0).astype(o_ref.dtype)


def _block_s2_kernel(x_ref, w1_ref, s1_ref, b1_ref, w2_ref, s2_ref, b2_ref,
                     w3_ref, s3_ref, b3_ref, *rest, cin, l2, has_id):
    if has_id:
        wid_ref, sid_ref, bid_ref, o_ref, h_pad = rest
    else:
        o_ref, h_pad = rest
    f32 = jnp.float32
    xe = x_ref[:, 0:cin]           # x[2t]
    xo = x_ref[:, cin:2 * cin]     # x[2t+1]
    # conv1 (1x1, pointwise) on both phases
    h1e = _bn_act(jnp.dot(xe, w1_ref[...], preferred_element_type=f32),
                  s1_ref, b1_ref, True).astype(jnp.bfloat16)
    h1o = _bn_act(jnp.dot(xo, w1_ref[...], preferred_element_type=f32),
                  s1_ref, b1_ref, True).astype(jnp.bfloat16)
    # conv2: ks=3 stride=2 pad=1 -> out[t] = W0.h1[2t-1] + W1.h1[2t] + W2.h1[2t+1]
    _shift_store(h_pad, h1o, l2)
    acc = jnp.dot(_tap(h_pad, 0, l2), w2_ref[0], preferred_element_type=f32)
    acc = acc + jnp.dot(h1e, w2_ref[1], preferred_element_type=f32)
    acc = acc + jnp.dot(h1o, w2_ref[2], preferred_element_type=f32)
    h2 = _bn_act(acc, s2_ref, b2_ref, True).astype(jnp.bfloat16)
    # conv3 (1x1) + BN
    h3 = _bn_act(jnp.dot(h2, w3_ref[...], preferred_element_type=f32), s3_ref, b3_ref, False)
    # identity path: AvgPool1d(2,2) then optional 1x1 idconv + BN (fused in-kernel)
    avg = (xe.astype(f32) + xo.astype(f32)) * 0.5
    if has_id:
        idt = _bn_act(jnp.dot(avg.astype(jnp.bfloat16), wid_ref[...],
                              preferred_element_type=f32), sid_ref, bid_ref, False)
    else:
        idt = avg
    o_ref[...] = jnp.maximum(h3 + idt, 0.0).astype(o_ref.dtype)


def res_block(x, blk):
    stride = blk['stride']
    B, L, cin = x.shape
    p1, p2, p3 = blk['conv1'], blk['conv2'], blk['conv3']
    nh = p2['w'].shape[-1]
    nf = p3['w'].shape[-1]
    has_id = 'idconv' in blk
    args = [p1['w'], p1['scale'], p1['bias'],
            p2['w'], p2['scale'], p2['bias'],
            p3['w'], p3['scale'], p3['bias']]
    specs = [_const_spec(a.shape) for a in args]
    if has_id:
        pid = blk['idconv']
        extra = [pid['w'], pid['scale'], pid['bias']]
        args += extra
        specs += [_const_spec(a.shape) for a in extra]
    if stride == 1:
        l_out, xin = L, x
        x_spec = pl.BlockSpec((None, L, cin), lambda b: (b, 0, 0))
        kernel = functools.partial(_block_s1_kernel, l=L, has_id=has_id)
    else:
        # TODO(synk): PyTorch AvgPool1d(2,2,ceil_mode=True)/stride-2 conv on odd L has an extra
        #             half window; all intermediate lengths are even for this config.
        assert L % 2 == 0
        l_out = L // 2
        xin = x.reshape(B, l_out, 2 * cin)   # free reshape: even/odd rows on the lane axis
        x_spec = pl.BlockSpec((None, l_out, 2 * cin), lambda b: (b, 0, 0))
        kernel = functools.partial(_block_s2_kernel, cin=cin, l2=l_out, has_id=has_id)
    return pl.pallas_call(
        kernel,
        out_shape=jax.ShapeDtypeStruct((B, l_out, nf), jnp.bfloat16),
        grid=(B,),
        in_specs=[x_spec] + specs,
        out_specs=pl.BlockSpec((None, l_out, nf), lambda b: (b, 0, 0)),
        scratch_shapes=[pltpu.VMEM((_PAD + l_out + 8, nh), jnp.bfloat16)],
        compiler_params=pltpu.CompilerParams(
            dimension_semantics=("parallel",), vmem_limit_bytes=VMEM_LIMIT),
    )(xin, *args)


# ---------------------------------------------------------------------------
# Kernel 4: classifier — concat pool (max ‖ avg over time) fused with Linear(2*nf -> 30)
# ---------------------------------------------------------------------------
def _pool_cls_kernel(x_ref, w_ref, b_ref, o_ref, *, inv_l):
    x = x_ref[...]                                               # (L, C) bf16
    mx = jnp.max(x, axis=0, keepdims=True)                       # bf16 max, no f32 blow-up
    av = (jnp.sum(x, axis=0, keepdims=True, dtype=jnp.float32) * inv_l).astype(jnp.bfloat16)
    acc = jnp.dot(mx, w_ref[0], preferred_element_type=jnp.float32)
    acc = acc + jnp.dot(av, w_ref[1], preferred_element_type=jnp.float32)
    o_ref[...] = acc + b_ref[...]


def concat_pool_classify(x, w, b):
    B, L, c = x.shape
    n_pad = w.shape[-1]
    return pl.pallas_call(
        functools.partial(_pool_cls_kernel, inv_l=1.0 / L),
        out_shape=jax.ShapeDtypeStruct((B, 1, n_pad), jnp.float32),
        grid=(B,),
        in_specs=[pl.BlockSpec((None, L, c), lambda b: (b, 0, 0)),
                  _const_spec((2, c, n_pad)), _const_spec((1, n_pad))],
        out_specs=pl.BlockSpec((None, 1, n_pad), lambda b: (b, 0, 0)),
        compiler_params=pltpu.CompilerParams(
            dimension_semantics=("parallel",), vmem_limit_bytes=VMEM_LIMIT),
    )(x, w, b)


# ---------------------------------------------------------------------------
# Parameters: raw (PyTorch-layout) init + one-time prepare (fold BN, pad, bf16 weights)
# ---------------------------------------------------------------------------
def init_conv_bn(key, c_in, c_out, ks):
    kw, kg, kb, km, kv = jax.random.split(key, 5)
    fan_in = c_in * ks
    return dict(
        w=jax.random.normal(kw, (c_out, c_in, ks), jnp.float32) * math.sqrt(2.0 / fan_in),
        gamma=1.0 + 0.1 * jax.random.normal(kg, (c_out,), jnp.float32),
        beta=0.1 * jax.random.normal(kb, (c_out,), jnp.float32),
        mean=0.1 * jax.random.normal(km, (c_out,), jnp.float32),
        var=1.0 + 0.1 * jnp.abs(jax.random.normal(kv, (c_out,), jnp.float32)),
    )


def init_params(key):
    keys = iter(jax.random.split(key, 64))
    params = {}
    stem, c_prev = [], IN_CHANNELS
    for c in STEM_SIZES:
        stem.append(init_conv_bn(next(keys), c_prev, c, KS))
        c_prev = c
    params['stem'] = stem
    stages, ni = [], STEM_SIZES[-1]
    for si, (w, n_blocks) in enumerate(zip(WIDTHS, LAYERS)):
        blocks = []
        for bi in range(n_blocks):
            stride = 2 if (si > 0 and bi == 0) else 1
            nh, nf = w, w * EXPANSION
            blk = dict(
                conv1=init_conv_bn(next(keys), ni, nh, 1),
                conv2=init_conv_bn(next(keys), nh, nh, KS),
                conv3=init_conv_bn(next(keys), nh, nf, 1),
                stride=stride,
            )
            if ni != nf:
                blk['idconv'] = init_conv_bn(next(keys), ni, nf, 1)
            blocks.append(blk)
            ni = nf
        stages.append(blocks)
    params['stages'] = stages
    # TODO(synk): exact Classifier_Pool_two definition is not in the prompt; modeled as
    #             AdaptiveConcatPool1d(max‖avg) -> Flatten -> Linear(2*nf, 30) (dropout omitted, eval).
    nf_last = WIDTHS[-1] * EXPANSION
    kw, kb = jax.random.split(next(keys))
    params['cls_w'] = jax.random.normal(kw, (2 * nf_last, N_CLASSES), jnp.float32) * math.sqrt(1.0 / (2 * nf_last))
    params['cls_b'] = 0.1 * jax.random.normal(kb, (N_CLASSES,), jnp.float32)
    return params


def prep_conv_bn(p):
    cout, cin, ks = p['w'].shape
    cin_p, cout_p = _cpad(cin), _cpad(cout)
    w = jnp.transpose(p['w'], (2, 1, 0))                                  # (ks, Cin, Cout)
    w = jnp.pad(w, ((0, 0), (0, cin_p - cin), (0, cout_p - cout))).astype(jnp.bfloat16)
    scale = p['gamma'] / jnp.sqrt(p['var'] + BN_EPS)                      # folded eval BN
    bias = p['beta'] - p['mean'] * scale
    scale = jnp.pad(scale, (0, cout_p - cout)).reshape(1, cout_p).astype(jnp.float32)
    bias = jnp.pad(bias, (0, cout_p - cout)).reshape(1, cout_p).astype(jnp.float32)
    if ks == 1:
        w = w.reshape(cin_p, cout_p)
    return dict(w=w, scale=scale, bias=bias)


def prepare_params(params):
    prep = {'stem': [prep_conv_bn(p) for p in params['stem']]}
    stages = []
    for blocks in params['stages']:
        pblocks = []
        for blk in blocks:
            pb = {k: prep_conv_bn(v) for k, v in blk.items() if k != 'stride'}
            pb['stride'] = blk['stride']
            pblocks.append(pb)
        stages.append(pblocks)
    prep['stages'] = stages
    nf = WIDTHS[-1] * EXPANSION
    c_p, n_p = _cpad(nf), _cpad(N_CLASSES)
    w = params['cls_w']                                                   # (2*nf, 30)
    w_max = jnp.pad(w[:nf], ((0, c_p - nf), (0, n_p - N_CLASSES)))
    w_avg = jnp.pad(w[nf:], ((0, c_p - nf), (0, n_p - N_CLASSES)))
    prep['cls_w'] = jnp.stack([w_max, w_avg]).astype(jnp.bfloat16)        # (2, C_pad, N_pad)
    prep['cls_b'] = jnp.pad(params['cls_b'], (0, n_p - N_CLASSES)).reshape(1, n_p).astype(jnp.float32)
    return prep


# ---------------------------------------------------------------------------
# Full forward:  x (B, C, L) NCL  ->  logits (B, 30)
# ---------------------------------------------------------------------------
def xrespool_forward(prep, x_ncl):
    x = jnp.transpose(x_ncl, (0, 2, 1))                          # NCL -> (B, L, C)
    B, L, c = x.shape
    x = jnp.pad(x, ((0, 0), (0, 0), (0, _cpad(c) - c))).astype(jnp.bfloat16)  # pad lanes once
    # backbone (= xresnet1d children()[:-1]): 1 fused call for the stem, 1 for maxpool,
    # then 1 fused call per residual block (intermediates never leave VMEM inside a block)
    x = stem_forward(x, prep['stem'])
    x = maxpool1d_k3s2p1(x)
    for blocks in prep['stages']:
        for blk in blocks:
            x = res_block(x, blk)
    # classifier (Classifier_Pool_two(30)): fused concat-pool + linear, one final slice
    logits = concat_pool_classify(x, prep['cls_w'], prep['cls_b'])
    return logits.reshape(B, -1)[:, :N_CLASSES]


if __name__ == "__main__":
    key = jax.random.PRNGKey(0)
    pkey, xkey = jax.random.split(key)
    params = init_params(pkey)
    prep = prepare_params(params)          # one-time: fold BN, transpose/pad/bf16 weights
    x = jax.random.normal(xkey, (2, IN_CHANNELS, 128), jnp.float32)  # (B, C, L) like PyTorch
    fwd = jax.jit(functools.partial(xrespool_forward, prep))
    out = jax.block_until_ready(fwd(x))
    assert out.shape == (2, N_CLASSES), out.shape
    assert bool(jnp.all(jnp.isfinite(out)))
    print("KERNEL_OK")
</pallas_src>

<mosaic_0001>
module attributes {stable_mosaic.version = 11 : i64} {
  func.func @_stem_kernel(%arg0: i32, %arg1: memref<1x64x256xbf16, #tpu.memory_space<vmem>>, %arg2: memref<3x128x128xbf16, #tpu.memory_space<vmem>>, %arg3: memref<1x128xf32, #tpu.memory_space<vmem>>, %arg4: memref<1x128xf32, #tpu.memory_space<vmem>>, %arg5: memref<3x128x128xbf16, #tpu.memory_space<vmem>>, %arg6: memref<1x128xf32, #tpu.memory_space<vmem>>, %arg7: memref<1x128xf32, #tpu.memory_space<vmem>>, %arg8: memref<3x128x128xbf16, #tpu.memory_space<vmem>>, %arg9: memref<1x128xf32, #tpu.memory_space<vmem>>, %arg10: memref<1x128xf32, #tpu.memory_space<vmem>>, %arg11: memref<1x64x128xbf16, #tpu.memory_space<vmem>>, %arg12: memref<88x128xbf16, #tpu.memory_space<vmem>>, %arg13: memref<88x128xbf16, #tpu.memory_space<vmem>>, %arg14: memref<88x128xbf16, #tpu.memory_space<vmem>>) attributes {dimension_semantics = [#tpu.dimension_semantics<parallel>], iteration_bounds = array<i64: 2>, scalar_prefetch = 0 : i64, scratch_operands = 3 : i64, tpu.core_type = #tpu.core_type<tc>, window_params = [{transform_indices = @transform_0, window_bounds = array<i64: 1, 64, 256>}, {pipeline_mode = #tpu.pipeline_mode<synchronous>, transform_indices = @transform_1, window_bounds = array<i64: 3, 128, 128>}, {pipeline_mode = #tpu.pipeline_mode<synchronous>, transform_indices = @transform_2, window_bounds = array<i64: 1, 128>}, {pipeline_mode = #tpu.pipeline_mode<synchronous>, transform_indices = @transform_3, window_bounds = array<i64: 1, 128>}, {pipeline_mode = #tpu.pipeline_mode<synchronous>, transform_indices = @transform_4, window_bounds = array<i64: 3, 128, 128>}, {pipeline_mode = #tpu.pipeline_mode<synchronous>, transform_indices = @transform_5, window_bounds = array<i64: 1, 128>}, {pipeline_mode = #tpu.pipeline_mode<synchronous>, transform_indices = @transform_6, window_bounds = array<i64: 1, 128>}, {pipeline_mode = #tpu.pipeline_mode<synchronous>, transform_indices = @transform_7, window_bounds = array<i64: 3, 128, 128>}, {pipeline_mode = #tpu.pipeline_mode<synchronous>, transform_indices = @transform_8, window_bounds = array<i64: 1, 128>}, {pipeline_mode = #tpu.pipeline_mode<synchronous>, transform_indices = @transform_9, window_bounds = array<i64: 1, 128>}, {transform_indices = @transform_10, window_bounds = array<i64: 1, 64, 128>}]} {
    %c0 = arith.constant 0 : index
    %c0_0 = arith.constant 0 : index
    %c0_1 = arith.constant 0 : index
    %0 = vector.load %arg1[%c0, %c0_0, %c0_1] : memref<1x64x256xbf16, #tpu.memory_space<vmem>>, vector<1x64x128xbf16>
    %1 = vector.shape_cast %0 : vector<1x64x128xbf16> to vector<64x128xbf16>
    %c0_2 = arith.constant 0 : index
    %c0_3 = arith.constant 0 : index
    %c128 = arith.constant 128 : index
    %2 = vector.load %arg1[%c0_2, %c0_3, %c128] : memref<1x64x256xbf16, #tpu.memory_space<vmem>>, vector<1x64x128xbf16>
    %3 = vector.shape_cast %2 : vector<1x64x128xbf16> to vector<64x128xbf16>
    %cst = arith.constant 0.000000e+00 : bf16
    %4 = vector.broadcast %cst : bf16 to vector<88x128xbf16>
    %c0_4 = arith.constant 0 : index
    %c0_5 = arith.constant 0 : index
    %5 = vector.load %arg12[%c0_4, %c0_5] : memref<88x128xbf16, #tpu.memory_space<vmem>>, vector<88x128xbf16>
    tpu.vector_store %arg12[%c0_4, %c0_5], %4 {strides = array<i32>} : memref<88x128xbf16, #tpu.memory_space<vmem>>, vector<88x128xbf16>,
    %c16 = arith.constant 16 : index
    %c0_6 = arith.constant 0 : index
    %6 = vector.load %arg12[%c16, %c0_6] : memref<88x128xbf16, #tpu.memory_space<vmem>>, vector<64x128xbf16>
    tpu.vector_store %arg12[%c16, %c0_6], %3 {strides = array<i32>} : memref<88x128xbf16, #tpu.memory_space<vmem>>, vector<64x128xbf16>,
    %c15 = arith.constant 15 : index
    %c0_7 = arith.constant 0 : index
    %7 = vector.load %arg12[%c15, %c0_7] : memref<88x128xbf16, #tpu.memory_space<vmem>>, vector<64x128xbf16>
    %c0_8 = arith.constant 0 : index
    %c0_9 = arith.constant 0 : index
    %c0_10 = arith.constant 0 : index
    %8 = vector.load %arg2[%c0_8, %c0_9, %c0_10] : memref<3x128x128xbf16, #tpu.memory_space<vmem>>, vector<1x128x128xbf16>
    %9 = vector.shape_cast %8 : vector<1x128x128xbf16> to vector<128x128xbf16>
    %cst_11 = arith.constant dense<0.000000e+00> : vector<64x128xf32>
    %10 = tpu.matmul %7, %9, %cst_11 {dimension_numbers = #tpu.dot_dimension_numbers<[1], [0], [0], [1], [0, 0, 1, 1], [], []>} : vector<64x128xbf16>, vector<128x128xbf16>, vector<64x128xf32> -> vector<64x128xf32>
    %c1 = arith.constant 1 : index
    %c0_12 = arith.constant 0 : index
    %c0_13 = arith.constant 0 : index
    %11 = vector.load %arg2[%c1, %c0_12, %c0_13] : memref<3x128x128xbf16, #tpu.memory_space<vmem>>, vector<1x128x128xbf16>
    %12 = vector.shape_cast %11 : vector<1x128x128xbf16> to vector<128x128xbf16>
    %cst_14 = arith.constant dense<0.000000e+00> : vector<64x128xf32>
    %13 = tpu.matmul %1, %12, %cst_14 {dimension_numbers = #tpu.dot_dimension_numbers<[1], [0], [0], [1], [0, 0, 1, 1], [], []>} : vector<64x128xbf16>, vector<128x128xbf16>, vector<64x128xf32> -> vector<64x128xf32>
    %14 = arith.addf %10, %13 : vector<64x128xf32>
    %c2 = arith.constant 2 : index
    %c0_15 = arith.constant 0 : index
    %c0_16 = arith.constant 0 : index
    %15 = vector.load %arg2[%c2, %c0_15, %c0_16] : memref<3x128x128xbf16, #tpu.memory_space<vmem>>, vector<1x128x128xbf16>
    %16 = vector.shape_cast %15 : vector<1x128x128xbf16> to vector<128x128xbf16>
    %cst_17 = arith.constant dense<0.000000e+00> : vector<64x128xf32>
    %17 = tpu.matmul %3, %16, %cst_17 {dimension_numbers = #tpu.dot_dimension_numbers<[1], [0], [0], [1], [0, 0, 1, 1], [], []>} : vector<64x128xbf16>, vector<128x128xbf16>, vector<64x128xf32> -> vector<64x128xf32>
    %18 = arith.addf %14, %17 : vector<64x128xf32>
    %c0_18 = arith.constant 0 : index
    %c0_19 = arith.constant 0 : index
    %19 = vector.load %arg3[%c0_18, %c0_19] : memref<1x128xf32, #tpu.memory_space<vmem>>, vector<1x128xf32>
    %20 = vector.broadcast %19 : vector<1x128xf32> to vector<64x128xf32>
    %21 = arith.mulf %18, %20 : vector<64x128xf32>
    %c0_20 = arith.constant 0 : index
    %c0_21 = arith.constant 0 : index
    %22 = vector.load %arg4[%c0_20, %c0_21] : memref<1x128xf32, #tpu.memory_space<vmem>>, vector<1x128xf32>
    %23 = vector.broadcast %22 : vector<1x128xf32> to vector<64x128xf32>
    %24 = arith.addf %21, %23 : vector<64x128xf32>
    %cst_22 = arith.constant 0.000000e+00 : f32
    %25 = vector.broadcast %cst_22 : f32 to vector<64x128xf32>
    %26 = arith.maximumf %24, %25 : vector<64x128xf32>
    %27 = arith.truncf %26 : vector<64x128xf32> to vector<64x128xbf16>
    %cst_23 = arith.constant 0.000000e+00 : bf16
    %28 = vector.broadcast %cst_23 : bf16 to vector<88x128xbf16>
    %c0_24 = arith.constant 0 : index
    %c0_25 = arith.constant 0 : index
    %29 = vector.load %arg13[%c0_24, %c0_25] : memref<88x128xbf16, #tpu.memory_space<vmem>>, vector<88x128xbf16>
    tpu.vector_store %arg13[%c0_24, %c0_25], %28 {strides = array<i32>} : memref<88x128xbf16, #tpu.memory_space<vmem>>, vector<88x128xbf16>,
    %c16_26 = arith.constant 16 : index
    %c0_27 = arith.constant 0 : index
    %30 = vector.load %arg13[%c16_26, %c0_27] : memref<88x128xbf16, #tpu.memory_space<vmem>>, vector<64x128xbf16>
    tpu.vector_store %arg13[%c16_26, %c0_27], %27 {strides = array<i32>} : memref<88x128xbf16, #tpu.memory_space<vmem>>, vector<64x128xbf16>,
    %c15_28 = arith.constant 15 : index
    %c0_29 = arith.constant 0 : index
    %31 = vector.load %arg13[%c15_28, %c0_29] : memref<88x128xbf16, #tpu.memory_space<vmem>>, vector<64x128xbf16>
    %c0_30 = arith.constant 0 : index
    %c0_31 = arith.constant 0 : index
    %c0_32 = arith.constant 0 : index
    %32 = vector.load %arg5[%c0_30, %c0_31, %c0_32] : memref<3x128x128xbf16, #tpu.memory_space<vmem>>, vector<1x128x128xbf16>
    %33 = vector.shape_cast %32 : vector<1x128x128xbf16> to vector<128x128xbf16>
    %cst_33 = arith.constant dense<0.000000e+00> : vector<64x128xf32>
    %34 = tpu.matmul %31, %33, %cst_33 {dimension_numbers = #tpu.dot_dimension_numbers<[1], [0], [0], [1], [0, 0, 1, 1], [], []>} : vector<64x128xbf16>, vector<128x128xbf16>, vector<64x128xf32> -> vector<64x128xf32>
    %c16_34 = arith.constant 16 : index
    %c0_35 = arith.constant 0 : index
    %35 = vector.load %arg13[%c16_34, %c0_35] : memref<88x128xbf16, #tpu.memory_space<vmem>>, vector<64x128xbf16>
    %c1_36 = arith.constant 1 : index
    %c0_37 = arith.constant 0 : index
    %c0_38 = arith.constant 0 : index
    %36 = vector.load %arg5[%c1_36, %c0_37, %c0_38] : memref<3x128x128xbf16, #tpu.memory_space<vmem>>, vector<1x128x128xbf16>
    %37 = vector.shape_cast %36 : vector<1x128x128xbf16> to vector<128x128xbf16>
    %cst_39 = arith.constant dense<0.000000e+00> : vector<64x128xf32>
    %38 = tpu.matmul %35, %37, %cst_39 {dimension_numbers = #tpu.dot_dimension_numbers<[1], [0], [0], [1], [0, 0, 1, 1], [], []>} : vector<64x128xbf16>, vector<128x128xbf16>, vector<64x128xf32> -> vector<64x128xf32>
    %39 = arith.addf %34, %38 : vector<64x128xf32>
    %c17 = arith.constant 17 : index
    %c0_40 = arith.constant 0 : index
    %40 = vector.load %arg13[%c17, %c0_40] : memref<88x128xbf16, #tpu.memory_space<vmem>>, vector<64x128xbf16>
    %c2_41 = arith.constant 2 : index
    %c0_42 = arith.constant 0 : index
    %c0_43 = arith.constant 0 : index
    %41 = vector.load %arg5[%c2_41, %c0_42, %c0_43] : memref<3x128x128xbf16, #tpu.memory_space<vmem>>, vector<1x128x128xbf16>
    %42 = vector.shape_cast %41 : vector<1x128x128xbf16> to vector<128x128xbf16>
    %cst_44 = arith.constant dense<0.000000e+00> : vector<64x128xf32>
    %43 = tpu.matmul %40, %42, %cst_44 {dimension_numbers = #tpu.dot_dimension_numbers<[1], [0], [0], [1], [0, 0, 1, 1], [], []>} : vector<64x128xbf16>, vector<128x128xbf16>, vector<64x128xf32> -> vector<64x128xf32>
    %44 = arith.addf %39, %43 : vector<64x128xf32>
    %c0_45 = arith.constant 0 : index
    %c0_46 = arith.constant 0 : index
    %45 = vector.load %arg6[%c0_45, %c0_46] : memref<1x128xf32, #tpu.memory_space<vmem>>, vector<1x128xf32>
    %46 = vector.broadcast %45 : vector<1x128xf32> to vector<64x128xf32>
    %47 = arith.mulf %44, %46 : vector<64x128xf32>
    %c0_47 = arith.constant 0 : index
    %c0_48 = arith.constant 0 : index
    %48 = vector.load %arg7[%c0_47, %c0_48] : memref<1x128xf32, #tpu.memory_space<vmem>>, vector<1x128xf32>
    %49 = vector.broadcast %48 : vector<1x128xf32> to vector<64x128xf32>
    %50 = arith.addf %47, %49 : vector<64x128xf32>
    %cst_49 = arith.constant 0.000000e+00 : f32
    %51 = vector.broadcast %cst_49 : f32 to vector<64x128xf32>
    %52 = arith.maximumf %50, %51 : vector<64x128xf32>
    %53 = arith.truncf %52 : vector<64x128xf32> to vector<64x128xbf16>
    %cst_50 = arith.constant 0.000000e+00 : bf16
    %54 = vector.broadcast %cst_50 : bf16 to vector<88x128xbf16>
    %c0_51 = arith.constant 0 : index
    %c0_52 = arith.constant 0 : index
    %55 = vector.load %arg14[%c0_51, %c0_52] : memref<88x128xbf16, #tpu.memory_space<vmem>>, vector<88x128xbf16>
    tpu.vector_store %arg14[%c0_51, %c0_52], %54 {strides = array<i32>} : memref<88x128xbf16, #tpu.memory_space<vmem>>, vector<88x128xbf16>,
    %c16_53 = arith.constant 16 : index
    %c0_54 = arith.constant 0 : index
    %56 = vector.load %arg14[%c16_53, %c0_54] : memref<88x128xbf16, #tpu.memory_space<vmem>>, vector<64x128xbf16>
    tpu.vector_store %arg14[%c16_53, %c0_54], %53 {strides = array<i32>} : memref<88x128xbf16, #tpu.memory_space<vmem>>, vector<64x128xbf16>,
    %c15_55 = arith.constant 15 : index
    %c0_56 = arith.constant 0 : index
    %57 = vector.load %arg14[%c15_55, %c0_56] : memref<88x128xbf16, #tpu.memory_space<vmem>>, vector<64x128xbf16>
    %c0_57 = arith.constant 0 : index
    %c0_58 = arith.constant 0 : index
    %c0_59 = arith.constant 0 : index
    %58 = vector.load %arg8[%c0_57, %c0_58, %c0_59] : memref<3x128x128xbf16, #tpu.memory_space<vmem>>, vector<1x128x128xbf16>
    %59 = vector.shape_cast %58 : vector<1x128x128xbf16> to vector<128x128xbf16>
    %cst_60 = arith.constant dense<0.000000e+00> : vector<64x128xf32>
    %60 = tpu.matmul %57, %59, %cst_60 {dimension_numbers = #tpu.dot_dimension_numbers<[1], [0], [0], [1], [0, 0, 1, 1], [], []>} : vector<64x128xbf16>, vector<128x128xbf16>, vector<64x128xf32> -> vector<64x128xf32>
    %c16_61 = arith.constant 16 : index
    %c0_62 = arith.constant 0 : index
    %61 = vector.load %arg14[%c16_61, %c0_62] : memref<88x128xbf16, #tpu.memory_space<vmem>>, vector<64x128xbf16>
    %c1_63 = arith.constant 1 : index
    %c0_64 = arith.constant 0 : index
    %c0_65 = arith.constant 0 : index
    %62 = vector.load %arg8[%c1_63, %c0_64, %c0_65] : memref<3x128x128xbf16, #tpu.memory_space<vmem>>, vector<1x128x128xbf16>
    %63 = vector.shape_cast %62 : vector<1x128x128xbf16> to vector<128x128xbf16>
    %cst_66 = arith.constant dense<0.000000e+00> : vector<64x128xf32>
    %64 = tpu.matmul %61, %63, %cst_66 {dimension_numbers = #tpu.dot_dimension_numbers<[1], [0], [0], [1], [0, 0, 1, 1], [], []>} : vector<64x128xbf16>, vector<128x128xbf16>, vector<64x128xf32> -> vector<64x128xf32>
    %65 = arith.addf %60, %64 : vector<64x128xf32>
    %c17_67 = arith.constant 17 : index
    %c0_68 = arith.constant 0 : index
    %66 = vector.load %arg14[%c17_67, %c0_68] : memref<88x128xbf16, #tpu.memory_space<vmem>>, vector<64x128xbf16>
    %c2_69 = arith.constant 2 : index
    %c0_70 = arith.constant 0 : index
    %c0_71 = arith.constant 0 : index
    %67 = vector.load %arg8[%c2_69, %c0_70, %c0_71] : memref<3x128x128xbf16, #tpu.memory_space<vmem>>, vector<1x128x128xbf16>
    %68 = vector.shape_cast %67 : vector<1x128x128xbf16> to vector<128x128xbf16>
    %cst_72 = arith.constant dense<0.000000e+00> : vector<64x128xf32>
    %69 = tpu.matmul %66, %68, %cst_72 {dimension_numbers = #tpu.dot_dimension_numbers<[1], [0], [0], [1], [0, 0, 1, 1], [], []>} : vector<64x128xbf16>, vector<128x128xbf16>, vector<64x128xf32> -> vector<64x128xf32>
    %70 = arith.addf %65, %69 : vector<64x128xf32>
    %c0_73 = arith.constant 0 : index
    %c0_74 = arith.constant 0 : index
    %71 = vector.load %arg9[%c0_73, %c0_74] : memref<1x128xf32, #tpu.memory_space<vmem>>, vector<1x128xf32>
    %72 = vector.broadcast %71 : vector<1x128xf32> to vector<64x128xf32>
    %73 = arith.mulf %70, %72 : vector<64x128xf32>
    %c0_75 = arith.constant 0 : index
    %c0_76 = arith.constant 0 : index
    %74 = vector.load %arg10[%c0_75, %c0_76] : memref<1x128xf32, #tpu.memory_space<vmem>>, vector<1x128xf32>
    %75 = vector.broadcast %74 : vector<1x128xf32> to vector<64x128xf32>
    %76 = arith.addf %73, %75 : vector<64x128xf32>
    %cst_77 = arith.constant 0.000000e+00 : f32
    %77 = vector.broadcast %cst_77 : f32 to vector<64x128xf32>
    %78 = arith.maximumf %76, %77 : vector<64x128xf32>
    %79 = arith.truncf %78 : vector<64x128xf32> to vector<64x128xbf16>
    %c0_78 = arith.constant 0 : index
    %c0_79 = arith.constant 0 : index
    %c0_80 = arith.constant 0 : index
    %80 = vector.load %arg11[%c0_78, %c0_79, %c0_80] : memref<1x64x128xbf16, #tpu.memory_space<vmem>>, vector<1x64x128xbf16>
    %81 = vector.shape_cast %80 : vector<1x64x128xbf16> to vector<64x128xbf16>
    %82 = vector.shape_cast %79 : vector<64x128xbf16> to vector<1x64x128xbf16>
    tpu.vector_store %arg11[%c0_78, %c0_79, %c0_80], %82 {strides = array<i32>} : memref<1x64x128xbf16, #tpu.memory_space<vmem>>, vector<1x64x128xbf16>,
    return
  }
  func.func @transform_0(%arg0: i32) -> (i32, i32, i32) {
    %c0_i32 = arith.constant 0 : i32
    %c0_i32_0 = arith.constant 0 : i32
    %c0_i32_1 = arith.constant 0 : i32
    return %arg0, %c0_i32, %c0_i32_0 : i32, i32, i32
  }
  func.func @transform_1(%arg0: i32) -> (i32, i32, i32) {
    %c0_i32 = arith.constant 0 : i32
    %c0_i32_0 = arith.constant 0 : i32
    %c0_i32_1 = arith.constant 0 : i32
    %c0_i32_2 = arith.constant 0 : i32
    return %c0_i32, %c0_i32_0, %c0_i32_1 : i32, i32, i32
  }
  func.func @transform_2(%arg0: i32) -> (i32, i32) {
    %c0_i32 = arith.constant 0 : i32
    %c0_i32_0 = arith.constant 0 : i32
    %c0_i32_1 = arith.constant 0 : i32
    return %c0_i32, %c0_i32_0 : i32, i32
  }
  func.func @transform_3(%arg0: i32) -> (i32, i32) {
    %c0_i32 = arith.constant 0 : i32
    %c0_i32_0 = arith.constant 0 : i32
    %c0_i32_1 = arith.constant 0 : i32
    return %c0_i32, %c0_i32_0 : i32, i32
  }
  func.func @transform_4(%arg0: i32) -> (i32, i32, i32) {
    %c0_i32 = arith.constant 0 : i32
    %c0_i32_0 = arith.constant 0 : i32
    %c0_i32_1 = arith.constant 0 : i32
    %c0_i32_2 = arith.constant 0 : i32
    return %c0_i32, %c0_i32_0, %c0_i32_1 : i32, i32, i32
  }
  func.func @transform_5(%arg0: i32) -> (i32, i32) {
    %c0_i32 = arith.constant 0 : i32
    %c0_i32_0 = arith.constant 0 : i32
    %c0_i32_1 = arith.constant 0 : i32
    return %c0_i32, %c0_i32_0 : i32, i32
  }
  func.func @transform_6(%arg0: i32) -> (i32, i32) {
    %c0_i32 = arith.constant 0 : i32
    %c0_i32_0 = arith.constant 0 : i32
    %c0_i32_1 = arith.constant 0 : i32
    return %c0_i32, %c0_i32_0 : i32, i32
  }
  func.func @transform_7(%arg0: i32) -> (i32, i32, i32) {
    %c0_i32 = arith.constant 0 : i32
    %c0_i32_0 = arith.constant 0 : i32
    %c0_i32_1 = arith.constant 0 : i32
    %c0_i32_2 = arith.constant 0 : i32
    return %c0_i32, %c0_i32_0, %c0_i32_1 : i32, i32, i32
  }
  func.func @transform_8(%arg0: i32) -> (i32, i32) {
    %c0_i32 = arith.constant 0 : i32
    %c0_i32_0 = arith.constant 0 : i32
    %c0_i32_1 = arith.constant 0 : i32
    return %c0_i32, %c0_i32_0 : i32, i32
  }
  func.func @transform_9(%arg0: i32) -> (i32, i32) {
    %c0_i32 = arith.constant 0 : i32
    %c0_i32_0 = arith.constant 0 : i32
    %c0_i32_1 = arith.constant 0 : i32
    return %c0_i32, %c0_i32_0 : i32, i32
  }
  func.func @transform_10(%arg0: i32) -> (i32, i32, i32) {
    %c0_i32 = arith.constant 0 : i32
    %c0_i32_0 = arith.constant 0 : i32
    %c0_i32_1 = arith.constant 0 : i32
    return %arg0, %c0_i32, %c0_i32_0 : i32, i32, i32
  }
}

module attributes {stable_mosaic.version = 11 : i64} {
  func.func @_maxpool_kernel(%arg0: i32, %arg1: memref<1x32x256xbf16, #tpu.memory_space<vmem>>, %arg2: memref<1x32x128xbf16, #tpu.memory_space<vmem>>, %arg3: memref<56x128xbf16, #tpu.memory_space<vmem>>) attributes {dimension_semantics = [#tpu.dimension_semantics<parallel>], iteration_bounds = array<i64: 2>, scalar_prefetch = 0 : i64, scratch_operands = 1 : i64, tpu.core_type = #tpu.core_type<tc>, window_params = [{transform_indices = @transform_0, window_bounds = array<i64: 1, 32, 256>}, {transform_indices = @transform_1, window_bounds = array<i64: 1, 32, 128>}]} {
    %c0 = arith.constant 0 : index
    %c0_0 = arith.constant 0 : index
    %c0_1 = arith.constant 0 : index
    %0 = vector.load %arg1[%c0, %c0_0, %c0_1] : memref<1x32x256xbf16, #tpu.memory_space<vmem>>, vector<1x32x128xbf16>
    %1 = vector.shape_cast %0 : vector<1x32x128xbf16> to vector<32x128xbf16>
    %c0_2 = arith.constant 0 : index
    %c0_3 = arith.constant 0 : index
    %c128 = arith.constant 128 : index
    %2 = vector.load %arg1[%c0_2, %c0_3, %c128] : memref<1x32x256xbf16, #tpu.memory_space<vmem>>, vector<1x32x128xbf16>
    %3 = vector.shape_cast %2 : vector<1x32x128xbf16> to vector<32x128xbf16>
    %cst = arith.constant 0.000000e+00 : bf16
    %4 = vector.broadcast %cst : bf16 to vector<56x128xbf16>
    %c0_4 = arith.constant 0 : index
    %c0_5 = arith.constant 0 : index
    %5 = vector.load %arg3[%c0_4, %c0_5] : memref<56x128xbf16, #tpu.memory_space<vmem>>, vector<56x128xbf16>
    tpu.vector_store %arg3[%c0_4, %c0_5], %4 {strides = array<i32>} : memref<56x128xbf16, #tpu.memory_space<vmem>>, vector<56x128xbf16>,
    %c16 = arith.constant 16 : index
    %c0_6 = arith.constant 0 : index
    %6 = vector.load %arg3[%c16, %c0_6] : memref<56x128xbf16, #tpu.memory_space<vmem>>, vector<32x128xbf16>
    tpu.vector_store %arg3[%c16, %c0_6], %3 {strides = array<i32>} : memref<56x128xbf16, #tpu.memory_space<vmem>>, vector<32x128xbf16>,
    %c15 = arith.constant 15 : index
    %c0_7 = arith.constant 0 : index
    %7 = vector.load %arg3[%c15, %c0_7] : memref<56x128xbf16, #tpu.memory_space<vmem>>, vector<32x128xbf16>
    %8 = arith.maximumf %7, %1 : vector<32x128xbf16>
    %9 = arith.maximumf %8, %3 : vector<32x128xbf16>
    %c0_8 = arith.constant 0 : index
    %c0_9 = arith.constant 0 : index
    %c0_10 = arith.constant 0 : index
    %10 = vector.load %arg2[%c0_8, %c0_9, %c0_10] : memref<1x32x128xbf16, #tpu.memory_space<vmem>>, vector<1x32x128xbf16>
    %11 = vector.shape_cast %10 : vector<1x32x128xbf16> to vector<32x128xbf16>
    %12 = vector.shape_cast %9 : vector<32x128xbf16> to vector<1x32x128xbf16>
    tpu.vector_store %arg2[%c0_8, %c0_9, %c0_10], %12 {strides = array<i32>} : memref<1x32x128xbf16, #tpu.memory_space<vmem>>, vector<1x32x128xbf16>,
    return
  }
  func.func @transform_0(%arg0: i32) -> (i32, i32, i32) {
    %c0_i32 = arith.constant 0 : i32
    %c0_i32_0 = arith.constant 0 : i32
    %c0_i32_1 = arith.constant 0 : i32
    return %arg0, %c0_i32, %c0_i32_0 : i32, i32, i32
  }
  func.func @transform_1(%arg0: i32) -> (i32, i32, i32) {
    %c0_i32 = arith.constant 0 : i32
    %c0_i32_0 = arith.constant 0 : i32
    %c0_i32_1 = arith.constant 0 : i32
    return %arg0, %c0_i32, %c0_i32_0 : i32, i32, i32
  }
}

module attributes {stable_mosaic.version = 11 : i64} {
  func.func @_block_s1_kernel(%arg0: i32, %arg1: memref<1x32x128xbf16, #tpu.memory_space<vmem>>, %arg2: memref<128x128xbf16, #tpu.memory_space<vmem>>, %arg3: memref<1x128xf32, #tpu.memory_space<vmem>>, %arg4: memref<1x128xf32, #tpu.memory_space<vmem>>, %arg5: memref<3x128x128xbf16, #tpu.memory_space<vmem>>, %arg6: memref<1x128xf32, #tpu.memory_space<vmem>>, %arg7: memref<1x128xf32, #tpu.memory_space<vmem>>, %arg8: memref<128x128xbf16, #tpu.memory_space<vmem>>, %arg9: memref<1x128xf32, #tpu.memory_space<vmem>>, %arg10: memref<1x128xf32, #tpu.memory_space<vmem>>, %arg11: memref<128x128xbf16, #tpu.memory_space<vmem>>, %arg12: memref<1x128xf32, #tpu.memory_space<vmem>>, %arg13: memref<1x128xf32, #tpu.memory_space<vmem>>, %arg14: memref<1x32x128xbf16, #tpu.memory_space<vmem>>, %arg15: memref<56x128xbf16, #tpu.memory_space<vmem>>) attributes {dimension_semantics = [#tpu.dimension_semantics<parallel>], iteration_bounds = array<i64: 2>, scalar_prefetch = 0 : i64, scratch_operands = 1 : i64, tpu.core_type = #tpu.core_type<tc>, window_params = [{transform_indices = @transform_0, window_bounds = array<i64: 1, 32, 128>}, {pipeline_mode = #tpu.pipeline_mode<synchronous>, transform_indices = @transform_1, window_bounds = array<i64: 128, 128>}, {pipeline_mode = #tpu.pipeline_mode<synchronous>, transform_indices = @transform_2, window_bounds = array<i64: 1, 128>}, {pipeline_mode = #tpu.pipeline_mode<synchronous>, transform_indices = @transform_3, window_bounds = array<i64: 1, 128>}, {pipeline_mode = #tpu.pipeline_mode<synchronous>, transform_indices = @transform_4, window_bounds = array<i64: 3, 128, 128>}, {pipeline_mode = #tpu.pipeline_mode<synchronous>, transform_indices = @transform_5, window_bounds = array<i64: 1, 128>}, {pipeline_mode = #tpu.pipeline_mode<synchronous>, transform_indices = @transform_6, window_bounds = array<i64: 1, 128>}, {pipeline_mode = #tpu.pipeline_mode<synchronous>, transform_indices = @transform_7, window_bounds = array<i64: 128, 128>}, {pipeline_mode = #tpu.pipeline_mode<synchronous>, transform_indices = @transform_8, window_bounds = array<i64: 1, 128>}, {pipeline_mode = #tpu.pipeline_mode<synchronous>, transform_indices = @transform_9, window_bounds = array<i64: 1, 128>}, {pipeline_mode = #tpu.pipeline_mode<synchronous>, transform_indices = @transform_10, window_bounds = array<i64: 128, 128>}, {pipeline_mode = #tpu.pipeline_mode<synchronous>, transform_indices = @transform_11, window_bounds = array<i64: 1, 128>}, {pipeline_mode = #tpu.pipeline_mode<synchronous>, transform_indices = @transform_12, window_bounds = array<i64: 1, 128>}, {transform_indices = @transform_13, window_bounds = array<i64: 1, 32, 128>}]} {
    %c0 = arith.constant 0 : index
    %c0_0 = arith.constant 0 : index
    %c0_1 = arith.constant 0 : index
    %0 = vector.load %arg1[%c0, %c0_0, %c0_1] : memref<1x32x128xbf16, #tpu.memory_space<vmem>>, vector<1x32x128xbf16>
    %1 = vector.shape_cast %0 : vector<1x32x128xbf16> to vector<32x128xbf16>
    %c0_2 = arith.constant 0 : index
    %c0_3 = arith.constant 0 : index
    %2 = vector.load %arg2[%c0_2, %c0_3] : memref<128x128xbf16, #tpu.memory_space<vmem>>, vector<128x128xbf16>
    %cst = arith.constant dense<0.000000e+00> : vector<32x128xf32>
    %3 = tpu.matmul %1, %2, %cst {dimension_numbers = #tpu.dot_dimension_numbers<[1], [0], [0], [1], [0, 0, 1, 1], [], []>} : vector<32x128xbf16>, vector<128x128xbf16>, vector<32x128xf32> -> vector<32x128xf32>
    %c0_4 = arith.constant 0 : index
    %c0_5 = arith.constant 0 : index
    %4 = vector.load %arg3[%c0_4, %c0_5] : memref<1x128xf32, #tpu.memory_space<vmem>>, vector<1x128xf32>
    %5 = vector.broadcast %4 : vector<1x128xf32> to vector<32x128xf32>
    %6 = arith.mulf %3, %5 : vector<32x128xf32>
    %c0_6 = arith.constant 0 : index
    %c0_7 = arith.constant 0 : index
    %7 = vector.load %arg4[%c0_6, %c0_7] : memref<1x128xf32, #tpu.memory_space<vmem>>, vector<1x128xf32>
    %8 = vector.broadcast %7 : vector<1x128xf32> to vector<32x128xf32>
    %9 = arith.addf %6, %8 : vector<32x128xf32>
    %cst_8 = arith.constant 0.000000e+00 : f32
    %10 = vector.broadcast %cst_8 : f32 to vector<32x128xf32>
    %11 = arith.maximumf %9, %10 : vector<32x128xf32>
    %12 = arith.truncf %11 : vector<32x128xf32> to vector<32x128xbf16>
    %cst_9 = arith.constant 0.000000e+00 : bf16
    %13 = vector.broadcast %cst_9 : bf16 to vector<56x128xbf16>
    %c0_10 = arith.constant 0 : index
    %c0_11 = arith.constant 0 : index
    %14 = vector.load %arg15[%c0_10, %c0_11] : memref<56x128xbf16, #tpu.memory_space<vmem>>, vector<56x128xbf16>
    tpu.vector_store %arg15[%c0_10, %c0_11], %13 {strides = array<i32>} : memref<56x128xbf16, #tpu.memory_space<vmem>>, vector<56x128xbf16>,
    %c16 = arith.constant 16 : index
    %c0_12 = arith.constant 0 : index
    %15 = vector.load %arg15[%c16, %c0_12] : memref<56x128xbf16, #tpu.memory_space<vmem>>, vector<32x128xbf16>
    tpu.vector_store %arg15[%c16, %c0_12], %12 {strides = array<i32>} : memref<56x128xbf16, #tpu.memory_space<vmem>>, vector<32x128xbf16>,
    %c15 = arith.constant 15 : index
    %c0_13 = arith.constant 0 : index
    %16 = vector.load %arg15[%c15, %c0_13] : memref<56x128xbf16, #tpu.memory_space<vmem>>, vector<32x128xbf16>
    %c0_14 = arith.constant 0 : index
    %c0_15 = arith.constant 0 : index
    %c0_16 = arith.constant 0 : index
    %17 = vector.load %arg5[%c0_14, %c0_15, %c0_16] : memref<3x128x128xbf16, #tpu.memory_space<vmem>>, vector<1x128x128xbf16>
    %18 = vector.shape_cast %17 : vector<1x128x128xbf16> to vector<128x128xbf16>
    %cst_17 = arith.constant dense<0.000000e+00> : vector<32x128xf32>
    %19 = tpu.matmul %16, %18, %cst_17 {dimension_numbers = #tpu.dot_dimension_numbers<[1], [0], [0], [1], [0, 0, 1, 1], [], []>} : vector<32x128xbf16>, vector<128x128xbf16>, vector<32x128xf32> -> vector<32x128xf32>
    %c16_18 = arith.constant 16 : index
    %c0_19 = arith.constant 0 : index
    %20 = vector.load %arg15[%c16_18, %c0_19] : memref<56x128xbf16, #tpu.memory_space<vmem>>, vector<32x128xbf16>
    %c1 = arith.constant 1 : index
    %c0_20 = arith.constant 0 : index
    %c0_21 = arith.constant 0 : index
    %21 = vector.load %arg5[%c1, %c0_20, %c0_21] : memref<3x128x128xbf16, #tpu.memory_space<vmem>>, vector<1x128x128xbf16>
    %22 = vector.shape_cast %21 : vector<1x128x128xbf16> to vector<128x128xbf16>
    %cst_22 = arith.constant dense<0.000000e+00> : vector<32x128xf32>
    %23 = tpu.matmul %20, %22, %cst_22 {dimension_numbers = #tpu.dot_dimension_numbers<[1], [0], [0], [1], [0, 0, 1, 1], [], []>} : vector<32x128xbf16>, vector<128x128xbf16>, vector<32x128xf32> -> vector<32x128xf32>
    %24 = arith.addf %19, %23 : vector<32x128xf32>
    %c17 = arith.constant 17 : index
    %c0_23 = arith.constant 0 : index
    %25 = vector.load %arg15[%c17, %c0_23] : memref<56x128xbf16, #tpu.memory_space<vmem>>, vector<32x128xbf16>
    %c2 = arith.constant 2 : index
    %c0_24 = arith.constant 0 : index
    %c0_25 = arith.constant 0 : index
    %26 = vector.load %arg5[%c2, %c0_24, %c0_25] : memref<3x128x128xbf16, #tpu.memory_space<vmem>>, vector<1x128x128xbf16>
    %27 = vector.shape_cast %26 : vector<1x128x128xbf16> to vector<128x128xbf16>
    %cst_26 = arith.constant dense<0.000000e+00> : vector<32x128xf32>
    %28 = tpu.matmul %25, %27, %cst_26 {dimension_numbers = #tpu.dot_dimension_numbers<[1], [0], [0], [1], [0, 0, 1, 1], [], []>} : vector<32x128xbf16>, vector<128x128xbf16>, vector<32x128xf32> -> vector<32x128xf32>
    %29 = arith.addf %24, %28 : vector<32x128xf32>
    %c0_27 = arith.constant 0 : index
    %c0_28 = arith.constant 0 : index
    %30 = vector.load %arg6[%c0_27, %c0_28] : memref<1x128xf32, #tpu.memory_space<vmem>>, vector<1x128xf32>
    %31 = vector.broadcast %30 : vector<1x128xf32> to vector<32x128xf32>
    %32 = arith.mulf %29, %31 : vector<32x128xf32>
    %c0_29 = arith.constant 0 : index
    %c0_30 = arith.constant 0 : index
    %33 = vector.load %arg7[%c0_29, %c0_30] : memref<1x128xf32, #tpu.memory_space<vmem>>, vector<1x128xf32>
    %34 = vector.broadcast %33 : vector<1x128xf32> to vector<32x128xf32>
    %35 = arith.addf %32, %34 : vector<32x128xf32>
    %cst_31 = arith.constant 0.000000e+00 : f32
    %36 = vector.broadcast %cst_31 : f32 to vector<32x128xf32>
    %37 = arith.maximumf %35, %36 : vector<32x128xf32>
    %38 = arith.truncf %37 : vector<32x128xf32> to vector<32x128xbf16>
    %c0_32 = arith.constant 0 : index
    %c0_33 = arith.constant 0 : index
    %39 = vector.load %arg8[%c0_32, %c0_33] : memref<128x128xbf16, #tpu.memory_space<vmem>>, vector<128x128xbf16>
    %cst_34 = arith.constant dense<0.000000e+00> : vector<32x128xf32>
    %40 = tpu.matmul %38, %39, %cst_34 {dimension_numbers = #tpu.dot_dimension_numbers<[1], [0], [0], [1], [0, 0, 1, 1], [], []>} : vector<32x128xbf16>, vector<128x128xbf16>, vector<32x128xf32> -> vector<32x128xf32>
    %c0_35 = arith.constant 0 : index
    %c0_36 = arith.constant 0 : index
    %41 = vector.load %arg9[%c0_35, %c0_36] : memref<1x128xf32, #tpu.memory_space<vmem>>, vector<1x128xf32>
    %42 = vector.broadcast %41 : vector<1x128xf32> to vector<32x128xf32>
    %43 = arith.mulf %40, %42 : vector<32x128xf32>
    %c0_37 = arith.constant 0 : index
    %c0_38 = arith.constant 0 : index
    %44 = vector.load %arg10[%c0_37, %c0_38] : memref<1x128xf32, #tpu.memory_space<vmem>>, vector<1x128xf32>
    %45 = vector.broadcast %44 : vector<1x128xf32> to vector<32x128xf32>
    %46 = arith.addf %43, %45 : vector<32x128xf32>
    %c0_39 = arith.constant 0 : index
    %c0_40 = arith.constant 0 : index
    %47 = vector.load %arg11[%c0_39, %c0_40] : memref<128x128xbf16, #tpu.memory_space<vmem>>, vector<128x128xbf16>
    %cst_41 = arith.constant dense<0.000000e+00> : vector<32x128xf32>
    %48 = tpu.matmul %1, %47, %cst_41 {dimension_numbers = #tpu.dot_dimension_numbers<[1], [0], [0], [1], [0, 0, 1, 1], [], []>} : vector<32x128xbf16>, vector<128x128xbf16>, vector<32x128xf32> -> vector<32x128xf32>
    %c0_42 = arith.constant 0 : index
    %c0_43 = arith.constant 0 : index
    %49 = vector.load %arg12[%c0_42, %c0_43] : memref<1x128xf32, #tpu.memory_space<vmem>>, vector<1x128xf32>
    %50 = vector.broadcast %49 : vector<1x128xf32> to vector<32x128xf32>
    %51 = arith.mulf %48, %50 : vector<32x128xf32>
    %c0_44 = arith.constant 0 : index
    %c0_45 = arith.constant 0 : index
    %52 = vector.load %arg13[%c0_44, %c0_45] : memref<1x128xf32, #tpu.memory_space<vmem>>, vector<1x128xf32>
    %53 = vector.broadcast %52 : vector<1x128xf32> to vector<32x128xf32>
    %54 = arith.addf %51, %53 : vector<32x128xf32>
    %55 = arith.addf %46, %54 : vector<32x128xf32>
    %cst_46 = arith.constant 0.000000e+00 : f32
    %56 = vector.broadcast %cst_46 : f32 to vector<32x128xf32>
    %57 = arith.maximumf %55, %56 : vector<32x128xf32>
    %58 = arith.truncf %57 : vector<32x128xf32> to vector<32x128xbf16>
    %c0_47 = arith.constant 0 : index
    %c0_48 = arith.constant 0 : index
    %c0_49 = arith.constant 0 : index
    %59 = vector.load %arg14[%c0_47, %c0_48, %c0_49] : memref<1x32x128xbf16, #tpu.memory_space<vmem>>, vector<1x32x128xbf16>
    %60 = vector.shape_cast %59 : vector<1x32x128xbf16> to vector<32x128xbf16>
    %61 = vector.shape_cast %58 : vector<32x128xbf16> to vector<1x32x128xbf16>
    tpu.vector_store %arg14[%c0_47, %c0_48, %c0_49], %61 {strides = array<i32>} : memref<1x32x128xbf16, #tpu.memory_space<vmem>>, vector<1x32x128xbf16>,
    return
  }
  func.func @transform_0(%arg0: i32) -> (i32, i32, i32) {
    %c0_i32 = arith.constant 0 : i32
    %c0_i32_0 = arith.constant 0 : i32
    %c0_i32_1 = arith.constant 0 : i32
    return %arg0, %c0_i32, %c0_i32_0 : i32, i32, i32
  }
  func.func @transform_1(%arg0: i32) -> (i32, i32) {
    %c0_i32 = arith.constant 0 : i32
    %c0_i32_0 = arith.constant 0 : i32
    %c0_i32_1 = arith.constant 0 : i32
    return %c0_i32, %c0_i32_0 : i32, i32
  }
  func.func @transform_2(%arg0: i32) -> (i32, i32) {
    %c0_i32 = arith.constant 0 : i32
    %c0_i32_0 = arith.constant 0 : i32
    %c0_i32_1 = arith.constant 0 : i32
    return %c0_i32, %c0_i32_0 : i32, i32
  }
  func.func @transform_3(%arg0: i32) -> (i32, i32) {
    %c0_i32 = arith.constant 0 : i32
    %c0_i32_0 = arith.constant 0 : i32
    %c0_i32_1 = arith.constant 0 : i32
    return %c0_i32, %c0_i32_0 : i32, i32
  }
  func.func @transform_4(%arg0: i32) -> (i32, i32, i32) {
    %c0_i32 = arith.constant 0 : i32
    %c0_i32_0 = arith.constant 0 : i32
    %c0_i32_1 = arith.constant 0 : i32
    %c0_i32_2 = arith.constant 0 : i32
    return %c0_i32, %c0_i32_0, %c0_i32_1 : i32, i32, i32
  }
  func.func @transform_5(%arg0: i32) -> (i32, i32) {
    %c0_i32 = arith.constant 0 : i32
    %c0_i32_0 = arith.constant 0 : i32
    %c0_i32_1 = arith.constant 0 : i32
    return %c0_i32, %c0_i32_0 : i32, i32
  }
  func.func @transform_6(%arg0: i32) -> (i32, i32) {
    %c0_i32 = arith.constant 0 : i32
    %c0_i32_0 = arith.constant 0 : i32
    %c0_i32_1 = arith.constant 0 : i32
    return %c0_i32, %c0_i32_0 : i32, i32
  }
  func.func @transform_7(%arg0: i32) -> (i32, i32) {
    %c0_i32 = arith.constant 0 : i32
    %c0_i32_0 = arith.constant 0 : i32
    %c0_i32_1 = arith.constant 0 : i32
    return %c0_i32, %c0_i32_0 : i32, i32
  }
  func.func @transform_8(%arg0: i32) -> (i32, i32) {
    %c0_i32 = arith.constant 0 : i32
    %c0_i32_0 = arith.constant 0 : i32
    %c0_i32_1 = arith.constant 0 : i32
    return %c0_i32, %c0_i32_0 : i32, i32
  }
  func.func @transform_9(%arg0: i32) -> (i32, i32) {
    %c0_i32 = arith.constant 0 : i32
    %c0_i32_0 = arith.constant 0 : i32
    %c0_i32_1 = arith.constant 0 : i32
    return %c0_i32, %c0_i32_0 : i32, i32
  }
  func.func @transform_10(%arg0: i32) -> (i32, i32) {
    %c0_i32 = arith.constant 0 : i32
    %c0_i32_0 = arith.constant 0 : i32
    %c0_i32_1 = arith.constant 0 : i32
    return %c0_i32, %c0_i32_0 : i32, i32
  }
  func.func @transform_11(%arg0: i32) -> (i32, i32) {
    %c0_i32 = arith.constant 0 : i32
    %c0_i32_0 = arith.constant 0 : i32
    %c0_i32_1 = arith.constant 0 : i32
    return %c0_i32, %c0_i32_0 : i32, i32
  }
  func.func @transform_12(%arg0: i32) -> (i32, i32) {
    %c0_i32 = arith.constant 0 : i32
    %c0_i32_0 = arith.constant 0 : i32
    %c0_i32_1 = arith.constant 0 : i32
    return %c0_i32, %c0_i32_0 : i32, i32
  }
  func.func @transform_13(%arg0: i32) -> (i32, i32, i32) {
    %c0_i32 = arith.constant 0 : i32
    %c0_i32_0 = arith.constant 0 : i32
    %c0_i32_1 = arith.constant 0 : i32
    return %arg0, %c0_i32, %c0_i32_0 : i32, i32, i32
  }
}

module attributes {stable_mosaic.version = 11 : i64} {
  func.func @_block_s2_kernel(%arg0: i32, %arg1: memref<1x16x256xbf16, #tpu.memory_space<vmem>>, %arg2: memref<128x128xbf16, #tpu.memory_space<vmem>>, %arg3: memref<1x128xf32, #tpu.memory_space<vmem>>, %arg4: memref<1x128xf32, #tpu.memory_space<vmem>>, %arg5: memref<3x128x128xbf16, #tpu.memory_space<vmem>>, %arg6: memref<1x128xf32, #tpu.memory_space<vmem>>, %arg7: memref<1x128xf32, #tpu.memory_space<vmem>>, %arg8: memref<128x128xbf16, #tpu.memory_space<vmem>>, %arg9: memref<1x128xf32, #tpu.memory_space<vmem>>, %arg10: memref<1x128xf32, #tpu.memory_space<vmem>>, %arg11: memref<1x16x128xbf16, #tpu.memory_space<vmem>>, %arg12: memref<40x128xbf16, #tpu.memory_space<vmem>>) attributes {dimension_semantics = [#tpu.dimension_semantics<parallel>], iteration_bounds = array<i64: 2>, scalar_prefetch = 0 : i64, scratch_operands = 1 : i64, tpu.core_type = #tpu.core_type<tc>, window_params = [{transform_indices = @transform_0, window_bounds = array<i64: 1, 16, 256>}, {pipeline_mode = #tpu.pipeline_mode<synchronous>, transform_indices = @transform_1, window_bounds = array<i64: 128, 128>}, {pipeline_mode = #tpu.pipeline_mode<synchronous>, transform_indices = @transform_2, window_bounds = array<i64: 1, 128>}, {pipeline_mode = #tpu.pipeline_mode<synchronous>, transform_indices = @transform_3, window_bounds = array<i64: 1, 128>}, {pipeline_mode = #tpu.pipeline_mode<synchronous>, transform_indices = @transform_4, window_bounds = array<i64: 3, 128, 128>}, {pipeline_mode = #tpu.pipeline_mode<synchronous>, transform_indices = @transform_5, window_bounds = array<i64: 1, 128>}, {pipeline_mode = #tpu.pipeline_mode<synchronous>, transform_indices = @transform_6, window_bounds = array<i64: 1, 128>}, {pipeline_mode = #tpu.pipeline_mode<synchronous>, transform_indices = @transform_7, window_bounds = array<i64: 128, 128>}, {pipeline_mode = #tpu.pipeline_mode<synchronous>, transform_indices = @transform_8, window_bounds = array<i64: 1, 128>}, {pipeline_mode = #tpu.pipeline_mode<synchronous>, transform_indices = @transform_9, window_bounds = array<i64: 1, 128>}, {transform_indices = @transform_10, window_bounds = array<i64: 1, 16, 128>}]} {
    %c0 = arith.constant 0 : index
    %c0_0 = arith.constant 0 : index
    %c0_1 = arith.constant 0 : index
    %0 = vector.load %arg1[%c0, %c0_0, %c0_1] : memref<1x16x256xbf16, #tpu.memory_space<vmem>>, vector<1x16x128xbf16>
    %1 = vector.shape_cast %0 : vector<1x16x128xbf16> to vector<16x128xbf16>
    %c0_2 = arith.constant 0 : index
    %c0_3 = arith.constant 0 : index
    %c128 = arith.constant 128 : index
    %2 = vector.load %arg1[%c0_2, %c0_3, %c128] : memref<1x16x256xbf16, #tpu.memory_space<vmem>>, vector<1x16x128xbf16>
    %3 = vector.shape_cast %2 : vector<1x16x128xbf16> to vector<16x128xbf16>
    %c0_4 = arith.constant 0 : index
    %c0_5 = arith.constant 0 : index
    %4 = vector.load %arg2[%c0_4, %c0_5] : memref<128x128xbf16, #tpu.memory_space<vmem>>, vector<128x128xbf16>
    %cst = arith.constant dense<0.000000e+00> : vector<16x128xf32>
    %5 = tpu.matmul %1, %4, %cst {dimension_numbers = #tpu.dot_dimension_numbers<[1], [0], [0], [1], [0, 0, 1, 1], [], []>} : vector<16x128xbf16>, vector<128x128xbf16>, vector<16x128xf32> -> vector<16x128xf32>
    %c0_6 = arith.constant 0 : index
    %c0_7 = arith.constant 0 : index
    %6 = vector.load %arg3[%c0_6, %c0_7] : memref<1x128xf32, #tpu.memory_space<vmem>>, vector<1x128xf32>
    %7 = vector.broadcast %6 : vector<1x128xf32> to vector<16x128xf32>
    %8 = arith.mulf %5, %7 : vector<16x128xf32>
    %c0_8 = arith.constant 0 : index
    %c0_9 = arith.constant 0 : index
    %9 = vector.load %arg4[%c0_8, %c0_9] : memref<1x128xf32, #tpu.memory_space<vmem>>, vector<1x128xf32>
    %10 = vector.broadcast %9 : vector<1x128xf32> to vector<16x128xf32>
    %11 = arith.addf %8, %10 : vector<16x128xf32>
    %cst_10 = arith.constant 0.000000e+00 : f32
    %12 = vector.broadcast %cst_10 : f32 to vector<16x128xf32>
    %13 = arith.maximumf %11, %12 : vector<16x128xf32>
    %14 = arith.truncf %13 : vector<16x128xf32> to vector<16x128xbf16>
    %c0_11 = arith.constant 0 : index
    %c0_12 = arith.constant 0 : index
    %15 = vector.load %arg2[%c0_11, %c0_12] : memref<128x128xbf16, #tpu.memory_space<vmem>>, vector<128x128xbf16>
    %cst_13 = arith.constant dense<0.000000e+00> : vector<16x128xf32>
    %16 = tpu.matmul %3, %15, %cst_13 {dimension_numbers = #tpu.dot_dimension_numbers<[1], [0], [0], [1], [0, 0, 1, 1], [], []>} : vector<16x128xbf16>, vector<128x128xbf16>, vector<16x128xf32> -> vector<16x128xf32>
    %c0_14 = arith.constant 0 : index
    %c0_15 = arith.constant 0 : index
    %17 = vector.load %arg3[%c0_14, %c0_15] : memref<1x128xf32, #tpu.memory_space<vmem>>, vector<1x128xf32>
    %18 = vector.broadcast %17 : vector<1x128xf32> to vector<16x128xf32>
    %19 = arith.mulf %16, %18 : vector<16x128xf32>
    %c0_16 = arith.constant 0 : index
    %c0_17 = arith.constant 0 : index
    %20 = vector.load %arg4[%c0_16, %c0_17] : memref<1x128xf32, #tpu.memory_space<vmem>>, vector<1x128xf32>
    %21 = vector.broadcast %20 : vector<1x128xf32> to vector<16x128xf32>
    %22 = arith.addf %19, %21 : vector<16x128xf32>
    %cst_18 = arith.constant 0.000000e+00 : f32
    %23 = vector.broadcast %cst_18 : f32 to vector<16x128xf32>
    %24 = arith.maximumf %22, %23 : vector<16x128xf32>
    %25 = arith.truncf %24 : vector<16x128xf32> to vector<16x128xbf16>
    %cst_19 = arith.constant 0.000000e+00 : bf16
    %26 = vector.broadcast %cst_19 : bf16 to vector<40x128xbf16>
    %c0_20 = arith.constant 0 : index
    %c0_21 = arith.constant 0 : index
    %27 = vector.load %arg12[%c0_20, %c0_21] : memref<40x128xbf16, #tpu.memory_space<vmem>>, vector<40x128xbf16>
    tpu.vector_store %arg12[%c0_20, %c0_21], %26 {strides = array<i32>} : memref<40x128xbf16, #tpu.memory_space<vmem>>, vector<40x128xbf16>,
    %c16 = arith.constant 16 : index
    %c0_22 = arith.constant 0 : index
    %28 = vector.load %arg12[%c16, %c0_22] : memref<40x128xbf16, #tpu.memory_space<vmem>>, vector<16x128xbf16>
    tpu.vector_store %arg12[%c16, %c0_22], %25 {strides = array<i32>} : memref<40x128xbf16, #tpu.memory_space<vmem>>, vector<16x128xbf16>,
    %c15 = arith.constant 15 : index
    %c0_23 = arith.constant 0 : index
    %29 = vector.load %arg12[%c15, %c0_23] : memref<40x128xbf16, #tpu.memory_space<vmem>>, vector<16x128xbf16>
    %c0_24 = arith.constant 0 : index
    %c0_25 = arith.constant 0 : index
    %c0_26 = arith.constant 0 : index
    %30 = vector.load %arg5[%c0_24, %c0_25, %c0_26] : memref<3x128x128xbf16, #tpu.memory_space<vmem>>, vector<1x128x128xbf16>
    %31 = vector.shape_cast %30 : vector<1x128x128xbf16> to vector<128x128xbf16>
    %cst_27 = arith.constant dense<0.000000e+00> : vector<16x128xf32>
    %32 = tpu.matmul %29, %31, %cst_27 {dimension_numbers = #tpu.dot_dimension_numbers<[1], [0], [0], [1], [0, 0, 1, 1], [], []>} : vector<16x128xbf16>, vector<128x128xbf16>, vector<16x128xf32> -> vector<16x128xf32>
    %c1 = arith.constant 1 : index
    %c0_28 = arith.constant 0 : index
    %c0_29 = arith.constant 0 : index
    %33 = vector.load %arg5[%c1, %c0_28, %c0_29] : memref<3x128x128xbf16, #tpu.memory_space<vmem>>, vector<1x128x128xbf16>
    %34 = vector.shape_cast %33 : vector<1x128x128xbf16> to vector<128x128xbf16>
    %cst_30 = arith.constant dense<0.000000e+00> : vector<16x128xf32>
    %35 = tpu.matmul %14, %34, %cst_30 {dimension_numbers = #tpu.dot_dimension_numbers<[1], [0], [0], [1], [0, 0, 1, 1], [], []>} : vector<16x128xbf16>, vector<128x128xbf16>, vector<16x128xf32> -> vector<16x128xf32>
    %36 = arith.addf %32, %35 : vector<16x128xf32>
    %c2 = arith.constant 2 : index
    %c0_31 = arith.constant 0 : index
    %c0_32 = arith.constant 0 : index
    %37 = vector.load %arg5[%c2, %c0_31, %c0_32] : memref<3x128x128xbf16, #tpu.memory_space<vmem>>, vector<1x128x128xbf16>
    %38 = vector.shape_cast %37 : vector<1x128x128xbf16> to vector<128x128xbf16>
    %cst_33 = arith.constant dense<0.000000e+00> : vector<16x128xf32>
    %39 = tpu.matmul %25, %38, %cst_33 {dimension_numbers = #tpu.dot_dimension_numbers<[1], [0], [0], [1], [0, 0, 1, 1], [], []>} : vector<16x128xbf16>, vector<128x128xbf16>, vector<16x128xf32> -> vector<16x128xf32>
    %40 = arith.addf %36, %39 : vector<16x128xf32>
    %c0_34 = arith.constant 0 : index
    %c0_35 = arith.constant 0 : index
    %41 = vector.load %arg6[%c0_34, %c0_35] : memref<1x128xf32, #tpu.memory_space<vmem>>, vector<1x128xf32>
    %42 = vector.broadcast %41 : vector<1x128xf32> to vector<16x128xf32>
    %43 = arith.mulf %40, %42 : vector<16x128xf32>
    %c0_36 = arith.constant 0 : index
    %c0_37 = arith.constant 0 : index
    %44 = vector.load %arg7[%c0_36, %c0_37] : memref<1x128xf32, #tpu.memory_space<vmem>>, vector<1x128xf32>
    %45 = vector.broadcast %44 : vector<1x128xf32> to vector<16x128xf32>
    %46 = arith.addf %43, %45 : vector<16x128xf32>
    %cst_38 = arith.constant 0.000000e+00 : f32
    %47 = vector.broadcast %cst_38 : f32 to vector<16x128xf32>
    %48 = arith.maximumf %46, %47 : vector<16x128xf32>
    %49 = arith.truncf %48 : vector<16x128xf32> to vector<16x128xbf16>
    %c0_39 = arith.constant 0 : index
    %c0_40 = arith.constant 0 : index
    %50 = vector.load %arg8[%c0_39, %c0_40] : memref<128x128xbf16, #tpu.memory_space<vmem>>, vector<128x128xbf16>
    %cst_41 = arith.constant dense<0.000000e+00> : vector<16x128xf32>
    %51 = tpu.matmul %49, %50, %cst_41 {dimension_numbers = #tpu.dot_dimension_numbers<[1], [0], [0], [1], [0, 0, 1, 1], [], []>} : vector<16x128xbf16>, vector<128x128xbf16>, vector<16x128xf32> -> vector<16x128xf32>
    %c0_42 = arith.constant 0 : index
    %c0_43 = arith.constant 0 : index
    %52 = vector.load %arg9[%c0_42, %c0_43] : memref<1x128xf32, #tpu.memory_space<vmem>>, vector<1x128xf32>
    %53 = vector.broadcast %52 : vector<1x128xf32> to vector<16x128xf32>
    %54 = arith.mulf %51, %53 : vector<16x128xf32>
    %c0_44 = arith.constant 0 : index
    %c0_45 = arith.constant 0 : index
    %55 = vector.load %arg10[%c0_44, %c0_45] : memref<1x128xf32, #tpu.memory_space<vmem>>, vector<1x128xf32>
    %56 = vector.broadcast %55 : vector<1x128xf32> to vector<16x128xf32>
    %57 = arith.addf %54, %56 : vector<16x128xf32>
    %58 = arith.extf %1 : vector<16x128xbf16> to vector<16x128xf32>
    %59 = arith.extf %3 : vector<16x128xbf16> to vector<16x128xf32>
    %60 = arith.addf %58, %59 : vector<16x128xf32>
    %cst_46 = arith.constant 5.000000e-01 : f32
    %61 = vector.broadcast %cst_46 : f32 to vector<16x128xf32>
    %62 = arith.mulf %60, %61 : vector<16x128xf32>
    %63 = arith.addf %57, %62 : vector<16x128xf32>
    %cst_47 = arith.constant 0.000000e+00 : f32
    %64 = vector.broadcast %cst_47 : f32 to vector<16x128xf32>
    %65 = arith.maximumf %63, %64 : vector<16x128xf32>
    %66 = arith.truncf %65 : vector<16x128xf32> to vector<16x128xbf16>
    %c0_48 = arith.constant 0 : index
    %c0_49 = arith.constant 0 : index
    %c0_50 = arith.constant 0 : index
    %67 = vector.load %arg11[%c0_48, %c0_49, %c0_50] : memref<1x16x128xbf16, #tpu.memory_space<vmem>>, vector<1x16x128xbf16>
    %68 = vector.shape_cast %67 : vector<1x16x128xbf16> to vector<16x128xbf16>
    %69 = vector.shape_cast %66 : vector<16x128xbf16> to vector<1x16x128xbf16>
    tpu.vector_store %arg11[%c0_48, %c0_49, %c0_50], %69 {strides = array<i32>} : memref<1x16x128xbf16, #tpu.memory_space<vmem>>, vector<1x16x128xbf16>,
    return
  }
  func.func @transform_0(%arg0: i32) -> (i32, i32, i32) {
    %c0_i32 = arith.constant 0 : i32
    %c0_i32_0 = arith.constant 0 : i32
    %c0_i32_1 = arith.constant 0 : i32
    return %arg0, %c0_i32, %c0_i32_0 : i32, i32, i32
  }
  func.func @transform_1(%arg0: i32) -> (i32, i32) {
    %c0_i32 = arith.constant 0 : i32
    %c0_i32_0 = arith.constant 0 : i32
    %c0_i32_1 = arith.constant 0 : i32
    return %c0_i32, %c0_i32_0 : i32, i32
  }
  func.func @transform_2(%arg0: i32) -> (i32, i32) {
    %c0_i32 = arith.constant 0 : i32
    %c0_i32_0 = arith.constant 0 : i32
    %c0_i32_1 = arith.constant 0 : i32
    return %c0_i32, %c0_i32_0 : i32, i32
  }
  func.func @transform_3(%arg0: i32) -> (i32, i32) {
    %c0_i32 = arith.constant 0 : i32
    %c0_i32_0 = arith.constant 0 : i32
    %c0_i32_1 = arith.constant 0 : i32
    return %c0_i32, %c0_i32_0 : i32, i32
  }
  func.func @transform_4(%arg0: i32) -> (i32, i32, i32) {
    %c0_i32 = arith.constant 0 : i32
    %c0_i32_0 = arith.constant 0 : i32
    %c0_i32_1 = arith.constant 0 : i32
    %c0_i32_2 = arith.constant 0 : i32
    return %c0_i32, %c0_i32_0, %c0_i32_1 : i32, i32, i32
  }
  func.func @transform_5(%arg0: i32) -> (i32, i32) {
    %c0_i32 = arith.constant 0 : i32
    %c0_i32_0 = arith.constant 0 : i32
    %c0_i32_1 = arith.constant 0 : i32
    return %c0_i32, %c0_i32_0 : i32, i32
  }
  func.func @transform_6(%arg0: i32) -> (i32, i32) {
    %c0_i32 = arith.constant 0 : i32
    %c0_i32_0 = arith.constant 0 : i32
    %c0_i32_1 = arith.constant 0 : i32
    return %c0_i32, %c0_i32_0 : i32, i32
  }
  func.func @transform_7(%arg0: i32) -> (i32, i32) {
    %c0_i32 = arith.constant 0 : i32
    %c0_i32_0 = arith.constant 0 : i32
    %c0_i32_1 = arith.constant 0 : i32
    return %c0_i32, %c0_i32_0 : i32, i32
  }
  func.func @transform_8(%arg0: i32) -> (i32, i32) {
    %c0_i32 = arith.constant 0 : i32
    %c0_i32_0 = arith.constant 0 : i32
    %c0_i32_1 = arith.constant 0 : i32
    return %c0_i32, %c0_i32_0 : i32, i32
  }
  func.func @transform_9(%arg0: i32) -> (i32, i32) {
    %c0_i32 = arith.constant 0 : i32
    %c0_i32_0 = arith.constant 0 : i32
    %c0_i32_1 = arith.constant 0 : i32
    return %c0_i32, %c0_i32_0 : i32, i32
  }
  func.func @transform_10(%arg0: i32) -> (i32, i32, i32) {
    %c0_i32 = arith.constant 0 : i32
    %c0_i32_0 = arith.constant 0 : i32
    %c0_i32_1 = arith.constant 0 : i32
    return %arg0, %c0_i32, %c0_i32_0 : i32, i32, i32
  }
}

module attributes {stable_mosaic.version = 11 : i64} {
  func.func @_block_s2_kernel(%arg0: i32, %arg1: memref<1x8x256xbf16, #tpu.memory_space<vmem>>, %arg2: memref<128x128xbf16, #tpu.memory_space<vmem>>, %arg3: memref<1x128xf32, #tpu.memory_space<vmem>>, %arg4: memref<1x128xf32, #tpu.memory_space<vmem>>, %arg5: memref<3x128x128xbf16, #tpu.memory_space<vmem>>, %arg6: memref<1x128xf32, #tpu.memory_space<vmem>>, %arg7: memref<1x128xf32, #tpu.memory_space<vmem>>, %arg8: memref<128x128xbf16, #tpu.memory_space<vmem>>, %arg9: memref<1x128xf32, #tpu.memory_space<vmem>>, %arg10: memref<1x128xf32, #tpu.memory_space<vmem>>, %arg11: memref<128x128xbf16, #tpu.memory_space<vmem>>, %arg12: memref<1x128xf32, #tpu.memory_space<vmem>>, %arg13: memref<1x128xf32, #tpu.memory_space<vmem>>, %arg14: memref<1x8x128xbf16, #tpu.memory_space<vmem>>, %arg15: memref<32x128xbf16, #tpu.memory_space<vmem>>) attributes {dimension_semantics = [#tpu.dimension_semantics<parallel>], iteration_bounds = array<i64: 2>, scalar_prefetch = 0 : i64, scratch_operands = 1 : i64, tpu.core_type = #tpu.core_type<tc>, window_params = [{transform_indices = @transform_0, window_bounds = array<i64: 1, 8, 256>}, {pipeline_mode = #tpu.pipeline_mode<synchronous>, transform_indices = @transform_1, window_bounds = array<i64: 128, 128>}, {pipeline_mode = #tpu.pipeline_mode<synchronous>, transform_indices = @transform_2, window_bounds = array<i64: 1, 128>}, {pipeline_mode = #tpu.pipeline_mode<synchronous>, transform_indices = @transform_3, window_bounds = array<i64: 1, 128>}, {pipeline_mode = #tpu.pipeline_mode<synchronous>, transform_indices = @transform_4, window_bounds = array<i64: 3, 128, 128>}, {pipeline_mode = #tpu.pipeline_mode<synchronous>, transform_indices = @transform_5, window_bounds = array<i64: 1, 128>}, {pipeline_mode = #tpu.pipeline_mode<synchronous>, transform_indices = @transform_6, window_bounds = array<i64: 1, 128>}, {pipeline_mode = #tpu.pipeline_mode<synchronous>, transform_indices = @transform_7, window_bounds = array<i64: 128, 128>}, {pipeline_mode = #tpu.pipeline_mode<synchronous>, transform_indices = @transform_8, window_bounds = array<i64: 1, 128>}, {pipeline_mode = #tpu.pipeline_mode<synchronous>, transform_indices = @transform_9, window_bounds = array<i64: 1, 128>}, {pipeline_mode = #tpu.pipeline_mode<synchronous>, transform_indices = @transform_10, window_bounds = array<i64: 128, 128>}, {pipeline_mode = #tpu.pipeline_mode<synchronous>, transform_indices = @transform_11, window_bounds = array<i64: 1, 128>}, {pipeline_mode = #tpu.pipeline_mode<synchronous>, transform_indices = @transform_12, window_bounds = array<i64: 1, 128>}, {transform_indices = @transform_13, window_bounds = array<i64: 1, 8, 128>}]} {
    %c0 = arith.constant 0 : index
    %c0_0 = arith.constant 0 : index
    %c0_1 = arith.constant 0 : index
    %0 = vector.load %arg1[%c0, %c0_0, %c0_1] : memref<1x8x256xbf16, #tpu.memory_space<vmem>>, vector<1x8x128xbf16>
    %1 = vector.shape_cast %0 : vector<1x8x128xbf16> to vector<8x128xbf16>
    %c0_2 = arith.constant 0 : index
    %c0_3 = arith.constant 0 : index
    %c128 = arith.constant 128 : index
    %2 = vector.load %arg1[%c0_2, %c0_3, %c128] : memref<1x8x256xbf16, #tpu.memory_space<vmem>>, vector<1x8x128xbf16>
    %3 = vector.shape_cast %2 : vector<1x8x128xbf16> to vector<8x128xbf16>
    %c0_4 = arith.constant 0 : index
    %c0_5 = arith.constant 0 : index
    %4 = vector.load %arg2[%c0_4, %c0_5] : memref<128x128xbf16, #tpu.memory_space<vmem>>, vector<128x128xbf16>
    %cst = arith.constant dense<0.000000e+00> : vector<8x128xf32>
    %5 = tpu.matmul %1, %4, %cst {dimension_numbers = #tpu.dot_dimension_numbers<[1], [0], [0], [1], [0, 0, 1, 1], [], []>} : vector<8x128xbf16>, vector<128x128xbf16>, vector<8x128xf32> -> vector<8x128xf32>
    %c0_6 = arith.constant 0 : index
    %c0_7 = arith.constant 0 : index
    %6 = vector.load %arg3[%c0_6, %c0_7] : memref<1x128xf32, #tpu.memory_space<vmem>>, vector<1x128xf32>
    %7 = vector.broadcast %6 : vector<1x128xf32> to vector<8x128xf32>
    %8 = arith.mulf %5, %7 : vector<8x128xf32>
    %c0_8 = arith.constant 0 : index
    %c0_9 = arith.constant 0 : index
    %9 = vector.load %arg4[%c0_8, %c0_9] : memref<1x128xf32, #tpu.memory_space<vmem>>, vector<1x128xf32>
    %10 = vector.broadcast %9 : vector<1x128xf32> to vector<8x128xf32>
    %11 = arith.addf %8, %10 : vector<8x128xf32>
    %cst_10 = arith.constant 0.000000e+00 : f32
    %12 = vector.broadcast %cst_10 : f32 to vector<8x128xf32>
    %13 = arith.maximumf %11, %12 : vector<8x128xf32>
    %14 = arith.truncf %13 : vector<8x128xf32> to vector<8x128xbf16>
    %c0_11 = arith.constant 0 : index
    %c0_12 = arith.constant 0 : index
    %15 = vector.load %arg2[%c0_11, %c0_12] : memref<128x128xbf16, #tpu.memory_space<vmem>>, vector<128x128xbf16>
    %cst_13 = arith.constant dense<0.000000e+00> : vector<8x128xf32>
    %16 = tpu.matmul %3, %15, %cst_13 {dimension_numbers = #tpu.dot_dimension_numbers<[1], [0], [0], [1], [0, 0, 1, 1], [], []>} : vector<8x128xbf16>, vector<128x128xbf16>, vector<8x128xf32> -> vector<8x128xf32>
    %c0_14 = arith.constant 0 : index
    %c0_15 = arith.constant 0 : index
    %17 = vector.load %arg3[%c0_14, %c0_15] : memref<1x128xf32, #tpu.memory_space<vmem>>, vector<1x128xf32>
    %18 = vector.broadcast %17 : vector<1x128xf32> to vector<8x128xf32>
    %19 = arith.mulf %16, %18 : vector<8x128xf32>
    %c0_16 = arith.constant 0 : index
    %c0_17 = arith.constant 0 : index
    %20 = vector.load %arg4[%c0_16, %c0_17] : memref<1x128xf32, #tpu.memory_space<vmem>>, vector<1x128xf32>
    %21 = vector.broadcast %20 : vector<1x128xf32> to vector<8x128xf32>
    %22 = arith.addf %19, %21 : vector<8x128xf32>
    %cst_18 = arith.constant 0.000000e+00 : f32
    %23 = vector.broadcast %cst_18 : f32 to vector<8x128xf32>
    %24 = arith.maximumf %22, %23 : vector<8x128xf32>
    %25 = arith.truncf %24 : vector<8x128xf32> to vector<8x128xbf16>
    %cst_19 = arith.constant 0.000000e+00 : bf16
    %26 = vector.broadcast %cst_19 : bf16 to vector<32x128xbf16>
    %c0_20 = arith.constant 0 : index
    %c0_21 = arith.constant 0 : index
    %27 = vector.load %arg15[%c0_20, %c0_21] : memref<32x128xbf16, #tpu.memory_space<vmem>>, vector<32x128xbf16>
    tpu.vector_store %arg15[%c0_20, %c0_21], %26 {strides = array<i32>} : memref<32x128xbf16, #tpu.memory_space<vmem>>, vector<32x128xbf16>,
    %c16 = arith.constant 16 : index
    %c0_22 = arith.constant 0 : index
    %28 = vector.load %arg15[%c16, %c0_22] : memref<32x128xbf16, #tpu.memory_space<vmem>>, vector<8x128xbf16>
    tpu.vector_store %arg15[%c16, %c0_22], %25 {strides = array<i32>} : memref<32x128xbf16, #tpu.memory_space<vmem>>, vector<8x128xbf16>,
    %c15 = arith.constant 15 : index
    %c0_23 = arith.constant 0 : index
    %29 = vector.load %arg15[%c15, %c0_23] : memref<32x128xbf16, #tpu.memory_space<vmem>>, vector<8x128xbf16>
    %c0_24 = arith.constant 0 : index
    %c0_25 = arith.constant 0 : index
    %c0_26 = arith.constant 0 : index
    %30 = vector.load %arg5[%c0_24, %c0_25, %c0_26] : memref<3x128x128xbf16, #tpu.memory_space<vmem>>, vector<1x128x128xbf16>
    %31 = vector.shape_cast %30 : vector<1x128x128xbf16> to vector<128x128xbf16>
    %cst_27 = arith.constant dense<0.000000e+00> : vector<8x128xf32>
    %32 = tpu.matmul %29, %31, %cst_27 {dimension_numbers = #tpu.dot_dimension_numbers<[1], [0], [0], [1], [0, 0, 1, 1], [], []>} : vector<8x128xbf16>, vector<128x128xbf16>, vector<8x128xf32> -> vector<8x128xf32>
    %c1 = arith.constant 1 : index
    %c0_28 = arith.constant 0 : index
    %c0_29 = arith.constant 0 : index
    %33 = vector.load %arg5[%c1, %c0_28, %c0_29] : memref<3x128x128xbf16, #tpu.memory_space<vmem>>, vector<1x128x128xbf16>
    %34 = vector.shape_cast %33 : vector<1x128x128xbf16> to vector<128x128xbf16>
    %cst_30 = arith.constant dense<0.000000e+00> : vector<8x128xf32>
    %35 = tpu.matmul %14, %34, %cst_30 {dimension_numbers = #tpu.dot_dimension_numbers<[1], [0], [0], [1], [0, 0, 1, 1], [], []>} : vector<8x128xbf16>, vector<128x128xbf16>, vector<8x128xf32> -> vector<8x128xf32>
    %36 = arith.addf %32, %35 : vector<8x128xf32>
    %c2 = arith.constant 2 : index
    %c0_31 = arith.constant 0 : index
    %c0_32 = arith.constant 0 : index
    %37 = vector.load %arg5[%c2, %c0_31, %c0_32] : memref<3x128x128xbf16, #tpu.memory_space<vmem>>, vector<1x128x128xbf16>
    %38 = vector.shape_cast %37 : vector<1x128x128xbf16> to vector<128x128xbf16>
    %cst_33 = arith.constant dense<0.000000e+00> : vector<8x128xf32>
    %39 = tpu.matmul %25, %38, %cst_33 {dimension_numbers = #tpu.dot_dimension_numbers<[1], [0], [0], [1], [0, 0, 1, 1], [], []>} : vector<8x128xbf16>, vector<128x128xbf16>, vector<8x128xf32> -> vector<8x128xf32>
    %40 = arith.addf %36, %39 : vector<8x128xf32>
    %c0_34 = arith.constant 0 : index
    %c0_35 = arith.constant 0 : index
    %41 = vector.load %arg6[%c0_34, %c0_35] : memref<1x128xf32, #tpu.memory_space<vmem>>, vector<1x128xf32>
    %42 = vector.broadcast %41 : vector<1x128xf32> to vector<8x128xf32>
    %43 = arith.mulf %40, %42 : vector<8x128xf32>
    %c0_36 = arith.constant 0 : index
    %c0_37 = arith.constant 0 : index
    %44 = vector.load %arg7[%c0_36, %c0_37] : memref<1x128xf32, #tpu.memory_space<vmem>>, vector<1x128xf32>
    %45 = vector.broadcast %44 : vector<1x128xf32> to vector<8x128xf32>
    %46 = arith.addf %43, %45 : vector<8x128xf32>
    %cst_38 = arith.constant 0.000000e+00 : f32
    %47 = vector.broadcast %cst_38 : f32 to vector<8x128xf32>
    %48 = arith.maximumf %46, %47 : vector<8x128xf32>
    %49 = arith.truncf %48 : vector<8x128xf32> to vector<8x128xbf16>
    %c0_39 = arith.constant 0 : index
    %c0_40 = arith.constant 0 : index
    %50 = vector.load %arg8[%c0_39, %c0_40] : memref<128x128xbf16, #tpu.memory_space<vmem>>, vector<128x128xbf16>
    %cst_41 = arith.constant dense<0.000000e+00> : vector<8x128xf32>
    %51 = tpu.matmul %49, %50, %cst_41 {dimension_numbers = #tpu.dot_dimension_numbers<[1], [0], [0], [1], [0, 0, 1, 1], [], []>} : vector<8x128xbf16>, vector<128x128xbf16>, vector<8x128xf32> -> vector<8x128xf32>
    %c0_42 = arith.constant 0 : index
    %c0_43 = arith.constant 0 : index
    %52 = vector.load %arg9[%c0_42, %c0_43] : memref<1x128xf32, #tpu.memory_space<vmem>>, vector<1x128xf32>
    %53 = vector.broadcast %52 : vector<1x128xf32> to vector<8x128xf32>
    %54 = arith.mulf %51, %53 : vector<8x128xf32>
    %c0_44 = arith.constant 0 : index
    %c0_45 = arith.constant 0 : index
    %55 = vector.load %arg10[%c0_44, %c0_45] : memref<1x128xf32, #tpu.memory_space<vmem>>, vector<1x128xf32>
    %56 = vector.broadcast %55 : vector<1x128xf32> to vector<8x128xf32>
    %57 = arith.addf %54, %56 : vector<8x128xf32>
    %58 = arith.extf %1 : vector<8x128xbf16> to vector<8x128xf32>
    %59 = arith.extf %3 : vector<8x128xbf16> to vector<8x128xf32>
    %60 = arith.addf %58, %59 : vector<8x128xf32>
    %cst_46 = arith.constant 5.000000e-01 : f32
    %61 = vector.broadcast %cst_46 : f32 to vector<8x128xf32>
    %62 = arith.mulf %60, %61 : vector<8x128xf32>
    %63 = arith.truncf %62 : vector<8x128xf32> to vector<8x128xbf16>
    %c0_47 = arith.constant 0 : index
    %c0_48 = arith.constant 0 : index
    %64 = vector.load %arg11[%c0_47, %c0_48] : memref<128x128xbf16, #tpu.memory_space<vmem>>, vector<128x128xbf16>
    %cst_49 = arith.constant dense<0.000000e+00> : vector<8x128xf32>
    %65 = tpu.matmul %63, %64, %cst_49 {dimension_numbers = #tpu.dot_dimension_numbers<[1], [0], [0], [1], [0, 0, 1, 1], [], []>} : vector<8x128xbf16>, vector<128x128xbf16>, vector<8x128xf32> -> vector<8x128xf32>
    %c0_50 = arith.constant 0 : index
    %c0_51 = arith.constant 0 : index
    %66 = vector.load %arg12[%c0_50, %c0_51] : memref<1x128xf32, #tpu.memory_space<vmem>>, vector<1x128xf32>
    %67 = vector.broadcast %66 : vector<1x128xf32> to vector<8x128xf32>
    %68 = arith.mulf %65, %67 : vector<8x128xf32>
    %c0_52 = arith.constant 0 : index
    %c0_53 = arith.constant 0 : index
    %69 = vector.load %arg13[%c0_52, %c0_53] : memref<1x128xf32, #tpu.memory_space<vmem>>, vector<1x128xf32>
    %70 = vector.broadcast %69 : vector<1x128xf32> to vector<8x128xf32>
    %71 = arith.addf %68, %70 : vector<8x128xf32>
    %72 = arith.addf %57, %71 : vector<8x128xf32>
    %cst_54 = arith.constant 0.000000e+00 : f32
    %73 = vector.broadcast %cst_54 : f32 to vector<8x128xf32>
    %74 = arith.maximumf %72, %73 : vector<8x128xf32>
    %75 = arith.truncf %74 : vector<8x128xf32> to vector<8x128xbf16>
    %c0_55 = arith.constant 0 : index
    %c0_56 = arith.constant 0 : index
    %c0_57 = arith.constant 0 : index
    %76 = vector.load %arg14[%c0_55, %c0_56, %c0_57] : memref<1x8x128xbf16, #tpu.memory_space<vmem>>, vector<1x8x128xbf16>
    %77 = vector.shape_cast %76 : vector<1x8x128xbf16> to vector<8x128xbf16>
    %78 = vector.shape_cast %75 : vector<8x128xbf16> to vector<1x8x128xbf16>
    tpu.vector_store %arg14[%c0_55, %c0_56, %c0_57], %78 {strides = array<i32>} : memref<1x8x128xbf16, #tpu.memory_space<vmem>>, vector<1x8x128xbf16>,
    return
  }
  func.func @transform_0(%arg0: i32) -> (i32, i32, i32) {
    %c0_i32 = arith.constant 0 : i32
    %c0_i32_0 = arith.constant 0 : i32
    %c0_i32_1 = arith.constant 0 : i32
    return %arg0, %c0_i32, %c0_i32_0 : i32, i32, i32
  }
  func.func @transform_1(%arg0: i32) -> (i32, i32) {
    %c0_i32 = arith.constant 0 : i32
    %c0_i32_0 = arith.constant 0 : i32
    %c0_i32_1 = arith.constant 0 : i32
    return %c0_i32, %c0_i32_0 : i32, i32
  }
  func.func @transform_2(%arg0: i32) -> (i32, i32) {
    %c0_i32 = arith.constant 0 : i32
    %c0_i32_0 = arith.constant 0 : i32
    %c0_i32_1 = arith.constant 0 : i32
    return %c0_i32, %c0_i32_0 : i32, i32
  }
  func.func @transform_3(%arg0: i32) -> (i32, i32) {
    %c0_i32 = arith.constant 0 : i32
    %c0_i32_0 = arith.constant 0 : i32
    %c0_i32_1 = arith.constant 0 : i32
    return %c0_i32, %c0_i32_0 : i32, i32
  }
  func.func @transform_4(%arg0: i32) -> (i32, i32, i32) {
    %c0_i32 = arith.constant 0 : i32
    %c0_i32_0 = arith.constant 0 : i32
    %c0_i32_1 = arith.constant 0 : i32
    %c0_i32_2 = arith.constant 0 : i32
    return %c0_i32, %c0_i32_0, %c0_i32_1 : i32, i32, i32
  }
  func.func @transform_5(%arg0: i32) -> (i32, i32) {
    %c0_i32 = arith.constant 0 : i32
    %c0_i32_0 = arith.constant 0 : i32
    %c0_i32_1 = arith.constant 0 : i32
    return %c0_i32, %c0_i32_0 : i32, i32
  }
  func.func @transform_6(%arg0: i32) -> (i32, i32) {
    %c0_i32 = arith.constant 0 : i32
    %c0_i32_0 = arith.constant 0 : i32
    %c0_i32_1 = arith.constant 0 : i32
    return %c0_i32, %c0_i32_0 : i32, i32
  }
  func.func @transform_7(%arg0: i32) -> (i32, i32) {
    %c0_i32 = arith.constant 0 : i32
    %c0_i32_0 = arith.constant 0 : i32
    %c0_i32_1 = arith.constant 0 : i32
    return %c0_i32, %c0_i32_0 : i32, i32
  }
  func.func @transform_8(%arg0: i32) -> (i32, i32) {
    %c0_i32 = arith.constant 0 : i32
    %c0_i32_0 = arith.constant 0 : i32
    %c0_i32_1 = arith.constant 0 : i32
    return %c0_i32, %c0_i32_0 : i32, i32
  }
  func.func @transform_9(%arg0: i32) -> (i32, i32) {
    %c0_i32 = arith.constant 0 : i32
    %c0_i32_0 = arith.constant 0 : i32
    %c0_i32_1 = arith.constant 0 : i32
    return %c0_i32, %c0_i32_0 : i32, i32
  }
  func.func @transform_10(%arg0: i32) -> (i32, i32) {
    %c0_i32 = arith.constant 0 : i32
    %c0_i32_0 = arith.constant 0 : i32
    %c0_i32_1 = arith.constant 0 : i32
    return %c0_i32, %c0_i32_0 : i32, i32
  }
  func.func @transform_11(%arg0: i32) -> (i32, i32) {
    %c0_i32 = arith.constant 0 : i32
    %c0_i32_0 = arith.constant 0 : i32
    %c0_i32_1 = arith.constant 0 : i32
    return %c0_i32, %c0_i32_0 : i32, i32
  }
  func.func @transform_12(%arg0: i32) -> (i32, i32) {
    %c0_i32 = arith.constant 0 : i32
    %c0_i32_0 = arith.constant 0 : i32
    %c0_i32_1 = arith.constant 0 : i32
    return %c0_i32, %c0_i32_0 : i32, i32
  }
  func.func @transform_13(%arg0: i32) -> (i32, i32, i32) {
    %c0_i32 = arith.constant 0 : i32
    %c0_i32_0 = arith.constant 0 : i32
    %c0_i32_1 = arith.constant 0 : i32
    return %arg0, %c0_i32, %c0_i32_0 : i32, i32, i32
  }
}

module attributes {stable_mosaic.version = 11 : i64} {
  func.func @_block_s2_kernel(%arg0: i32, %arg1: memref<1x4x256xbf16, #tpu.memory_space<vmem>>, %arg2: memref<128x128xbf16, #tpu.memory_space<vmem>>, %arg3: memref<1x128xf32, #tpu.memory_space<vmem>>, %arg4: memref<1x128xf32, #tpu.memory_space<vmem>>, %arg5: memref<3x128x128xbf16, #tpu.memory_space<vmem>>, %arg6: memref<1x128xf32, #tpu.memory_space<vmem>>, %arg7: memref<1x128xf32, #tpu.memory_space<vmem>>, %arg8: memref<128x128xbf16, #tpu.memory_space<vmem>>, %arg9: memref<1x128xf32, #tpu.memory_space<vmem>>, %arg10: memref<1x128xf32, #tpu.memory_space<vmem>>, %arg11: memref<1x4x128xbf16, #tpu.memory_space<vmem>>, %arg12: memref<28x128xbf16, #tpu.memory_space<vmem>>) attributes {dimension_semantics = [#tpu.dimension_semantics<parallel>], iteration_bounds = array<i64: 2>, scalar_prefetch = 0 : i64, scratch_operands = 1 : i64, tpu.core_type = #tpu.core_type<tc>, window_params = [{transform_indices = @transform_0, window_bounds = array<i64: 1, 4, 256>}, {pipeline_mode = #tpu.pipeline_mode<synchronous>, transform_indices = @transform_1, window_bounds = array<i64: 128, 128>}, {pipeline_mode = #tpu.pipeline_mode<synchronous>, transform_indices = @transform_2, window_bounds = array<i64: 1, 128>}, {pipeline_mode = #tpu.pipeline_mode<synchronous>, transform_indices = @transform_3, window_bounds = array<i64: 1, 128>}, {pipeline_mode = #tpu.pipeline_mode<synchronous>, transform_indices = @transform_4, window_bounds = array<i64: 3, 128, 128>}, {pipeline_mode = #tpu.pipeline_mode<synchronous>, transform_indices = @transform_5, window_bounds = array<i64: 1, 128>}, {pipeline_mode = #tpu.pipeline_mode<synchronous>, transform_indices = @transform_6, window_bounds = array<i64: 1, 128>}, {pipeline_mode = #tpu.pipeline_mode<synchronous>, transform_indices = @transform_7, window_bounds = array<i64: 128, 128>}, {pipeline_mode = #tpu.pipeline_mode<synchronous>, transform_indices = @transform_8, window_bounds = array<i64: 1, 128>}, {pipeline_mode = #tpu.pipeline_mode<synchronous>, transform_indices = @transform_9, window_bounds = array<i64: 1, 128>}, {transform_indices = @transform_10, window_bounds = array<i64: 1, 4, 128>}]} {
    %c0 = arith.constant 0 : index
    %c0_0 = arith.constant 0 : index
    %c0_1 = arith.constant 0 : index
    %0 = vector.load %arg1[%c0, %c0_0, %c0_1] : memref<1x4x256xbf16, #tpu.memory_space<vmem>>, vector<1x4x128xbf16>
    %1 = vector.shape_cast %0 : vector<1x4x128xbf16> to vector<4x128xbf16>
    %c0_2 = arith.constant 0 : index
    %c0_3 = arith.constant 0 : index
    %c128 = arith.constant 128 : index
    %2 = vector.load %arg1[%c0_2, %c0_3, %c128] : memref<1x4x256xbf16, #tpu.memory_space<vmem>>, vector<1x4x128xbf16>
    %3 = vector.shape_cast %2 : vector<1x4x128xbf16> to vector<4x128xbf16>
    %c0_4 = arith.constant 0 : index
    %c0_5 = arith.constant 0 : index
    %4 = vector.load %arg2[%c0_4, %c0_5] : memref<128x128xbf16, #tpu.memory_space<vmem>>, vector<128x128xbf16>
    %cst = arith.constant dense<0.000000e+00> : vector<4x128xf32>
    %5 = tpu.matmul %1, %4, %cst {dimension_numbers = #tpu.dot_dimension_numbers<[1], [0], [0], [1], [0, 0, 1, 1], [], []>} : vector<4x128xbf16>, vector<128x128xbf16>, vector<4x128xf32> -> vector<4x128xf32>
    %c0_6 = arith.constant 0 : index
    %c0_7 = arith.constant 0 : index
    %6 = vector.load %arg3[%c0_6, %c0_7] : memref<1x128xf32, #tpu.memory_space<vmem>>, vector<1x128xf32>
    %7 = vector.broadcast %6 : vector<1x128xf32> to vector<4x128xf32>
    %8 = arith.mulf %5, %7 : vector<4x128xf32>
    %c0_8 = arith.constant 0 : index
    %c0_9 = arith.constant 0 : index
    %9 = vector.load %arg4[%c0_8, %c0_9] : memref<1x128xf32, #tpu.memory_space<vmem>>, vector<1x128xf32>
    %10 = vector.broadcast %9 : vector<1x128xf32> to vector<4x128xf32>
    %11 = arith.addf %8, %10 : vector<4x128xf32>
    %cst_10 = arith.constant 0.000000e+00 : f32
    %12 = vector.broadcast %cst_10 : f32 to vector<4x128xf32>
    %13 = arith.maximumf %11, %12 : vector<4x128xf32>
    %14 = arith.truncf %13 : vector<4x128xf32> to vector<4x128xbf16>
    %c0_11 = arith.constant 0 : index
    %c0_12 = arith.constant 0 : index
    %15 = vector.load %arg2[%c0_11, %c0_12] : memref<128x128xbf16, #tpu.memory_space<vmem>>, vector<128x128xbf16>
    %cst_13 = arith.constant dense<0.000000e+00> : vector<4x128xf32>
    %16 = tpu.matmul %3, %15, %cst_13 {dimension_numbers = #tpu.dot_dimension_numbers<[1], [0], [0], [1], [0, 0, 1, 1], [], []>} : vector<4x128xbf16>, vector<128x128xbf16>, vector<4x128xf32> -> vector<4x128xf32>
    %c0_14 = arith.constant 0 : index
    %c0_15 = arith.constant 0 : index
    %17 = vector.load %arg3[%c0_14, %c0_15] : memref<1x128xf32, #tpu.memory_space<vmem>>, vector<1x128xf32>
    %18 = vector.broadcast %17 : vector<1x128xf32> to vector<4x128xf32>
    %19 = arith.mulf %16, %18 : vector<4x128xf32>
    %c0_16 = arith.constant 0 : index
    %c0_17 = arith.constant 0 : index
    %20 = vector.load %arg4[%c0_16, %c0_17] : memref<1x128xf32, #tpu.memory_space<vmem>>, vector<1x128xf32>
    %21 = vector.broadcast %20 : vector<1x128xf32> to vector<4x128xf32>
    %22 = arith.addf %19, %21 : vector<4x128xf32>
    %cst_18 = arith.constant 0.000000e+00 : f32
    %23 = vector.broadcast %cst_18 : f32 to vector<4x128xf32>
    %24 = arith.maximumf %22, %23 : vector<4x128xf32>
    %25 = arith.truncf %24 : vector<4x128xf32> to vector<4x128xbf16>
    %cst_19 = arith.constant 0.000000e+00 : bf16
    %26 = vector.broadcast %cst_19 : bf16 to vector<28x128xbf16>
    %c0_20 = arith.constant 0 : index
    %c0_21 = arith.constant 0 : index
    %27 = vector.load %arg12[%c0_20, %c0_21] : memref<28x128xbf16, #tpu.memory_space<vmem>>, vector<28x128xbf16>
    tpu.vector_store %arg12[%c0_20, %c0_21], %26 {strides = array<i32>} : memref<28x128xbf16, #tpu.memory_space<vmem>>, vector<28x128xbf16>,
    %c16 = arith.constant 16 : index
    %c0_22 = arith.constant 0 : index
    %28 = vector.load %arg12[%c16, %c0_22] : memref<28x128xbf16, #tpu.memory_space<vmem>>, vector<4x128xbf16>
    tpu.vector_store %arg12[%c16, %c0_22], %25 {strides = array<i32>} : memref<28x128xbf16, #tpu.memory_space<vmem>>, vector<4x128xbf16>,
    %c15 = arith.constant 15 : index
    %c0_23 = arith.constant 0 : index
    %29 = vector.load %arg12[%c15, %c0_23] : memref<28x128xbf16, #tpu.memory_space<vmem>>, vector<4x128xbf16>
    %c0_24 = arith.constant 0 : index
    %c0_25 = arith.constant 0 : index
    %c0_26 = arith.constant 0 : index
    %30 = vector.load %arg5[%c0_24, %c0_25, %c0_26] : memref<3x128x128xbf16, #tpu.memory_space<vmem>>, vector<1x128x128xbf16>
    %31 = vector.shape_cast %30 : vector<1x128x128xbf16> to vector<128x128xbf16>
    %cst_27 = arith.constant dense<0.000000e+00> : vector<4x128xf32>
    %32 = tpu.matmul %29, %31, %cst_27 {dimension_numbers = #tpu.dot_dimension_numbers<[1], [0], [0], [1], [0, 0, 1, 1], [], []>} : vector<4x128xbf16>, vector<128x128xbf16>, vector<4x128xf32> -> vector<4x128xf32>
    %c1 = arith.constant 1 : index
    %c0_28 = arith.constant 0 : index
    %c0_29 = arith.constant 0 : index
    %33 = vector.load %arg5[%c1, %c0_28, %c0_29] : memref<3x128x128xbf16, #tpu.memory_space<vmem>>, vector<1x128x128xbf16>
    %34 = vector.shape_cast %33 : vector<1x128x128xbf16> to vector<128x128xbf16>
    %cst_30 = arith.constant dense<0.000000e+00> : vector<4x128xf32>
    %35 = tpu.matmul %14, %34, %cst_30 {dimension_numbers = #tpu.dot_dimension_numbers<[1], [0], [0], [1], [0, 0, 1, 1], [], []>} : vector<4x128xbf16>, vector<128x128xbf16>, vector<4x128xf32> -> vector<4x128xf32>
    %36 = arith.addf %32, %35 : vector<4x128xf32>
    %c2 = arith.constant 2 : index
    %c0_31 = arith.constant 0 : index
    %c0_32 = arith.constant 0 : index
    %37 = vector.load %arg5[%c2, %c0_31, %c0_32] : memref<3x128x128xbf16, #tpu.memory_space<vmem>>, vector<1x128x128xbf16>
    %38 = vector.shape_cast %37 : vector<1x128x128xbf16> to vector<128x128xbf16>
    %cst_33 = arith.constant dense<0.000000e+00> : vector<4x128xf32>
    %39 = tpu.matmul %25, %38, %cst_33 {dimension_numbers = #tpu.dot_dimension_numbers<[1], [0], [0], [1], [0, 0, 1, 1], [], []>} : vector<4x128xbf16>, vector<128x128xbf16>, vector<4x128xf32> -> vector<4x128xf32>
    %40 = arith.addf %36, %39 : vector<4x128xf32>
    %c0_34 = arith.constant 0 : index
    %c0_35 = arith.constant 0 : index
    %41 = vector.load %arg6[%c0_34, %c0_35] : memref<1x128xf32, #tpu.memory_space<vmem>>, vector<1x128xf32>
    %42 = vector.broadcast %41 : vector<1x128xf32> to vector<4x128xf32>
    %43 = arith.mulf %40, %42 : vector<4x128xf32>
    %c0_36 = arith.constant 0 : index
    %c0_37 = arith.constant 0 : index
    %44 = vector.load %arg7[%c0_36, %c0_37] : memref<1x128xf32, #tpu.memory_space<vmem>>, vector<1x128xf32>
    %45 = vector.broadcast %44 : vector<1x128xf32> to vector<4x128xf32>
    %46 = arith.addf %43, %45 : vector<4x128xf32>
    %cst_38 = arith.constant 0.000000e+00 : f32
    %47 = vector.broadcast %cst_38 : f32 to vector<4x128xf32>
    %48 = arith.maximumf %46, %47 : vector<4x128xf32>
    %49 = arith.truncf %48 : vector<4x128xf32> to vector<4x128xbf16>
    %c0_39 = arith.constant 0 : index
    %c0_40 = arith.constant 0 : index
    %50 = vector.load %arg8[%c0_39, %c0_40] : memref<128x128xbf16, #tpu.memory_space<vmem>>, vector<128x128xbf16>
    %cst_41 = arith.constant dense<0.000000e+00> : vector<4x128xf32>
    %51 = tpu.matmul %49, %50, %cst_41 {dimension_numbers = #tpu.dot_dimension_numbers<[1], [0], [0], [1], [0, 0, 1, 1], [], []>} : vector<4x128xbf16>, vector<128x128xbf16>, vector<4x128xf32> -> vector<4x128xf32>
    %c0_42 = arith.constant 0 : index
    %c0_43 = arith.constant 0 : index
    %52 = vector.load %arg9[%c0_42, %c0_43] : memref<1x128xf32, #tpu.memory_space<vmem>>, vector<1x128xf32>
    %53 = vector.broadcast %52 : vector<1x128xf32> to vector<4x128xf32>
    %54 = arith.mulf %51, %53 : vector<4x128xf32>
    %c0_44 = arith.constant 0 : index
    %c0_45 = arith.constant 0 : index
    %55 = vector.load %arg10[%c0_44, %c0_45] : memref<1x128xf32, #tpu.memory_space<vmem>>, vector<1x128xf32>
    %56 = vector.broadcast %55 : vector<1x128xf32> to vector<4x128xf32>
    %57 = arith.addf %54, %56 : vector<4x128xf32>
    %58 = arith.extf %1 : vector<4x128xbf16> to vector<4x128xf32>
    %59 = arith.extf %3 : vector<4x128xbf16> to vector<4x128xf32>
    %60 = arith.addf %58, %59 : vector<4x128xf32>
    %cst_46 = arith.constant 5.000000e-01 : f32
    %61 = vector.broadcast %cst_46 : f32 to vector<4x128xf32>
    %62 = arith.mulf %60, %61 : vector<4x128xf32>
    %63 = arith.addf %57, %62 : vector<4x128xf32>
    %cst_47 = arith.constant 0.000000e+00 : f32
    %64 = vector.broadcast %cst_47 : f32 to vector<4x128xf32>
    %65 = arith.maximumf %63, %64 : vector<4x128xf32>
    %66 = arith.truncf %65 : vector<4x128xf32> to vector<4x128xbf16>
    %c0_48 = arith.constant 0 : index
    %c0_49 = arith.constant 0 : index
    %c0_50 = arith.constant 0 : index
    %67 = vector.load %arg11[%c0_48, %c0_49, %c0_50] : memref<1x4x128xbf16, #tpu.memory_space<vmem>>, vector<1x4x128xbf16>
    %68 = vector.shape_cast %67 : vector<1x4x128xbf16> to vector<4x128xbf16>
    %69 = vector.shape_cast %66 : vector<4x128xbf16> to vector<1x4x128xbf16>
    tpu.vector_store %arg11[%c0_48, %c0_49, %c0_50], %69 {strides = array<i32>} : memref<1x4x128xbf16, #tpu.memory_space<vmem>>, vector<1x4x128xbf16>,
    return
  }
  func.func @transform_0(%arg0: i32) -> (i32, i32, i32) {
    %c0_i32 = arith.constant 0 : i32
    %c0_i32_0 = arith.constant 0 : i32
    %c0_i32_1 = arith.constant 0 : i32
    return %arg0, %c0_i32, %c0_i32_0 : i32, i32, i32
  }
  func.func @transform_1(%arg0: i32) -> (i32, i32) {
    %c0_i32 = arith.constant 0 : i32
    %c0_i32_0 = arith.constant 0 : i32
    %c0_i32_1 = arith.constant 0 : i32
    return %c0_i32, %c0_i32_0 : i32, i32
  }
  func.func @transform_2(%arg0: i32) -> (i32, i32) {
    %c0_i32 = arith.constant 0 : i32
    %c0_i32_0 = arith.constant 0 : i32
    %c0_i32_1 = arith.constant 0 : i32
    return %c0_i32, %c0_i32_0 : i32, i32
  }
  func.func @transform_3(%arg0: i32) -> (i32, i32) {
    %c0_i32 = arith.constant 0 : i32
    %c0_i32_0 = arith.constant 0 : i32
    %c0_i32_1 = arith.constant 0 : i32
    return %c0_i32, %c0_i32_0 : i32, i32
  }
  func.func @transform_4(%arg0: i32) -> (i32, i32, i32) {
    %c0_i32 = arith.constant 0 : i32
    %c0_i32_0 = arith.constant 0 : i32
    %c0_i32_1 = arith.constant 0 : i32
    %c0_i32_2 = arith.constant 0 : i32
    return %c0_i32, %c0_i32_0, %c0_i32_1 : i32, i32, i32
  }
  func.func @transform_5(%arg0: i32) -> (i32, i32) {
    %c0_i32 = arith.constant 0 : i32
    %c0_i32_0 = arith.constant 0 : i32
    %c0_i32_1 = arith.constant 0 : i32
    return %c0_i32, %c0_i32_0 : i32, i32
  }
  func.func @transform_6(%arg0: i32) -> (i32, i32) {
    %c0_i32 = arith.constant 0 : i32
    %c0_i32_0 = arith.constant 0 : i32
    %c0_i32_1 = arith.constant 0 : i32
    return %c0_i32, %c0_i32_0 : i32, i32
  }
  func.func @transform_7(%arg0: i32) -> (i32, i32) {
    %c0_i32 = arith.constant 0 : i32
    %c0_i32_0 = arith.constant 0 : i32
    %c0_i32_1 = arith.constant 0 : i32
    return %c0_i32, %c0_i32_0 : i32, i32
  }
  func.func @transform_8(%arg0: i32) -> (i32, i32) {
    %c0_i32 = arith.constant 0 : i32
    %c0_i32_0 = arith.constant 0 : i32
    %c0_i32_1 = arith.constant 0 : i32
    return %c0_i32, %c0_i32_0 : i32, i32
  }
  func.func @transform_9(%arg0: i32) -> (i32, i32) {
    %c0_i32 = arith.constant 0 : i32
    %c0_i32_0 = arith.constant 0 : i32
    %c0_i32_1 = arith.constant 0 : i32
    return %c0_i32, %c0_i32_0 : i32, i32
  }
  func.func @transform_10(%arg0: i32) -> (i32, i32, i32) {
    %c0_i32 = arith.constant 0 : i32
    %c0_i32_0 = arith.constant 0 : i32
    %c0_i32_1 = arith.constant 0 : i32
    return %arg0, %c0_i32, %c0_i32_0 : i32, i32, i32
  }
}

module attributes {stable_mosaic.version = 11 : i64} {
  func.func @_pool_cls_kernel(%arg0: i32, %arg1: memref<1x4x128xbf16, #tpu.memory_space<vmem>>, %arg2: memref<2x128x128xbf16, #tpu.memory_space<vmem>>, %arg3: memref<1x128xf32, #tpu.memory_space<vmem>>, %arg4: memref<1x1x128xf32, #tpu.memory_space<vmem>>) attributes {dimension_semantics = [#tpu.dimension_semantics<parallel>], iteration_bounds = array<i64: 2>, scalar_prefetch = 0 : i64, scratch_operands = 0 : i64, tpu.core_type = #tpu.core_type<tc>, window_params = [{transform_indices = @transform_0, window_bounds = array<i64: 1, 4, 128>}, {pipeline_mode = #tpu.pipeline_mode<synchronous>, transform_indices = @transform_1, window_bounds = array<i64: 2, 128, 128>}, {pipeline_mode = #tpu.pipeline_mode<synchronous>, transform_indices = @transform_2, window_bounds = array<i64: 1, 128>}, {transform_indices = @transform_3, window_bounds = array<i64: 1, 1, 128>}]} {
    %c0 = arith.constant 0 : index
    %c0_0 = arith.constant 0 : index
    %c0_1 = arith.constant 0 : index
    %0 = vector.load %arg1[%c0, %c0_0, %c0_1] : memref<1x4x128xbf16, #tpu.memory_space<vmem>>, vector<1x4x128xbf16>
    %1 = vector.shape_cast %0 : vector<1x4x128xbf16> to vector<4x128xbf16>
    %cst = arith.constant dense<0xFF80> : vector<128xbf16>
    %2 = vector.multi_reduction <maximumf>, %1, %cst [0] : vector<4x128xbf16> to vector<128xbf16>
    %3 = vector.shape_cast %2 : vector<128xbf16> to vector<1x128xbf16>
    %4 = arith.extf %1 : vector<4x128xbf16> to vector<4x128xf32>
    %cst_2 = arith.constant dense<0.000000e+00> : vector<128xf32>
    %5 = vector.multi_reduction <add>, %4, %cst_2 [0] : vector<4x128xf32> to vector<128xf32>
    %6 = vector.shape_cast %5 : vector<128xf32> to vector<1x128xf32>
    %cst_3 = arith.constant 2.500000e-01 : f32
    %7 = vector.broadcast %cst_3 : f32 to vector<1x128xf32>
    %8 = arith.mulf %6, %7 : vector<1x128xf32>
    %9 = arith.truncf %8 : vector<1x128xf32> to vector<1x128xbf16>
    %c0_4 = arith.constant 0 : index
    %c0_5 = arith.constant 0 : index
    %c0_6 = arith.constant 0 : index
    %10 = vector.load %arg2[%c0_4, %c0_5, %c0_6] : memref<2x128x128xbf16, #tpu.memory_space<vmem>>, vector<1x128x128xbf16>
    %11 = vector.shape_cast %10 : vector<1x128x128xbf16> to vector<128x128xbf16>
    %cst_7 = arith.constant dense<0.000000e+00> : vector<1x128xf32>
    %12 = tpu.matmul %3, %11, %cst_7 {dimension_numbers = #tpu.dot_dimension_numbers<[1], [0], [0], [1], [0, 0, 1, 1], [], []>} : vector<1x128xbf16>, vector<128x128xbf16>, vector<1x128xf32> -> vector<1x128xf32>
    %c1 = arith.constant 1 : index
    %c0_8 = arith.constant 0 : index
    %c0_9 = arith.constant 0 : index
    %13 = vector.load %arg2[%c1, %c0_8, %c0_9] : memref<2x128x128xbf16, #tpu.memory_space<vmem>>, vector<1x128x128xbf16>
    %14 = vector.shape_cast %13 : vector<1x128x128xbf16> to vector<128x128xbf16>
    %cst_10 = arith.constant dense<0.000000e+00> : vector<1x128xf32>
    %15 = tpu.matmul %9, %14, %cst_10 {dimension_numbers = #tpu.dot_dimension_numbers<[1], [0], [0], [1], [0, 0, 1, 1], [], []>} : vector<1x128xbf16>, vector<128x128xbf16>, vector<1x128xf32> -> vector<1x128xf32>
    %16 = arith.addf %12, %15 : vector<1x128xf32>
    %c0_11 = arith.constant 0 : index
    %c0_12 = arith.constant 0 : index
    %17 = vector.load %arg3[%c0_11, %c0_12] : memref<1x128xf32, #tpu.memory_space<vmem>>, vector<1x128xf32>
    %18 = arith.addf %16, %17 : vector<1x128xf32>
    %c0_13 = arith.constant 0 : index
    %c0_14 = arith.constant 0 : index
    %c0_15 = arith.constant 0 : index
    %19 = vector.load %arg4[%c0_13, %c0_14, %c0_15] : memref<1x1x128xf32, #tpu.memory_space<vmem>>, vector<1x1x128xf32>
    %20 = vector.shape_cast %19 : vector<1x1x128xf32> to vector<1x128xf32>
    %21 = vector.shape_cast %18 : vector<1x128xf32> to vector<1x1x128xf32>
    tpu.vector_store %arg4[%c0_13, %c0_14, %c0_15], %21 {strides = array<i32>} : memref<1x1x128xf32, #tpu.memory_space<vmem>>, vector<1x1x128xf32>,
    return
  }
  func.func @transform_0(%arg0: i32) -> (i32, i32, i32) {
    %c0_i32 = arith.constant 0 : i32
    %c0_i32_0 = arith.constant 0 : i32
    %c0_i32_1 = arith.constant 0 : i32
    return %arg0, %c0_i32, %c0_i32_0 : i32, i32, i32
  }
  func.func @transform_1(%arg0: i32) -> (i32, i32, i32) {
    %c0_i32 = arith.constant 0 : i32
    %c0_i32_0 = arith.constant 0 : i32
    %c0_i32_1 = arith.constant 0 : i32
    %c0_i32_2 = arith.constant 0 : i32
    return %c0_i32, %c0_i32_0, %c0_i32_1 : i32, i32, i32
  }
  func.func @transform_2(%arg0: i32) -> (i32, i32) {
    %c0_i32 = arith.constant 0 : i32
    %c0_i32_0 = arith.constant 0 : i32
    %c0_i32_1 = arith.constant 0 : i32
    return %c0_i32, %c0_i32_0 : i32, i32
  }
  func.func @transform_3(%arg0: i32) -> (i32, i32, i32) {
    %c0_i32 = arith.constant 0 : i32
    %c0_i32_0 = arith.constant 0 : i32
    %c0_i32_1 = arith.constant 0 : i32
    return %arg0, %c0_i32, %c0_i32_0 : i32, i32, i32
  }
}

</mosaic_0001>

<llo_original>
// kernel: xrespool_forward.8
$region0: #{xrespool_forward.8}
  #allocation0 [shape = 'u32[]', space=smem, size = 0x4, offset = 0x4, fixed_abs, tag = 'smem constant byte address 0x4 - core index']
  #allocation1 [shape = 'u32[144,128]{1,0:T(1,128)}', space=vmem, size = 0x12000, scoped, tag = 'internal scratch']
  #allocation2 [shape = 'bf16[56,128]{1,0:T(8,128)(2,1)}', space=vmem, size = 0x3800, scoped, tag = 'scratch operand']
  %s0 = inlined_call_operand.vmem [shape: bf16[2,32,256], index: 0, kind: input, shape index: {}]
  %s1 = inlined_call_operand.vmem [shape: bf16[2,32,128], index: 1, kind: output, shape index: {}]
  %s2 = sld [smem:[#allocation0]]
  $region37: #{xrespool_forward.8} parent=0
    _
  %s4 = ssub.s32 1, %s2
  %s5 = scalar_select 0, %s4, %s2
  loop: start=0, step=1, limit=4
  $region2: #{xrespool_forward.8} parent=0 // loop_pre_header
    _
  $region3: #{xrespool_forward.8} parent=0 // loop_header
    %s7 = sphi 0, %s11
    %p8 = scmp.ge.s32.totalorder %s7, 4
    %s17 = sphi 0, %s19
    %s20 = sphi 0, %s17
    %s21 = sphi 0, %s20
    %s37 = sphi 0, %s21
    %s43 = sphi 0, %s45
    %s46 = sphi 0, %s43
    %s47 = sphi 0, %s46
    %s63 = sphi 0, %s47
  $region4: #{xrespool_forward.8} parent=0 // loop_header_branch
    %10 = sbr.rel (%p8) target = $region8
  $region5: #{xrespool_forward.8} parent=0 // loop_body
    %s12 = ssub.s32 %s7, 1
    %s13 = ssub.s32 %s7, 2
    %s14 = sadd.s32 %s7, 1
    %s15 = ssub.s32 %s7, %s14
    %p16 = scmp.eq.s32.totalorder %s15, 0
    %s18 = sadd.s32 %s17, 1
    %s19 = scalar_select %p16, %s17, %s18
    %p22 = pneg %p16
    %p23 = scmp.eq.s32.totalorder %s7, 1
    %p24 = por %p22, %p23
    %p25 = scmp.ne.s32.totalorder %s17, %s20
    %p26 = scmp.eq.s32.totalorder %s7, 0
    %p27 = por %p25, %p26
    %p28 = scmp.ne.s32.totalorder %s17, %s20
    %p29 = scmp.eq.s32.totalorder %s12, 1
    %p30 = por %p28, %p29
    %p31 = scmp.ne.s32.totalorder %s20, %s21
    %p32 = scmp.eq.s32.totalorder %s12, 0
    %p33 = por %p31, %p32
    %p34 = scmp.ne.s32.totalorder %s20, %s21
    %p35 = scmp.eq.s32.totalorder %s13, 1
    %p36 = por %p34, %p35
    %p38 = scmp.ne.s32.totalorder %s21, %s37
    %p39 = scmp.eq.s32.totalorder %s13, 0
    %p40 = por %p38, %p39
    %s41 = ssub.s32 %s7, %s14
    %p42 = scmp.eq.s32.totalorder %s41, 0
    %s44 = sadd.s32 %s43, 1
    %s45 = scalar_select %p42, %s43, %s44
    %p48 = pneg %p42
    %p49 = scmp.eq.s32.totalorder %s7, 1
    %p50 = por %p48, %p49
    %p51 = scmp.ne.s32.totalorder %s43, %s46
    %p52 = scmp.eq.s32.totalorder %s7, 0
    %p53 = por %p51, %p52
    %p54 = scmp.ne.s32.totalorder %s43, %s46
    %p55 = scmp.eq.s32.totalorder %s12, 1
    %p56 = por %p54, %p55
    %p57 = scmp.ne.s32.totalorder %s46, %s47
    %p58 = scmp.eq.s32.totalorder %s12, 0
    %p59 = por %p57, %p58
    %p60 = scmp.ne.s32.totalorder %s46, %s47
    %p61 = scmp.eq.s32.totalorder %s13, 1
    %p62 = por %p60, %p61
    %p64 = scmp.ne.s32.totalorder %s47, %s63
    %p65 = scmp.eq.s32.totalorder %s13, 0
    %p66 = por %p64, %p65
    %p67 = scmp.le.s32.totalorder 1, %s7
    %p68 = scmp.lt.s32.totalorder %s7, 3
    %p69 = pnand %p67, %p68
    %p70 = pneg %p69
    // Predicated region
    $region9: #{xrespool_forward.8} parent=5 // pred_check
      _
    $region10: #{xrespool_forward.8} parent=5 // pred_check_branch
      %72 = sbr.rel (%p69) target = $region12
    $region11: #{xrespool_forward.8} parent=5 // pred_region
      %s73 = ssub.s32 %s7, 1
    $region12: #{xrespool_forward.8} parent=5 // pred_fallthru
      _
    %p74 = scmp.lt.s32.totalorder %s7, 2
    // Predicated region
    $region13: #{xrespool_forward.8} parent=5 // pred_check
      %p75 = pneg %p74
    $region14: #{xrespool_forward.8} parent=5 // pred_check_branch
      %77 = sbr.rel (%p75) target = $region16
    $region15: #{xrespool_forward.8} parent=5 // pred_region
      // Predicated region
      $region17: #{xrespool_forward.8} parent=15 // pred_check
        %p78 = pneg %p27
      $region18: #{xrespool_forward.8} parent=15 // pred_check_branch
        %80 = sbr.rel (%p78) target = $region20
      $region19: #{xrespool_forward.8} parent=15 // pred_region
        %p81 = scmp.lt.s32.totalorder %s7, 1
        %s82 = scalar_select %p81, %s7, 1
        %s83 = smul.addr %s82, 8
        %s84 = smul.addr %s83, 4
        %s85 = scalar_lea.vmem %s0, %s84
      $region20: #{xrespool_forward.8} parent=15 // pred_fallthru
        _
    $region16: #{xrespool_forward.8} parent=5 // pred_fallthru
      _
    %p86 = scmp.le.s32.totalorder 1, %s7
    %p87 = scmp.lt.s32.totalorder %s7, 3
    %p88 = pnand %p86, %p87
    %p89 = pneg %p88
    // Predicated region
    $region21: #{xrespool_forward.8} parent=5 // pred_check
      _
    $region22: #{xrespool_forward.8} parent=5 // pred_check_branch
      %91 = sbr.rel (%p88) target = $region24
    $region23: #{xrespool_forward.8} parent=5 // pred_region
      %s92 = ssub.s32 %s7, 1
      %p93 = scmp.lt.s32.totalorder %s12, 1
      %s94 = scalar_select %p93, %s12, 1
      %s95 = smul.addr %s94, 8
      %s96 = smul.addr %s95, 4
      %s97 = scalar_lea.vmem %s0, %s96
      %p98 = pneg %p33
      %p99 = pneg %p30
      %p100 = pneg %p59
      %p101 = pneg %p56
      %p102 = scmp.lt.s32.totalorder %s12, 1
      %s103 = scalar_select %p102, %s12, 1
      %s104 = smul.addr %s103, 4
      %s105 = smul.addr %s104, 4
      %s106 = scalar_lea.vmem %s1, %s105
      %p107 = scmp.lt.s32.totalorder %s12, 1
      %s108 = scalar_select %p107, %s12, 1
      %s109 = smul.addr %s108, 8
      %s110 = smul.addr %s109, 4
      %s111 = scalar_lea.vmem %s0, %s110
      %p112 = scmp.lt.s32.totalorder %s12, 1
      %s113 = scalar_select %p112, %s12, 1
      %s114 = smul.addr %s113, 4
      %s115 = smul.addr %s114, 4
      %s116 = scalar_lea.vmem %s1, %s115
      %v118 = vld [vmem:[%s111] sm:$0xf]
      %v119 = vld [vmem:[%s111 + $0x8] sm:$0xf]
      %v120 = vld [vmem:[%s111 + $0x10] sm:$0xf]
      %v121 = vld [vmem:[%s111 + $0x18] sm:$0xf]
      %v122 = vld [vmem:[%s111 + $0x4] sm:$0xf]
      %v123 = vld [vmem:[%s111 + $0xc] sm:$0xf]
      %v124 = vld [vmem:[%s111 + $0x14] sm:$0xf]
      %v125 = vld [vmem:[%s111 + $0x1c] sm:$0xf]
      %126 = vst [vmem:[#allocation2] sm:$0xf] 0
      %127 = vst [vmem:[#allocation2 + $0x4] sm:$0xf] 0
      %128 = vst [vmem:[#allocation2 + $0x8] sm:$0xf] 0
      %129 = vst [vmem:[#allocation2 + $0xc] sm:$0xf] 0
      %130 = vst [vmem:[#allocation2 + $0x10] sm:$0xf] 0
      %131 = vst [vmem:[#allocation2 + $0x14] sm:$0xf] 0
      %132 = vst [vmem:[#allocation2 + $0x18] sm:$0xf] 0
      %133 = vst [vmem:[#allocation2 + $0x8] sm:$0xf] %v122
      %134 = vst [vmem:[#allocation2 + $0xc] sm:$0xf] %v123
      %135 = vst [vmem:[#allocation2 + $0x10] sm:$0xf] %v124
      %136 = vst [vmem:[#allocation2 + $0x14] sm:$0xf] %v125
      %v137 = vld [vmem:[#allocation2 + $0x4] sm:$0x8]
      %v138 = vld [vmem:[#allocation2 + $0x8] sm:$0xf]
      %v139 = vld [vmem:[#allocation2 + $0xc] sm:$0xf]
      %v140 = vld [vmem:[#allocation2 + $0x10] sm:$0xf]
      %v141 = vld [vmem:[#allocation2 + $0x14] sm:$0xf]
      %vm142 = vsmask.f32 3328
      %vm143 = vsmask.f32 7440
      %vm144 = vmor %vm142, %vm143
      %v146 = vshll.u32 %v118, 16
      %v148 = vrot.slane %v146, 5
      %v149 = vshrl.u32 %v118, 16
      %v151 = vrot.slane %v149, 4
      %v152 = vor.u32 %v151, %v148
      %v153 = vrot.slane %v152, 4
      %v155 = vshll.u32 %v119, 16
      %v157 = vrot.slane %v155, 5
      %v158 = vsel %vm144, %v153, %v157
      %v159 = vshrl.u32 %v119, 16
      %v161 = vrot.slane %v159, 4
      %v162 = vor.u32 %v161, %v157
      %v163 = vrot.slane %v162, 4
      %v165 = vshll.u32 %v120, 16
      %v167 = vrot.slane %v165, 5
      %v168 = vsel %vm144, %v163, %v167
      %v169 = vshrl.u32 %v120, 16
      %v171 = vrot.slane %v169, 4
      %v172 = vor.u32 %v171, %v167
      %v173 = vrot.slane %v172, 4
      %v175 = vshll.u32 %v121, 16
      %v177 = vrot.slane %v175, 5
      %v178 = vsel %vm144, %v173, %v177
      %v179 = vshrl.u32 %v121, 16
      %v181 = vrot.slane %v179, 4
      %v182 = vor.u32 %v181, %v177
      %v183 = vrot.slane %v182, 4
      %v189 = vmax.bf16 %v137, %v148
      %v190 = vmax.bf16 %v138, %v158
      %v191 = vmax.bf16 %v139, %v168
      %v192 = vmax.bf16 %v140, %v178
      %v193 = vmax.bf16 %v141, %v183
      %v195 = vshll.u32 %v122, 16
      %v197 = vrot.slane %v195, 5
      %v198 = vshrl.u32 %v122, 16
      %v200 = vrot.slane %v198, 4
      %v201 = vor.u32 %v200, %v197
      %v202 = vrot.slane %v201, 4
      %v204 = vshll.u32 %v123, 16
      %v206 = vrot.slane %v204, 5
      %v207 = vsel %vm144, %v202, %v206
      %v208 = vshrl.u32 %v123, 16
      %v210 = vrot.slane %v208, 4
      %v211 = vor.u32 %v210, %v206
      %v212 = vrot.slane %v211, 4
      %v214 = vshll.u32 %v124, 16
      %v216 = vrot.slane %v214, 5
      %v217 = vsel %vm144, %v212, %v216
      %v218 = vshrl.u32 %v124, 16
      %v220 = vrot.slane %v218, 4
      %v221 = vor.u32 %v220, %v216
      %v222 = vrot.slane %v221, 4
      %v224 = vshll.u32 %v125, 16
      %v226 = vrot.slane %v224, 5
      %v227 = vsel %vm144, %v222, %v226
      %v228 = vshrl.u32 %v125, 16
      %v230 = vrot.slane %v228, 4
      %v231 = vor.u32 %v230, %v226
      %v232 = vrot.slane %v231, 4
      %v238 = vmax.bf16 %v189, %v197
      %v239 = vmax.bf16 %v190, %v207
      %v240 = vmax.bf16 %v191, %v217
      %v241 = vmax.bf16 %v192, %v227
      %v242 = vmax.bf16 %v193, %v232
      %vm243 = vsmask.f32 256
      %vm244 = vsmask.f32 4368
      %vm245 = vmor %vm243, %vm244
      %v247 = vshrl.u32 %v238, 16
      %v249 = vrot.slane %v247, 7
      %v250 = vrot.slane %v249, 4
      %v252 = vshrl.u32 %v239, 16
      %v254 = vrot.slane %v252, 7
      %v255 = vshll.u32 %v239, 16
      %v257 = vor.u32 %v254, %v255
      %v258 = vsel %vm245, %v250, %v257
      %v259 = vrot.slane %v254, 4
      %v261 = vshrl.u32 %v240, 16
      %v263 = vrot.slane %v261, 7
      %v264 = vshll.u32 %v240, 16
      %v266 = vor.u32 %v263, %v264
      %v267 = vsel %vm245, %v259, %v266
      %v268 = vrot.slane %v263, 4
      %v270 = vshrl.u32 %v241, 16
      %v272 = vrot.slane %v270, 7
      %v273 = vshll.u32 %v241, 16
      %v275 = vor.u32 %v272, %v273
      %v276 = vsel %vm245, %v268, %v275
      %v277 = vrot.slane %v272, 4
      %v279 = vshrl.u32 %v242, 16
      %v281 = vrot.slane %v279, 7
      %v282 = vshll.u32 %v242, 16
      %v284 = vor.u32 %v281, %v282
      %v285 = vsel %vm245, %v277, %v284
      %290 = vst [vmem:[%s116] sm:$0xf] %v258
      %291 = vst [vmem:[%s116 + $0x4] sm:$0xf] %v267
      %292 = vst [vmem:[%s116 + $0x8] sm:$0xf] %v276
      %293 = vst [vmem:[%s116 + $0xc] sm:$0xf] %v285
      %p294 = scmp.lt.s32.totalorder %s12, 1
      %s295 = scalar_select %p294, %s12, 1
      %s296 = smul.addr %s295, 4
      %s297 = smul.addr %s296, 4
      %s298 = scalar_lea.vmem %s1, %s297
      // Predicated region
      $region25: #{xrespool_forward.8} parent=23 // pred_check
        %p299 = pneg %p56
      $region26: #{xrespool_forward.8} parent=23 // pred_check_branch
        %301 = sbr.rel (%p299) target = $region28
      $region27: #{xrespool_forward.8} parent=23 // pred_region
        _
      $region28: #{xrespool_forward.8} parent=23 // pred_fallthru
        _
    $region24: #{xrespool_forward.8} parent=5 // pred_fallthru
      _
    %p302 = scmp.le.s32.totalorder 2, %s7
    // Predicated region
    $region29: #{xrespool_forward.8} parent=5 // pred_check
      %p303 = pneg %p302
    $region30: #{xrespool_forward.8} parent=5 // pred_check_branch
      %305 = sbr.rel (%p303) target = $region32
    $region31: #{xrespool_forward.8} parent=5 // pred_region
      %s306 = ssub.s32 %s7, 2
      // Predicated region
      $region33: #{xrespool_forward.8} parent=31 // pred_check
        %p307 = pneg %p62
      $region34: #{xrespool_forward.8} parent=31 // pred_check_branch
        %309 = sbr.rel (%p307) target = $region36
      $region35: #{xrespool_forward.8} parent=31 // pred_region
        %p310 = scmp.lt.s32.totalorder %s13, 1
        %s311 = scalar_select %p310, %s13, 1
        %s312 = smul.addr %s311, 4
        %s313 = smul.addr %s312, 4
        %s314 = scalar_lea.vmem %s1, %s313
      $region36: #{xrespool_forward.8} parent=31 // pred_fallthru
        _
    $region32: #{xrespool_forward.8} parent=5 // pred_fallthru
      _
  $region6: #{xrespool_forward.8} parent=0 // loop_footer
    %s11 = sadd.s32 1, %s7
  $region7: #{xrespool_forward.8} parent=0 // loop_footer_branch
    %6 = sbr.rel target = $region3
  $region8: #{xrespool_forward.8} parent=0 // loop_exit
    _

// kernel: xrespool_forward.10
$region0: #{xrespool_forward.10}
  #allocation0 [shape = 'u32[]', space=smem, size = 0x4, offset = 0x4, fixed_abs, tag = 'smem constant byte address 0x4 - core index']
  #allocation1 [shape = 'u32[144,128]{1,0:T(1,128)}', space=vmem, size = 0x12000, scoped, tag = 'internal scratch']
  #allocation2 [shape = 'bf16[40,128]{1,0:T(8,128)(2,1)}', space=vmem, size = 0x2800, scoped, tag = 'scratch operand']
  %s0 = inlined_call_operand.vmem [shape: bf16[2,16,256], index: 0, kind: input, shape index: {}]
  %s1 = inlined_call_operand.vmem [shape: bf16[128,128], index: 1, kind: input, shape index: {}]
  %s2 = inlined_call_operand.vmem [shape: f32[1,128], index: 2, kind: input, shape index: {}]
  %s3 = inlined_call_operand.vmem [shape: f32[1,128], index: 3, kind: input, shape index: {}]
  %s4 = inlined_call_operand.vmem [shape: bf16[3,128,128], index: 4, kind: input, shape index: {}]
  %s5 = inlined_call_operand.vmem [shape: f32[1,128], index: 5, kind: input, shape index: {}]
  %s6 = inlined_call_operand.vmem [shape: f32[1,128], index: 6, kind: input, shape index: {}]
  %s7 = inlined_call_operand.vmem [shape: bf16[128,128], index: 7, kind: input, shape index: {}]
  %s8 = inlined_call_operand.vmem [shape: f32[1,128], index: 8, kind: input, shape index: {}]
  %s9 = inlined_call_operand.vmem [shape: f32[1,128], index: 9, kind: input, shape index: {}]
  %s10 = inlined_call_operand.vmem [shape: bf16[2,16,128], index: 10, kind: output, shape index: {}]
  %s11 = sld [smem:[#allocation0]]
  $region73: #{xrespool_forward.10} parent=0
    _
  %s13 = ssub.s32 1, %s11
  %s14 = scalar_select 0, %s13, %s11
  loop: start=0, step=1, limit=4
  $region2: #{xrespool_forward.10} parent=0 // loop_pre_header
    _
  $region3: #{xrespool_forward.10} parent=0 // loop_header
    %s16 = sphi 0, %s20
    %p17 = scmp.ge.s32.totalorder %s16, 4
    %s26 = sphi 0, %s28
    %s29 = sphi 0, %s26
    %s30 = sphi 0, %s29
    %s46 = sphi 0, %s30
    %s50 = sphi 0, %s50
    %s52 = sphi 0, %s50
    %s53 = sphi 0, %s52
    %s67 = sphi 0, %s53
    %s71 = sphi 0, %s71
    %s73 = sphi 0, %s71
    %s74 = sphi 0, %s73
    %s88 = sphi 0, %s74
    %s92 = sphi 0, %s92
    %s94 = sphi 0, %s92
    %s95 = sphi 0, %s94
    %s109 = sphi 0, %s95
    %s113 = sphi 0, %s113
    %s115 = sphi 0, %s113
    %s116 = sphi 0, %s115
    %s130 = sphi 0, %s116
    %s134 = sphi 0, %s134
    %s136 = sphi 0, %s134
    %s137 = sphi 0, %s136
    %s151 = sphi 0, %s137
    %s155 = sphi 0, %s155
    %s157 = sphi 0, %s155
    %s158 = sphi 0, %s157
    %s172 = sphi 0, %s158
    %s176 = sphi 0, %s176
    %s178 = sphi 0, %s176
    %s179 = sphi 0, %s178
    %s193 = sphi 0, %s179
    %s197 = sphi 0, %s197
    %s199 = sphi 0, %s197
    %s200 = sphi 0, %s199
    %s214 = sphi 0, %s200
    %s218 = sphi 0, %s218
    %s220 = sphi 0, %s218
    %s221 = sphi 0, %s220
    %s235 = sphi 0, %s221
    %s241 = sphi 0, %s243
    %s244 = sphi 0, %s241
    %s245 = sphi 0, %s244
    %s261 = sphi 0, %s245
  $region4: #{xrespool_forward.10} parent=0 // loop_header_branch
    %19 = sbr.rel (%p17) target = $region8
  $region5: #{xrespool_forward.10} parent=0 // loop_body
    %s21 = ssub.s32 %s16, 1
    %s22 = ssub.s32 %s16, 2
    %s23 = sadd.s32 %s16, 1
    %s24 = ssub.s32 %s16, %s23
    %p25 = scmp.eq.s32.totalorder %s24, 0
    %s27 = sadd.s32 %s26, 1
    %s28 = scalar_select %p25, %s26, %s27
    %p31 = pneg %p25
    %p32 = scmp.eq.s32.totalorder %s16, 1
    %p33 = por %p31, %p32
    %p34 = scmp.ne.s32.totalorder %s26, %s29
    %p35 = scmp.eq.s32.totalorder %s16, 0
    %p36 = por %p34, %p35
    %p37 = scmp.ne.s32.totalorder %s26, %s29
    %p38 = scmp.eq.s32.totalorder %s21, 1
    %p39 = por %p37, %p38
    %p40 = scmp.ne.s32.totalorder %s29, %s30
    %p41 = scmp.eq.s32.totalorder %s21, 0
    %p42 = por %p40, %p41
    %p43 = scmp.ne.s32.totalorder %s29, %s30
    %p44 = scmp.eq.s32.totalorder %s22, 1
    %p45 = por %p43, %p44
    %p47 = scmp.ne.s32.totalorder %s30, %s46
    %p48 = scmp.eq.s32.totalorder %s22, 0
    %p49 = por %p47, %p48
    %s51 = sadd.s32 %s50, 1
    %p54 = scmp.eq.s32.totalorder %s16, 1
    %p55 = scmp.ne.s32.totalorder %s50, %s52
    %p56 = scmp.eq.s32.totalorder %s16, 0
    %p57 = por %p55, %p56
    %p58 = scmp.ne.s32.totalorder %s50, %s52
    %p59 = scmp.eq.s32.totalorder %s21, 1
    %p60 = por %p58, %p59
    %p61 = scmp.ne.s32.totalorder %s52, %s53
    %p62 = scmp.eq.s32.totalorder %s21, 0
    %p63 = por %p61, %p62
    %p64 = scmp.ne.s32.totalorder %s52, %s53
    %p65 = scmp.eq.s32.totalorder %s22, 1
    %p66 = por %p64, %p65
    %p68 = scmp.ne.s32.totalorder %s53, %s67
    %p69 = scmp.eq.s32.totalorder %s22, 0
    %p70 = por %p68, %p69
    %s72 = sadd.s32 %s71, 1
    %p75 = scmp.eq.s32.totalorder %s16, 1
    %p76 = scmp.ne.s32.totalorder %s71, %s73
    %p77 = scmp.eq.s32.totalorder %s16, 0
    %p78 = por %p76, %p77
    %p79 = scmp.ne.s32.totalorder %s71, %s73
    %p80 = scmp.eq.s32.totalorder %s21, 1
    %p81 = por %p79, %p80
    %p82 = scmp.ne.s32.totalorder %s73, %s74
    %p83 = scmp.eq.s32.totalorder %s21, 0
    %p84 = por %p82, %p83
    %p85 = scmp.ne.s32.totalorder %s73, %s74
    %p86 = scmp.eq.s32.totalorder %s22, 1
    %p87 = por %p85, %p86
    %p89 = scmp.ne.s32.totalorder %s74, %s88
    %p90 = scmp.eq.s32.totalorder %s22, 0
    %p91 = por %p89, %p90
    %s93 = sadd.s32 %s92, 1
    %p96 = scmp.eq.s32.totalorder %s16, 1
    %p97 = scmp.ne.s32.totalorder %s92, %s94
    %p98 = scmp.eq.s32.totalorder %s16, 0
    %p99 = por %p97, %p98
    %p100 = scmp.ne.s32.totalorder %s92, %s94
    %p101 = scmp.eq.s32.totalorder %s21, 1
    %p102 = por %p100, %p101
    %p103 = scmp.ne.s32.totalorder %s94, %s95
    %p104 = scmp.eq.s32.totalorder %s21, 0
    %p105 = por %p103, %p104
    %p106 = scmp.ne.s32.totalorder %s94, %s95
    %p107 = scmp.eq.s32.totalorder %s22, 1
    %p108 = por %p106, %p107
    %p110 = scmp.ne.s32.totalorder %s95, %s109
    %p111 = scmp.eq.s32.totalorder %s22, 0
    %p112 = por %p110, %p111
    %s114 = sadd.s32 %s113, 1
    %p117 = scmp.eq.s32.totalorder %s16, 1
    %p118 = scmp.ne.s32.totalorder %s113, %s115
    %p119 = scmp.eq.s32.totalorder %s16, 0
    %p120 = por %p118, %p119
    %p121 = scmp.ne.s32.totalorder %s113, %s115
    %p122 = scmp.eq.s32.totalorder %s21, 1
    %p123 = por %p121, %p122
    %p124 = scmp.ne.s32.totalorder %s115, %s116
    %p125 = scmp.eq.s32.totalorder %s21, 0
    %p126 = por %p124, %p125
    %p127 = scmp.ne.s32.totalorder %s115, %s116
    %p128 = scmp.eq.s32.totalorder %s22, 1
    %p129 = por %p127, %p128
    %p131 = scmp.ne.s32.totalorder %s116, %s130
    %p132 = scmp.eq.s32.totalorder %s22, 0
    %p133 = por %p131, %p132
    %s135 = sadd.s32 %s134, 1
    %p138 = scmp.eq.s32.totalorder %s16, 1
    %p139 = scmp.ne.s32.totalorder %s134, %s136
    %p140 = scmp.eq.s32.totalorder %s16, 0
    %p141 = por %p139, %p140
    %p142 = scmp.ne.s32.totalorder %s134, %s136
    %p143 = scmp.eq.s32.totalorder %s21, 1
    %p144 = por %p142, %p143
    %p145 = scmp.ne.s32.totalorder %s136, %s137
    %p146 = scmp.eq.s32.totalorder %s21, 0
    %p147 = por %p145, %p146
    %p148 = scmp.ne.s32.totalorder %s136, %s137
    %p149 = scmp.eq.s32.totalorder %s22, 1
    %p150 = por %p148, %p149
    %p152 = scmp.ne.s32.totalorder %s137, %s151
    %p153 = scmp.eq.s32.totalorder %s22, 0
    %p154 = por %p152, %p153
    %s156 = sadd.s32 %s155, 1
    %p159 = scmp.eq.s32.totalorder %s16, 1
    %p160 = scmp.ne.s32.totalorder %s155, %s157
    %p161 = scmp.eq.s32.totalorder %s16, 0
    %p162 = por %p160, %p161
    %p163 = scmp.ne.s32.totalorder %s155, %s157
    %p164 = scmp.eq.s32.totalorder %s21, 1
    %p165 = por %p163, %p164
    %p166 = scmp.ne.s32.totalorder %s157, %s158
    %p167 = scmp.eq.s32.totalorder %s21, 0
    %p168 = por %p166, %p167
    %p169 = scmp.ne.s32.totalorder %s157, %s158
    %p170 = scmp.eq.s32.totalorder %s22, 1
    %p171 = por %p169, %p170
    %p173 = scmp.ne.s32.totalorder %s158, %s172
    %p174 = scmp.eq.s32.totalorder %s22, 0
    %p175 = por %p173, %p174
    %s177 = sadd.s32 %s176, 1
    %p180 = scmp.eq.s32.totalorder %s16, 1
    %p181 = scmp.ne.s32.totalorder %s176, %s178
    %p182 = scmp.eq.s32.totalorder %s16, 0
    %p183 = por %p181, %p182
    %p184 = scmp.ne.s32.totalorder %s176, %s178
    %p185 = scmp.eq.s32.totalorder %s21, 1
    %p186 = por %p184, %p185
    %p187 = scmp.ne.s32.totalorder %s178, %s179
    %p188 = scmp.eq.s32.totalorder %s21, 0
    %p189 = por %p187, %p188
    %p190 = scmp.ne.s32.totalorder %s178, %s179
    %p191 = scmp.eq.s32.totalorder %s22, 1
    %p192 = por %p190, %p191
    %p194 = scmp.ne.s32.totalorder %s179, %s193
    %p195 = scmp.eq.s32.totalorder %s22, 0
    %p196 = por %p194, %p195
    %s198 = sadd.s32 %s197, 1
    %p201 = scmp.eq.s32.totalorder %s16, 1
    %p202 = scmp.ne.s32.totalorder %s197, %s199
    %p203 = scmp.eq.s32.totalorder %s16, 0
    %p204 = por %p202, %p203
    %p205 = scmp.ne.s32.totalorder %s197, %s199
    %p206 = scmp.eq.s32.totalorder %s21, 1
    %p207 = por %p205, %p206
    %p208 = scmp.ne.s32.totalorder %s199, %s200
    %p209 = scmp.eq.s32.totalorder %s21, 0
    %p210 = por %p208, %p209
    %p211 = scmp.ne.s32.totalorder %s199, %s200
    %p212 = scmp.eq.s32.totalorder %s22, 1
    %p213 = por %p211, %p212
    %p215 = scmp.ne.s32.totalorder %s200, %s214
    %p216 = scmp.eq.s32.totalorder %s22, 0
    %p217 = por %p215, %p216
    %s219 = sadd.s32 %s218, 1
    %p222 = scmp.eq.s32.totalorder %s16, 1
    %p223 = scmp.ne.s32.totalorder %s218, %s220
    %p224 = scmp.eq.s32.totalorder %s16, 0
    %p225 = por %p223, %p224
    %p226 = scmp.ne.s32.totalorder %s218, %s220
    %p227 = scmp.eq.s32.totalorder %s21, 1
    %p228 = por %p226, %p227
    %p229 = scmp.ne.s32.totalorder %s220, %s221
    %p230 = scmp.eq.s32.totalorder %s21, 0
    %p231 = por %p229, %p230
    %p232 = scmp.ne.s32.totalorder %s220, %s221
    %p233 = scmp.eq.s32.totalorder %s22, 1
    %p234 = por %p232, %p233
    %p236 = scmp.ne.s32.totalorder %s221, %s235
    %p237 = scmp.eq.s32.totalorder %s22, 0
    %p238 = por %p236, %p237
    %s239 = ssub.s32 %s16, %s23
    %p240 = scmp.eq.s32.totalorder %s239, 0
    %s242 = sadd.s32 %s241, 1
    %s243 = scalar_select %p240, %s241, %s242
    %p246 = pneg %p240
    %p247 = scmp.eq.s32.totalorder %s16, 1
    %p248 = por %p246, %p247
    %p249 = scmp.ne.s32.totalorder %s241, %s244
    %p250 = scmp.eq.s32.totalorder %s16, 0
    %p251 = por %p249, %p250
    %p252 = scmp.ne.s32.totalorder %s241, %s244
    %p253 = scmp.eq.s32.totalorder %s21, 1
    %p254 = por %p252, %p253
    %p255 = scmp.ne.s32.totalorder %s244, %s245
    %p256 = scmp.eq.s32.totalorder %s21, 0
    %p257 = por %p255, %p256
    %p258 = scmp.ne.s32.totalorder %s244, %s245
    %p259 = scmp.eq.s32.totalorder %s22, 1
    %p260 = por %p258, %p259
    %p262 = scmp.ne.s32.totalorder %s245, %s261
    %p263 = scmp.eq.s32.totalorder %s22, 0
    %p264 = por %p262, %p263
    %p265 = scmp.le.s32.totalorder 1, %s16
    %p266 = scmp.lt.s32.totalorder %s16, 3
    %p267 = pnand %p265, %p266
    %p268 = pneg %p267
    // Predicated region
    $region9: #{xrespool_forward.10} parent=5 // pred_check
      _
    $region10: #{xrespool_forward.10} parent=5 // pred_check_branch
      %270 = sbr.rel (%p267) target = $region12
    $region11: #{xrespool_forward.10} parent=5 // pred_region
      %s271 = ssub.s32 %s16, 1
      // Predicated region
      $region13: #{xrespool_forward.10} parent=11 // pred_check
        %p272 = pneg %p63
      $region14: #{xrespool_forward.10} parent=11 // pred_check_branch
        %274 = sbr.rel (%p272) target = $region16
      $region15: #{xrespool_forward.10} parent=11 // pred_region
        _
      $region16: #{xrespool_forward.10} parent=11 // pred_fallthru
        _
      // Predicated region
      $region17: #{xrespool_forward.10} parent=11 // pred_check
        %p275 = pneg %p84
      $region18: #{xrespool_forward.10} parent=11 // pred_check_branch
        %277 = sbr.rel (%p275) target = $region20
      $region19: #{xrespool_forward.10} parent=11 // pred_region
        _
      $region20: #{xrespool_forward.10} parent=11 // pred_fallthru
        _
      // Predicated region
      $region21: #{xrespool_forward.10} parent=11 // pred_check
        %p278 = pneg %p105
      $region22: #{xrespool_forward.10} parent=11 // pred_check_branch
        %280 = sbr.rel (%p278) target = $region24
      $region23: #{xrespool_forward.10} parent=11 // pred_region
        _
      $region24: #{xrespool_forward.10} parent=11 // pred_fallthru
        _
      // Predicated region
      $region25: #{xrespool_forward.10} parent=11 // pred_check
        %p281 = pneg %p126
      $region26: #{xrespool_forward.10} parent=11 // pred_check_branch
        %283 = sbr.rel (%p281) target = $region28
      $region27: #{xrespool_forward.10} parent=11 // pred_region
        _
      $region28: #{xrespool_forward.10} parent=11 // pred_fallthru
        _
      // Predicated region
      $region29: #{xrespool_forward.10} parent=11 // pred_check
        %p284 = pneg %p147
      $region30: #{xrespool_forward.10} parent=11 // pred_check_branch
        %286 = sbr.rel (%p284) target = $region32
      $region31: #{xrespool_forward.10} parent=11 // pred_region
        _
      $region32: #{xrespool_forward.10} parent=11 // pred_fallthru
        _
      // Predicated region
      $region33: #{xrespool_forward.10} parent=11 // pred_check
        %p287 = pneg %p168
      $region34: #{xrespool_forward.10} parent=11 // pred_check_branch
        %289 = sbr.rel (%p287) target = $region36
      $region35: #{xrespool_forward.10} parent=11 // pred_region
        _
      $region36: #{xrespool_forward.10} parent=11 // pred_fallthru
        _
      // Predicated region
      $region37: #{xrespool_forward.10} parent=11 // pred_check
        %p290 = pneg %p189
      $region38: #{xrespool_forward.10} parent=11 // pred_check_branch
        %292 = sbr.rel (%p290) target = $region40
      $region39: #{xrespool_forward.10} parent=11 // pred_region
        _
      $region40: #{xrespool_forward.10} parent=11 // pred_fallthru
        _
      // Predicated region
      $region41: #{xrespool_forward.10} parent=11 // pred_check
        %p293 = pneg %p210
      $region42: #{xrespool_forward.10} parent=11 // pred_check_branch
        %295 = sbr.rel (%p293) target = $region44
      $region43: #{xrespool_forward.10} parent=11 // pred_region
        _
      $region44: #{xrespool_forward.10} parent=11 // pred_fallthru
        _
      // Predicated region
      $region45: #{xrespool_forward.10} parent=11 // pred_check
        %p296 = pneg %p231
      $region46: #{xrespool_forward.10} parent=11 // pred_check_branch
        %298 = sbr.rel (%p296) target = $region48
      $region47: #{xrespool_forward.10} parent=11 // pred_region
        _
      $region48: #{xrespool_forward.10} parent=11 // pred_fallthru
        _
    $region12: #{xrespool_forward.10} parent=5 // pred_fallthru
      _
    %p299 = scmp.lt.s32.totalorder %s16, 2
    // Predicated region
    $region49: #{xrespool_forward.10} parent=5 // pred_check
      %p300 = pneg %p299
    $region50: #{xrespool_forward.10} parent=5 // pred_check_branch
      %302 = sbr.rel (%p300) target = $region52
    $region51: #{xrespool_forward.10} parent=5 // pred_region
      // Predicated region
      $region53: #{xrespool_forward.10} parent=51 // pred_check
        %p303 = pneg %p36
      $region54: #{xrespool_forward.10} parent=51 // pred_check_branch
        %305 = sbr.rel (%p303) target = $region56
      $region55: #{xrespool_forward.10} parent=51 // pred_region
        %p306 = scmp.lt.s32.totalorder %s16, 1
        %s307 = scalar_select %p306, %s16, 1
        %s308 = smul.addr %s307, 4
        %s309 = smul.addr %s308, 4
        %s310 = scalar_lea.vmem %s0, %s309
      $region56: #{xrespool_forward.10} parent=51 // pred_fallthru
        _
    $region52: #{xrespool_forward.10} parent=5 // pred_fallthru
      _
    %p311 = scmp.le.s32.totalorder 1, %s16
    %p312 = scmp.lt.s32.totalorder %s16, 3
    %p313 = pnand %p311, %p312
    %p314 = pneg %p313
    // Predicated region
    $region57: #{xrespool_forward.10} parent=5 // pred_check
      _
    $region58: #{xrespool_forward.10} parent=5 // pred_check_branch
      %316 = sbr.rel (%p313) target = $region60
    $region59: #{xrespool_forward.10} parent=5 // pred_region
      %s317 = ssub.s32 %s16, 1
      %p318 = scmp.lt.s32.totalorder %s21, 1
      %s319 = scalar_select %p318, %s21, 1
      %s320 = smul.addr %s319, 4
      %s321 = smul.addr %s320, 4
      %s322 = scalar_lea.vmem %s0, %s321
      %p323 = pneg %p42
      %p324 = pneg %p39
      %p325 = pneg %p63
      %p326 = pneg %p60
      %p327 = pneg %p84
      %p328 = pneg %p81
      %p329 = pneg %p105
      %p330 = pneg %p102
      %p331 = pneg %p126
      %p332 = pneg %p123
      %p333 = pneg %p147
      %p334 = pneg %p144
      %p335 = pneg %p168
      %p336 = pneg %p165
      %p337 = pneg %p189
      %p338 = pneg %p186
      %p339 = pneg %p210
      %p340 = pneg %p207
      %p341 = pneg %p231
      %p342 = pneg %p228
      %p343 = pneg %p257
      %p344 = pneg %p254
      %p345 = scmp.lt.s32.totalorder %s21, 1
      %s346 = scalar_select %p345, %s21, 1
      %s347 = smul.addr %s346, 2
      %s348 = smul.addr %s347, 4
      %s349 = scalar_lea.vmem %s10, %s348
      %p350 = scmp.lt.s32.totalorder %s21, 1
      %s351 = scalar_select %p350, %s21, 1
      %s352 = smul.addr %s351, 4
      %s353 = smul.addr %s352, 4
      %s354 = scalar_lea.vmem %s0, %s353
      %p355 = scmp.lt.s32.totalorder %s21, 1
      %s356 = scalar_select %p355, %s21, 1
      %s357 = smul.addr %s356, 2
      %s358 = smul.addr %s357, 4
      %s359 = scalar_lea.vmem %s10, %s358
      %v361 = vld [vmem:[%s354] sm:$0xf]
      %v362 = vld [vmem:[%s354 + $0x8] sm:$0xf]
      %v363 = vld [vmem:[%s354 + $0x4] sm:$0xf]
      %v364 = vld [vmem:[%s354 + $0xc] sm:$0xf]
      %v365 = vld [vmem:[%s1] sm:$0xf]
      %v366 = vld [vmem:[%s1 + $0x4] sm:$0xf]
      %v367 = vld [vmem:[%s1 + $0x8] sm:$0xf]
      %v368 = vld [vmem:[%s1 + $0xc] sm:$0xf]
      %v369 = vld [vmem:[%s1 + $0x10] sm:$0xf]
      %v370 = vld [vmem:[%s1 + $0x14] sm:$0xf]
      %v371 = vld [vmem:[%s1 + $0x18] sm:$0xf]
      %v372 = vld [vmem:[%s1 + $0x1c] sm:$0xf]
      %v373 = vld [vmem:[%s1 + $0x20] sm:$0xf]
      %v374 = vld [vmem:[%s1 + $0x24] sm:$0xf]
      %v375 = vld [vmem:[%s1 + $0x28] sm:$0xf]
      %v376 = vld [vmem:[%s1 + $0x2c] sm:$0xf]
      %v377 = vld [vmem:[%s1 + $0x30] sm:$0xf]
      %v378 = vld [vmem:[%s1 + $0x34] sm:$0xf]
      %v379 = vld [vmem:[%s1 + $0x38] sm:$0xf]
      %v380 = vld [vmem:[%s1 + $0x3c] sm:$0xf]
      %v383 = vunpack.c.l.b16 %v361
      %v384 = vunpack.c.l.b16 %v362
      %v385 = vpack.c.b16 %v384, %v383
      %v403 = vunpack.c.l.b16 %v365
      %v404 = vunpack.c.l.b16 %v366
      %v405 = vunpack.c.l.b16 %v367
      %v406 = vunpack.c.l.b16 %v368
      %v407 = vunpack.c.l.b16 %v369
      %v408 = vunpack.c.l.b16 %v370
      %v409 = vunpack.c.l.b16 %v371
      %v410 = vunpack.c.l.b16 %v372
      %v411 = vunpack.c.l.b16 %v373
      %v412 = vunpack.c.l.b16 %v374
      %v413 = vunpack.c.l.b16 %v375
      %v414 = vunpack.c.l.b16 %v376
      %v415 = vunpack.c.l.b16 %v377
      %v416 = vunpack.c.l.b16 %v378
      %v417 = vunpack.c.l.b16 %v379
      %v418 = vunpack.c.l.b16 %v380
      %v419 = vpack.c.b16 %v404, %v403
      %v420 = vpack.c.b16 %v406, %v405
      %v421 = vpack.c.b16 %v408, %v407
      %v422 = vpack.c.b16 %v410, %v409
      %v423 = vpack.c.b16 %v412, %v411
      %v424 = vpack.c.b16 %v414, %v413
      %v425 = vpack.c.b16 %v416, %v415
      %v426 = vpack.c.b16 %v418, %v417
      %435 = vmatprep.subr.bf16.mxu0 0
      %436 = vmatpush1.bf16.msra.mxu0 %v419
      %437 = vmatprep.subr.bf16.mxu0 0
      %438 = vmatpush1.bf16.msra.mxu0 %v420
      %439 = vmatprep.subr.bf16.mxu0 0
      %440 = vmatpush1.bf16.msra.mxu0 %v421
      %441 = vmatprep.subr.bf16.mxu0 0
      %442 = vmatpush1.bf16.msra.mxu0 %v422
      %443 = vmatprep.subr.bf16.mxu0 0
      %444 = vmatpush1.bf16.msra.mxu0 %v423
      %445 = vmatprep.subr.bf16.mxu0 0
      %446 = vmatpush1.bf16.msra.mxu0 %v424
      %447 = vmatprep.subr.bf16.mxu0 0
      %448 = vmatpush1.bf16.msra.mxu0 %v425
      %449 = vmatprep.subr.bf16.mxu0 0
      %450 = vmatpush1.bf16.msra.mxu0 %v426
      %451 = vmatprep.subr.bf16.mxu0 0
      %452 = vmatpush1.bf16.msra.mxu0 0
      %453 = vmatprep.subr.bf16.mxu0 0
      %454 = vmatpush1.bf16.msra.mxu0 0
      %455 = vmatprep.subr.bf16.mxu0 0
      %456 = vmatpush1.bf16.msra.mxu0 0
      %457 = vmatprep.subr.bf16.mxu0 0
      %458 = vmatpush1.bf16.msra.mxu0 0
      %459 = vmatprep.subr.bf16.mxu0 0
      %460 = vmatpush1.bf16.msra.mxu0 0
      %461 = vmatprep.subr.bf16.mxu0 0
      %462 = vmatpush1.bf16.msra.mxu0 0
      %463 = vmatprep.subr.bf16.mxu0 0
      %464 = vmatpush1.bf16.msra.mxu0 0
      %465 = vmatprep.subr.bf16.mxu0 0
      %466 = vmatpush1.bf16.msra.mxu0 0
      %467 = vmatprep.mubr.bf16.mxu0 0
      %468 = vmatmul.mubr.bf16.gmra.mrb[0].mxu0 %v385
      %v469 = vpop.f32.mrb[0].mxu0
      %v470 = vadd.f32 0.0, %v469
      %v471 = vpop.f32.mrb[0].mxu0
      %v472 = vpop.f32.mrb[0].mxu0
      %v473 = vadd.f32 0.0, %v472
      %v474 = vpop.f32.mrb[0].mxu0
      %475 = vdwg.mxu0
      %v476 = vld [vmem:[%s2] sm:$0x1]
      %v478 = vlaneseq
      %v479 = vshrl.u32 %v478, 7
      %v480 = vsub.s32 0, %v479
      %v481 = vrot.slane %v476, %v480
      %v483 = vmul.f32 %v470, %v481
      %v484 = vmul.f32 %v473, %v481
      %v485 = vld [vmem:[%s3] sm:$0x1]
      %v487 = vlaneseq
      %v488 = vshrl.u32 %v487, 7
      %v489 = vsub.s32 0, %v488
      %v490 = vrot.slane %v485, %v489
      %v492 = vadd.f32 %v483, %v490
      %v493 = vadd.f32 %v484, %v490
      %v494 = vmax.f32 %v492, 0.0
      %v495 = vmax.f32 %v493, 0.0
      %v496 = vpack.c.bf16 %v495, %v494
      %v499 = vunpack.c.l.b16 %v363
      %v500 = vunpack.c.l.b16 %v364
      %v501 = vpack.c.b16 %v500, %v499
      %503 = vmatprep.subr.bf16.mxu0 0
      %504 = vmatpush1.bf16.msra.mxu0 %v419
      %505 = vmatprep.subr.bf16.mxu0 0
      %506 = vmatpush1.bf16.msra.mxu0 %v420
      %507 = vmatprep.subr.bf16.mxu0 0
      %508 = vmatpush1.bf16.msra.mxu0 %v421
      %509 = vmatprep.subr.bf16.mxu0 0
      %510 = vmatpush1.bf16.msra.mxu0 %v422
      %511 = vmatprep.subr.bf16.mxu0 0
      %512 = vmatpush1.bf16.msra.mxu0 %v423
      %513 = vmatprep.subr.bf16.mxu0 0
      %514 = vmatpush1.bf16.msra.mxu0 %v424
      %515 = vmatprep.subr.bf16.mxu0 0
      %516 = vmatpush1.bf16.msra.mxu0 %v425
      %517 = vmatprep.subr.bf16.mxu0 0
      %518 = vmatpush1.bf16.msra.mxu0 %v426
      %519 = vmatprep.subr.bf16.mxu0 0
      %520 = vmatpush1.bf16.msra.mxu0 0
      %521 = vmatprep.subr.bf16.mxu0 0
      %522 = vmatpush1.bf16.msra.mxu0 0
      %523 = vmatprep.subr.bf16.mxu0 0
      %524 = vmatpush1.bf16.msra.mxu0 0
      %525 = vmatprep.subr.bf16.mxu0 0
      %526 = vmatpush1.bf16.msra.mxu0 0
      %527 = vmatprep.subr.bf16.mxu0 0
      %528 = vmatpush1.bf16.msra.mxu0 0
      %529 = vmatprep.subr.bf16.mxu0 0
      %530 = vmatpush1.bf16.msra.mxu0 0
      %531 = vmatprep.subr.bf16.mxu0 0
      %532 = vmatpush1.bf16.msra.mxu0 0
      %533 = vmatprep.subr.bf16.mxu0 0
      %534 = vmatpush1.bf16.msra.mxu0 0
      %535 = vmatprep.mubr.bf16.mxu0 0
      %536 = vmatmul.mubr.bf16.gmra.mrb[0].mxu0 %v501
      %v537 = vpop.f32.mrb[0].mxu0
      %v538 = vadd.f32 0.0, %v537
      %v539 = vpop.f32.mrb[0].mxu0
      %v540 = vpop.f32.mrb[0].mxu0
      %v541 = vadd.f32 0.0, %v540
      %v542 = vpop.f32.mrb[0].mxu0
      %543 = vdwg.mxu0
      %v544 = vmul.f32 %v538, %v481
      %v545 = vmul.f32 %v541, %v481
      %v546 = vadd.f32 %v544, %v490
      %v547 = vadd.f32 %v545, %v490
      %v548 = vmax.f32 %v546, 0.0
      %v549 = vmax.f32 %v547, 0.0
      %v550 = vpack.c.bf16 %v549, %v548
      %551 = vst [vmem:[#allocation2] sm:$0xf] 0
      %552 = vst [vmem:[#allocation2 + $0x4] sm:$0xf] 0
      %553 = vst [vmem:[#allocation2 + $0x8] sm:$0xf] 0
      %554 = vst [vmem:[#allocation2 + $0xc] sm:$0xf] 0
      %555 = vst [vmem:[#allocation2 + $0x10] sm:$0xf] 0
      %v557 = vunpack.c.l.b16 %v550
      %v558 = vunpack.c.h.b16 %v550
      %v559 = vpack.c.b16 %v557, %v557
      %v560 = vpack.c.b16 %v558, %v558
      %563 = vst [vmem:[#allocation2 + $0x8] sm:$0xf] %v559
      %564 = vst [vmem:[#allocation2 + $0xc] sm:$0xf] %v560
      %v565 = vld [vmem:[#allocation2 + $0x4] sm:$0x8]
      %v566 = vld [vmem:[#allocation2 + $0x8] sm:$0xf]
      %v567 = vld [vmem:[#allocation2 + $0xc] sm:$0xf]
      %v568 = vld [vmem:[%s4] sm:$0xf]
      %v569 = vld [vmem:[%s4 + $0x4] sm:$0xf]
      %v570 = vld [vmem:[%s4 + $0x8] sm:$0xf]
      %v571 = vld [vmem:[%s4 + $0xc] sm:$0xf]
      %v572 = vld [vmem:[%s4 + $0x10] sm:$0xf]
      %v573 = vld [vmem:[%s4 + $0x14] sm:$0xf]
      %v574 = vld [vmem:[%s4 + $0x18] sm:$0xf]
      %v575 = vld [vmem:[%s4 + $0x1c] sm:$0xf]
      %v576 = vld [vmem:[%s4 + $0x20] sm:$0xf]
      %v577 = vld [vmem:[%s4 + $0x24] sm:$0xf]
      %v578 = vld [vmem:[%s4 + $0x28] sm:$0xf]
      %v579 = vld [vmem:[%s4 + $0x2c] sm:$0xf]
      %v580 = vld [vmem:[%s4 + $0x30] sm:$0xf]
      %v581 = vld [vmem:[%s4 + $0x34] sm:$0xf]
      %v582 = vld [vmem:[%s4 + $0x38] sm:$0xf]
      %v583 = vld [vmem:[%s4 + $0x3c] sm:$0xf]
      %s584 = scalar_lea.vmem %s4, 64
      %v585 = vld [vmem:[%s584] sm:$0xf]
      %v586 = vld [vmem:[%s584 + $0x4] sm:$0xf]
      %v587 = vld [vmem:[%s584 + $0x8] sm:$0xf]
      %v588 = vld [vmem:[%s584 + $0xc] sm:$0xf]
      %v589 = vld [vmem:[%s584 + $0x10] sm:$0xf]
      %v590 = vld [vmem:[%s584 + $0x14] sm:$0xf]
      %v591 = vld [vmem:[%s584 + $0x18] sm:$0xf]
      %v592 = vld [vmem:[%s584 + $0x1c] sm:$0xf]
      %v593 = vld [vmem:[%s584 + $0x20] sm:$0xf]
      %v594 = vld [vmem:[%s584 + $0x24] sm:$0xf]
      %v595 = vld [vmem:[%s584 + $0x28] sm:$0xf]
      %v596 = vld [vmem:[%s584 + $0x2c] sm:$0xf]
      %v597 = vld [vmem:[%s584 + $0x30] sm:$0xf]
      %v598 = vld [vmem:[%s584 + $0x34] sm:$0xf]
      %v599 = vld [vmem:[%s584 + $0x38] sm:$0xf]
      %v600 = vld [vmem:[%s584 + $0x3c] sm:$0xf]
      %v617 = vunpack.c.l.b16 %v585
      %v618 = vunpack.c.l.b16 %v586
      %v619 = vunpack.c.l.b16 %v587
      %v620 = vunpack.c.l.b16 %v588
      %v621 = vunpack.c.l.b16 %v589
      %v622 = vunpack.c.l.b16 %v590
      %v623 = vunpack.c.l.b16 %v591
      %v624 = vunpack.c.l.b16 %v592
      %v625 = vunpack.c.l.b16 %v593
      %v626 = vunpack.c.l.b16 %v594
      %v627 = vunpack.c.l.b16 %v595
      %v628 = vunpack.c.l.b16 %v596
      %v629 = vunpack.c.l.b16 %v597
      %v630 = vunpack.c.l.b16 %v598
      %v631 = vunpack.c.l.b16 %v599
      %v632 = vunpack.c.l.b16 %v600
      %v633 = vpack.c.b16 %v618, %v617
      %v634 = vpack.c.b16 %v620, %v619
      %v635 = vpack.c.b16 %v622, %v621
      %v636 = vpack.c.b16 %v624, %v623
      %v637 = vpack.c.b16 %v626, %v625
      %v638 = vpack.c.b16 %v628, %v627
      %v639 = vpack.c.b16 %v630, %v629
      %v640 = vpack.c.b16 %v632, %v631
      %649 = vmatprep.subr.bf16.mxu0 0
      %650 = vmatpush1.bf16.msra.mxu0 %v633
      %651 = vmatprep.subr.bf16.mxu0 0
      %652 = vmatpush1.bf16.msra.mxu0 %v634
      %653 = vmatprep.subr.bf16.mxu0 0
      %654 = vmatpush1.bf16.msra.mxu0 %v635
      %655 = vmatprep.subr.bf16.mxu0 0
      %656 = vmatpush1.bf16.msra.mxu0 %v636
      %657 = vmatprep.subr.bf16.mxu0 0
      %658 = vmatpush1.bf16.msra.mxu0 %v637
      %659 = vmatprep.subr.bf16.mxu0 0
      %660 = vmatpush1.bf16.msra.mxu0 %v638
      %661 = vmatprep.subr.bf16.mxu0 0
      %662 = vmatpush1.bf16.msra.mxu0 %v639
      %663 = vmatprep.subr.bf16.mxu0 0
      %664 = vmatpush1.bf16.msra.mxu0 %v640
      %665 = vmatprep.subr.bf16.mxu0 0
      %666 = vmatpush1.bf16.msra.mxu0 0
      %667 = vmatprep.subr.bf16.mxu0 0
      %668 = vmatpush1.bf16.msra.mxu0 0
      %669 = vmatprep.subr.bf16.mxu0 0
      %670 = vmatpush1.bf16.msra.mxu0 0
      %671 = vmatprep.subr.bf16.mxu0 0
      %672 = vmatpush1.bf16.msra.mxu0 0
      %673 = vmatprep.subr.bf16.mxu0 0
      %674 = vmatpush1.bf16.msra.mxu0 0
      %675 = vmatprep.subr.bf16.mxu0 0
      %676 = vmatpush1.bf16.msra.mxu0 0
      %677 = vmatprep.subr.bf16.mxu0 0
      %678 = vmatpush1.bf16.msra.mxu0 0
      %679 = vmatprep.subr.bf16.mxu0 0
      %680 = vmatpush1.bf16.msra.mxu0 0
      %681 = vmatprep.mubr.bf16.mxu0 0
      %682 = vmatmul.mubr.bf16.gmra.mrb[0].mxu0 %v496
      %v683 = vpop.f32.mrb[0].mxu0
      %v684 = vadd.f32 0.0, %v683
      %v685 = vpop.f32.mrb[0].mxu0
      %v686 = vpop.f32.mrb[0].mxu0
      %v687 = vadd.f32 0.0, %v686
      %v688 = vpop.f32.mrb[0].mxu0
      %689 = vdwg.mxu0
      %v693 = vunpack.c.l.b16 %v565
      %v694 = vunpack.c.l.b16 %v566
      %v695 = vunpack.c.l.b16 %v567
      %v696 = vpack.c.b16 %v694, %v693
      %v697 = vpack.c.b16 %v695, %v695
      %vm698 = vsmask.f32 4352
      %v700 = vshrl.u32 %v696, 16
      %v702 = vrot.slane %v700, 3
      %v703 = vshll.u32 %v696, 16
      %v705 = vrot.slane %v703, 4
      %v706 = vor.u32 %v702, %v705
      %v708 = vshrl.u32 %v697, 16
      %v710 = vrot.slane %v708, 3
      %v711 = vshll.u32 %v697, 16
      %v713 = vrot.slane %v711, 4
      %v714 = vor.u32 %v710, %v713
      %v715 = vsel %vm698, %v706, %v714
      %v733 = vunpack.c.l.b16 %v568
      %v734 = vunpack.c.l.b16 %v569
      %v735 = vunpack.c.l.b16 %v570
      %v736 = vunpack.c.l.b16 %v571
      %v737 = vunpack.c.l.b16 %v572
      %v738 = vunpack.c.l.b16 %v573
      %v739 = vunpack.c.l.b16 %v574
      %v740 = vunpack.c.l.b16 %v575
      %v741 = vunpack.c.l.b16 %v576
      %v742 = vunpack.c.l.b16 %v577
      %v743 = vunpack.c.l.b16 %v578
      %v744 = vunpack.c.l.b16 %v579
      %v745 = vunpack.c.l.b16 %v580
      %v746 = vunpack.c.l.b16 %v581
      %v747 = vunpack.c.l.b16 %v582
      %v748 = vunpack.c.l.b16 %v583
      %v749 = vpack.c.b16 %v734, %v733
      %v750 = vpack.c.b16 %v736, %v735
      %v751 = vpack.c.b16 %v738, %v737
      %v752 = vpack.c.b16 %v740, %v739
      %v753 = vpack.c.b16 %v742, %v741
      %v754 = vpack.c.b16 %v744, %v743
      %v755 = vpack.c.b16 %v746, %v745
      %v756 = vpack.c.b16 %v748, %v747
      %765 = vmatprep.subr.bf16.mxu0 0
      %766 = vmatpush1.bf16.msra.mxu0 %v749
      %767 = vmatprep.subr.bf16.mxu0 0
      %768 = vmatpush1.bf16.msra.mxu0 %v750
      %769 = vmatprep.subr.bf16.mxu0 0
      %770 = vmatpush1.bf16.msra.mxu0 %v751
      %771 = vmatprep.subr.bf16.mxu0 0
      %772 = vmatpush1.bf16.msra.mxu0 %v752
      %773 = vmatprep.subr.bf16.mxu0 0
      %774 = vmatpush1.bf16.msra.mxu0 %v753
      %775 = vmatprep.subr.bf16.mxu0 0
      %776 = vmatpush1.bf16.msra.mxu0 %v754
      %777 = vmatprep.subr.bf16.mxu0 0
      %778 = vmatpush1.bf16.msra.mxu0 %v755
      %779 = vmatprep.subr.bf16.mxu0 0
      %780 = vmatpush1.bf16.msra.mxu0 %v756
      %781 = vmatprep.subr.bf16.mxu0 0
      %782 = vmatpush1.bf16.msra.mxu0 0
      %783 = vmatprep.subr.bf16.mxu0 0
      %784 = vmatpush1.bf16.msra.mxu0 0
      %785 = vmatprep.subr.bf16.mxu0 0
      %786 = vmatpush1.bf16.msra.mxu0 0
      %787 = vmatprep.subr.bf16.mxu0 0
      %788 = vmatpush1.bf16.msra.mxu0 0
      %789 = vmatprep.subr.bf16.mxu0 0
      %790 = vmatpush1.bf16.msra.mxu0 0
      %791 = vmatprep.subr.bf16.mxu0 0
      %792 = vmatpush1.bf16.msra.mxu0 0
      %793 = vmatprep.subr.bf16.mxu0 0
      %794 = vmatpush1.bf16.msra.mxu0 0
      %795 = vmatprep.subr.bf16.mxu0 0
      %796 = vmatpush1.bf16.msra.mxu0 0
      %797 = vmatprep.mubr.bf16.mxu0 0
      %798 = vmatmul.mubr.bf16.gmra.mrb[0].mxu0 %v715
      %v799 = vpop.f32.mrb[0].mxu0
      %v800 = vadd.f32 %v684, %v799
      %v801 = vpop.f32.mrb[0].mxu0
      %v802 = vpop.f32.mrb[0].mxu0
      %v803 = vadd.f32 %v687, %v802
      %v804 = vpop.f32.mrb[0].mxu0
      %805 = vdwg.mxu0
      %s806 = scalar_lea.vmem %s4, 128
      %v807 = vld [vmem:[%s806] sm:$0xf]
      %v808 = vld [vmem:[%s806 + $0x4] sm:$0xf]
      %v809 = vld [vmem:[%s806 + $0x8] sm:$0xf]
      %v810 = vld [vmem:[%s806 + $0xc] sm:$0xf]
      %v811 = vld [vmem:[%s806 + $0x10] sm:$0xf]
      %v812 = vld [vmem:[%s806 + $0x14] sm:$0xf]
      %v813 = vld [vmem:[%s806 + $0x18] sm:$0xf]
      %v814 = vld [vmem:[%s806 + $0x1c] sm:$0xf]
      %v815 = vld [vmem:[%s806 + $0x20] sm:$0xf]
      %v816 = vld [vmem:[%s806 + $0x24] sm:$0xf]
      %v817 = vld [vmem:[%s806 + $0x28] sm:$0xf]
      %v818 = vld [vmem:[%s806 + $0x2c] sm:$0xf]
      %v819 = vld [vmem:[%s806 + $0x30] sm:$0xf]
      %v820 = vld [vmem:[%s806 + $0x34] sm:$0xf]
      %v821 = vld [vmem:[%s806 + $0x38] sm:$0xf]
      %v822 = vld [vmem:[%s806 + $0x3c] sm:$0xf]
      %v839 = vunpack.c.l.b16 %v807
      %v840 = vunpack.c.l.b16 %v808
      %v841 = vunpack.c.l.b16 %v809
      %v842 = vunpack.c.l.b16 %v810
      %v843 = vunpack.c.l.b16 %v811
      %v844 = vunpack.c.l.b16 %v812
      %v845 = vunpack.c.l.b16 %v813
      %v846 = vunpack.c.l.b16 %v814
      %v847 = vunpack.c.l.b16 %v815
      %v848 = vunpack.c.l.b16 %v816
      %v849 = vunpack.c.l.b16 %v817
      %v850 = vunpack.c.l.b16 %v818
      %v851 = vunpack.c.l.b16 %v819
      %v852 = vunpack.c.l.b16 %v820
      %v853 = vunpack.c.l.b16 %v821
      %v854 = vunpack.c.l.b16 %v822
      %v855 = vpack.c.b16 %v840, %v839
      %v856 = vpack.c.b16 %v842, %v841
      %v857 = vpack.c.b16 %v844, %v843
      %v858 = vpack.c.b16 %v846, %v845
      %v859 = vpack.c.b16 %v848, %v847
      %v860 = vpack.c.b16 %v850, %v849
      %v861 = vpack.c.b16 %v852, %v851
      %v862 = vpack.c.b16 %v854, %v853
      %871 = vmatprep.subr.bf16.mxu0 0
      %872 = vmatpush1.bf16.msra.mxu0 %v855
      %873 = vmatprep.subr.bf16.mxu0 0
      %874 = vmatpush1.bf16.msra.mxu0 %v856
      %875 = vmatprep.subr.bf16.mxu0 0
      %876 = vmatpush1.bf16.msra.mxu0 %v857
      %877 = vmatprep.subr.bf16.mxu0 0
      %878 = vmatpush1.bf16.msra.mxu0 %v858
      %879 = vmatprep.subr.bf16.mxu0 0
      %880 = vmatpush1.bf16.msra.mxu0 %v859
      %881 = vmatprep.subr.bf16.mxu0 0
      %882 = vmatpush1.bf16.msra.mxu0 %v860
      %883 = vmatprep.subr.bf16.mxu0 0
      %884 = vmatpush1.bf16.msra.mxu0 %v861
      %885 = vmatprep.subr.bf16.mxu0 0
      %886 = vmatpush1.bf16.msra.mxu0 %v862
      %887 = vmatprep.subr.bf16.mxu0 0
      %888 = vmatpush1.bf16.msra.mxu0 0
      %889 = vmatprep.subr.bf16.mxu0 0
      %890 = vmatpush1.bf16.msra.mxu0 0
      %891 = vmatprep.subr.bf16.mxu0 0
      %892 = vmatpush1.bf16.msra.mxu0 0
      %893 = vmatprep.subr.bf16.mxu0 0
      %894 = vmatpush1.bf16.msra.mxu0 0
      %895 = vmatprep.subr.bf16.mxu0 0
      %896 = vmatpush1.bf16.msra.mxu0 0
      %897 = vmatprep.subr.bf16.mxu0 0
      %898 = vmatpush1.bf16.msra.mxu0 0
      %899 = vmatprep.subr.bf16.mxu0 0
      %900 = vmatpush1.bf16.msra.mxu0 0
      %901 = vmatprep.subr.bf16.mxu0 0
      %902 = vmatpush1.bf16.msra.mxu0 0
      %903 = vmatprep.mubr.bf16.mxu0 0
      %904 = vmatmul.mubr.bf16.gmra.mrb[0].mxu0 %v550
      %v905 = vpop.f32.mrb[0].mxu0
      %v906 = vadd.f32 0.0, %v905
      %v907 = vpop.f32.mrb[0].mxu0
      %v908 = vpop.f32.mrb[0].mxu0
      %v909 = vadd.f32 0.0, %v908
      %v910 = vpop.f32.mrb[0].mxu0
      %911 = vdwg.mxu0
      %v912 = vadd.f32 %v800, %v906
      %v913 = vadd.f32 %v803, %v909
      %v914 = vld [vmem:[%s5] sm:$0x1]
      %v916 = vlaneseq
      %v917 = vshrl.u32 %v916, 7
      %v918 = vsub.s32 0, %v917
      %v919 = vrot.slane %v914, %v918
      %v921 = vmul.f32 %v912, %v919
      %v922 = vmul.f32 %v913, %v919
      %v923 = vld [vmem:[%s6] sm:$0x1]
      %v925 = vlaneseq
      %v926 = vshrl.u32 %v925, 7
      %v927 = vsub.s32 0, %v926
      %v928 = vrot.slane %v923, %v927
      %v930 = vadd.f32 %v921, %v928
      %v931 = vadd.f32 %v922, %v928
      %v932 = vmax.f32 %v930, 0.0
      %v933 = vmax.f32 %v931, 0.0
      %v934 = vpack.c.bf16 %v933, %v932
      %v935 = vld [vmem:[%s7] sm:$0xf]
      %v936 = vld [vmem:[%s7 + $0x4] sm:$0xf]
      %v937 = vld [vmem:[%s7 + $0x8] sm:$0xf]
      %v938 = vld [vmem:[%s7 + $0xc] sm:$0xf]
      %v939 = vld [vmem:[%s7 + $0x10] sm:$0xf]
      %v940 = vld [vmem:[%s7 + $0x14] sm:$0xf]
      %v941 = vld [vmem:[%s7 + $0x18] sm:$0xf]
      %v942 = vld [vmem:[%s7 + $0x1c] sm:$0xf]
      %v943 = vld [vmem:[%s7 + $0x20] sm:$0xf]
      %v944 = vld [vmem:[%s7 + $0x24] sm:$0xf]
      %v945 = vld [vmem:[%s7 + $0x28] sm:$0xf]
      %v946 = vld [vmem:[%s7 + $0x2c] sm:$0xf]
      %v947 = vld [vmem:[%s7 + $0x30] sm:$0xf]
      %v948 = vld [vmem:[%s7 + $0x34] sm:$0xf]
      %v949 = vld [vmem:[%s7 + $0x38] sm:$0xf]
      %v950 = vld [vmem:[%s7 + $0x3c] sm:$0xf]
      %v967 = vunpack.c.l.b16 %v935
      %v968 = vunpack.c.l.b16 %v936
      %v969 = vunpack.c.l.b16 %v937
      %v970 = vunpack.c.l.b16 %v938
      %v971 = vunpack.c.l.b16 %v939
      %v972 = vunpack.c.l.b16 %v940
      %v973 = vunpack.c.l.b16 %v941
      %v974 = vunpack.c.l.b16 %v942
      %v975 = vunpack.c.l.b16 %v943
      %v976 = vunpack.c.l.b16 %v944
      %v977 = vunpack.c.l.b16 %v945
      %v978 = vunpack.c.l.b16 %v946
      %v979 = vunpack.c.l.b16 %v947
      %v980 = vunpack.c.l.b16 %v948
      %v981 = vunpack.c.l.b16 %v949
      %v982 = vunpack.c.l.b16 %v950
      %v983 = vpack.c.b16 %v968, %v967
      %v984 = vpack.c.b16 %v970, %v969
      %v985 = vpack.c.b16 %v972, %v971
      %v986 = vpack.c.b16 %v974, %v973
      %v987 = vpack.c.b16 %v976, %v975
      %v988 = vpack.c.b16 %v978, %v977
      %v989 = vpack.c.b16 %v980, %v979
      %v990 = vpack.c.b16 %v982, %v981
      %999 = vmatprep.subr.bf16.mxu0 0
      %1000 = vmatpush1.bf16.msra.mxu0 %v983
      %1001 = vmatprep.subr.bf16.mxu0 0
      %1002 = vmatpush1.bf16.msra.mxu0 %v984
      %1003 = vmatprep.subr.bf16.mxu0 0
      %1004 = vmatpush1.bf16.msra.mxu0 %v985
      %1005 = vmatprep.subr.bf16.mxu0 0
      %1006 = vmatpush1.bf16.msra.mxu0 %v986
      %1007 = vmatprep.subr.bf16.mxu0 0
      %1008 = vmatpush1.bf16.msra.mxu0 %v987
      %1009 = vmatprep.subr.bf16.mxu0 0
      %1010 = vmatpush1.bf16.msra.mxu0 %v988
      %1011 = vmatprep.subr.bf16.mxu0 0
      %1012 = vmatpush1.bf16.msra.mxu0 %v989
      %1013 = vmatprep.subr.bf16.mxu0 0
      %1014 = vmatpush1.bf16.msra.mxu0 %v990
      %1015 = vmatprep.subr.bf16.mxu0 0
      %1016 = vmatpush1.bf16.msra.mxu0 0
      %1017 = vmatprep.subr.bf16.mxu0 0
      %1018 = vmatpush1.bf16.msra.mxu0 0
      %1019 = vmatprep.subr.bf16.mxu0 0
      %1020 = vmatpush1.bf16.msra.mxu0 0
      %1021 = vmatprep.subr.bf16.mxu0 0
      %1022 = vmatpush1.bf16.msra.mxu0 0
      %1023 = vmatprep.subr.bf16.mxu0 0
      %1024 = vmatpush1.bf16.msra.mxu0 0
      %1025 = vmatprep.subr.bf16.mxu0 0
      %1026 = vmatpush1.bf16.msra.mxu0 0
      %1027 = vmatprep.subr.bf16.mxu0 0
      %1028 = vmatpush1.bf16.msra.mxu0 0
      %1029 = vmatprep.subr.bf16.mxu0 0
      %1030 = vmatpush1.bf16.msra.mxu0 0
      %1031 = vmatprep.mubr.bf16.mxu0 0
      %1032 = vmatmul.mubr.bf16.gmra.mrb[0].mxu0 %v934
      %v1033 = vpop.f32.mrb[0].mxu0
      %v1034 = vadd.f32 0.0, %v1033
      %v1035 = vpop.f32.mrb[0].mxu0
      %v1036 = vpop.f32.mrb[0].mxu0
      %v1037 = vadd.f32 0.0, %v1036
      %v1038 = vpop.f32.mrb[0].mxu0
      %1039 = vdwg.mxu0
      %v1040 = vld [vmem:[%s8] sm:$0x1]
      %v1042 = vlaneseq
      %v1043 = vshrl.u32 %v1042, 7
      %v1044 = vsub.s32 0, %v1043
      %v1045 = vrot.slane %v1040, %v1044
      %v1047 = vmul.f32 %v1034, %v1045
      %v1048 = vmul.f32 %v1037, %v1045
      %v1049 = vld [vmem:[%s9] sm:$0x1]
      %v1051 = vlaneseq
      %v1052 = vshrl.u32 %v1051, 7
      %v1053 = vsub.s32 0, %v1052
      %v1054 = vrot.slane %v1049, %v1053
      %v1056 = vadd.f32 %v1047, %v1054
      %v1057 = vadd.f32 %v1048, %v1054
      %v1058 = vunpack.c.l.bf16 %v361
      %v1059 = vunpack.c.l.bf16 %v362
      %v1060 = vunpack.c.l.bf16 %v363
      %v1061 = vunpack.c.l.bf16 %v364
      %v1062 = vadd.f32 %v1058, %v1060
      %v1063 = vadd.f32 %v1059, %v1061
      %v1064 = vmul.f32 %v1062, 0.5
      %v1065 = vmul.f32 %v1063, 0.5
      %v1066 = vadd.f32 %v1056, %v1064
      %v1067 = vadd.f32 %v1057, %v1065
      %v1068 = vmax.f32 %v1066, 0.0
      %v1069 = vmax.f32 %v1067, 0.0
      %v1070 = vpack.c.bf16 %v1069, %v1068
      %v1072 = vunpack.c.l.b16 %v1070
      %v1073 = vunpack.c.h.b16 %v1070
      %v1074 = vpack.c.b16 %v1072, %v1072
      %v1075 = vpack.c.b16 %v1073, %v1073
      %1078 = vst [vmem:[%s359] sm:$0xf] %v1074
      %1079 = vst [vmem:[%s359 + $0x4] sm:$0xf] %v1075
      %p1080 = scmp.lt.s32.totalorder %s21, 1
      %s1081 = scalar_select %p1080, %s21, 1
      %s1082 = smul.addr %s1081, 2
      %s1083 = smul.addr %s1082, 4
      %s1084 = scalar_lea.vmem %s10, %s1083
      // Predicated region
      $region61: #{xrespool_forward.10} parent=59 // pred_check
        %p1085 = pneg %p254
      $region62: #{xrespool_forward.10} parent=59 // pred_check_branch
        %1087 = sbr.rel (%p1085) target = $region64
      $region63: #{xrespool_forward.10} parent=59 // pred_region
        _
      $region64: #{xrespool_forward.10} parent=59 // pred_fallthru
        _
    $region60: #{xrespool_forward.10} parent=5 // pred_fallthru
      _
    %p1088 = scmp.le.s32.totalorder 2, %s16
    // Predicated region
    $region65: #{xrespool_forward.10} parent=5 // pred_check
      %p1089 = pneg %p1088
    $region66: #{xrespool_forward.10} parent=5 // pred_check_branch
      %1091 = sbr.rel (%p1089) target = $region68
    $region67: #{xrespool_forward.10} parent=5 // pred_region
      %s1092 = ssub.s32 %s16, 2
      // Predicated region
      $region69: #{xrespool_forward.10} parent=67 // pred_check
        %p1093 = pneg %p260
      $region70: #{xrespool_forward.10} parent=67 // pred_check_branch
        %1095 = sbr.rel (%p1093) target = $region72
      $region71: #{xrespool_forward.10} parent=67 // pred_region
        %p1096 = scmp.lt.s32.totalorder %s22, 1
        %s1097 = scalar_select %p1096, %s22, 1
        %s1098 = smul.addr %s1097, 2
        %s1099 = smul.addr %s1098, 4
        %s1100 = scalar_lea.vmem %s10, %s1099
      $region72: #{xrespool_forward.10} parent=67 // pred_fallthru
        _
    $region68: #{xrespool_forward.10} parent=5 // pred_fallthru
      _
  $region6: #{xrespool_forward.10} parent=0 // loop_footer
    %s20 = sadd.s32 1, %s16
  $region7: #{xrespool_forward.10} parent=0 // loop_footer_branch
    %15 = sbr.rel target = $region3
  $region8: #{xrespool_forward.10} parent=0 // loop_exit
    _

// kernel: xrespool_forward.9
$region0: #{xrespool_forward.9}
  #allocation0 [shape = 'u32[]', space=smem, size = 0x4, offset = 0x4, fixed_abs, tag = 'smem constant byte address 0x4 - core index']
  #allocation1 [shape = 'u32[144,128]{1,0:T(1,128)}', space=vmem, size = 0x12000, scoped, tag = 'internal scratch']
  #allocation2 [shape = 'bf16[56,128]{1,0:T(8,128)(2,1)}', space=vmem, size = 0x3800, scoped, tag = 'scratch operand']
  %s0 = inlined_call_operand.vmem [shape: bf16[2,32,128], index: 0, kind: input, shape index: {}]
  %s1 = inlined_call_operand.vmem [shape: bf16[128,128], index: 1, kind: input, shape index: {}]
  %s2 = inlined_call_operand.vmem [shape: f32[1,128], index: 2, kind: input, shape index: {}]
  %s3 = inlined_call_operand.vmem [shape: f32[1,128], index: 3, kind: input, shape index: {}]
  %s4 = inlined_call_operand.vmem [shape: bf16[3,128,128], index: 4, kind: input, shape index: {}]
  %s5 = inlined_call_operand.vmem [shape: f32[1,128], index: 5, kind: input, shape index: {}]
  %s6 = inlined_call_operand.vmem [shape: f32[1,128], index: 6, kind: input, shape index: {}]
  %s7 = inlined_call_operand.vmem [shape: bf16[128,128], index: 7, kind: input, shape index: {}]
  %s8 = inlined_call_operand.vmem [shape: f32[1,128], index: 8, kind: input, shape index: {}]
  %s9 = inlined_call_operand.vmem [shape: f32[1,128], index: 9, kind: input, shape index: {}]
  %s10 = inlined_call_operand.vmem [shape: bf16[128,128], index: 10, kind: input, shape index: {}]
  %s11 = inlined_call_operand.vmem [shape: f32[1,128], index: 11, kind: input, shape index: {}]
  %s12 = inlined_call_operand.vmem [shape: f32[1,128], index: 12, kind: input, shape index: {}]
  %s13 = inlined_call_operand.vmem [shape: bf16[2,32,128], index: 13, kind: output, shape index: {}]
  %s14 = sld [smem:[#allocation0]]
  $region85: #{xrespool_forward.9} parent=0
    _
  %s16 = ssub.s32 1, %s14
  %s17 = scalar_select 0, %s16, %s14
  loop: start=0, step=1, limit=4
  $region2: #{xrespool_forward.9} parent=0 // loop_pre_header
    _
  $region3: #{xrespool_forward.9} parent=0 // loop_header
    %s19 = sphi 0, %s23
    %p20 = scmp.ge.s32.totalorder %s19, 4
    %s29 = sphi 0, %s31
    %s32 = sphi 0, %s29
    %s33 = sphi 0, %s32
    %s49 = sphi 0, %s33
    %s53 = sphi 0, %s53
    %s55 = sphi 0, %s53
    %s56 = sphi 0, %s55
    %s70 = sphi 0, %s56
    %s74 = sphi 0, %s74
    %s76 = sphi 0, %s74
    %s77 = sphi 0, %s76
    %s91 = sphi 0, %s77
    %s95 = sphi 0, %s95
    %s97 = sphi 0, %s95
    %s98 = sphi 0, %s97
    %s112 = sphi 0, %s98
    %s116 = sphi 0, %s116
    %s118 = sphi 0, %s116
    %s119 = sphi 0, %s118
    %s133 = sphi 0, %s119
    %s137 = sphi 0, %s137
    %s139 = sphi 0, %s137
    %s140 = sphi 0, %s139
    %s154 = sphi 0, %s140
    %s158 = sphi 0, %s158
    %s160 = sphi 0, %s158
    %s161 = sphi 0, %s160
    %s175 = sphi 0, %s161
    %s179 = sphi 0, %s179
    %s181 = sphi 0, %s179
    %s182 = sphi 0, %s181
    %s196 = sphi 0, %s182
    %s200 = sphi 0, %s200
    %s202 = sphi 0, %s200
    %s203 = sphi 0, %s202
    %s217 = sphi 0, %s203
    %s221 = sphi 0, %s221
    %s223 = sphi 0, %s221
    %s224 = sphi 0, %s223
    %s238 = sphi 0, %s224
    %s242 = sphi 0, %s242
    %s244 = sphi 0, %s242
    %s245 = sphi 0, %s244
    %s259 = sphi 0, %s245
    %s263 = sphi 0, %s263
    %s265 = sphi 0, %s263
    %s266 = sphi 0, %s265
    %s280 = sphi 0, %s266
    %s284 = sphi 0, %s284
    %s286 = sphi 0, %s284
    %s287 = sphi 0, %s286
    %s301 = sphi 0, %s287
    %s307 = sphi 0, %s309
    %s310 = sphi 0, %s307
    %s311 = sphi 0, %s310
    %s327 = sphi 0, %s311
  $region4: #{xrespool_forward.9} parent=0 // loop_header_branch
    %22 = sbr.rel (%p20) target = $region8
  $region5: #{xrespool_forward.9} parent=0 // loop_body
    %s24 = ssub.s32 %s19, 1
    %s25 = ssub.s32 %s19, 2
    %s26 = sadd.s32 %s19, 1
    %s27 = ssub.s32 %s19, %s26
    %p28 = scmp.eq.s32.totalorder %s27, 0
    %s30 = sadd.s32 %s29, 1
    %s31 = scalar_select %p28, %s29, %s30
    %p34 = pneg %p28
    %p35 = scmp.eq.s32.totalorder %s19, 1
    %p36 = por %p34, %p35
    %p37 = scmp.ne.s32.totalorder %s29, %s32
    %p38 = scmp.eq.s32.totalorder %s19, 0
    %p39 = por %p37, %p38
    %p40 = scmp.ne.s32.totalorder %s29, %s32
    %p41 = scmp.eq.s32.totalorder %s24, 1
    %p42 = por %p40, %p41
    %p43 = scmp.ne.s32.totalorder %s32, %s33
    %p44 = scmp.eq.s32.totalorder %s24, 0
    %p45 = por %p43, %p44
    %p46 = scmp.ne.s32.totalorder %s32, %s33
    %p47 = scmp.eq.s32.totalorder %s25, 1
    %p48 = por %p46, %p47
    %p50 = scmp.ne.s32.totalorder %s33, %s49
    %p51 = scmp.eq.s32.totalorder %s25, 0
    %p52 = por %p50, %p51
    %s54 = sadd.s32 %s53, 1
    %p57 = scmp.eq.s32.totalorder %s19, 1
    %p58 = scmp.ne.s32.totalorder %s53, %s55
    %p59 = scmp.eq.s32.totalorder %s19, 0
    %p60 = por %p58, %p59
    %p61 = scmp.ne.s32.totalorder %s53, %s55
    %p62 = scmp.eq.s32.totalorder %s24, 1
    %p63 = por %p61, %p62
    %p64 = scmp.ne.s32.totalorder %s55, %s56
    %p65 = scmp.eq.s32.totalorder %s24, 0
    %p66 = por %p64, %p65
    %p67 = scmp.ne.s32.totalorder %s55, %s56
    %p68 = scmp.eq.s32.totalorder %s25, 1
    %p69 = por %p67, %p68
    %p71 = scmp.ne.s32.totalorder %s56, %s70
    %p72 = scmp.eq.s32.totalorder %s25, 0
    %p73 = por %p71, %p72
    %s75 = sadd.s32 %s74, 1
    %p78 = scmp.eq.s32.totalorder %s19, 1
    %p79 = scmp.ne.s32.totalorder %s74, %s76
    %p80 = scmp.eq.s32.totalorder %s19, 0
    %p81 = por %p79, %p80
    %p82 = scmp.ne.s32.totalorder %s74, %s76
    %p83 = scmp.eq.s32.totalorder %s24, 1
    %p84 = por %p82, %p83
    %p85 = scmp.ne.s32.totalorder %s76, %s77
    %p86 = scmp.eq.s32.totalorder %s24, 0
    %p87 = por %p85, %p86
    %p88 = scmp.ne.s32.totalorder %s76, %s77
    %p89 = scmp.eq.s32.totalorder %s25, 1
    %p90 = por %p88, %p89
    %p92 = scmp.ne.s32.totalorder %s77, %s91
    %p93 = scmp.eq.s32.totalorder %s25, 0
    %p94 = por %p92, %p93
    %s96 = sadd.s32 %s95, 1
    %p99 = scmp.eq.s32.totalorder %s19, 1
    %p100 = scmp.ne.s32.totalorder %s95, %s97
    %p101 = scmp.eq.s32.totalorder %s19, 0
    %p102 = por %p100, %p101
    %p103 = scmp.ne.s32.totalorder %s95, %s97
    %p104 = scmp.eq.s32.totalorder %s24, 1
    %p105 = por %p103, %p104
    %p106 = scmp.ne.s32.totalorder %s97, %s98
    %p107 = scmp.eq.s32.totalorder %s24, 0
    %p108 = por %p106, %p107
    %p109 = scmp.ne.s32.totalorder %s97, %s98
    %p110 = scmp.eq.s32.totalorder %s25, 1
    %p111 = por %p109, %p110
    %p113 = scmp.ne.s32.totalorder %s98, %s112
    %p114 = scmp.eq.s32.totalorder %s25, 0
    %p115 = por %p113, %p114
    %s117 = sadd.s32 %s116, 1
    %p120 = scmp.eq.s32.totalorder %s19, 1
    %p121 = scmp.ne.s32.totalorder %s116, %s118
    %p122 = scmp.eq.s32.totalorder %s19, 0
    %p123 = por %p121, %p122
    %p124 = scmp.ne.s32.totalorder %s116, %s118
    %p125 = scmp.eq.s32.totalorder %s24, 1
    %p126 = por %p124, %p125
    %p127 = scmp.ne.s32.totalorder %s118, %s119
    %p128 = scmp.eq.s32.totalorder %s24, 0
    %p129 = por %p127, %p128
    %p130 = scmp.ne.s32.totalorder %s118, %s119
    %p131 = scmp.eq.s32.totalorder %s25, 1
    %p132 = por %p130, %p131
    %p134 = scmp.ne.s32.totalorder %s119, %s133
    %p135 = scmp.eq.s32.totalorder %s25, 0
    %p136 = por %p134, %p135
    %s138 = sadd.s32 %s137, 1
    %p141 = scmp.eq.s32.totalorder %s19, 1
    %p142 = scmp.ne.s32.totalorder %s137, %s139
    %p143 = scmp.eq.s32.totalorder %s19, 0
    %p144 = por %p142, %p143
    %p145 = scmp.ne.s32.totalorder %s137, %s139
    %p146 = scmp.eq.s32.totalorder %s24, 1
    %p147 = por %p145, %p146
    %p148 = scmp.ne.s32.totalorder %s139, %s140
    %p149 = scmp.eq.s32.totalorder %s24, 0
    %p150 = por %p148, %p149
    %p151 = scmp.ne.s32.totalorder %s139, %s140
    %p152 = scmp.eq.s32.totalorder %s25, 1
    %p153 = por %p151, %p152
    %p155 = scmp.ne.s32.totalorder %s140, %s154
    %p156 = scmp.eq.s32.totalorder %s25, 0
    %p157 = por %p155, %p156
    %s159 = sadd.s32 %s158, 1
    %p162 = scmp.eq.s32.totalorder %s19, 1
    %p163 = scmp.ne.s32.totalorder %s158, %s160
    %p164 = scmp.eq.s32.totalorder %s19, 0
    %p165 = por %p163, %p164
    %p166 = scmp.ne.s32.totalorder %s158, %s160
    %p167 = scmp.eq.s32.totalorder %s24, 1
    %p168 = por %p166, %p167
    %p169 = scmp.ne.s32.totalorder %s160, %s161
    %p170 = scmp.eq.s32.totalorder %s24, 0
    %p171 = por %p169, %p170
    %p172 = scmp.ne.s32.totalorder %s160, %s161
    %p173 = scmp.eq.s32.totalorder %s25, 1
    %p174 = por %p172, %p173
    %p176 = scmp.ne.s32.totalorder %s161, %s175
    %p177 = scmp.eq.s32.totalorder %s25, 0
    %p178 = por %p176, %p177
    %s180 = sadd.s32 %s179, 1
    %p183 = scmp.eq.s32.totalorder %s19, 1
    %p184 = scmp.ne.s32.totalorder %s179, %s181
    %p185 = scmp.eq.s32.totalorder %s19, 0
    %p186 = por %p184, %p185
    %p187 = scmp.ne.s32.totalorder %s179, %s181
    %p188 = scmp.eq.s32.totalorder %s24, 1
    %p189 = por %p187, %p188
    %p190 = scmp.ne.s32.totalorder %s181, %s182
    %p191 = scmp.eq.s32.totalorder %s24, 0
    %p192 = por %p190, %p191
    %p193 = scmp.ne.s32.totalorder %s181, %s182
    %p194 = scmp.eq.s32.totalorder %s25, 1
    %p195 = por %p193, %p194
    %p197 = scmp.ne.s32.totalorder %s182, %s196
    %p198 = scmp.eq.s32.totalorder %s25, 0
    %p199 = por %p197, %p198
    %s201 = sadd.s32 %s200, 1
    %p204 = scmp.eq.s32.totalorder %s19, 1
    %p205 = scmp.ne.s32.totalorder %s200, %s202
    %p206 = scmp.eq.s32.totalorder %s19, 0
    %p207 = por %p205, %p206
    %p208 = scmp.ne.s32.totalorder %s200, %s202
    %p209 = scmp.eq.s32.totalorder %s24, 1
    %p210 = por %p208, %p209
    %p211 = scmp.ne.s32.totalorder %s202, %s203
    %p212 = scmp.eq.s32.totalorder %s24, 0
    %p213 = por %p211, %p212
    %p214 = scmp.ne.s32.totalorder %s202, %s203
    %p215 = scmp.eq.s32.totalorder %s25, 1
    %p216 = por %p214, %p215
    %p218 = scmp.ne.s32.totalorder %s203, %s217
    %p219 = scmp.eq.s32.totalorder %s25, 0
    %p220 = por %p218, %p219
    %s222 = sadd.s32 %s221, 1
    %p225 = scmp.eq.s32.totalorder %s19, 1
    %p226 = scmp.ne.s32.totalorder %s221, %s223
    %p227 = scmp.eq.s32.totalorder %s19, 0
    %p228 = por %p226, %p227
    %p229 = scmp.ne.s32.totalorder %s221, %s223
    %p230 = scmp.eq.s32.totalorder %s24, 1
    %p231 = por %p229, %p230
    %p232 = scmp.ne.s32.totalorder %s223, %s224
    %p233 = scmp.eq.s32.totalorder %s24, 0
    %p234 = por %p232, %p233
    %p235 = scmp.ne.s32.totalorder %s223, %s224
    %p236 = scmp.eq.s32.totalorder %s25, 1
    %p237 = por %p235, %p236
    %p239 = scmp.ne.s32.totalorder %s224, %s238
    %p240 = scmp.eq.s32.totalorder %s25, 0
    %p241 = por %p239, %p240
    %s243 = sadd.s32 %s242, 1
    %p246 = scmp.eq.s32.totalorder %s19, 1
    %p247 = scmp.ne.s32.totalorder %s242, %s244
    %p248 = scmp.eq.s32.totalorder %s19, 0
    %p249 = por %p247, %p248
    %p250 = scmp.ne.s32.totalorder %s242, %s244
    %p251 = scmp.eq.s32.totalorder %s24, 1
    %p252 = por %p250, %p251
    %p253 = scmp.ne.s32.totalorder %s244, %s245
    %p254 = scmp.eq.s32.totalorder %s24, 0
    %p255 = por %p253, %p254
    %p256 = scmp.ne.s32.totalorder %s244, %s245
    %p257 = scmp.eq.s32.totalorder %s25, 1
    %p258 = por %p256, %p257
    %p260 = scmp.ne.s32.totalorder %s245, %s259
    %p261 = scmp.eq.s32.totalorder %s25, 0
    %p262 = por %p260, %p261
    %s264 = sadd.s32 %s263, 1
    %p267 = scmp.eq.s32.totalorder %s19, 1
    %p268 = scmp.ne.s32.totalorder %s263, %s265
    %p269 = scmp.eq.s32.totalorder %s19, 0
    %p270 = por %p268, %p269
    %p271 = scmp.ne.s32.totalorder %s263, %s265
    %p272 = scmp.eq.s32.totalorder %s24, 1
    %p273 = por %p271, %p272
    %p274 = scmp.ne.s32.totalorder %s265, %s266
    %p275 = scmp.eq.s32.totalorder %s24, 0
    %p276 = por %p274, %p275
    %p277 = scmp.ne.s32.totalorder %s265, %s266
    %p278 = scmp.eq.s32.totalorder %s25, 1
    %p279 = por %p277, %p278
    %p281 = scmp.ne.s32.totalorder %s266, %s280
    %p282 = scmp.eq.s32.totalorder %s25, 0
    %p283 = por %p281, %p282
    %s285 = sadd.s32 %s284, 1
    %p288 = scmp.eq.s32.totalorder %s19, 1
    %p289 = scmp.ne.s32.totalorder %s284, %s286
    %p290 = scmp.eq.s32.totalorder %s19, 0
    %p291 = por %p289, %p290
    %p292 = scmp.ne.s32.totalorder %s284, %s286
    %p293 = scmp.eq.s32.totalorder %s24, 1
    %p294 = por %p292, %p293
    %p295 = scmp.ne.s32.totalorder %s286, %s287
    %p296 = scmp.eq.s32.totalorder %s24, 0
    %p297 = por %p295, %p296
    %p298 = scmp.ne.s32.totalorder %s286, %s287
    %p299 = scmp.eq.s32.totalorder %s25, 1
    %p300 = por %p298, %p299
    %p302 = scmp.ne.s32.totalorder %s287, %s301
    %p303 = scmp.eq.s32.totalorder %s25, 0
    %p304 = por %p302, %p303
    %s305 = ssub.s32 %s19, %s26
    %p306 = scmp.eq.s32.totalorder %s305, 0
    %s308 = sadd.s32 %s307, 1
    %s309 = scalar_select %p306, %s307, %s308
    %p312 = pneg %p306
    %p313 = scmp.eq.s32.totalorder %s19, 1
    %p314 = por %p312, %p313
    %p315 = scmp.ne.s32.totalorder %s307, %s310
    %p316 = scmp.eq.s32.totalorder %s19, 0
    %p317 = por %p315, %p316
    %p318 = scmp.ne.s32.totalorder %s307, %s310
    %p319 = scmp.eq.s32.totalorder %s24, 1
    %p320 = por %p318, %p319
    %p321 = scmp.ne.s32.totalorder %s310, %s311
    %p322 = scmp.eq.s32.totalorder %s24, 0
    %p323 = por %p321, %p322
    %p324 = scmp.ne.s32.totalorder %s310, %s311
    %p325 = scmp.eq.s32.totalorder %s25, 1
    %p326 = por %p324, %p325
    %p328 = scmp.ne.s32.totalorder %s311, %s327
    %p329 = scmp.eq.s32.totalorder %s25, 0
    %p330 = por %p328, %p329
    %p331 = scmp.le.s32.totalorder 1, %s19
    %p332 = scmp.lt.s32.totalorder %s19, 3
    %p333 = pnand %p331, %p332
    %p334 = pneg %p333
    // Predicated region
    $region9: #{xrespool_forward.9} parent=5 // pred_check
      _
    $region10: #{xrespool_forward.9} parent=5 // pred_check_branch
      %336 = sbr.rel (%p333) target = $region12
    $region11: #{xrespool_forward.9} parent=5 // pred_region
      %s337 = ssub.s32 %s19, 1
      // Predicated region
      $region13: #{xrespool_forward.9} parent=11 // pred_check
        %p338 = pneg %p66
      $region14: #{xrespool_forward.9} parent=11 // pred_check_branch
        %340 = sbr.rel (%p338) target = $region16
      $region15: #{xrespool_forward.9} parent=11 // pred_region
        _
      $region16: #{xrespool_forward.9} parent=11 // pred_fallthru
        _
      // Predicated region
      $region17: #{xrespool_forward.9} parent=11 // pred_check
        %p341 = pneg %p87
      $region18: #{xrespool_forward.9} parent=11 // pred_check_branch
        %343 = sbr.rel (%p341) target = $region20
      $region19: #{xrespool_forward.9} parent=11 // pred_region
        _
      $region20: #{xrespool_forward.9} parent=11 // pred_fallthru
        _
      // Predicated region
      $region21: #{xrespool_forward.9} parent=11 // pred_check
        %p344 = pneg %p108
      $region22: #{xrespool_forward.9} parent=11 // pred_check_branch
        %346 = sbr.rel (%p344) target = $region24
      $region23: #{xrespool_forward.9} parent=11 // pred_region
        _
      $region24: #{xrespool_forward.9} parent=11 // pred_fallthru
        _
      // Predicated region
      $region25: #{xrespool_forward.9} parent=11 // pred_check
        %p347 = pneg %p129
      $region26: #{xrespool_forward.9} parent=11 // pred_check_branch
        %349 = sbr.rel (%p347) target = $region28
      $region27: #{xrespool_forward.9} parent=11 // pred_region
        _
      $region28: #{xrespool_forward.9} parent=11 // pred_fallthru
        _
      // Predicated region
      $region29: #{xrespool_forward.9} parent=11 // pred_check
        %p350 = pneg %p150
      $region30: #{xrespool_forward.9} parent=11 // pred_check_branch
        %352 = sbr.rel (%p350) target = $region32
      $region31: #{xrespool_forward.9} parent=11 // pred_region
        _
      $region32: #{xrespool_forward.9} parent=11 // pred_fallthru
        _
      // Predicated region
      $region33: #{xrespool_forward.9} parent=11 // pred_check
        %p353 = pneg %p171
      $region34: #{xrespool_forward.9} parent=11 // pred_check_branch
        %355 = sbr.rel (%p353) target = $region36
      $region35: #{xrespool_forward.9} parent=11 // pred_region
        _
      $region36: #{xrespool_forward.9} parent=11 // pred_fallthru
        _
      // Predicated region
      $region37: #{xrespool_forward.9} parent=11 // pred_check
        %p356 = pneg %p192
      $region38: #{xrespool_forward.9} parent=11 // pred_check_branch
        %358 = sbr.rel (%p356) target = $region40
      $region39: #{xrespool_forward.9} parent=11 // pred_region
        _
      $region40: #{xrespool_forward.9} parent=11 // pred_fallthru
        _
      // Predicated region
      $region41: #{xrespool_forward.9} parent=11 // pred_check
        %p359 = pneg %p213
      $region42: #{xrespool_forward.9} parent=11 // pred_check_branch
        %361 = sbr.rel (%p359) target = $region44
      $region43: #{xrespool_forward.9} parent=11 // pred_region
        _
      $region44: #{xrespool_forward.9} parent=11 // pred_fallthru
        _
      // Predicated region
      $region45: #{xrespool_forward.9} parent=11 // pred_check
        %p362 = pneg %p234
      $region46: #{xrespool_forward.9} parent=11 // pred_check_branch
        %364 = sbr.rel (%p362) target = $region48
      $region47: #{xrespool_forward.9} parent=11 // pred_region
        _
      $region48: #{xrespool_forward.9} parent=11 // pred_fallthru
        _
      // Predicated region
      $region49: #{xrespool_forward.9} parent=11 // pred_check
        %p365 = pneg %p255
      $region50: #{xrespool_forward.9} parent=11 // pred_check_branch
        %367 = sbr.rel (%p365) target = $region52
      $region51: #{xrespool_forward.9} parent=11 // pred_region
        _
      $region52: #{xrespool_forward.9} parent=11 // pred_fallthru
        _
      // Predicated region
      $region53: #{xrespool_forward.9} parent=11 // pred_check
        %p368 = pneg %p276
      $region54: #{xrespool_forward.9} parent=11 // pred_check_branch
        %370 = sbr.rel (%p368) target = $region56
      $region55: #{xrespool_forward.9} parent=11 // pred_region
        _
      $region56: #{xrespool_forward.9} parent=11 // pred_fallthru
        _
      // Predicated region
      $region57: #{xrespool_forward.9} parent=11 // pred_check
        %p371 = pneg %p297
      $region58: #{xrespool_forward.9} parent=11 // pred_check_branch
        %373 = sbr.rel (%p371) target = $region60
      $region59: #{xrespool_forward.9} parent=11 // pred_region
        _
      $region60: #{xrespool_forward.9} parent=11 // pred_fallthru
        _
    $region12: #{xrespool_forward.9} parent=5 // pred_fallthru
      _
    %p374 = scmp.lt.s32.totalorder %s19, 2
    // Predicated region
    $region61: #{xrespool_forward.9} parent=5 // pred_check
      %p375 = pneg %p374
    $region62: #{xrespool_forward.9} parent=5 // pred_check_branch
      %377 = sbr.rel (%p375) target = $region64
    $region63: #{xrespool_forward.9} parent=5 // pred_region
      // Predicated region
      $region65: #{xrespool_forward.9} parent=63 // pred_check
        %p378 = pneg %p39
      $region66: #{xrespool_forward.9} parent=63 // pred_check_branch
        %380 = sbr.rel (%p378) target = $region68
      $region67: #{xrespool_forward.9} parent=63 // pred_region
        %p381 = scmp.lt.s32.totalorder %s19, 1
        %s382 = scalar_select %p381, %s19, 1
        %s383 = smul.addr %s382, 4
        %s384 = smul.addr %s383, 4
        %s385 = scalar_lea.vmem %s0, %s384
      $region68: #{xrespool_forward.9} parent=63 // pred_fallthru
        _
    $region64: #{xrespool_forward.9} parent=5 // pred_fallthru
      _
    %p386 = scmp.le.s32.totalorder 1, %s19
    %p387 = scmp.lt.s32.totalorder %s19, 3
    %p388 = pnand %p386, %p387
    %p389 = pneg %p388
    // Predicated region
    $region69: #{xrespool_forward.9} parent=5 // pred_check
      _
    $region70: #{xrespool_forward.9} parent=5 // pred_check_branch
      %391 = sbr.rel (%p388) target = $region72
    $region71: #{xrespool_forward.9} parent=5 // pred_region
      %s392 = ssub.s32 %s19, 1
      %p393 = scmp.lt.s32.totalorder %s24, 1
      %s394 = scalar_select %p393, %s24, 1
      %s395 = smul.addr %s394, 4
      %s396 = smul.addr %s395, 4
      %s397 = scalar_lea.vmem %s0, %s396
      %p398 = pneg %p45
      %p399 = pneg %p42
      %p400 = pneg %p66
      %p401 = pneg %p63
      %p402 = pneg %p87
      %p403 = pneg %p84
      %p404 = pneg %p108
      %p405 = pneg %p105
      %p406 = pneg %p129
      %p407 = pneg %p126
      %p408 = pneg %p150
      %p409 = pneg %p147
      %p410 = pneg %p171
      %p411 = pneg %p168
      %p412 = pneg %p192
      %p413 = pneg %p189
      %p414 = pneg %p213
      %p415 = pneg %p210
      %p416 = pneg %p234
      %p417 = pneg %p231
      %p418 = pneg %p255
      %p419 = pneg %p252
      %p420 = pneg %p276
      %p421 = pneg %p273
      %p422 = pneg %p297
      %p423 = pneg %p294
      %p424 = pneg %p323
      %p425 = pneg %p320
      %p426 = scmp.lt.s32.totalorder %s24, 1
      %s427 = scalar_select %p426, %s24, 1
      %s428 = smul.addr %s427, 4
      %s429 = smul.addr %s428, 4
      %s430 = scalar_lea.vmem %s13, %s429
      %p431 = scmp.lt.s32.totalorder %s24, 1
      %s432 = scalar_select %p431, %s24, 1
      %s433 = smul.addr %s432, 4
      %s434 = smul.addr %s433, 4
      %s435 = scalar_lea.vmem %s0, %s434
      %p436 = scmp.lt.s32.totalorder %s24, 1
      %s437 = scalar_select %p436, %s24, 1
      %s438 = smul.addr %s437, 4
      %s439 = smul.addr %s438, 4
      %s440 = scalar_lea.vmem %s13, %s439
      %v442 = vld [vmem:[%s435] sm:$0xf]
      %v443 = vld [vmem:[%s435 + $0x4] sm:$0xf]
      %v444 = vld [vmem:[%s435 + $0x8] sm:$0xf]
      %v445 = vld [vmem:[%s435 + $0xc] sm:$0xf]
      %v446 = vld [vmem:[%s1] sm:$0xf]
      %v447 = vld [vmem:[%s1 + $0x4] sm:$0xf]
      %v448 = vld [vmem:[%s1 + $0x8] sm:$0xf]
      %v449 = vld [vmem:[%s1 + $0xc] sm:$0xf]
      %v450 = vld [vmem:[%s1 + $0x10] sm:$0xf]
      %v451 = vld [vmem:[%s1 + $0x14] sm:$0xf]
      %v452 = vld [vmem:[%s1 + $0x18] sm:$0xf]
      %v453 = vld [vmem:[%s1 + $0x1c] sm:$0xf]
      %v454 = vld [vmem:[%s1 + $0x20] sm:$0xf]
      %v455 = vld [vmem:[%s1 + $0x24] sm:$0xf]
      %v456 = vld [vmem:[%s1 + $0x28] sm:$0xf]
      %v457 = vld [vmem:[%s1 + $0x2c] sm:$0xf]
      %v458 = vld [vmem:[%s1 + $0x30] sm:$0xf]
      %v459 = vld [vmem:[%s1 + $0x34] sm:$0xf]
      %v460 = vld [vmem:[%s1 + $0x38] sm:$0xf]
      %v461 = vld [vmem:[%s1 + $0x3c] sm:$0xf]
      %v466 = vunpack.c.l.b16 %v442
      %v467 = vunpack.c.l.b16 %v443
      %v468 = vunpack.c.l.b16 %v444
      %v469 = vunpack.c.l.b16 %v445
      %v470 = vpack.c.b16 %v467, %v466
      %v471 = vpack.c.b16 %v469, %v468
      %v490 = vunpack.c.l.b16 %v446
      %v491 = vunpack.c.l.b16 %v447
      %v492 = vunpack.c.l.b16 %v448
      %v493 = vunpack.c.l.b16 %v449
      %v494 = vunpack.c.l.b16 %v450
      %v495 = vunpack.c.l.b16 %v451
      %v496 = vunpack.c.l.b16 %v452
      %v497 = vunpack.c.l.b16 %v453
      %v498 = vunpack.c.l.b16 %v454
      %v499 = vunpack.c.l.b16 %v455
      %v500 = vunpack.c.l.b16 %v456
      %v501 = vunpack.c.l.b16 %v457
      %v502 = vunpack.c.l.b16 %v458
      %v503 = vunpack.c.l.b16 %v459
      %v504 = vunpack.c.l.b16 %v460
      %v505 = vunpack.c.l.b16 %v461
      %v506 = vpack.c.b16 %v491, %v490
      %v507 = vpack.c.b16 %v493, %v492
      %v508 = vpack.c.b16 %v495, %v494
      %v509 = vpack.c.b16 %v497, %v496
      %v510 = vpack.c.b16 %v499, %v498
      %v511 = vpack.c.b16 %v501, %v500
      %v512 = vpack.c.b16 %v503, %v502
      %v513 = vpack.c.b16 %v505, %v504
      %522 = vmatprep.subr.bf16.mxu0 0
      %523 = vmatpush1.bf16.msra.mxu0 %v506
      %524 = vmatprep.subr.bf16.mxu0 0
      %525 = vmatpush1.bf16.msra.mxu0 %v507
      %526 = vmatprep.subr.bf16.mxu0 0
      %527 = vmatpush1.bf16.msra.mxu0 %v508
      %528 = vmatprep.subr.bf16.mxu0 0
      %529 = vmatpush1.bf16.msra.mxu0 %v509
      %530 = vmatprep.subr.bf16.mxu0 0
      %531 = vmatpush1.bf16.msra.mxu0 %v510
      %532 = vmatprep.subr.bf16.mxu0 0
      %533 = vmatpush1.bf16.msra.mxu0 %v511
      %534 = vmatprep.subr.bf16.mxu0 0
      %535 = vmatpush1.bf16.msra.mxu0 %v512
      %536 = vmatprep.subr.bf16.mxu0 0
      %537 = vmatpush1.bf16.msra.mxu0 %v513
      %538 = vmatprep.subr.bf16.mxu0 0
      %539 = vmatpush1.bf16.msra.mxu0 0
      %540 = vmatprep.subr.bf16.mxu0 0
      %541 = vmatpush1.bf16.msra.mxu0 0
      %542 = vmatprep.subr.bf16.mxu0 0
      %543 = vmatpush1.bf16.msra.mxu0 0
      %544 = vmatprep.subr.bf16.mxu0 0
      %545 = vmatpush1.bf16.msra.mxu0 0
      %546 = vmatprep.subr.bf16.mxu0 0
      %547 = vmatpush1.bf16.msra.mxu0 0
      %548 = vmatprep.subr.bf16.mxu0 0
      %549 = vmatpush1.bf16.msra.mxu0 0
      %550 = vmatprep.subr.bf16.mxu0 0
      %551 = vmatpush1.bf16.msra.mxu0 0
      %552 = vmatprep.subr.bf16.mxu0 0
      %553 = vmatpush1.bf16.msra.mxu0 0
      %554 = vmatprep.mubr.bf16.mxu0 0
      %555 = vmatmul.mubr.bf16.gmra.mrb[0].mxu0 %v470
      %v556 = vpop.f32.mrb[0].mxu0
      %v557 = vadd.f32 0.0, %v556
      %v558 = vpop.f32.mrb[0].mxu0
      %v559 = vpop.f32.mrb[0].mxu0
      %v560 = vadd.f32 0.0, %v559
      %v561 = vpop.f32.mrb[0].mxu0
      %562 = vmatprep.mubr.bf16.mxu0 0
      %563 = vmatmul.mubr.bf16.gmra.mrb[0].mxu0 %v471
      %v564 = vpop.f32.mrb[0].mxu0
      %v565 = vadd.f32 0.0, %v564
      %v566 = vpop.f32.mrb[0].mxu0
      %v567 = vpop.f32.mrb[0].mxu0
      %v568 = vadd.f32 0.0, %v567
      %v569 = vpop.f32.mrb[0].mxu0
      %570 = vdwg.mxu0
      %v571 = vld [vmem:[%s2] sm:$0x1]
      %v573 = vlaneseq
      %v574 = vshrl.u32 %v573, 7
      %v575 = vsub.s32 0, %v574
      %v576 = vrot.slane %v571, %v575
      %v578 = vmul.f32 %v557, %v576
      %v579 = vmul.f32 %v560, %v576
      %v580 = vmul.f32 %v565, %v576
      %v581 = vmul.f32 %v568, %v576
      %v582 = vld [vmem:[%s3] sm:$0x1]
      %v584 = vlaneseq
      %v585 = vshrl.u32 %v584, 7
      %v586 = vsub.s32 0, %v585
      %v587 = vrot.slane %v582, %v586
      %v589 = vadd.f32 %v578, %v587
      %v590 = vadd.f32 %v579, %v587
      %v591 = vadd.f32 %v580, %v587
      %v592 = vadd.f32 %v581, %v587
      %v593 = vmax.f32 %v589, 0.0
      %v594 = vmax.f32 %v590, 0.0
      %v595 = vmax.f32 %v591, 0.0
      %v596 = vmax.f32 %v592, 0.0
      %v597 = vpack.c.bf16 %v594, %v593
      %v598 = vpack.c.bf16 %v596, %v595
      %599 = vst [vmem:[#allocation2] sm:$0xf] 0
      %600 = vst [vmem:[#allocation2 + $0x4] sm:$0xf] 0
      %601 = vst [vmem:[#allocation2 + $0x8] sm:$0xf] 0
      %602 = vst [vmem:[#allocation2 + $0xc] sm:$0xf] 0
      %603 = vst [vmem:[#allocation2 + $0x10] sm:$0xf] 0
      %604 = vst [vmem:[#allocation2 + $0x14] sm:$0xf] 0
      %605 = vst [vmem:[#allocation2 + $0x18] sm:$0xf] 0
      %v608 = vunpack.c.l.b16 %v597
      %v609 = vunpack.c.h.b16 %v597
      %v610 = vunpack.c.l.b16 %v598
      %v611 = vunpack.c.h.b16 %v598
      %v612 = vpack.c.b16 %v608, %v608
      %v613 = vpack.c.b16 %v609, %v609
      %v614 = vpack.c.b16 %v610, %v610
      %v615 = vpack.c.b16 %v611, %v611
      %620 = vst [vmem:[#allocation2 + $0x8] sm:$0xf] %v612
      %621 = vst [vmem:[#allocation2 + $0xc] sm:$0xf] %v613
      %622 = vst [vmem:[#allocation2 + $0x10] sm:$0xf] %v614
      %623 = vst [vmem:[#allocation2 + $0x14] sm:$0xf] %v615
      %v624 = vld [vmem:[#allocation2 + $0x4] sm:$0x8]
      %v625 = vld [vmem:[#allocation2 + $0x8] sm:$0xf]
      %v626 = vld [vmem:[#allocation2 + $0xc] sm:$0xf]
      %v627 = vld [vmem:[#allocation2 + $0x10] sm:$0xf]
      %v628 = vld [vmem:[#allocation2 + $0x14] sm:$0xf]
      %v629 = vld [vmem:[%s4] sm:$0xf]
      %v630 = vld [vmem:[%s4 + $0x4] sm:$0xf]
      %v631 = vld [vmem:[%s4 + $0x8] sm:$0xf]
      %v632 = vld [vmem:[%s4 + $0xc] sm:$0xf]
      %v633 = vld [vmem:[%s4 + $0x10] sm:$0xf]
      %v634 = vld [vmem:[%s4 + $0x14] sm:$0xf]
      %v635 = vld [vmem:[%s4 + $0x18] sm:$0xf]
      %v636 = vld [vmem:[%s4 + $0x1c] sm:$0xf]
      %v637 = vld [vmem:[%s4 + $0x20] sm:$0xf]
      %v638 = vld [vmem:[%s4 + $0x24] sm:$0xf]
      %v639 = vld [vmem:[%s4 + $0x28] sm:$0xf]
      %v640 = vld [vmem:[%s4 + $0x2c] sm:$0xf]
      %v641 = vld [vmem:[%s4 + $0x30] sm:$0xf]
      %v642 = vld [vmem:[%s4 + $0x34] sm:$0xf]
      %v643 = vld [vmem:[%s4 + $0x38] sm:$0xf]
      %v644 = vld [vmem:[%s4 + $0x3c] sm:$0xf]
      %s645 = scalar_lea.vmem %s4, 64
      %v646 = vld [vmem:[%s645] sm:$0xf]
      %v647 = vld [vmem:[%s645 + $0x4] sm:$0xf]
      %v648 = vld [vmem:[%s645 + $0x8] sm:$0xf]
      %v649 = vld [vmem:[%s645 + $0xc] sm:$0xf]
      %v650 = vld [vmem:[%s645 + $0x10] sm:$0xf]
      %v651 = vld [vmem:[%s645 + $0x14] sm:$0xf]
      %v652 = vld [vmem:[%s645 + $0x18] sm:$0xf]
      %v653 = vld [vmem:[%s645 + $0x1c] sm:$0xf]
      %v654 = vld [vmem:[%s645 + $0x20] sm:$0xf]
      %v655 = vld [vmem:[%s645 + $0x24] sm:$0xf]
      %v656 = vld [vmem:[%s645 + $0x28] sm:$0xf]
      %v657 = vld [vmem:[%s645 + $0x2c] sm:$0xf]
      %v658 = vld [vmem:[%s645 + $0x30] sm:$0xf]
      %v659 = vld [vmem:[%s645 + $0x34] sm:$0xf]
      %v660 = vld [vmem:[%s645 + $0x38] sm:$0xf]
      %v661 = vld [vmem:[%s645 + $0x3c] sm:$0xf]
      %v666 = vunpack.c.l.b16 %v625
      %v667 = vunpack.c.l.b16 %v626
      %v668 = vunpack.c.l.b16 %v627
      %v669 = vunpack.c.l.b16 %v628
      %v670 = vpack.c.b16 %v667, %v666
      %v671 = vpack.c.b16 %v669, %v668
      %v690 = vunpack.c.l.b16 %v646
      %v691 = vunpack.c.l.b16 %v647
      %v692 = vunpack.c.l.b16 %v648
      %v693 = vunpack.c.l.b16 %v649
      %v694 = vunpack.c.l.b16 %v650
      %v695 = vunpack.c.l.b16 %v651
      %v696 = vunpack.c.l.b16 %v652
      %v697 = vunpack.c.l.b16 %v653
      %v698 = vunpack.c.l.b16 %v654
      %v699 = vunpack.c.l.b16 %v655
      %v700 = vunpack.c.l.b16 %v656
      %v701 = vunpack.c.l.b16 %v657
      %v702 = vunpack.c.l.b16 %v658
      %v703 = vunpack.c.l.b16 %v659
      %v704 = vunpack.c.l.b16 %v660
      %v705 = vunpack.c.l.b16 %v661
      %v706 = vpack.c.b16 %v691, %v690
      %v707 = vpack.c.b16 %v693, %v692
      %v708 = vpack.c.b16 %v695, %v694
      %v709 = vpack.c.b16 %v697, %v696
      %v710 = vpack.c.b16 %v699, %v698
      %v711 = vpack.c.b16 %v701, %v700
      %v712 = vpack.c.b16 %v703, %v702
      %v713 = vpack.c.b16 %v705, %v704
      %722 = vmatprep.subr.bf16.mxu0 0
      %723 = vmatpush1.bf16.msra.mxu0 %v706
      %724 = vmatprep.subr.bf16.mxu0 0
      %725 = vmatpush1.bf16.msra.mxu0 %v707
      %726 = vmatprep.subr.bf16.mxu0 0
      %727 = vmatpush1.bf16.msra.mxu0 %v708
      %728 = vmatprep.subr.bf16.mxu0 0
      %729 = vmatpush1.bf16.msra.mxu0 %v709
      %730 = vmatprep.subr.bf16.mxu0 0
      %731 = vmatpush1.bf16.msra.mxu0 %v710
      %732 = vmatprep.subr.bf16.mxu0 0
      %733 = vmatpush1.bf16.msra.mxu0 %v711
      %734 = vmatprep.subr.bf16.mxu0 0
      %735 = vmatpush1.bf16.msra.mxu0 %v712
      %736 = vmatprep.subr.bf16.mxu0 0
      %737 = vmatpush1.bf16.msra.mxu0 %v713
      %738 = vmatprep.subr.bf16.mxu0 0
      %739 = vmatpush1.bf16.msra.mxu0 0
      %740 = vmatprep.subr.bf16.mxu0 0
      %741 = vmatpush1.bf16.msra.mxu0 0
      %742 = vmatprep.subr.bf16.mxu0 0
      %743 = vmatpush1.bf16.msra.mxu0 0
      %744 = vmatprep.subr.bf16.mxu0 0
      %745 = vmatpush1.bf16.msra.mxu0 0
      %746 = vmatprep.subr.bf16.mxu0 0
      %747 = vmatpush1.bf16.msra.mxu0 0
      %748 = vmatprep.subr.bf16.mxu0 0
      %749 = vmatpush1.bf16.msra.mxu0 0
      %750 = vmatprep.subr.bf16.mxu0 0
      %751 = vmatpush1.bf16.msra.mxu0 0
      %752 = vmatprep.subr.bf16.mxu0 0
      %753 = vmatpush1.bf16.msra.mxu0 0
      %754 = vmatprep.mubr.bf16.mxu0 0
      %755 = vmatmul.mubr.bf16.gmra.mrb[0].mxu0 %v670
      %v756 = vpop.f32.mrb[0].mxu0
      %v757 = vadd.f32 0.0, %v756
      %v758 = vpop.f32.mrb[0].mxu0
      %v759 = vpop.f32.mrb[0].mxu0
      %v760 = vadd.f32 0.0, %v759
      %v761 = vpop.f32.mrb[0].mxu0
      %762 = vmatprep.mubr.bf16.mxu0 0
      %763 = vmatmul.mubr.bf16.gmra.mrb[0].mxu0 %v671
      %v764 = vpop.f32.mrb[0].mxu0
      %v765 = vadd.f32 0.0, %v764
      %v766 = vpop.f32.mrb[0].mxu0
      %v767 = vpop.f32.mrb[0].mxu0
      %v768 = vadd.f32 0.0, %v767
      %v769 = vpop.f32.mrb[0].mxu0
      %770 = vdwg.mxu0
      %v772 = vunpack.c.l.b16 %v624
      %v773 = vpack.c.b16 %v666, %v772
      %v774 = vpack.c.b16 %v668, %v667
      %v775 = vpack.c.b16 %v669, %v669
      %vm776 = vsmask.f32 4352
      %v778 = vshrl.u32 %v773, 16
      %v780 = vrot.slane %v778, 3
      %v781 = vshll.u32 %v773, 16
      %v783 = vrot.slane %v781, 4
      %v784 = vor.u32 %v780, %v783
      %v786 = vshrl.u32 %v774, 16
      %v788 = vrot.slane %v786, 3
      %v789 = vshll.u32 %v774, 16
      %v791 = vrot.slane %v789, 4
      %v792 = vor.u32 %v788, %v791
      %v793 = vsel %vm776, %v784, %v792
      %v795 = vshrl.u32 %v775, 16
      %v797 = vrot.slane %v795, 3
      %v798 = vshll.u32 %v775, 16
      %v800 = vrot.slane %v798, 4
      %v801 = vor.u32 %v797, %v800
      %v802 = vsel %vm776, %v792, %v801
      %v821 = vunpack.c.l.b16 %v629
      %v822 = vunpack.c.l.b16 %v630
      %v823 = vunpack.c.l.b16 %v631
      %v824 = vunpack.c.l.b16 %v632
      %v825 = vunpack.c.l.b16 %v633
      %v826 = vunpack.c.l.b16 %v634
      %v827 = vunpack.c.l.b16 %v635
      %v828 = vunpack.c.l.b16 %v636
      %v829 = vunpack.c.l.b16 %v637
      %v830 = vunpack.c.l.b16 %v638
      %v831 = vunpack.c.l.b16 %v639
      %v832 = vunpack.c.l.b16 %v640
      %v833 = vunpack.c.l.b16 %v641
      %v834 = vunpack.c.l.b16 %v642
      %v835 = vunpack.c.l.b16 %v643
      %v836 = vunpack.c.l.b16 %v644
      %v837 = vpack.c.b16 %v822, %v821
      %v838 = vpack.c.b16 %v824, %v823
      %v839 = vpack.c.b16 %v826, %v825
      %v840 = vpack.c.b16 %v828, %v827
      %v841 = vpack.c.b16 %v830, %v829
      %v842 = vpack.c.b16 %v832, %v831
      %v843 = vpack.c.b16 %v834, %v833
      %v844 = vpack.c.b16 %v836, %v835
      %853 = vmatprep.subr.bf16.mxu0 0
      %854 = vmatpush1.bf16.msra.mxu0 %v837
      %855 = vmatprep.subr.bf16.mxu0 0
      %856 = vmatpush1.bf16.msra.mxu0 %v838
      %857 = vmatprep.subr.bf16.mxu0 0
      %858 = vmatpush1.bf16.msra.mxu0 %v839
      %859 = vmatprep.subr.bf16.mxu0 0
      %860 = vmatpush1.bf16.msra.mxu0 %v840
      %861 = vmatprep.subr.bf16.mxu0 0
      %862 = vmatpush1.bf16.msra.mxu0 %v841
      %863 = vmatprep.subr.bf16.mxu0 0
      %864 = vmatpush1.bf16.msra.mxu0 %v842
      %865 = vmatprep.subr.bf16.mxu0 0
      %866 = vmatpush1.bf16.msra.mxu0 %v843
      %867 = vmatprep.subr.bf16.mxu0 0
      %868 = vmatpush1.bf16.msra.mxu0 %v844
      %869 = vmatprep.subr.bf16.mxu0 0
      %870 = vmatpush1.bf16.msra.mxu0 0
      %871 = vmatprep.subr.bf16.mxu0 0
      %872 = vmatpush1.bf16.msra.mxu0 0
      %873 = vmatprep.subr.bf16.mxu0 0
      %874 = vmatpush1.bf16.msra.mxu0 0
      %875 = vmatprep.subr.bf16.mxu0 0
      %876 = vmatpush1.bf16.msra.mxu0 0
      %877 = vmatprep.subr.bf16.mxu0 0
      %878 = vmatpush1.bf16.msra.mxu0 0
      %879 = vmatprep.subr.bf16.mxu0 0
      %880 = vmatpush1.bf16.msra.mxu0 0
      %881 = vmatprep.subr.bf16.mxu0 0
      %882 = vmatpush1.bf16.msra.mxu0 0
      %883 = vmatprep.subr.bf16.mxu0 0
      %884 = vmatpush1.bf16.msra.mxu0 0
      %885 = vmatprep.mubr.bf16.mxu0 0
      %886 = vmatmul.mubr.bf16.gmra.mrb[0].mxu0 %v793
      %v887 = vpop.f32.mrb[0].mxu0
      %v888 = vadd.f32 %v757, %v887
      %v889 = vpop.f32.mrb[0].mxu0
      %v890 = vpop.f32.mrb[0].mxu0
      %v891 = vadd.f32 %v760, %v890
      %v892 = vpop.f32.mrb[0].mxu0
      %893 = vmatprep.mubr.bf16.mxu0 0
      %894 = vmatmul.mubr.bf16.gmra.mrb[0].mxu0 %v802
      %v895 = vpop.f32.mrb[0].mxu0
      %v896 = vadd.f32 %v765, %v895
      %v897 = vpop.f32.mrb[0].mxu0
      %v898 = vpop.f32.mrb[0].mxu0
      %v899 = vadd.f32 %v768, %v898
      %v900 = vpop.f32.mrb[0].mxu0
      %901 = vdwg.mxu0
      %v902 = vld [vmem:[#allocation2 + $0x8] sm:$0xf]
      %v903 = vld [vmem:[#allocation2 + $0xc] sm:$0xf]
      %v904 = vld [vmem:[#allocation2 + $0x10] sm:$0xf]
      %v905 = vld [vmem:[#allocation2 + $0x14] sm:$0xf]
      %v906 = vld [vmem:[#allocation2 + $0x18] sm:$0x1]
      %s907 = scalar_lea.vmem %s4, 128
      %v908 = vld [vmem:[%s907] sm:$0xf]
      %v909 = vld [vmem:[%s907 + $0x4] sm:$0xf]
      %v910 = vld [vmem:[%s907 + $0x8] sm:$0xf]
      %v911 = vld [vmem:[%s907 + $0xc] sm:$0xf]
      %v912 = vld [vmem:[%s907 + $0x10] sm:$0xf]
      %v913 = vld [vmem:[%s907 + $0x14] sm:$0xf]
      %v914 = vld [vmem:[%s907 + $0x18] sm:$0xf]
      %v915 = vld [vmem:[%s907 + $0x1c] sm:$0xf]
      %v916 = vld [vmem:[%s907 + $0x20] sm:$0xf]
      %v917 = vld [vmem:[%s907 + $0x24] sm:$0xf]
      %v918 = vld [vmem:[%s907 + $0x28] sm:$0xf]
      %v919 = vld [vmem:[%s907 + $0x2c] sm:$0xf]
      %v920 = vld [vmem:[%s907 + $0x30] sm:$0xf]
      %v921 = vld [vmem:[%s907 + $0x34] sm:$0xf]
      %v922 = vld [vmem:[%s907 + $0x38] sm:$0xf]
      %v923 = vld [vmem:[%s907 + $0x3c] sm:$0xf]
      %v929 = vunpack.c.l.b16 %v902
      %v930 = vunpack.c.l.b16 %v903
      %v931 = vunpack.c.l.b16 %v904
      %v932 = vunpack.c.l.b16 %v905
      %v933 = vunpack.c.l.b16 %v906
      %v934 = vpack.c.b16 %v930, %v929
      %v935 = vpack.c.b16 %v932, %v931
      %v936 = vpack.c.b16 %v933, %v933
      %vm937 = vsmask.f32 7424
      %v939 = vshrl.u32 %v934, 16
      %v941 = vshll.u32 %v934, 16
      %v943 = vrot.slane %v941, 1
      %v944 = vor.u32 %v939, %v943
      %v946 = vshll.u32 %v935, 16
      %v948 = vrot.slane %v946, 1
      %v949 = vsel %vm937, %v944, %v948
      %v950 = vshrl.u32 %v935, 16
      %v952 = vor.u32 %v950, %v948
      %v954 = vshll.u32 %v936, 16
      %v956 = vrot.slane %v954, 1
      %v957 = vsel %vm937, %v952, %v956
      %v976 = vunpack.c.l.b16 %v908
      %v977 = vunpack.c.l.b16 %v909
      %v978 = vunpack.c.l.b16 %v910
      %v979 = vunpack.c.l.b16 %v911
      %v980 = vunpack.c.l.b16 %v912
      %v981 = vunpack.c.l.b16 %v913
      %v982 = vunpack.c.l.b16 %v914
      %v983 = vunpack.c.l.b16 %v915
      %v984 = vunpack.c.l.b16 %v916
      %v985 = vunpack.c.l.b16 %v917
      %v986 = vunpack.c.l.b16 %v918
      %v987 = vunpack.c.l.b16 %v919
      %v988 = vunpack.c.l.b16 %v920
      %v989 = vunpack.c.l.b16 %v921
      %v990 = vunpack.c.l.b16 %v922
      %v991 = vunpack.c.l.b16 %v923
      %v992 = vpack.c.b16 %v977, %v976
      %v993 = vpack.c.b16 %v979, %v978
      %v994 = vpack.c.b16 %v981, %v980
      %v995 = vpack.c.b16 %v983, %v982
      %v996 = vpack.c.b16 %v985, %v984
      %v997 = vpack.c.b16 %v987, %v986
      %v998 = vpack.c.b16 %v989, %v988
      %v999 = vpack.c.b16 %v991, %v990
      %1008 = vmatprep.subr.bf16.mxu0 0
      %1009 = vmatpush1.bf16.msra.mxu0 %v992
      %1010 = vmatprep.subr.bf16.mxu0 0
      %1011 = vmatpush1.bf16.msra.mxu0 %v993
      %1012 = vmatprep.subr.bf16.mxu0 0
      %1013 = vmatpush1.bf16.msra.mxu0 %v994
      %1014 = vmatprep.subr.bf16.mxu0 0
      %1015 = vmatpush1.bf16.msra.mxu0 %v995
      %1016 = vmatprep.subr.bf16.mxu0 0
      %1017 = vmatpush1.bf16.msra.mxu0 %v996
      %1018 = vmatprep.subr.bf16.mxu0 0
      %1019 = vmatpush1.bf16.msra.mxu0 %v997
      %1020 = vmatprep.subr.bf16.mxu0 0
      %1021 = vmatpush1.bf16.msra.mxu0 %v998
      %1022 = vmatprep.subr.bf16.mxu0 0
      %1023 = vmatpush1.bf16.msra.mxu0 %v999
      %1024 = vmatprep.subr.bf16.mxu0 0
      %1025 = vmatpush1.bf16.msra.mxu0 0
      %1026 = vmatprep.subr.bf16.mxu0 0
      %1027 = vmatpush1.bf16.msra.mxu0 0
      %1028 = vmatprep.subr.bf16.mxu0 0
      %1029 = vmatpush1.bf16.msra.mxu0 0
      %1030 = vmatprep.subr.bf16.mxu0 0
      %1031 = vmatpush1.bf16.msra.mxu0 0
      %1032 = vmatprep.subr.bf16.mxu0 0
      %1033 = vmatpush1.bf16.msra.mxu0 0
      %1034 = vmatprep.subr.bf16.mxu0 0
      %1035 = vmatpush1.bf16.msra.mxu0 0
      %1036 = vmatprep.subr.bf16.mxu0 0
      %1037 = vmatpush1.bf16.msra.mxu0 0
      %1038 = vmatprep.subr.bf16.mxu0 0
      %1039 = vmatpush1.bf16.msra.mxu0 0
      %1040 = vmatprep.mubr.bf16.mxu0 0
      %1041 = vmatmul.mubr.bf16.gmra.mrb[0].mxu0 %v949
      %v1042 = vpop.f32.mrb[0].mxu0
      %v1043 = vadd.f32 0.0, %v1042
      %v1044 = vpop.f32.mrb[0].mxu0
      %v1045 = vpop.f32.mrb[0].mxu0
      %v1046 = vadd.f32 0.0, %v1045
      %v1047 = vpop.f32.mrb[0].mxu0
      %1048 = vmatprep.mubr.bf16.mxu0 0
      %1049 = vmatmul.mubr.bf16.gmra.mrb[0].mxu0 %v957
      %v1050 = vpop.f32.mrb[0].mxu0
      %v1051 = vadd.f32 0.0, %v1050
      %v1052 = vpop.f32.mrb[0].mxu0
      %v1053 = vpop.f32.mrb[0].mxu0
      %v1054 = vadd.f32 0.0, %v1053
      %v1055 = vpop.f32.mrb[0].mxu0
      %1056 = vdwg.mxu0
      %v1057 = vadd.f32 %v888, %v1043
      %v1058 = vadd.f32 %v891, %v1046
      %v1059 = vadd.f32 %v896, %v1051
      %v1060 = vadd.f32 %v899, %v1054
      %v1061 = vld [vmem:[%s5] sm:$0x1]
      %v1063 = vlaneseq
      %v1064 = vshrl.u32 %v1063, 7
      %v1065 = vsub.s32 0, %v1064
      %v1066 = vrot.slane %v1061, %v1065
      %v1068 = vmul.f32 %v1057, %v1066
      %v1069 = vmul.f32 %v1058, %v1066
      %v1070 = vmul.f32 %v1059, %v1066
      %v1071 = vmul.f32 %v1060, %v1066
      %v1072 = vld [vmem:[%s6] sm:$0x1]
      %v1074 = vlaneseq
      %v1075 = vshrl.u32 %v1074, 7
      %v1076 = vsub.s32 0, %v1075
      %v1077 = vrot.slane %v1072, %v1076
      %v1079 = vadd.f32 %v1068, %v1077
      %v1080 = vadd.f32 %v1069, %v1077
      %v1081 = vadd.f32 %v1070, %v1077
      %v1082 = vadd.f32 %v1071, %v1077
      %v1083 = vmax.f32 %v1079, 0.0
      %v1084 = vmax.f32 %v1080, 0.0
      %v1085 = vmax.f32 %v1081, 0.0
      %v1086 = vmax.f32 %v1082, 0.0
      %v1087 = vpack.c.bf16 %v1084, %v1083
      %v1088 = vpack.c.bf16 %v1086, %v1085
      %v1089 = vld [vmem:[%s7] sm:$0xf]
      %v1090 = vld [vmem:[%s7 + $0x4] sm:$0xf]
      %v1091 = vld [vmem:[%s7 + $0x8] sm:$0xf]
      %v1092 = vld [vmem:[%s7 + $0xc] sm:$0xf]
      %v1093 = vld [vmem:[%s7 + $0x10] sm:$0xf]
      %v1094 = vld [vmem:[%s7 + $0x14] sm:$0xf]
      %v1095 = vld [vmem:[%s7 + $0x18] sm:$0xf]
      %v1096 = vld [vmem:[%s7 + $0x1c] sm:$0xf]
      %v1097 = vld [vmem:[%s7 + $0x20] sm:$0xf]
      %v1098 = vld [vmem:[%s7 + $0x24] sm:$0xf]
      %v1099 = vld [vmem:[%s7 + $0x28] sm:$0xf]
      %v1100 = vld [vmem:[%s7 + $0x2c] sm:$0xf]
      %v1101 = vld [vmem:[%s7 + $0x30] sm:$0xf]
      %v1102 = vld [vmem:[%s7 + $0x34] sm:$0xf]
      %v1103 = vld [vmem:[%s7 + $0x38] sm:$0xf]
      %v1104 = vld [vmem:[%s7 + $0x3c] sm:$0xf]
      %v1121 = vunpack.c.l.b16 %v1089
      %v1122 = vunpack.c.l.b16 %v1090
      %v1123 = vunpack.c.l.b16 %v1091
      %v1124 = vunpack.c.l.b16 %v1092
      %v1125 = vunpack.c.l.b16 %v1093
      %v1126 = vunpack.c.l.b16 %v1094
      %v1127 = vunpack.c.l.b16 %v1095
      %v1128 = vunpack.c.l.b16 %v1096
      %v1129 = vunpack.c.l.b16 %v1097
      %v1130 = vunpack.c.l.b16 %v1098
      %v1131 = vunpack.c.l.b16 %v1099
      %v1132 = vunpack.c.l.b16 %v1100
      %v1133 = vunpack.c.l.b16 %v1101
      %v1134 = vunpack.c.l.b16 %v1102
      %v1135 = vunpack.c.l.b16 %v1103
      %v1136 = vunpack.c.l.b16 %v1104
      %v1137 = vpack.c.b16 %v1122, %v1121
      %v1138 = vpack.c.b16 %v1124, %v1123
      %v1139 = vpack.c.b16 %v1126, %v1125
      %v1140 = vpack.c.b16 %v1128, %v1127
      %v1141 = vpack.c.b16 %v1130, %v1129
      %v1142 = vpack.c.b16 %v1132, %v1131
      %v1143 = vpack.c.b16 %v1134, %v1133
      %v1144 = vpack.c.b16 %v1136, %v1135
      %1153 = vmatprep.subr.bf16.mxu0 0
      %1154 = vmatpush1.bf16.msra.mxu0 %v1137
      %1155 = vmatprep.subr.bf16.mxu0 0
      %1156 = vmatpush1.bf16.msra.mxu0 %v1138
      %1157 = vmatprep.subr.bf16.mxu0 0
      %1158 = vmatpush1.bf16.msra.mxu0 %v1139
      %1159 = vmatprep.subr.bf16.mxu0 0
      %1160 = vmatpush1.bf16.msra.mxu0 %v1140
      %1161 = vmatprep.subr.bf16.mxu0 0
      %1162 = vmatpush1.bf16.msra.mxu0 %v1141
      %1163 = vmatprep.subr.bf16.mxu0 0
      %1164 = vmatpush1.bf16.msra.mxu0 %v1142
      %1165 = vmatprep.subr.bf16.mxu0 0
      %1166 = vmatpush1.bf16.msra.mxu0 %v1143
      %1167 = vmatprep.subr.bf16.mxu0 0
      %1168 = vmatpush1.bf16.msra.mxu0 %v1144
      %1169 = vmatprep.subr.bf16.mxu0 0
      %1170 = vmatpush1.bf16.msra.mxu0 0
      %1171 = vmatprep.subr.bf16.mxu0 0
      %1172 = vmatpush1.bf16.msra.mxu0 0
      %1173 = vmatprep.subr.bf16.mxu0 0
      %1174 = vmatpush1.bf16.msra.mxu0 0
      %1175 = vmatprep.subr.bf16.mxu0 0
      %1176 = vmatpush1.bf16.msra.mxu0 0
      %1177 = vmatprep.subr.bf16.mxu0 0
      %1178 = vmatpush1.bf16.msra.mxu0 0
      %1179 = vmatprep.subr.bf16.mxu0 0
      %1180 = vmatpush1.bf16.msra.mxu0 0
      %1181 = vmatprep.subr.bf16.mxu0 0
      %1182 = vmatpush1.bf16.msra.mxu0 0
      %1183 = vmatprep.subr.bf16.mxu0 0
      %1184 = vmatpush1.bf16.msra.mxu0 0
      %1185 = vmatprep.mubr.bf16.mxu0 0
      %1186 = vmatmul.mubr.bf16.gmra.mrb[0].mxu0 %v1087
      %v1187 = vpop.f32.mrb[0].mxu0
      %v1188 = vadd.f32 0.0, %v1187
      %v1189 = vpop.f32.mrb[0].mxu0
      %v1190 = vpop.f32.mrb[0].mxu0
      %v1191 = vadd.f32 0.0, %v1190
      %v1192 = vpop.f32.mrb[0].mxu0
      %1193 = vmatprep.mubr.bf16.mxu0 0
      %1194 = vmatmul.mubr.bf16.gmra.mrb[0].mxu0 %v1088
      %v1195 = vpop.f32.mrb[0].mxu0
      %v1196 = vadd.f32 0.0, %v1195
      %v1197 = vpop.f32.mrb[0].mxu0
      %v1198 = vpop.f32.mrb[0].mxu0
      %v1199 = vadd.f32 0.0, %v1198
      %v1200 = vpop.f32.mrb[0].mxu0
      %1201 = vdwg.mxu0
      %v1202 = vld [vmem:[%s8] sm:$0x1]
      %v1204 = vlaneseq
      %v1205 = vshrl.u32 %v1204, 7
      %v1206 = vsub.s32 0, %v1205
      %v1207 = vrot.slane %v1202, %v1206
      %v1209 = vmul.f32 %v1188, %v1207
      %v1210 = vmul.f32 %v1191, %v1207
      %v1211 = vmul.f32 %v1196, %v1207
      %v1212 = vmul.f32 %v1199, %v1207
      %v1213 = vld [vmem:[%s9] sm:$0x1]
      %v1215 = vlaneseq
      %v1216 = vshrl.u32 %v1215, 7
      %v1217 = vsub.s32 0, %v1216
      %v1218 = vrot.slane %v1213, %v1217
      %v1220 = vadd.f32 %v1209, %v1218
      %v1221 = vadd.f32 %v1210, %v1218
      %v1222 = vadd.f32 %v1211, %v1218
      %v1223 = vadd.f32 %v1212, %v1218
      %v1224 = vld [vmem:[%s10] sm:$0xf]
      %v1225 = vld [vmem:[%s10 + $0x4] sm:$0xf]
      %v1226 = vld [vmem:[%s10 + $0x8] sm:$0xf]
      %v1227 = vld [vmem:[%s10 + $0xc] sm:$0xf]
      %v1228 = vld [vmem:[%s10 + $0x10] sm:$0xf]
      %v1229 = vld [vmem:[%s10 + $0x14] sm:$0xf]
      %v1230 = vld [vmem:[%s10 + $0x18] sm:$0xf]
      %v1231 = vld [vmem:[%s10 + $0x1c] sm:$0xf]
      %v1232 = vld [vmem:[%s10 + $0x20] sm:$0xf]
      %v1233 = vld [vmem:[%s10 + $0x24] sm:$0xf]
      %v1234 = vld [vmem:[%s10 + $0x28] sm:$0xf]
      %v1235 = vld [vmem:[%s10 + $0x2c] sm:$0xf]
      %v1236 = vld [vmem:[%s10 + $0x30] sm:$0xf]
      %v1237 = vld [vmem:[%s10 + $0x34] sm:$0xf]
      %v1238 = vld [vmem:[%s10 + $0x38] sm:$0xf]
      %v1239 = vld [vmem:[%s10 + $0x3c] sm:$0xf]
      %v1256 = vunpack.c.l.b16 %v1224
      %v1257 = vunpack.c.l.b16 %v1225
      %v1258 = vunpack.c.l.b16 %v1226
      %v1259 = vunpack.c.l.b16 %v1227
      %v1260 = vunpack.c.l.b16 %v1228
      %v1261 = vunpack.c.l.b16 %v1229
      %v1262 = vunpack.c.l.b16 %v1230
      %v1263 = vunpack.c.l.b16 %v1231
      %v1264 = vunpack.c.l.b16 %v1232
      %v1265 = vunpack.c.l.b16 %v1233
      %v1266 = vunpack.c.l.b16 %v1234
      %v1267 = vunpack.c.l.b16 %v1235
      %v1268 = vunpack.c.l.b16 %v1236
      %v1269 = vunpack.c.l.b16 %v1237
      %v1270 = vunpack.c.l.b16 %v1238
      %v1271 = vunpack.c.l.b16 %v1239
      %v1272 = vpack.c.b16 %v1257, %v1256
      %v1273 = vpack.c.b16 %v1259, %v1258
      %v1274 = vpack.c.b16 %v1261, %v1260
      %v1275 = vpack.c.b16 %v1263, %v1262
      %v1276 = vpack.c.b16 %v1265, %v1264
      %v1277 = vpack.c.b16 %v1267, %v1266
      %v1278 = vpack.c.b16 %v1269, %v1268
      %v1279 = vpack.c.b16 %v1271, %v1270
      %1288 = vmatprep.subr.bf16.mxu0 0
      %1289 = vmatpush1.bf16.msra.mxu0 %v1272
      %1290 = vmatprep.subr.bf16.mxu0 0
      %1291 = vmatpush1.bf16.msra.mxu0 %v1273
      %1292 = vmatprep.subr.bf16.mxu0 0
      %1293 = vmatpush1.bf16.msra.mxu0 %v1274
      %1294 = vmatprep.subr.bf16.mxu0 0
      %1295 = vmatpush1.bf16.msra.mxu0 %v1275
      %1296 = vmatprep.subr.bf16.mxu0 0
      %1297 = vmatpush1.bf16.msra.mxu0 %v1276
      %1298 = vmatprep.subr.bf16.mxu0 0
      %1299 = vmatpush1.bf16.msra.mxu0 %v1277
      %1300 = vmatprep.subr.bf16.mxu0 0
      %1301 = vmatpush1.bf16.msra.mxu0 %v1278
      %1302 = vmatprep.subr.bf16.mxu0 0
      %1303 = vmatpush1.bf16.msra.mxu0 %v1279
      %1304 = vmatprep.subr.bf16.mxu0 0
      %1305 = vmatpush1.bf16.msra.mxu0 0
      %1306 = vmatprep.subr.bf16.mxu0 0
      %1307 = vmatpush1.bf16.msra.mxu0 0
      %1308 = vmatprep.subr.bf16.mxu0 0
      %1309 = vmatpush1.bf16.msra.mxu0 0
      %1310 = vmatprep.subr.bf16.mxu0 0
      %1311 = vmatpush1.bf16.msra.mxu0 0
      %1312 = vmatprep.subr.bf16.mxu0 0
      %1313 = vmatpush1.bf16.msra.mxu0 0
      %1314 = vmatprep.subr.bf16.mxu0 0
      %1315 = vmatpush1.bf16.msra.mxu0 0
      %1316 = vmatprep.subr.bf16.mxu0 0
      %1317 = vmatpush1.bf16.msra.mxu0 0
      %1318 = vmatprep.subr.bf16.mxu0 0
      %1319 = vmatpush1.bf16.msra.mxu0 0
      %1320 = vmatprep.mubr.bf16.mxu0 0
      %1321 = vmatmul.mubr.bf16.gmra.mrb[0].mxu0 %v470
      %v1322 = vpop.f32.mrb[0].mxu0
      %v1323 = vadd.f32 0.0, %v1322
      %v1324 = vpop.f32.mrb[0].mxu0
      %v1325 = vpop.f32.mrb[0].mxu0
      %v1326 = vadd.f32 0.0, %v1325
      %v1327 = vpop.f32.mrb[0].mxu0
      %1328 = vmatprep.mubr.bf16.mxu0 0
      %1329 = vmatmul.mubr.bf16.gmra.mrb[0].mxu0 %v471
      %v1330 = vpop.f32.mrb[0].mxu0
      %v1331 = vadd.f32 0.0, %v1330
      %v1332 = vpop.f32.mrb[0].mxu0
      %v1333 = vpop.f32.mrb[0].mxu0
      %v1334 = vadd.f32 0.0, %v1333
      %v1335 = vpop.f32.mrb[0].mxu0
      %1336 = vdwg.mxu0
      %v1337 = vld [vmem:[%s11] sm:$0x1]
      %v1339 = vlaneseq
      %v1340 = vshrl.u32 %v1339, 7
      %v1341 = vsub.s32 0, %v1340
      %v1342 = vrot.slane %v1337, %v1341
      %v1344 = vmul.f32 %v1323, %v1342
      %v1345 = vmul.f32 %v1326, %v1342
      %v1346 = vmul.f32 %v1331, %v1342
      %v1347 = vmul.f32 %v1334, %v1342
      %v1348 = vld [vmem:[%s12] sm:$0x1]
      %v1350 = vlaneseq
      %v1351 = vshrl.u32 %v1350, 7
      %v1352 = vsub.s32 0, %v1351
      %v1353 = vrot.slane %v1348, %v1352
      %v1355 = vadd.f32 %v1344, %v1353
      %v1356 = vadd.f32 %v1345, %v1353
      %v1357 = vadd.f32 %v1346, %v1353
      %v1358 = vadd.f32 %v1347, %v1353
      %v1359 = vadd.f32 %v1220, %v1355
      %v1360 = vadd.f32 %v1221, %v1356
      %v1361 = vadd.f32 %v1222, %v1357
      %v1362 = vadd.f32 %v1223, %v1358
      %v1363 = vmax.f32 %v1359, 0.0
      %v1364 = vmax.f32 %v1360, 0.0
      %v1365 = vmax.f32 %v1361, 0.0
      %v1366 = vmax.f32 %v1362, 0.0
      %v1367 = vpack.c.bf16 %v1364, %v1363
      %v1368 = vpack.c.bf16 %v1366, %v1365
      %v1371 = vunpack.c.l.b16 %v1367
      %v1372 = vunpack.c.h.b16 %v1367
      %v1373 = vunpack.c.l.b16 %v1368
      %v1374 = vunpack.c.h.b16 %v1368
      %v1375 = vpack.c.b16 %v1371, %v1371
      %v1376 = vpack.c.b16 %v1372, %v1372
      %v1377 = vpack.c.b16 %v1373, %v1373
      %v1378 = vpack.c.b16 %v1374, %v1374
      %1383 = vst [vmem:[%s440] sm:$0xf] %v1375
      %1384 = vst [vmem:[%s440 + $0x4] sm:$0xf] %v1376
      %1385 = vst [vmem:[%s440 + $0x8] sm:$0xf] %v1377
      %1386 = vst [vmem:[%s440 + $0xc] sm:$0xf] %v1378
      %p1387 = scmp.lt.s32.totalorder %s24, 1
      %s1388 = scalar_select %p1387, %s24, 1
      %s1389 = smul.addr %s1388, 4
      %s1390 = smul.addr %s1389, 4
      %s1391 = scalar_lea.vmem %s13, %s1390
      // Predicated region
      $region73: #{xrespool_forward.9} parent=71 // pred_check
        %p1392 = pneg %p320
      $region74: #{xrespool_forward.9} parent=71 // pred_check_branch
        %1394 = sbr.rel (%p1392) target = $region76
      $region75: #{xrespool_forward.9} parent=71 // pred_region
        _
      $region76: #{xrespool_forward.9} parent=71 // pred_fallthru
        _
    $region72: #{xrespool_forward.9} parent=5 // pred_fallthru
      _
    %p1395 = scmp.le.s32.totalorder 2, %s19
    // Predicated region
    $region77: #{xrespool_forward.9} parent=5 // pred_check
      %p1396 = pneg %p1395
    $region78: #{xrespool_forward.9} parent=5 // pred_check_branch
      %1398 = sbr.rel (%p1396) target = $region80
    $region79: #{xrespool_forward.9} parent=5 // pred_region
      %s1399 = ssub.s32 %s19, 2
      // Predicated region
      $region81: #{xrespool_forward.9} parent=79 // pred_check
        %p1400 = pneg %p326
      $region82: #{xrespool_forward.9} parent=79 // pred_check_branch
        %1402 = sbr.rel (%p1400) target = $region84
      $region83: #{xrespool_forward.9} parent=79 // pred_region
        %p1403 = scmp.lt.s32.totalorder %s25, 1
        %s1404 = scalar_select %p1403, %s25, 1
        %s1405 = smul.addr %s1404, 4
        %s1406 = smul.addr %s1405, 4
        %s1407 = scalar_lea.vmem %s13, %s1406
      $region84: #{xrespool_forward.9} parent=79 // pred_fallthru
        _
    $region80: #{xrespool_forward.9} parent=5 // pred_fallthru
      _
  $region6: #{xrespool_forward.9} parent=0 // loop_footer
    %s23 = sadd.s32 1, %s19
  $region7: #{xrespool_forward.9} parent=0 // loop_footer_branch
    %18 = sbr.rel target = $region3
  $region8: #{xrespool_forward.9} parent=0 // loop_exit
    _

// kernel: xrespool_forward.7
$region0: #{xrespool_forward.7}
  #allocation0 [shape = 'u32[]', space=smem, size = 0x4, offset = 0x4, fixed_abs, tag = 'smem constant byte address 0x4 - core index']
  #allocation1 [shape = 'u32[144,128]{1,0:T(1,128)}', space=vmem, size = 0x12000, scoped, tag = 'internal scratch']
  #allocation2 [shape = 'bf16[88,128]{1,0:T(8,128)(2,1)}', space=vmem, size = 0x5800, scoped, tag = 'scratch operand']
  #allocation3 [shape = 'bf16[88,128]{1,0:T(8,128)(2,1)}', space=vmem, size = 0x5800, scoped, tag = 'scratch operand']
  #allocation4 [shape = 'bf16[88,128]{1,0:T(8,128)(2,1)}', space=vmem, size = 0x5800, scoped, tag = 'scratch operand']
  %s0 = inlined_call_operand.vmem [shape: bf16[2,64,256], index: 0, kind: input, shape index: {}]
  %s1 = inlined_call_operand.vmem [shape: bf16[3,128,128], index: 1, kind: input, shape index: {}]
  %s2 = inlined_call_operand.vmem [shape: f32[1,128], index: 2, kind: input, shape index: {}]
  %s3 = inlined_call_operand.vmem [shape: f32[1,128], index: 3, kind: input, shape index: {}]
  %s4 = inlined_call_operand.vmem [shape: bf16[3,128,128], index: 4, kind: input, shape index: {}]
  %s5 = inlined_call_operand.vmem [shape: f32[1,128], index: 5, kind: input, shape index: {}]
  %s6 = inlined_call_operand.vmem [shape: f32[1,128], index: 6, kind: input, shape index: {}]
  %s7 = inlined_call_operand.vmem [shape: bf16[3,128,128], index: 7, kind: input, shape index: {}]
  %s8 = inlined_call_operand.vmem [shape: f32[1,128], index: 8, kind: input, shape index: {}]
  %s9 = inlined_call_operand.vmem [shape: f32[1,128], index: 9, kind: input, shape index: {}]
  %s10 = inlined_call_operand.vmem [shape: bf16[2,64,128], index: 10, kind: output, shape index: {}]
  %s11 = sld [smem:[#allocation0]]
  $region73: #{xrespool_forward.7} parent=0
    _
  %s13 = ssub.s32 1, %s11
  %s14 = scalar_select 0, %s13, %s11
  loop: start=0, step=1, limit=4
  $region2: #{xrespool_forward.7} parent=0 // loop_pre_header
    _
  $region3: #{xrespool_forward.7} parent=0 // loop_header
    %s16 = sphi 0, %s20
    %p17 = scmp.ge.s32.totalorder %s16, 4
    %s26 = sphi 0, %s28
    %s29 = sphi 0, %s26
    %s30 = sphi 0, %s29
    %s46 = sphi 0, %s30
    %s50 = sphi 0, %s50
    %s52 = sphi 0, %s50
    %s53 = sphi 0, %s52
    %s67 = sphi 0, %s53
    %s71 = sphi 0, %s71
    %s73 = sphi 0, %s71
    %s74 = sphi 0, %s73
    %s88 = sphi 0, %s74
    %s92 = sphi 0, %s92
    %s94 = sphi 0, %s92
    %s95 = sphi 0, %s94
    %s109 = sphi 0, %s95
    %s113 = sphi 0, %s113
    %s115 = sphi 0, %s113
    %s116 = sphi 0, %s115
    %s130 = sphi 0, %s116
    %s134 = sphi 0, %s134
    %s136 = sphi 0, %s134
    %s137 = sphi 0, %s136
    %s151 = sphi 0, %s137
    %s155 = sphi 0, %s155
    %s157 = sphi 0, %s155
    %s158 = sphi 0, %s157
    %s172 = sphi 0, %s158
    %s176 = sphi 0, %s176
    %s178 = sphi 0, %s176
    %s179 = sphi 0, %s178
    %s193 = sphi 0, %s179
    %s197 = sphi 0, %s197
    %s199 = sphi 0, %s197
    %s200 = sphi 0, %s199
    %s214 = sphi 0, %s200
    %s218 = sphi 0, %s218
    %s220 = sphi 0, %s218
    %s221 = sphi 0, %s220
    %s235 = sphi 0, %s221
    %s241 = sphi 0, %s243
    %s244 = sphi 0, %s241
    %s245 = sphi 0, %s244
    %s261 = sphi 0, %s245
  $region4: #{xrespool_forward.7} parent=0 // loop_header_branch
    %19 = sbr.rel (%p17) target = $region8
  $region5: #{xrespool_forward.7} parent=0 // loop_body
    %s21 = ssub.s32 %s16, 1
    %s22 = ssub.s32 %s16, 2
    %s23 = sadd.s32 %s16, 1
    %s24 = ssub.s32 %s16, %s23
    %p25 = scmp.eq.s32.totalorder %s24, 0
    %s27 = sadd.s32 %s26, 1
    %s28 = scalar_select %p25, %s26, %s27
    %p31 = pneg %p25
    %p32 = scmp.eq.s32.totalorder %s16, 1
    %p33 = por %p31, %p32
    %p34 = scmp.ne.s32.totalorder %s26, %s29
    %p35 = scmp.eq.s32.totalorder %s16, 0
    %p36 = por %p34, %p35
    %p37 = scmp.ne.s32.totalorder %s26, %s29
    %p38 = scmp.eq.s32.totalorder %s21, 1
    %p39 = por %p37, %p38
    %p40 = scmp.ne.s32.totalorder %s29, %s30
    %p41 = scmp.eq.s32.totalorder %s21, 0
    %p42 = por %p40, %p41
    %p43 = scmp.ne.s32.totalorder %s29, %s30
    %p44 = scmp.eq.s32.totalorder %s22, 1
    %p45 = por %p43, %p44
    %p47 = scmp.ne.s32.totalorder %s30, %s46
    %p48 = scmp.eq.s32.totalorder %s22, 0
    %p49 = por %p47, %p48
    %s51 = sadd.s32 %s50, 1
    %p54 = scmp.eq.s32.totalorder %s16, 1
    %p55 = scmp.ne.s32.totalorder %s50, %s52
    %p56 = scmp.eq.s32.totalorder %s16, 0
    %p57 = por %p55, %p56
    %p58 = scmp.ne.s32.totalorder %s50, %s52
    %p59 = scmp.eq.s32.totalorder %s21, 1
    %p60 = por %p58, %p59
    %p61 = scmp.ne.s32.totalorder %s52, %s53
    %p62 = scmp.eq.s32.totalorder %s21, 0
    %p63 = por %p61, %p62
    %p64 = scmp.ne.s32.totalorder %s52, %s53
    %p65 = scmp.eq.s32.totalorder %s22, 1
    %p66 = por %p64, %p65
    %p68 = scmp.ne.s32.totalorder %s53, %s67
    %p69 = scmp.eq.s32.totalorder %s22, 0
    %p70 = por %p68, %p69
    %s72 = sadd.s32 %s71, 1
    %p75 = scmp.eq.s32.totalorder %s16, 1
    %p76 = scmp.ne.s32.totalorder %s71, %s73
    %p77 = scmp.eq.s32.totalorder %s16, 0
    %p78 = por %p76, %p77
    %p79 = scmp.ne.s32.totalorder %s71, %s73
    %p80 = scmp.eq.s32.totalorder %s21, 1
    %p81 = por %p79, %p80
    %p82 = scmp.ne.s32.totalorder %s73, %s74
    %p83 = scmp.eq.s32.totalorder %s21, 0
    %p84 = por %p82, %p83
    %p85 = scmp.ne.s32.totalorder %s73, %s74
    %p86 = scmp.eq.s32.totalorder %s22, 1
    %p87 = por %p85, %p86
    %p89 = scmp.ne.s32.totalorder %s74, %s88
    %p90 = scmp.eq.s32.totalorder %s22, 0
    %p91 = por %p89, %p90
    %s93 = sadd.s32 %s92, 1
    %p96 = scmp.eq.s32.totalorder %s16, 1
    %p97 = scmp.ne.s32.totalorder %s92, %s94
    %p98 = scmp.eq.s32.totalorder %s16, 0
    %p99 = por %p97, %p98
    %p100 = scmp.ne.s32.totalorder %s92, %s94
    %p101 = scmp.eq.s32.totalorder %s21, 1
    %p102 = por %p100, %p101
    %p103 = scmp.ne.s32.totalorder %s94, %s95
    %p104 = scmp.eq.s32.totalorder %s21, 0
    %p105 = por %p103, %p104
    %p106 = scmp.ne.s32.totalorder %s94, %s95
    %p107 = scmp.eq.s32.totalorder %s22, 1
    %p108 = por %p106, %p107
    %p110 = scmp.ne.s32.totalorder %s95, %s109
    %p111 = scmp.eq.s32.totalorder %s22, 0
    %p112 = por %p110, %p111
    %s114 = sadd.s32 %s113, 1
    %p117 = scmp.eq.s32.totalorder %s16, 1
    %p118 = scmp.ne.s32.totalorder %s113, %s115
    %p119 = scmp.eq.s32.totalorder %s16, 0
    %p120 = por %p118, %p119
    %p121 = scmp.ne.s32.totalorder %s113, %s115
    %p122 = scmp.eq.s32.totalorder %s21, 1
    %p123 = por %p121, %p122
    %p124 = scmp.ne.s32.totalorder %s115, %s116
    %p125 = scmp.eq.s32.totalorder %s21, 0
    %p126 = por %p124, %p125
    %p127 = scmp.ne.s32.totalorder %s115, %s116
    %p128 = scmp.eq.s32.totalorder %s22, 1
    %p129 = por %p127, %p128
    %p131 = scmp.ne.s32.totalorder %s116, %s130
    %p132 = scmp.eq.s32.totalorder %s22, 0
    %p133 = por %p131, %p132
    %s135 = sadd.s32 %s134, 1
    %p138 = scmp.eq.s32.totalorder %s16, 1
    %p139 = scmp.ne.s32.totalorder %s134, %s136
    %p140 = scmp.eq.s32.totalorder %s16, 0
    %p141 = por %p139, %p140
    %p142 = scmp.ne.s32.totalorder %s134, %s136
    %p143 = scmp.eq.s32.totalorder %s21, 1
    %p144 = por %p142, %p143
    %p145 = scmp.ne.s32.totalorder %s136, %s137
    %p146 = scmp.eq.s32.totalorder %s21, 0
    %p147 = por %p145, %p146
    %p148 = scmp.ne.s32.totalorder %s136, %s137
    %p149 = scmp.eq.s32.totalorder %s22, 1
    %p150 = por %p148, %p149
    %p152 = scmp.ne.s32.totalorder %s137, %s151
    %p153 = scmp.eq.s32.totalorder %s22, 0
    %p154 = por %p152, %p153
    %s156 = sadd.s32 %s155, 1
    %p159 = scmp.eq.s32.totalorder %s16, 1
    %p160 = scmp.ne.s32.totalorder %s155, %s157
    %p161 = scmp.eq.s32.totalorder %s16, 0
    %p162 = por %p160, %p161
    %p163 = scmp.ne.s32.totalorder %s155, %s157
    %p164 = scmp.eq.s32.totalorder %s21, 1
    %p165 = por %p163, %p164
    %p166 = scmp.ne.s32.totalorder %s157, %s158
    %p167 = scmp.eq.s32.totalorder %s21, 0
    %p168 = por %p166, %p167
    %p169 = scmp.ne.s32.totalorder %s157, %s158
    %p170 = scmp.eq.s32.totalorder %s22, 1
    %p171 = por %p169, %p170
    %p173 = scmp.ne.s32.totalorder %s158, %s172
    %p174 = scmp.eq.s32.totalorder %s22, 0
    %p175 = por %p173, %p174
    %s177 = sadd.s32 %s176, 1
    %p180 = scmp.eq.s32.totalorder %s16, 1
    %p181 = scmp.ne.s32.totalorder %s176, %s178
    %p182 = scmp.eq.s32.totalorder %s16, 0
    %p183 = por %p181, %p182
    %p184 = scmp.ne.s32.totalorder %s176, %s178
    %p185 = scmp.eq.s32.totalorder %s21, 1
    %p186 = por %p184, %p185
    %p187 = scmp.ne.s32.totalorder %s178, %s179
    %p188 = scmp.eq.s32.totalorder %s21, 0
    %p189 = por %p187, %p188
    %p190 = scmp.ne.s32.totalorder %s178, %s179
    %p191 = scmp.eq.s32.totalorder %s22, 1
    %p192 = por %p190, %p191
    %p194 = scmp.ne.s32.totalorder %s179, %s193
    %p195 = scmp.eq.s32.totalorder %s22, 0
    %p196 = por %p194, %p195
    %s198 = sadd.s32 %s197, 1
    %p201 = scmp.eq.s32.totalorder %s16, 1
    %p202 = scmp.ne.s32.totalorder %s197, %s199
    %p203 = scmp.eq.s32.totalorder %s16, 0
    %p204 = por %p202, %p203
    %p205 = scmp.ne.s32.totalorder %s197, %s199
    %p206 = scmp.eq.s32.totalorder %s21, 1
    %p207 = por %p205, %p206
    %p208 = scmp.ne.s32.totalorder %s199, %s200
    %p209 = scmp.eq.s32.totalorder %s21, 0
    %p210 = por %p208, %p209
    %p211 = scmp.ne.s32.totalorder %s199, %s200
    %p212 = scmp.eq.s32.totalorder %s22, 1
    %p213 = por %p211, %p212
    %p215 = scmp.ne.s32.totalorder %s200, %s214
    %p216 = scmp.eq.s32.totalorder %s22, 0
    %p217 = por %p215, %p216
    %s219 = sadd.s32 %s218, 1
    %p222 = scmp.eq.s32.totalorder %s16, 1
    %p223 = scmp.ne.s32.totalorder %s218, %s220
    %p224 = scmp.eq.s32.totalorder %s16, 0
    %p225 = por %p223, %p224
    %p226 = scmp.ne.s32.totalorder %s218, %s220
    %p227 = scmp.eq.s32.totalorder %s21, 1
    %p228 = por %p226, %p227
    %p229 = scmp.ne.s32.totalorder %s220, %s221
    %p230 = scmp.eq.s32.totalorder %s21, 0
    %p231 = por %p229, %p230
    %p232 = scmp.ne.s32.totalorder %s220, %s221
    %p233 = scmp.eq.s32.totalorder %s22, 1
    %p234 = por %p232, %p233
    %p236 = scmp.ne.s32.totalorder %s221, %s235
    %p237 = scmp.eq.s32.totalorder %s22, 0
    %p238 = por %p236, %p237
    %s239 = ssub.s32 %s16, %s23
    %p240 = scmp.eq.s32.totalorder %s239, 0
    %s242 = sadd.s32 %s241, 1
    %s243 = scalar_select %p240, %s241, %s242
    %p246 = pneg %p240
    %p247 = scmp.eq.s32.totalorder %s16, 1
    %p248 = por %p246, %p247
    %p249 = scmp.ne.s32.totalorder %s241, %s244
    %p250 = scmp.eq.s32.totalorder %s16, 0
    %p251 = por %p249, %p250
    %p252 = scmp.ne.s32.totalorder %s241, %s244
    %p253 = scmp.eq.s32.totalorder %s21, 1
    %p254 = por %p252, %p253
    %p255 = scmp.ne.s32.totalorder %s244, %s245
    %p256 = scmp.eq.s32.totalorder %s21, 0
    %p257 = por %p255, %p256
    %p258 = scmp.ne.s32.totalorder %s244, %s245
    %p259 = scmp.eq.s32.totalorder %s22, 1
    %p260 = por %p258, %p259
    %p262 = scmp.ne.s32.totalorder %s245, %s261
    %p263 = scmp.eq.s32.totalorder %s22, 0
    %p264 = por %p262, %p263
    %p265 = scmp.le.s32.totalorder 1, %s16
    %p266 = scmp.lt.s32.totalorder %s16, 3
    %p267 = pnand %p265, %p266
    %p268 = pneg %p267
    // Predicated region
    $region9: #{xrespool_forward.7} parent=5 // pred_check
      _
    $region10: #{xrespool_forward.7} parent=5 // pred_check_branch
      %270 = sbr.rel (%p267) target = $region12
    $region11: #{xrespool_forward.7} parent=5 // pred_region
      %s271 = ssub.s32 %s16, 1
      // Predicated region
      $region13: #{xrespool_forward.7} parent=11 // pred_check
        %p272 = pneg %p63
      $region14: #{xrespool_forward.7} parent=11 // pred_check_branch
        %274 = sbr.rel (%p272) target = $region16
      $region15: #{xrespool_forward.7} parent=11 // pred_region
        _
      $region16: #{xrespool_forward.7} parent=11 // pred_fallthru
        _
      // Predicated region
      $region17: #{xrespool_forward.7} parent=11 // pred_check
        %p275 = pneg %p84
      $region18: #{xrespool_forward.7} parent=11 // pred_check_branch
        %277 = sbr.rel (%p275) target = $region20
      $region19: #{xrespool_forward.7} parent=11 // pred_region
        _
      $region20: #{xrespool_forward.7} parent=11 // pred_fallthru
        _
      // Predicated region
      $region21: #{xrespool_forward.7} parent=11 // pred_check
        %p278 = pneg %p105
      $region22: #{xrespool_forward.7} parent=11 // pred_check_branch
        %280 = sbr.rel (%p278) target = $region24
      $region23: #{xrespool_forward.7} parent=11 // pred_region
        _
      $region24: #{xrespool_forward.7} parent=11 // pred_fallthru
        _
      // Predicated region
      $region25: #{xrespool_forward.7} parent=11 // pred_check
        %p281 = pneg %p126
      $region26: #{xrespool_forward.7} parent=11 // pred_check_branch
        %283 = sbr.rel (%p281) target = $region28
      $region27: #{xrespool_forward.7} parent=11 // pred_region
        _
      $region28: #{xrespool_forward.7} parent=11 // pred_fallthru
        _
      // Predicated region
      $region29: #{xrespool_forward.7} parent=11 // pred_check
        %p284 = pneg %p147
      $region30: #{xrespool_forward.7} parent=11 // pred_check_branch
        %286 = sbr.rel (%p284) target = $region32
      $region31: #{xrespool_forward.7} parent=11 // pred_region
        _
      $region32: #{xrespool_forward.7} parent=11 // pred_fallthru
        _
      // Predicated region
      $region33: #{xrespool_forward.7} parent=11 // pred_check
        %p287 = pneg %p168
      $region34: #{xrespool_forward.7} parent=11 // pred_check_branch
        %289 = sbr.rel (%p287) target = $region36
      $region35: #{xrespool_forward.7} parent=11 // pred_region
        _
      $region36: #{xrespool_forward.7} parent=11 // pred_fallthru
        _
      // Predicated region
      $region37: #{xrespool_forward.7} parent=11 // pred_check
        %p290 = pneg %p189
      $region38: #{xrespool_forward.7} parent=11 // pred_check_branch
        %292 = sbr.rel (%p290) target = $region40
      $region39: #{xrespool_forward.7} parent=11 // pred_region
        _
      $region40: #{xrespool_forward.7} parent=11 // pred_fallthru
        _
      // Predicated region
      $region41: #{xrespool_forward.7} parent=11 // pred_check
        %p293 = pneg %p210
      $region42: #{xrespool_forward.7} parent=11 // pred_check_branch
        %295 = sbr.rel (%p293) target = $region44
      $region43: #{xrespool_forward.7} parent=11 // pred_region
        _
      $region44: #{xrespool_forward.7} parent=11 // pred_fallthru
        _
      // Predicated region
      $region45: #{xrespool_forward.7} parent=11 // pred_check
        %p296 = pneg %p231
      $region46: #{xrespool_forward.7} parent=11 // pred_check_branch
        %298 = sbr.rel (%p296) target = $region48
      $region47: #{xrespool_forward.7} parent=11 // pred_region
        _
      $region48: #{xrespool_forward.7} parent=11 // pred_fallthru
        _
    $region12: #{xrespool_forward.7} parent=5 // pred_fallthru
      _
    %p299 = scmp.lt.s32.totalorder %s16, 2
    // Predicated region
    $region49: #{xrespool_forward.7} parent=5 // pred_check
      %p300 = pneg %p299
    $region50: #{xrespool_forward.7} parent=5 // pred_check_branch
      %302 = sbr.rel (%p300) target = $region52
    $region51: #{xrespool_forward.7} parent=5 // pred_region
      // Predicated region
      $region53: #{xrespool_forward.7} parent=51 // pred_check
        %p303 = pneg %p36
      $region54: #{xrespool_forward.7} parent=51 // pred_check_branch
        %305 = sbr.rel (%p303) target = $region56
      $region55: #{xrespool_forward.7} parent=51 // pred_region
        %p306 = scmp.lt.s32.totalorder %s16, 1
        %s307 = scalar_select %p306, %s16, 1
        %s308 = smul.addr %s307, 16
        %s309 = smul.addr %s308, 4
        %s310 = scalar_lea.vmem %s0, %s309
      $region56: #{xrespool_forward.7} parent=51 // pred_fallthru
        _
    $region52: #{xrespool_forward.7} parent=5 // pred_fallthru
      _
    %p311 = scmp.le.s32.totalorder 1, %s16
    %p312 = scmp.lt.s32.totalorder %s16, 3
    %p313 = pnand %p311, %p312
    %p314 = pneg %p313
    // Predicated region
    $region57: #{xrespool_forward.7} parent=5 // pred_check
      _
    $region58: #{xrespool_forward.7} parent=5 // pred_check_branch
      %316 = sbr.rel (%p313) target = $region60
    $region59: #{xrespool_forward.7} parent=5 // pred_region
      %s317 = ssub.s32 %s16, 1
      %p318 = scmp.lt.s32.totalorder %s21, 1
      %s319 = scalar_select %p318, %s21, 1
      %s320 = smul.addr %s319, 16
      %s321 = smul.addr %s320, 4
      %s322 = scalar_lea.vmem %s0, %s321
      %p323 = pneg %p42
      %p324 = pneg %p39
      %p325 = pneg %p63
      %p326 = pneg %p60
      %p327 = pneg %p84
      %p328 = pneg %p81
      %p329 = pneg %p105
      %p330 = pneg %p102
      %p331 = pneg %p126
      %p332 = pneg %p123
      %p333 = pneg %p147
      %p334 = pneg %p144
      %p335 = pneg %p168
      %p336 = pneg %p165
      %p337 = pneg %p189
      %p338 = pneg %p186
      %p339 = pneg %p210
      %p340 = pneg %p207
      %p341 = pneg %p231
      %p342 = pneg %p228
      %p343 = pneg %p257
      %p344 = pneg %p254
      %p345 = scmp.lt.s32.totalorder %s21, 1
      %s346 = scalar_select %p345, %s21, 1
      %s347 = smul.addr %s346, 8
      %s348 = smul.addr %s347, 4
      %s349 = scalar_lea.vmem %s10, %s348
      %p350 = scmp.lt.s32.totalorder %s21, 1
      %s351 = scalar_select %p350, %s21, 1
      %s352 = smul.addr %s351, 16
      %s353 = smul.addr %s352, 4
      %s354 = scalar_lea.vmem %s0, %s353
      %p355 = scmp.lt.s32.totalorder %s21, 1
      %s356 = scalar_select %p355, %s21, 1
      %s357 = smul.addr %s356, 8
      %s358 = smul.addr %s357, 4
      %s359 = scalar_lea.vmem %s10, %s358
      %v361 = vld [vmem:[%s354] sm:$0xf]
      %v362 = vld [vmem:[%s354 + $0x8] sm:$0xf]
      %v363 = vld [vmem:[%s354 + $0x10] sm:$0xf]
      %v364 = vld [vmem:[%s354 + $0x18] sm:$0xf]
      %v365 = vld [vmem:[%s354 + $0x20] sm:$0xf]
      %v366 = vld [vmem:[%s354 + $0x28] sm:$0xf]
      %v367 = vld [vmem:[%s354 + $0x30] sm:$0xf]
      %v368 = vld [vmem:[%s354 + $0x38] sm:$0xf]
      %v369 = vld [vmem:[%s354 + $0x4] sm:$0xf]
      %v370 = vld [vmem:[%s354 + $0xc] sm:$0xf]
      %v371 = vld [vmem:[%s354 + $0x14] sm:$0xf]
      %v372 = vld [vmem:[%s354 + $0x1c] sm:$0xf]
      %v373 = vld [vmem:[%s354 + $0x24] sm:$0xf]
      %v374 = vld [vmem:[%s354 + $0x2c] sm:$0xf]
      %v375 = vld [vmem:[%s354 + $0x34] sm:$0xf]
      %v376 = vld [vmem:[%s354 + $0x3c] sm:$0xf]
      %377 = vst [vmem:[#allocation2] sm:$0xf] 0
      %378 = vst [vmem:[#allocation2 + $0x4] sm:$0xf] 0
      %379 = vst [vmem:[#allocation2 + $0x8] sm:$0xf] 0
      %380 = vst [vmem:[#allocation2 + $0xc] sm:$0xf] 0
      %381 = vst [vmem:[#allocation2 + $0x10] sm:$0xf] 0
      %382 = vst [vmem:[#allocation2 + $0x14] sm:$0xf] 0
      %383 = vst [vmem:[#allocation2 + $0x18] sm:$0xf] 0
      %384 = vst [vmem:[#allocation2 + $0x1c] sm:$0xf] 0
      %385 = vst [vmem:[#allocation2 + $0x20] sm:$0xf] 0
      %386 = vst [vmem:[#allocation2 + $0x24] sm:$0xf] 0
      %387 = vst [vmem:[#allocation2 + $0x28] sm:$0xf] 0
      %388 = vst [vmem:[#allocation2 + $0x8] sm:$0xf] %v369
      %389 = vst [vmem:[#allocation2 + $0xc] sm:$0xf] %v370
      %390 = vst [vmem:[#allocation2 + $0x10] sm:$0xf] %v371
      %391 = vst [vmem:[#allocation2 + $0x14] sm:$0xf] %v372
      %392 = vst [vmem:[#allocation2 + $0x18] sm:$0xf] %v373
      %393 = vst [vmem:[#allocation2 + $0x1c] sm:$0xf] %v374
      %394 = vst [vmem:[#allocation2 + $0x20] sm:$0xf] %v375
      %395 = vst [vmem:[#allocation2 + $0x24] sm:$0xf] %v376
      %v396 = vld [vmem:[#allocation2 + $0x4] sm:$0x8]
      %v397 = vld [vmem:[#allocation2 + $0x8] sm:$0xf]
      %v398 = vld [vmem:[#allocation2 + $0xc] sm:$0xf]
      %v399 = vld [vmem:[#allocation2 + $0x10] sm:$0xf]
      %v400 = vld [vmem:[#allocation2 + $0x14] sm:$0xf]
      %v401 = vld [vmem:[#allocation2 + $0x18] sm:$0xf]
      %v402 = vld [vmem:[#allocation2 + $0x1c] sm:$0xf]
      %v403 = vld [vmem:[#allocation2 + $0x20] sm:$0xf]
      %v404 = vld [vmem:[#allocation2 + $0x24] sm:$0xf]
      %v405 = vld [vmem:[%s1] sm:$0xf]
      %v406 = vld [vmem:[%s1 + $0x4] sm:$0xf]
      %v407 = vld [vmem:[%s1 + $0x8] sm:$0xf]
      %v408 = vld [vmem:[%s1 + $0xc] sm:$0xf]
      %v409 = vld [vmem:[%s1 + $0x10] sm:$0xf]
      %v410 = vld [vmem:[%s1 + $0x14] sm:$0xf]
      %v411 = vld [vmem:[%s1 + $0x18] sm:$0xf]
      %v412 = vld [vmem:[%s1 + $0x1c] sm:$0xf]
      %v413 = vld [vmem:[%s1 + $0x20] sm:$0xf]
      %v414 = vld [vmem:[%s1 + $0x24] sm:$0xf]
      %v415 = vld [vmem:[%s1 + $0x28] sm:$0xf]
      %v416 = vld [vmem:[%s1 + $0x2c] sm:$0xf]
      %v417 = vld [vmem:[%s1 + $0x30] sm:$0xf]
      %v418 = vld [vmem:[%s1 + $0x34] sm:$0xf]
      %v419 = vld [vmem:[%s1 + $0x38] sm:$0xf]
      %v420 = vld [vmem:[%s1 + $0x3c] sm:$0xf]
      %s421 = scalar_lea.vmem %s1, 64
      %v422 = vld [vmem:[%s421] sm:$0xf]
      %v423 = vld [vmem:[%s421 + $0x4] sm:$0xf]
      %v424 = vld [vmem:[%s421 + $0x8] sm:$0xf]
      %v425 = vld [vmem:[%s421 + $0xc] sm:$0xf]
      %v426 = vld [vmem:[%s421 + $0x10] sm:$0xf]
      %v427 = vld [vmem:[%s421 + $0x14] sm:$0xf]
      %v428 = vld [vmem:[%s421 + $0x18] sm:$0xf]
      %v429 = vld [vmem:[%s421 + $0x1c] sm:$0xf]
      %v430 = vld [vmem:[%s421 + $0x20] sm:$0xf]
      %v431 = vld [vmem:[%s421 + $0x24] sm:$0xf]
      %v432 = vld [vmem:[%s421 + $0x28] sm:$0xf]
      %v433 = vld [vmem:[%s421 + $0x2c] sm:$0xf]
      %v434 = vld [vmem:[%s421 + $0x30] sm:$0xf]
      %v435 = vld [vmem:[%s421 + $0x34] sm:$0xf]
      %v436 = vld [vmem:[%s421 + $0x38] sm:$0xf]
      %v437 = vld [vmem:[%s421 + $0x3c] sm:$0xf]
      %v446 = vunpack.c.l.b16 %v361
      %v447 = vunpack.c.l.b16 %v362
      %v448 = vunpack.c.l.b16 %v363
      %v449 = vunpack.c.l.b16 %v364
      %v450 = vunpack.c.l.b16 %v365
      %v451 = vunpack.c.l.b16 %v366
      %v452 = vunpack.c.l.b16 %v367
      %v453 = vunpack.c.l.b16 %v368
      %v454 = vpack.c.b16 %v447, %v446
      %v455 = vpack.c.b16 %v449, %v448
      %v456 = vpack.c.b16 %v451, %v450
      %v457 = vpack.c.b16 %v453, %v452
      %v478 = vunpack.c.l.b16 %v422
      %v479 = vunpack.c.l.b16 %v423
      %v480 = vunpack.c.l.b16 %v424
      %v481 = vunpack.c.l.b16 %v425
      %v482 = vunpack.c.l.b16 %v426
      %v483 = vunpack.c.l.b16 %v427
      %v484 = vunpack.c.l.b16 %v428
      %v485 = vunpack.c.l.b16 %v429
      %v486 = vunpack.c.l.b16 %v430
      %v487 = vunpack.c.l.b16 %v431
      %v488 = vunpack.c.l.b16 %v432
      %v489 = vunpack.c.l.b16 %v433
      %v490 = vunpack.c.l.b16 %v434
      %v491 = vunpack.c.l.b16 %v435
      %v492 = vunpack.c.l.b16 %v436
      %v493 = vunpack.c.l.b16 %v437
      %v494 = vpack.c.b16 %v479, %v478
      %v495 = vpack.c.b16 %v481, %v480
      %v496 = vpack.c.b16 %v483, %v482
      %v497 = vpack.c.b16 %v485, %v484
      %v498 = vpack.c.b16 %v487, %v486
      %v499 = vpack.c.b16 %v489, %v488
      %v500 = vpack.c.b16 %v491, %v490
      %v501 = vpack.c.b16 %v493, %v492
      %510 = vmatprep.subr.bf16.mxu0 0
      %511 = vmatpush1.bf16.msra.mxu0 %v494
      %512 = vmatprep.subr.bf16.mxu0 0
      %513 = vmatpush1.bf16.msra.mxu0 %v495
      %514 = vmatprep.subr.bf16.mxu0 0
      %515 = vmatpush1.bf16.msra.mxu0 %v496
      %516 = vmatprep.subr.bf16.mxu0 0
      %517 = vmatpush1.bf16.msra.mxu0 %v497
      %518 = vmatprep.subr.bf16.mxu0 0
      %519 = vmatpush1.bf16.msra.mxu0 %v498
      %520 = vmatprep.subr.bf16.mxu0 0
      %521 = vmatpush1.bf16.msra.mxu0 %v499
      %522 = vmatprep.subr.bf16.mxu0 0
      %523 = vmatpush1.bf16.msra.mxu0 %v500
      %524 = vmatprep.subr.bf16.mxu0 0
      %525 = vmatpush1.bf16.msra.mxu0 %v501
      %526 = vmatprep.subr.bf16.mxu0 0
      %527 = vmatpush1.bf16.msra.mxu0 0
      %528 = vmatprep.subr.bf16.mxu0 0
      %529 = vmatpush1.bf16.msra.mxu0 0
      %530 = vmatprep.subr.bf16.mxu0 0
      %531 = vmatpush1.bf16.msra.mxu0 0
      %532 = vmatprep.subr.bf16.mxu0 0
      %533 = vmatpush1.bf16.msra.mxu0 0
      %534 = vmatprep.subr.bf16.mxu0 0
      %535 = vmatpush1.bf16.msra.mxu0 0
      %536 = vmatprep.subr.bf16.mxu0 0
      %537 = vmatpush1.bf16.msra.mxu0 0
      %538 = vmatprep.subr.bf16.mxu0 0
      %539 = vmatpush1.bf16.msra.mxu0 0
      %540 = vmatprep.subr.bf16.mxu0 0
      %541 = vmatpush1.bf16.msra.mxu0 0
      %542 = vmatprep.mubr.bf16.mxu0 0
      %543 = vmatmul.mubr.bf16.gmra.mrb[0].mxu0 %v454
      %v544 = vpop.f32.mrb[0].mxu0
      %v545 = vadd.f32 0.0, %v544
      %v546 = vpop.f32.mrb[0].mxu0
      %v547 = vpop.f32.mrb[0].mxu0
      %v548 = vadd.f32 0.0, %v547
      %v549 = vpop.f32.mrb[0].mxu0
      %550 = vmatprep.mubr.bf16.mxu0 0
      %551 = vmatmul.mubr.bf16.gmra.mrb[0].mxu0 %v455
      %v552 = vpop.f32.mrb[0].mxu0
      %v553 = vadd.f32 0.0, %v552
      %v554 = vpop.f32.mrb[0].mxu0
      %v555 = vpop.f32.mrb[0].mxu0
      %v556 = vadd.f32 0.0, %v555
      %v557 = vpop.f32.mrb[0].mxu0
      %558 = vmatprep.mubr.bf16.mxu0 0
      %559 = vmatmul.mubr.bf16.gmra.mrb[0].mxu0 %v456
      %v560 = vpop.f32.mrb[0].mxu0
      %v561 = vadd.f32 0.0, %v560
      %v562 = vpop.f32.mrb[0].mxu0
      %v563 = vpop.f32.mrb[0].mxu0
      %v564 = vadd.f32 0.0, %v563
      %v565 = vpop.f32.mrb[0].mxu0
      %566 = vmatprep.mubr.bf16.mxu0 0
      %567 = vmatmul.mubr.bf16.gmra.mrb[0].mxu0 %v457
      %v568 = vpop.f32.mrb[0].mxu0
      %v569 = vadd.f32 0.0, %v568
      %v570 = vpop.f32.mrb[0].mxu0
      %v571 = vpop.f32.mrb[0].mxu0
      %v572 = vadd.f32 0.0, %v571
      %v573 = vpop.f32.mrb[0].mxu0
      %574 = vdwg.mxu0
      %v584 = vunpack.c.l.b16 %v396
      %v585 = vunpack.c.l.b16 %v397
      %v586 = vunpack.c.l.b16 %v398
      %v587 = vunpack.c.l.b16 %v399
      %v588 = vunpack.c.l.b16 %v400
      %v589 = vunpack.c.l.b16 %v401
      %v590 = vunpack.c.l.b16 %v402
      %v591 = vunpack.c.l.b16 %v403
      %v592 = vunpack.c.l.b16 %v404
      %v593 = vpack.c.b16 %v585, %v584
      %v594 = vpack.c.b16 %v587, %v586
      %v595 = vpack.c.b16 %v589, %v588
      %v596 = vpack.c.b16 %v591, %v590
      %v597 = vpack.c.b16 %v592, %v592
      %vm598 = vsmask.f32 4352
      %v600 = vshrl.u32 %v593, 16
      %v602 = vrot.slane %v600, 3
      %v603 = vshll.u32 %v593, 16
      %v605 = vrot.slane %v603, 4
      %v606 = vor.u32 %v602, %v605
      %v608 = vshrl.u32 %v594, 16
      %v610 = vrot.slane %v608, 3
      %v611 = vshll.u32 %v594, 16
      %v613 = vrot.slane %v611, 4
      %v614 = vor.u32 %v610, %v613
      %v615 = vsel %vm598, %v606, %v614
      %v617 = vshrl.u32 %v595, 16
      %v619 = vrot.slane %v617, 3
      %v620 = vshll.u32 %v595, 16
      %v622 = vrot.slane %v620, 4
      %v623 = vor.u32 %v619, %v622
      %v624 = vsel %vm598, %v614, %v623
      %v626 = vshrl.u32 %v596, 16
      %v628 = vrot.slane %v626, 3
      %v629 = vshll.u32 %v596, 16
      %v631 = vrot.slane %v629, 4
      %v632 = vor.u32 %v628, %v631
      %v633 = vsel %vm598, %v623, %v632
      %v635 = vshrl.u32 %v597, 16
      %v637 = vrot.slane %v635, 3
      %v638 = vshll.u32 %v597, 16
      %v640 = vrot.slane %v638, 4
      %v641 = vor.u32 %v637, %v640
      %v642 = vsel %vm598, %v632, %v641
      %v663 = vunpack.c.l.b16 %v405
      %v664 = vunpack.c.l.b16 %v406
      %v665 = vunpack.c.l.b16 %v407
      %v666 = vunpack.c.l.b16 %v408
      %v667 = vunpack.c.l.b16 %v409
      %v668 = vunpack.c.l.b16 %v410
      %v669 = vunpack.c.l.b16 %v411
      %v670 = vunpack.c.l.b16 %v412
      %v671 = vunpack.c.l.b16 %v413
      %v672 = vunpack.c.l.b16 %v414
      %v673 = vunpack.c.l.b16 %v415
      %v674 = vunpack.c.l.b16 %v416
      %v675 = vunpack.c.l.b16 %v417
      %v676 = vunpack.c.l.b16 %v418
      %v677 = vunpack.c.l.b16 %v419
      %v678 = vunpack.c.l.b16 %v420
      %v679 = vpack.c.b16 %v664, %v663
      %v680 = vpack.c.b16 %v666, %v665
      %v681 = vpack.c.b16 %v668, %v667
      %v682 = vpack.c.b16 %v670, %v669
      %v683 = vpack.c.b16 %v672, %v671
      %v684 = vpack.c.b16 %v674, %v673
      %v685 = vpack.c.b16 %v676, %v675
      %v686 = vpack.c.b16 %v678, %v677
      %695 = vmatprep.subr.bf16.mxu0 0
      %696 = vmatpush1.bf16.msra.mxu0 %v679
      %697 = vmatprep.subr.bf16.mxu0 0
      %698 = vmatpush1.bf16.msra.mxu0 %v680
      %699 = vmatprep.subr.bf16.mxu0 0
      %700 = vmatpush1.bf16.msra.mxu0 %v681
      %701 = vmatprep.subr.bf16.mxu0 0
      %702 = vmatpush1.bf16.msra.mxu0 %v682
      %703 = vmatprep.subr.bf16.mxu0 0
      %704 = vmatpush1.bf16.msra.mxu0 %v683
      %705 = vmatprep.subr.bf16.mxu0 0
      %706 = vmatpush1.bf16.msra.mxu0 %v684
      %707 = vmatprep.subr.bf16.mxu0 0
      %708 = vmatpush1.bf16.msra.mxu0 %v685
      %709 = vmatprep.subr.bf16.mxu0 0
      %710 = vmatpush1.bf16.msra.mxu0 %v686
      %711 = vmatprep.subr.bf16.mxu0 0
      %712 = vmatpush1.bf16.msra.mxu0 0
      %713 = vmatprep.subr.bf16.mxu0 0
      %714 = vmatpush1.bf16.msra.mxu0 0
      %715 = vmatprep.subr.bf16.mxu0 0
      %716 = vmatpush1.bf16.msra.mxu0 0
      %717 = vmatprep.subr.bf16.mxu0 0
      %718 = vmatpush1.bf16.msra.mxu0 0
      %719 = vmatprep.subr.bf16.mxu0 0
      %720 = vmatpush1.bf16.msra.mxu0 0
      %721 = vmatprep.subr.bf16.mxu0 0
      %722 = vmatpush1.bf16.msra.mxu0 0
      %723 = vmatprep.subr.bf16.mxu0 0
      %724 = vmatpush1.bf16.msra.mxu0 0
      %725 = vmatprep.subr.bf16.mxu0 0
      %726 = vmatpush1.bf16.msra.mxu0 0
      %727 = vmatprep.mubr.bf16.mxu0 0
      %728 = vmatmul.mubr.bf16.gmra.mrb[0].mxu0 %v615
      %v729 = vpop.f32.mrb[0].mxu0
      %v730 = vadd.f32 %v545, %v729
      %v731 = vpop.f32.mrb[0].mxu0
      %v732 = vpop.f32.mrb[0].mxu0
      %v733 = vadd.f32 %v548, %v732
      %v734 = vpop.f32.mrb[0].mxu0
      %735 = vmatprep.mubr.bf16.mxu0 0
      %736 = vmatmul.mubr.bf16.gmra.mrb[0].mxu0 %v624
      %v737 = vpop.f32.mrb[0].mxu0
      %v738 = vadd.f32 %v553, %v737
      %v739 = vpop.f32.mrb[0].mxu0
      %v740 = vpop.f32.mrb[0].mxu0
      %v741 = vadd.f32 %v556, %v740
      %v742 = vpop.f32.mrb[0].mxu0
      %743 = vmatprep.mubr.bf16.mxu0 0
      %744 = vmatmul.mubr.bf16.gmra.mrb[0].mxu0 %v633
      %v745 = vpop.f32.mrb[0].mxu0
      %v746 = vadd.f32 %v561, %v745
      %v747 = vpop.f32.mrb[0].mxu0
      %v748 = vpop.f32.mrb[0].mxu0
      %v749 = vadd.f32 %v564, %v748
      %v750 = vpop.f32.mrb[0].mxu0
      %751 = vmatprep.mubr.bf16.mxu0 0
      %752 = vmatmul.mubr.bf16.gmra.mrb[0].mxu0 %v642
      %v753 = vpop.f32.mrb[0].mxu0
      %v754 = vadd.f32 %v569, %v753
      %v755 = vpop.f32.mrb[0].mxu0
      %v756 = vpop.f32.mrb[0].mxu0
      %v757 = vadd.f32 %v572, %v756
      %v758 = vpop.f32.mrb[0].mxu0
      %759 = vdwg.mxu0
      %s760 = scalar_lea.vmem %s1, 128
      %v761 = vld [vmem:[%s760] sm:$0xf]
      %v762 = vld [vmem:[%s760 + $0x4] sm:$0xf]
      %v763 = vld [vmem:[%s760 + $0x8] sm:$0xf]
      %v764 = vld [vmem:[%s760 + $0xc] sm:$0xf]
      %v765 = vld [vmem:[%s760 + $0x10] sm:$0xf]
      %v766 = vld [vmem:[%s760 + $0x14] sm:$0xf]
      %v767 = vld [vmem:[%s760 + $0x18] sm:$0xf]
      %v768 = vld [vmem:[%s760 + $0x1c] sm:$0xf]
      %v769 = vld [vmem:[%s760 + $0x20] sm:$0xf]
      %v770 = vld [vmem:[%s760 + $0x24] sm:$0xf]
      %v771 = vld [vmem:[%s760 + $0x28] sm:$0xf]
      %v772 = vld [vmem:[%s760 + $0x2c] sm:$0xf]
      %v773 = vld [vmem:[%s760 + $0x30] sm:$0xf]
      %v774 = vld [vmem:[%s760 + $0x34] sm:$0xf]
      %v775 = vld [vmem:[%s760 + $0x38] sm:$0xf]
      %v776 = vld [vmem:[%s760 + $0x3c] sm:$0xf]
      %v785 = vunpack.c.l.b16 %v369
      %v786 = vunpack.c.l.b16 %v370
      %v787 = vunpack.c.l.b16 %v371
      %v788 = vunpack.c.l.b16 %v372
      %v789 = vunpack.c.l.b16 %v373
      %v790 = vunpack.c.l.b16 %v374
      %v791 = vunpack.c.l.b16 %v375
      %v792 = vunpack.c.l.b16 %v376
      %v793 = vpack.c.b16 %v786, %v785
      %v794 = vpack.c.b16 %v788, %v787
      %v795 = vpack.c.b16 %v790, %v789
      %v796 = vpack.c.b16 %v792, %v791
      %v817 = vunpack.c.l.b16 %v761
      %v818 = vunpack.c.l.b16 %v762
      %v819 = vunpack.c.l.b16 %v763
      %v820 = vunpack.c.l.b16 %v764
      %v821 = vunpack.c.l.b16 %v765
      %v822 = vunpack.c.l.b16 %v766
      %v823 = vunpack.c.l.b16 %v767
      %v824 = vunpack.c.l.b16 %v768
      %v825 = vunpack.c.l.b16 %v769
      %v826 = vunpack.c.l.b16 %v770
      %v827 = vunpack.c.l.b16 %v771
      %v828 = vunpack.c.l.b16 %v772
      %v829 = vunpack.c.l.b16 %v773
      %v830 = vunpack.c.l.b16 %v774
      %v831 = vunpack.c.l.b16 %v775
      %v832 = vunpack.c.l.b16 %v776
      %v833 = vpack.c.b16 %v818, %v817
      %v834 = vpack.c.b16 %v820, %v819
      %v835 = vpack.c.b16 %v822, %v821
      %v836 = vpack.c.b16 %v824, %v823
      %v837 = vpack.c.b16 %v826, %v825
      %v838 = vpack.c.b16 %v828, %v827
      %v839 = vpack.c.b16 %v830, %v829
      %v840 = vpack.c.b16 %v832, %v831
      %849 = vmatprep.subr.bf16.mxu0 0
      %850 = vmatpush1.bf16.msra.mxu0 %v833
      %851 = vmatprep.subr.bf16.mxu0 0
      %852 = vmatpush1.bf16.msra.mxu0 %v834
      %853 = vmatprep.subr.bf16.mxu0 0
      %854 = vmatpush1.bf16.msra.mxu0 %v835
      %855 = vmatprep.subr.bf16.mxu0 0
      %856 = vmatpush1.bf16.msra.mxu0 %v836
      %857 = vmatprep.subr.bf16.mxu0 0
      %858 = vmatpush1.bf16.msra.mxu0 %v837
      %859 = vmatprep.subr.bf16.mxu0 0
      %860 = vmatpush1.bf16.msra.mxu0 %v838
      %861 = vmatprep.subr.bf16.mxu0 0
      %862 = vmatpush1.bf16.msra.mxu0 %v839
      %863 = vmatprep.subr.bf16.mxu0 0
      %864 = vmatpush1.bf16.msra.mxu0 %v840
      %865 = vmatprep.subr.bf16.mxu0 0
      %866 = vmatpush1.bf16.msra.mxu0 0
      %867 = vmatprep.subr.bf16.mxu0 0
      %868 = vmatpush1.bf16.msra.mxu0 0
      %869 = vmatprep.subr.bf16.mxu0 0
      %870 = vmatpush1.bf16.msra.mxu0 0
      %871 = vmatprep.subr.bf16.mxu0 0
      %872 = vmatpush1.bf16.msra.mxu0 0
      %873 = vmatprep.subr.bf16.mxu0 0
      %874 = vmatpush1.bf16.msra.mxu0 0
      %875 = vmatprep.subr.bf16.mxu0 0
      %876 = vmatpush1.bf16.msra.mxu0 0
      %877 = vmatprep.subr.bf16.mxu0 0
      %878 = vmatpush1.bf16.msra.mxu0 0
      %879 = vmatprep.subr.bf16.mxu0 0
      %880 = vmatpush1.bf16.msra.mxu0 0
      %881 = vmatprep.mubr.bf16.mxu0 0
      %882 = vmatmul.mubr.bf16.gmra.mrb[0].mxu0 %v793
      %v883 = vpop.f32.mrb[0].mxu0
      %v884 = vadd.f32 0.0, %v883
      %v885 = vpop.f32.mrb[0].mxu0
      %v886 = vpop.f32.mrb[0].mxu0
      %v887 = vadd.f32 0.0, %v886
      %v888 = vpop.f32.mrb[0].mxu0
      %889 = vmatprep.mubr.bf16.mxu0 0
      %890 = vmatmul.mubr.bf16.gmra.mrb[0].mxu0 %v794
      %v891 = vpop.f32.mrb[0].mxu0
      %v892 = vadd.f32 0.0, %v891
      %v893 = vpop.f32.mrb[0].mxu0
      %v894 = vpop.f32.mrb[0].mxu0
      %v895 = vadd.f32 0.0, %v894
      %v896 = vpop.f32.mrb[0].mxu0
      %897 = vmatprep.mubr.bf16.mxu0 0
      %898 = vmatmul.mubr.bf16.gmra.mrb[0].mxu0 %v795
      %v899 = vpop.f32.mrb[0].mxu0
      %v900 = vadd.f32 0.0, %v899
      %v901 = vpop.f32.mrb[0].mxu0
      %v902 = vpop.f32.mrb[0].mxu0
      %v903 = vadd.f32 0.0, %v902
      %v904 = vpop.f32.mrb[0].mxu0
      %905 = vmatprep.mubr.bf16.mxu0 0
      %906 = vmatmul.mubr.bf16.gmra.mrb[0].mxu0 %v796
      %v907 = vpop.f32.mrb[0].mxu0
      %v908 = vadd.f32 0.0, %v907
      %v909 = vpop.f32.mrb[0].mxu0
      %v910 = vpop.f32.mrb[0].mxu0
      %v911 = vadd.f32 0.0, %v910
      %v912 = vpop.f32.mrb[0].mxu0
      %913 = vdwg.mxu0
      %v914 = vadd.f32 %v730, %v884
      %v915 = vadd.f32 %v733, %v887
      %v916 = vadd.f32 %v738, %v892
      %v917 = vadd.f32 %v741, %v895
      %v918 = vadd.f32 %v746, %v900
      %v919 = vadd.f32 %v749, %v903
      %v920 = vadd.f32 %v754, %v908
      %v921 = vadd.f32 %v757, %v911
      %v922 = vld [vmem:[%s2] sm:$0x1]
      %v924 = vlaneseq
      %v925 = vshrl.u32 %v924, 7
      %v926 = vsub.s32 0, %v925
      %v927 = vrot.slane %v922, %v926
      %v929 = vmul.f32 %v914, %v927
      %v930 = vmul.f32 %v915, %v927
      %v931 = vmul.f32 %v916, %v927
      %v932 = vmul.f32 %v917, %v927
      %v933 = vmul.f32 %v918, %v927
      %v934 = vmul.f32 %v919, %v927
      %v935 = vmul.f32 %v920, %v927
      %v936 = vmul.f32 %v921, %v927
      %v937 = vld [vmem:[%s3] sm:$0x1]
      %v939 = vlaneseq
      %v940 = vshrl.u32 %v939, 7
      %v941 = vsub.s32 0, %v940
      %v942 = vrot.slane %v937, %v941
      %v944 = vadd.f32 %v929, %v942
      %v945 = vadd.f32 %v930, %v942
      %v946 = vadd.f32 %v931, %v942
      %v947 = vadd.f32 %v932, %v942
      %v948 = vadd.f32 %v933, %v942
      %v949 = vadd.f32 %v934, %v942
      %v950 = vadd.f32 %v935, %v942
      %v951 = vadd.f32 %v936, %v942
      %v952 = vmax.f32 %v944, 0.0
      %v953 = vmax.f32 %v945, 0.0
      %v954 = vmax.f32 %v946, 0.0
      %v955 = vmax.f32 %v947, 0.0
      %v956 = vmax.f32 %v948, 0.0
      %v957 = vmax.f32 %v949, 0.0
      %v958 = vmax.f32 %v950, 0.0
      %v959 = vmax.f32 %v951, 0.0
      %v960 = vpack.c.bf16 %v953, %v952
      %v961 = vpack.c.bf16 %v955, %v954
      %v962 = vpack.c.bf16 %v957, %v956
      %v963 = vpack.c.bf16 %v959, %v958
      %964 = vst [vmem:[#allocation3] sm:$0xf] 0
      %965 = vst [vmem:[#allocation3 + $0x4] sm:$0xf] 0
      %966 = vst [vmem:[#allocation3 + $0x8] sm:$0xf] 0
      %967 = vst [vmem:[#allocation3 + $0xc] sm:$0xf] 0
      %968 = vst [vmem:[#allocation3 + $0x10] sm:$0xf] 0
      %969 = vst [vmem:[#allocation3 + $0x14] sm:$0xf] 0
      %970 = vst [vmem:[#allocation3 + $0x18] sm:$0xf] 0
      %971 = vst [vmem:[#allocation3 + $0x1c] sm:$0xf] 0
      %972 = vst [vmem:[#allocation3 + $0x20] sm:$0xf] 0
      %973 = vst [vmem:[#allocation3 + $0x24] sm:$0xf] 0
      %974 = vst [vmem:[#allocation3 + $0x28] sm:$0xf] 0
      %v979 = vunpack.c.l.b16 %v960
      %v980 = vunpack.c.h.b16 %v960
      %v981 = vunpack.c.l.b16 %v961
      %v982 = vunpack.c.h.b16 %v961
      %v983 = vunpack.c.l.b16 %v962
      %v984 = vunpack.c.h.b16 %v962
      %v985 = vunpack.c.l.b16 %v963
      %v986 = vunpack.c.h.b16 %v963
      %v987 = vpack.c.b16 %v979, %v979
      %v988 = vpack.c.b16 %v980, %v980
      %v989 = vpack.c.b16 %v981, %v981
      %v990 = vpack.c.b16 %v982, %v982
      %v991 = vpack.c.b16 %v983, %v983
      %v992 = vpack.c.b16 %v984, %v984
      %v993 = vpack.c.b16 %v985, %v985
      %v994 = vpack.c.b16 %v986, %v986
      %1003 = vst [vmem:[#allocation3 + $0x8] sm:$0xf] %v987
      %1004 = vst [vmem:[#allocation3 + $0xc] sm:$0xf] %v988
      %1005 = vst [vmem:[#allocation3 + $0x10] sm:$0xf] %v989
      %1006 = vst [vmem:[#allocation3 + $0x14] sm:$0xf] %v990
      %1007 = vst [vmem:[#allocation3 + $0x18] sm:$0xf] %v991
      %1008 = vst [vmem:[#allocation3 + $0x1c] sm:$0xf] %v992
      %1009 = vst [vmem:[#allocation3 + $0x20] sm:$0xf] %v993
      %1010 = vst [vmem:[#allocation3 + $0x24] sm:$0xf] %v994
      %v1011 = vld [vmem:[#allocation3 + $0x4] sm:$0x8]
      %v1012 = vld [vmem:[#allocation3 + $0x8] sm:$0xf]
      %v1013 = vld [vmem:[#allocation3 + $0xc] sm:$0xf]
      %v1014 = vld [vmem:[#allocation3 + $0x10] sm:$0xf]
      %v1015 = vld [vmem:[#allocation3 + $0x14] sm:$0xf]
      %v1016 = vld [vmem:[#allocation3 + $0x18] sm:$0xf]
      %v1017 = vld [vmem:[#allocation3 + $0x1c] sm:$0xf]
      %v1018 = vld [vmem:[#allocation3 + $0x20] sm:$0xf]
      %v1019 = vld [vmem:[#allocation3 + $0x24] sm:$0xf]
      %v1020 = vld [vmem:[%s4] sm:$0xf]
      %v1021 = vld [vmem:[%s4 + $0x4] sm:$0xf]
      %v1022 = vld [vmem:[%s4 + $0x8] sm:$0xf]
      %v1023 = vld [vmem:[%s4 + $0xc] sm:$0xf]
      %v1024 = vld [vmem:[%s4 + $0x10] sm:$0xf]
      %v1025 = vld [vmem:[%s4 + $0x14] sm:$0xf]
      %v1026 = vld [vmem:[%s4 + $0x18] sm:$0xf]
      %v1027 = vld [vmem:[%s4 + $0x1c] sm:$0xf]
      %v1028 = vld [vmem:[%s4 + $0x20] sm:$0xf]
      %v1029 = vld [vmem:[%s4 + $0x24] sm:$0xf]
      %v1030 = vld [vmem:[%s4 + $0x28] sm:$0xf]
      %v1031 = vld [vmem:[%s4 + $0x2c] sm:$0xf]
      %v1032 = vld [vmem:[%s4 + $0x30] sm:$0xf]
      %v1033 = vld [vmem:[%s4 + $0x34] sm:$0xf]
      %v1034 = vld [vmem:[%s4 + $0x38] sm:$0xf]
      %v1035 = vld [vmem:[%s4 + $0x3c] sm:$0xf]
      %s1036 = scalar_lea.vmem %s4, 64
      %v1037 = vld [vmem:[%s1036] sm:$0xf]
      %v1038 = vld [vmem:[%s1036 + $0x4] sm:$0xf]
      %v1039 = vld [vmem:[%s1036 + $0x8] sm:$0xf]
      %v1040 = vld [vmem:[%s1036 + $0xc] sm:$0xf]
      %v1041 = vld [vmem:[%s1036 + $0x10] sm:$0xf]
      %v1042 = vld [vmem:[%s1036 + $0x14] sm:$0xf]
      %v1043 = vld [vmem:[%s1036 + $0x18] sm:$0xf]
      %v1044 = vld [vmem:[%s1036 + $0x1c] sm:$0xf]
      %v1045 = vld [vmem:[%s1036 + $0x20] sm:$0xf]
      %v1046 = vld [vmem:[%s1036 + $0x24] sm:$0xf]
      %v1047 = vld [vmem:[%s1036 + $0x28] sm:$0xf]
      %v1048 = vld [vmem:[%s1036 + $0x2c] sm:$0xf]
      %v1049 = vld [vmem:[%s1036 + $0x30] sm:$0xf]
      %v1050 = vld [vmem:[%s1036 + $0x34] sm:$0xf]
      %v1051 = vld [vmem:[%s1036 + $0x38] sm:$0xf]
      %v1052 = vld [vmem:[%s1036 + $0x3c] sm:$0xf]
      %v1061 = vunpack.c.l.b16 %v1012
      %v1062 = vunpack.c.l.b16 %v1013
      %v1063 = vunpack.c.l.b16 %v1014
      %v1064 = vunpack.c.l.b16 %v1015
      %v1065 = vunpack.c.l.b16 %v1016
      %v1066 = vunpack.c.l.b16 %v1017
      %v1067 = vunpack.c.l.b16 %v1018
      %v1068 = vunpack.c.l.b16 %v1019
      %v1069 = vpack.c.b16 %v1062, %v1061
      %v1070 = vpack.c.b16 %v1064, %v1063
      %v1071 = vpack.c.b16 %v1066, %v1065
      %v1072 = vpack.c.b16 %v1068, %v1067
      %v1093 = vunpack.c.l.b16 %v1037
      %v1094 = vunpack.c.l.b16 %v1038
      %v1095 = vunpack.c.l.b16 %v1039
      %v1096 = vunpack.c.l.b16 %v1040
      %v1097 = vunpack.c.l.b16 %v1041
      %v1098 = vunpack.c.l.b16 %v1042
      %v1099 = vunpack.c.l.b16 %v1043
      %v1100 = vunpack.c.l.b16 %v1044
      %v1101 = vunpack.c.l.b16 %v1045
      %v1102 = vunpack.c.l.b16 %v1046
      %v1103 = vunpack.c.l.b16 %v1047
      %v1104 = vunpack.c.l.b16 %v1048
      %v1105 = vunpack.c.l.b16 %v1049
      %v1106 = vunpack.c.l.b16 %v1050
      %v1107 = vunpack.c.l.b16 %v1051
      %v1108 = vunpack.c.l.b16 %v1052
      %v1109 = vpack.c.b16 %v1094, %v1093
      %v1110 = vpack.c.b16 %v1096, %v1095
      %v1111 = vpack.c.b16 %v1098, %v1097
      %v1112 = vpack.c.b16 %v1100, %v1099
      %v1113 = vpack.c.b16 %v1102, %v1101
      %v1114 = vpack.c.b16 %v1104, %v1103
      %v1115 = vpack.c.b16 %v1106, %v1105
      %v1116 = vpack.c.b16 %v1108, %v1107
      %1125 = vmatprep.subr.bf16.mxu0 0
      %1126 = vmatpush1.bf16.msra.mxu0 %v1109
      %1127 = vmatprep.subr.bf16.mxu0 0
      %1128 = vmatpush1.bf16.msra.mxu0 %v1110
      %1129 = vmatprep.subr.bf16.mxu0 0
      %1130 = vmatpush1.bf16.msra.mxu0 %v1111
      %1131 = vmatprep.subr.bf16.mxu0 0
      %1132 = vmatpush1.bf16.msra.mxu0 %v1112
      %1133 = vmatprep.subr.bf16.mxu0 0
      %1134 = vmatpush1.bf16.msra.mxu0 %v1113
      %1135 = vmatprep.subr.bf16.mxu0 0
      %1136 = vmatpush1.bf16.msra.mxu0 %v1114
      %1137 = vmatprep.subr.bf16.mxu0 0
      %1138 = vmatpush1.bf16.msra.mxu0 %v1115
      %1139 = vmatprep.subr.bf16.mxu0 0
      %1140 = vmatpush1.bf16.msra.mxu0 %v1116
      %1141 = vmatprep.subr.bf16.mxu0 0
      %1142 = vmatpush1.bf16.msra.mxu0 0
      %1143 = vmatprep.subr.bf16.mxu0 0
      %1144 = vmatpush1.bf16.msra.mxu0 0
      %1145 = vmatprep.subr.bf16.mxu0 0
      %1146 = vmatpush1.bf16.msra.mxu0 0
      %1147 = vmatprep.subr.bf16.mxu0 0
      %1148 = vmatpush1.bf16.msra.mxu0 0
      %1149 = vmatprep.subr.bf16.mxu0 0
      %1150 = vmatpush1.bf16.msra.mxu0 0
      %1151 = vmatprep.subr.bf16.mxu0 0
      %1152 = vmatpush1.bf16.msra.mxu0 0
      %1153 = vmatprep.subr.bf16.mxu0 0
      %1154 = vmatpush1.bf16.msra.mxu0 0
      %1155 = vmatprep.subr.bf16.mxu0 0
      %1156 = vmatpush1.bf16.msra.mxu0 0
      %1157 = vmatprep.mubr.bf16.mxu0 0
      %1158 = vmatmul.mubr.bf16.gmra.mrb[0].mxu0 %v1069
      %v1159 = vpop.f32.mrb[0].mxu0
      %v1160 = vadd.f32 0.0, %v1159
      %v1161 = vpop.f32.mrb[0].mxu0
      %v1162 = vpop.f32.mrb[0].mxu0
      %v1163 = vadd.f32 0.0, %v1162
      %v1164 = vpop.f32.mrb[0].mxu0
      %1165 = vmatprep.mubr.bf16.mxu0 0
      %1166 = vmatmul.mubr.bf16.gmra.mrb[0].mxu0 %v1070
      %v1167 = vpop.f32.mrb[0].mxu0
      %v1168 = vadd.f32 0.0, %v1167
      %v1169 = vpop.f32.mrb[0].mxu0
      %v1170 = vpop.f32.mrb[0].mxu0
      %v1171 = vadd.f32 0.0, %v1170
      %v1172 = vpop.f32.mrb[0].mxu0
      %1173 = vmatprep.mubr.bf16.mxu0 0
      %1174 = vmatmul.mubr.bf16.gmra.mrb[0].mxu0 %v1071
      %v1175 = vpop.f32.mrb[0].mxu0
      %v1176 = vadd.f32 0.0, %v1175
      %v1177 = vpop.f32.mrb[0].mxu0
      %v1178 = vpop.f32.mrb[0].mxu0
      %v1179 = vadd.f32 0.0, %v1178
      %v1180 = vpop.f32.mrb[0].mxu0
      %1181 = vmatprep.mubr.bf16.mxu0 0
      %1182 = vmatmul.mubr.bf16.gmra.mrb[0].mxu0 %v1072
      %v1183 = vpop.f32.mrb[0].mxu0
      %v1184 = vadd.f32 0.0, %v1183
      %v1185 = vpop.f32.mrb[0].mxu0
      %v1186 = vpop.f32.mrb[0].mxu0
      %v1187 = vadd.f32 0.0, %v1186
      %v1188 = vpop.f32.mrb[0].mxu0
      %1189 = vdwg.mxu0
      %v1191 = vunpack.c.l.b16 %v1011
      %v1192 = vpack.c.b16 %v1061, %v1191
      %v1193 = vpack.c.b16 %v1063, %v1062
      %v1194 = vpack.c.b16 %v1065, %v1064
      %v1195 = vpack.c.b16 %v1067, %v1066
      %v1196 = vpack.c.b16 %v1068, %v1068
      %v1198 = vshrl.u32 %v1192, 16
      %v1200 = vrot.slane %v1198, 3
      %v1201 = vshll.u32 %v1192, 16
      %v1203 = vrot.slane %v1201, 4
      %v1204 = vor.u32 %v1200, %v1203
      %v1206 = vshrl.u32 %v1193, 16
      %v1208 = vrot.slane %v1206, 3
      %v1209 = vshll.u32 %v1193, 16
      %v1211 = vrot.slane %v1209, 4
      %v1212 = vor.u32 %v1208, %v1211
      %v1213 = vsel %vm598, %v1204, %v1212
      %v1215 = vshrl.u32 %v1194, 16
      %v1217 = vrot.slane %v1215, 3
      %v1218 = vshll.u32 %v1194, 16
      %v1220 = vrot.slane %v1218, 4
      %v1221 = vor.u32 %v1217, %v1220
      %v1222 = vsel %vm598, %v1212, %v1221
      %v1224 = vshrl.u32 %v1195, 16
      %v1226 = vrot.slane %v1224, 3
      %v1227 = vshll.u32 %v1195, 16
      %v1229 = vrot.slane %v1227, 4
      %v1230 = vor.u32 %v1226, %v1229
      %v1231 = vsel %vm598, %v1221, %v1230
      %v1233 = vshrl.u32 %v1196, 16
      %v1235 = vrot.slane %v1233, 3
      %v1236 = vshll.u32 %v1196, 16
      %v1238 = vrot.slane %v1236, 4
      %v1239 = vor.u32 %v1235, %v1238
      %v1240 = vsel %vm598, %v1230, %v1239
      %v1261 = vunpack.c.l.b16 %v1020
      %v1262 = vunpack.c.l.b16 %v1021
      %v1263 = vunpack.c.l.b16 %v1022
      %v1264 = vunpack.c.l.b16 %v1023
      %v1265 = vunpack.c.l.b16 %v1024
      %v1266 = vunpack.c.l.b16 %v1025
      %v1267 = vunpack.c.l.b16 %v1026
      %v1268 = vunpack.c.l.b16 %v1027
      %v1269 = vunpack.c.l.b16 %v1028
      %v1270 = vunpack.c.l.b16 %v1029
      %v1271 = vunpack.c.l.b16 %v1030
      %v1272 = vunpack.c.l.b16 %v1031
      %v1273 = vunpack.c.l.b16 %v1032
      %v1274 = vunpack.c.l.b16 %v1033
      %v1275 = vunpack.c.l.b16 %v1034
      %v1276 = vunpack.c.l.b16 %v1035
      %v1277 = vpack.c.b16 %v1262, %v1261
      %v1278 = vpack.c.b16 %v1264, %v1263
      %v1279 = vpack.c.b16 %v1266, %v1265
      %v1280 = vpack.c.b16 %v1268, %v1267
      %v1281 = vpack.c.b16 %v1270, %v1269
      %v1282 = vpack.c.b16 %v1272, %v1271
      %v1283 = vpack.c.b16 %v1274, %v1273
      %v1284 = vpack.c.b16 %v1276, %v1275
      %1293 = vmatprep.subr.bf16.mxu0 0
      %1294 = vmatpush1.bf16.msra.mxu0 %v1277
      %1295 = vmatprep.subr.bf16.mxu0 0
      %1296 = vmatpush1.bf16.msra.mxu0 %v1278
      %1297 = vmatprep.subr.bf16.mxu0 0
      %1298 = vmatpush1.bf16.msra.mxu0 %v1279
      %1299 = vmatprep.subr.bf16.mxu0 0
      %1300 = vmatpush1.bf16.msra.mxu0 %v1280
      %1301 = vmatprep.subr.bf16.mxu0 0
      %1302 = vmatpush1.bf16.msra.mxu0 %v1281
      %1303 = vmatprep.subr.bf16.mxu0 0
      %1304 = vmatpush1.bf16.msra.mxu0 %v1282
      %1305 = vmatprep.subr.bf16.mxu0 0
      %1306 = vmatpush1.bf16.msra.mxu0 %v1283
      %1307 = vmatprep.subr.bf16.mxu0 0
      %1308 = vmatpush1.bf16.msra.mxu0 %v1284
      %1309 = vmatprep.subr.bf16.mxu0 0
      %1310 = vmatpush1.bf16.msra.mxu0 0
      %1311 = vmatprep.subr.bf16.mxu0 0
      %1312 = vmatpush1.bf16.msra.mxu0 0
      %1313 = vmatprep.subr.bf16.mxu0 0
      %1314 = vmatpush1.bf16.msra.mxu0 0
      %1315 = vmatprep.subr.bf16.mxu0 0
      %1316 = vmatpush1.bf16.msra.mxu0 0
      %1317 = vmatprep.subr.bf16.mxu0 0
      %1318 = vmatpush1.bf16.msra.mxu0 0
      %1319 = vmatprep.subr.bf16.mxu0 0
      %1320 = vmatpush1.bf16.msra.mxu0 0
      %1321 = vmatprep.subr.bf16.mxu0 0
      %1322 = vmatpush1.bf16.msra.mxu0 0
      %1323 = vmatprep.subr.bf16.mxu0 0
      %1324 = vmatpush1.bf16.msra.mxu0 0
      %1325 = vmatprep.mubr.bf16.mxu0 0
      %1326 = vmatmul.mubr.bf16.gmra.mrb[0].mxu0 %v1213
      %v1327 = vpop.f32.mrb[0].mxu0
      %v1328 = vadd.f32 %v1160, %v1327
      %v1329 = vpop.f32.mrb[0].mxu0
      %v1330 = vpop.f32.mrb[0].mxu0
      %v1331 = vadd.f32 %v1163, %v1330
      %v1332 = vpop.f32.mrb[0].mxu0
      %1333 = vmatprep.mubr.bf16.mxu0 0
      %1334 = vmatmul.mubr.bf16.gmra.mrb[0].mxu0 %v1222
      %v1335 = vpop.f32.mrb[0].mxu0
      %v1336 = vadd.f32 %v1168, %v1335
      %v1337 = vpop.f32.mrb[0].mxu0
      %v1338 = vpop.f32.mrb[0].mxu0
      %v1339 = vadd.f32 %v1171, %v1338
      %v1340 = vpop.f32.mrb[0].mxu0
      %1341 = vmatprep.mubr.bf16.mxu0 0
      %1342 = vmatmul.mubr.bf16.gmra.mrb[0].mxu0 %v1231
      %v1343 = vpop.f32.mrb[0].mxu0
      %v1344 = vadd.f32 %v1176, %v1343
      %v1345 = vpop.f32.mrb[0].mxu0
      %v1346 = vpop.f32.mrb[0].mxu0
      %v1347 = vadd.f32 %v1179, %v1346
      %v1348 = vpop.f32.mrb[0].mxu0
      %1349 = vmatprep.mubr.bf16.mxu0 0
      %1350 = vmatmul.mubr.bf16.gmra.mrb[0].mxu0 %v1240
      %v1351 = vpop.f32.mrb[0].mxu0
      %v1352 = vadd.f32 %v1184, %v1351
      %v1353 = vpop.f32.mrb[0].mxu0
      %v1354 = vpop.f32.mrb[0].mxu0
      %v1355 = vadd.f32 %v1187, %v1354
      %v1356 = vpop.f32.mrb[0].mxu0
      %1357 = vdwg.mxu0
      %v1358 = vld [vmem:[#allocation3 + $0x8] sm:$0xf]
      %v1359 = vld [vmem:[#allocation3 + $0xc] sm:$0xf]
      %v1360 = vld [vmem:[#allocation3 + $0x10] sm:$0xf]
      %v1361 = vld [vmem:[#allocation3 + $0x14] sm:$0xf]
      %v1362 = vld [vmem:[#allocation3 + $0x18] sm:$0xf]
      %v1363 = vld [vmem:[#allocation3 + $0x1c] sm:$0xf]
      %v1364 = vld [vmem:[#allocation3 + $0x20] sm:$0xf]
      %v1365 = vld [vmem:[#allocation3 + $0x24] sm:$0xf]
      %v1366 = vld [vmem:[#allocation3 + $0x28] sm:$0x1]
      %s1367 = scalar_lea.vmem %s4, 128
      %v1368 = vld [vmem:[%s1367] sm:$0xf]
      %v1369 = vld [vmem:[%s1367 + $0x4] sm:$0xf]
      %v1370 = vld [vmem:[%s1367 + $0x8] sm:$0xf]
      %v1371 = vld [vmem:[%s1367 + $0xc] sm:$0xf]
      %v1372 = vld [vmem:[%s1367 + $0x10] sm:$0xf]
      %v1373 = vld [vmem:[%s1367 + $0x14] sm:$0xf]
      %v1374 = vld [vmem:[%s1367 + $0x18] sm:$0xf]
      %v1375 = vld [vmem:[%s1367 + $0x1c] sm:$0xf]
      %v1376 = vld [vmem:[%s1367 + $0x20] sm:$0xf]
      %v1377 = vld [vmem:[%s1367 + $0x24] sm:$0xf]
      %v1378 = vld [vmem:[%s1367 + $0x28] sm:$0xf]
      %v1379 = vld [vmem:[%s1367 + $0x2c] sm:$0xf]
      %v1380 = vld [vmem:[%s1367 + $0x30] sm:$0xf]
      %v1381 = vld [vmem:[%s1367 + $0x34] sm:$0xf]
      %v1382 = vld [vmem:[%s1367 + $0x38] sm:$0xf]
      %v1383 = vld [vmem:[%s1367 + $0x3c] sm:$0xf]
      %v1393 = vunpack.c.l.b16 %v1358
      %v1394 = vunpack.c.l.b16 %v1359
      %v1395 = vunpack.c.l.b16 %v1360
      %v1396 = vunpack.c.l.b16 %v1361
      %v1397 = vunpack.c.l.b16 %v1362
      %v1398 = vunpack.c.l.b16 %v1363
      %v1399 = vunpack.c.l.b16 %v1364
      %v1400 = vunpack.c.l.b16 %v1365
      %v1401 = vunpack.c.l.b16 %v1366
      %v1402 = vpack.c.b16 %v1394, %v1393
      %v1403 = vpack.c.b16 %v1396, %v1395
      %v1404 = vpack.c.b16 %v1398, %v1397
      %v1405 = vpack.c.b16 %v1400, %v1399
      %v1406 = vpack.c.b16 %v1401, %v1401
      %vm1407 = vsmask.f32 7424
      %v1409 = vshrl.u32 %v1402, 16
      %v1411 = vshll.u32 %v1402, 16
      %v1413 = vrot.slane %v1411, 1
      %v1414 = vor.u32 %v1409, %v1413
      %v1416 = vshll.u32 %v1403, 16
      %v1418 = vrot.slane %v1416, 1
      %v1419 = vsel %vm1407, %v1414, %v1418
      %v1420 = vshrl.u32 %v1403, 16
      %v1422 = vor.u32 %v1420, %v1418
      %v1424 = vshll.u32 %v1404, 16
      %v1426 = vrot.slane %v1424, 1
      %v1427 = vsel %vm1407, %v1422, %v1426
      %v1428 = vshrl.u32 %v1404, 16
      %v1430 = vor.u32 %v1428, %v1426
      %v1432 = vshll.u32 %v1405, 16
      %v1434 = vrot.slane %v1432, 1
      %v1435 = vsel %vm1407, %v1430, %v1434
      %v1436 = vshrl.u32 %v1405, 16
      %v1438 = vor.u32 %v1436, %v1434
      %v1440 = vshll.u32 %v1406, 16
      %v1442 = vrot.slane %v1440, 1
      %v1443 = vsel %vm1407, %v1438, %v1442
      %v1464 = vunpack.c.l.b16 %v1368
      %v1465 = vunpack.c.l.b16 %v1369
      %v1466 = vunpack.c.l.b16 %v1370
      %v1467 = vunpack.c.l.b16 %v1371
      %v1468 = vunpack.c.l.b16 %v1372
      %v1469 = vunpack.c.l.b16 %v1373
      %v1470 = vunpack.c.l.b16 %v1374
      %v1471 = vunpack.c.l.b16 %v1375
      %v1472 = vunpack.c.l.b16 %v1376
      %v1473 = vunpack.c.l.b16 %v1377
      %v1474 = vunpack.c.l.b16 %v1378
      %v1475 = vunpack.c.l.b16 %v1379
      %v1476 = vunpack.c.l.b16 %v1380
      %v1477 = vunpack.c.l.b16 %v1381
      %v1478 = vunpack.c.l.b16 %v1382
      %v1479 = vunpack.c.l.b16 %v1383
      %v1480 = vpack.c.b16 %v1465, %v1464
      %v1481 = vpack.c.b16 %v1467, %v1466
      %v1482 = vpack.c.b16 %v1469, %v1468
      %v1483 = vpack.c.b16 %v1471, %v1470
      %v1484 = vpack.c.b16 %v1473, %v1472
      %v1485 = vpack.c.b16 %v1475, %v1474
      %v1486 = vpack.c.b16 %v1477, %v1476
      %v1487 = vpack.c.b16 %v1479, %v1478
      %1496 = vmatprep.subr.bf16.mxu0 0
      %1497 = vmatpush1.bf16.msra.mxu0 %v1480
      %1498 = vmatprep.subr.bf16.mxu0 0
      %1499 = vmatpush1.bf16.msra.mxu0 %v1481
      %1500 = vmatprep.subr.bf16.mxu0 0
      %1501 = vmatpush1.bf16.msra.mxu0 %v1482
      %1502 = vmatprep.subr.bf16.mxu0 0
      %1503 = vmatpush1.bf16.msra.mxu0 %v1483
      %1504 = vmatprep.subr.bf16.mxu0 0
      %1505 = vmatpush1.bf16.msra.mxu0 %v1484
      %1506 = vmatprep.subr.bf16.mxu0 0
      %1507 = vmatpush1.bf16.msra.mxu0 %v1485
      %1508 = vmatprep.subr.bf16.mxu0 0
      %1509 = vmatpush1.bf16.msra.mxu0 %v1486
      %1510 = vmatprep.subr.bf16.mxu0 0
      %1511 = vmatpush1.bf16.msra.mxu0 %v1487
      %1512 = vmatprep.subr.bf16.mxu0 0
      %1513 = vmatpush1.bf16.msra.mxu0 0
      %1514 = vmatprep.subr.bf16.mxu0 0
      %1515 = vmatpush1.bf16.msra.mxu0 0
      %1516 = vmatprep.subr.bf16.mxu0 0
      %1517 = vmatpush1.bf16.msra.mxu0 0
      %1518 = vmatprep.subr.bf16.mxu0 0
      %1519 = vmatpush1.bf16.msra.mxu0 0
      %1520 = vmatprep.subr.bf16.mxu0 0
      %1521 = vmatpush1.bf16.msra.mxu0 0
      %1522 = vmatprep.subr.bf16.mxu0 0
      %1523 = vmatpush1.bf16.msra.mxu0 0
      %1524 = vmatprep.subr.bf16.mxu0 0
      %1525 = vmatpush1.bf16.msra.mxu0 0
      %1526 = vmatprep.subr.bf16.mxu0 0
      %1527 = vmatpush1.bf16.msra.mxu0 0
      %1528 = vmatprep.mubr.bf16.mxu0 0
      %1529 = vmatmul.mubr.bf16.gmra.mrb[0].mxu0 %v1419
      %v1530 = vpop.f32.mrb[0].mxu0
      %v1531 = vadd.f32 0.0, %v1530
      %v1532 = vpop.f32.mrb[0].mxu0
      %v1533 = vpop.f32.mrb[0].mxu0
      %v1534 = vadd.f32 0.0, %v1533
      %v1535 = vpop.f32.mrb[0].mxu0
      %1536 = vmatprep.mubr.bf16.mxu0 0
      %1537 = vmatmul.mubr.bf16.gmra.mrb[0].mxu0 %v1427
      %v1538 = vpop.f32.mrb[0].mxu0
      %v1539 = vadd.f32 0.0, %v1538
      %v1540 = vpop.f32.mrb[0].mxu0
      %v1541 = vpop.f32.mrb[0].mxu0
      %v1542 = vadd.f32 0.0, %v1541
      %v1543 = vpop.f32.mrb[0].mxu0
      %1544 = vmatprep.mubr.bf16.mxu0 0
      %1545 = vmatmul.mubr.bf16.gmra.mrb[0].mxu0 %v1435
      %v1546 = vpop.f32.mrb[0].mxu0
      %v1547 = vadd.f32 0.0, %v1546
      %v1548 = vpop.f32.mrb[0].mxu0
      %v1549 = vpop.f32.mrb[0].mxu0
      %v1550 = vadd.f32 0.0, %v1549
      %v1551 = vpop.f32.mrb[0].mxu0
      %1552 = vmatprep.mubr.bf16.mxu0 0
      %1553 = vmatmul.mubr.bf16.gmra.mrb[0].mxu0 %v1443
      %v1554 = vpop.f32.mrb[0].mxu0
      %v1555 = vadd.f32 0.0, %v1554
      %v1556 = vpop.f32.mrb[0].mxu0
      %v1557 = vpop.f32.mrb[0].mxu0
      %v1558 = vadd.f32 0.0, %v1557
      %v1559 = vpop.f32.mrb[0].mxu0
      %1560 = vdwg.mxu0
      %v1561 = vadd.f32 %v1328, %v1531
      %v1562 = vadd.f32 %v1331, %v1534
      %v1563 = vadd.f32 %v1336, %v1539
      %v1564 = vadd.f32 %v1339, %v1542
      %v1565 = vadd.f32 %v1344, %v1547
      %v1566 = vadd.f32 %v1347, %v1550
      %v1567 = vadd.f32 %v1352, %v1555
      %v1568 = vadd.f32 %v1355, %v1558
      %v1569 = vld [vmem:[%s5] sm:$0x1]
      %v1571 = vlaneseq
      %v1572 = vshrl.u32 %v1571, 7
      %v1573 = vsub.s32 0, %v1572
      %v1574 = vrot.slane %v1569, %v1573
      %v1576 = vmul.f32 %v1561, %v1574
      %v1577 = vmul.f32 %v1562, %v1574
      %v1578 = vmul.f32 %v1563, %v1574
      %v1579 = vmul.f32 %v1564, %v1574
      %v1580 = vmul.f32 %v1565, %v1574
      %v1581 = vmul.f32 %v1566, %v1574
      %v1582 = vmul.f32 %v1567, %v1574
      %v1583 = vmul.f32 %v1568, %v1574
      %v1584 = vld [vmem:[%s6] sm:$0x1]
      %v1586 = vlaneseq
      %v1587 = vshrl.u32 %v1586, 7
      %v1588 = vsub.s32 0, %v1587
      %v1589 = vrot.slane %v1584, %v1588
      %v1591 = vadd.f32 %v1576, %v1589
      %v1592 = vadd.f32 %v1577, %v1589
      %v1593 = vadd.f32 %v1578, %v1589
      %v1594 = vadd.f32 %v1579, %v1589
      %v1595 = vadd.f32 %v1580, %v1589
      %v1596 = vadd.f32 %v1581, %v1589
      %v1597 = vadd.f32 %v1582, %v1589
      %v1598 = vadd.f32 %v1583, %v1589
      %v1599 = vmax.f32 %v1591, 0.0
      %v1600 = vmax.f32 %v1592, 0.0
      %v1601 = vmax.f32 %v1593, 0.0
      %v1602 = vmax.f32 %v1594, 0.0
      %v1603 = vmax.f32 %v1595, 0.0
      %v1604 = vmax.f32 %v1596, 0.0
      %v1605 = vmax.f32 %v1597, 0.0
      %v1606 = vmax.f32 %v1598, 0.0
      %v1607 = vpack.c.bf16 %v1600, %v1599
      %v1608 = vpack.c.bf16 %v1602, %v1601
      %v1609 = vpack.c.bf16 %v1604, %v1603
      %v1610 = vpack.c.bf16 %v1606, %v1605
      %1611 = vst [vmem:[#allocation4] sm:$0xf] 0
      %1612 = vst [vmem:[#allocation4 + $0x4] sm:$0xf] 0
      %1613 = vst [vmem:[#allocation4 + $0x8] sm:$0xf] 0
      %1614 = vst [vmem:[#allocation4 + $0xc] sm:$0xf] 0
      %1615 = vst [vmem:[#allocation4 + $0x10] sm:$0xf] 0
      %1616 = vst [vmem:[#allocation4 + $0x14] sm:$0xf] 0
      %1617 = vst [vmem:[#allocation4 + $0x18] sm:$0xf] 0
      %1618 = vst [vmem:[#allocation4 + $0x1c] sm:$0xf] 0
      %1619 = vst [vmem:[#allocation4 + $0x20] sm:$0xf] 0
      %1620 = vst [vmem:[#allocation4 + $0x24] sm:$0xf] 0
      %1621 = vst [vmem:[#allocation4 + $0x28] sm:$0xf] 0
      %v1626 = vunpack.c.l.b16 %v1607
      %v1627 = vunpack.c.h.b16 %v1607
      %v1628 = vunpack.c.l.b16 %v1608
      %v1629 = vunpack.c.h.b16 %v1608
      %v1630 = vunpack.c.l.b16 %v1609
      %v1631 = vunpack.c.h.b16 %v1609
      %v1632 = vunpack.c.l.b16 %v1610
      %v1633 = vunpack.c.h.b16 %v1610
      %v1634 = vpack.c.b16 %v1626, %v1626
      %v1635 = vpack.c.b16 %v1627, %v1627
      %v1636 = vpack.c.b16 %v1628, %v1628
      %v1637 = vpack.c.b16 %v1629, %v1629
      %v1638 = vpack.c.b16 %v1630, %v1630
      %v1639 = vpack.c.b16 %v1631, %v1631
      %v1640 = vpack.c.b16 %v1632, %v1632
      %v1641 = vpack.c.b16 %v1633, %v1633
      %1650 = vst [vmem:[#allocation4 + $0x8] sm:$0xf] %v1634
      %1651 = vst [vmem:[#allocation4 + $0xc] sm:$0xf] %v1635
      %1652 = vst [vmem:[#allocation4 + $0x10] sm:$0xf] %v1636
      %1653 = vst [vmem:[#allocation4 + $0x14] sm:$0xf] %v1637
      %1654 = vst [vmem:[#allocation4 + $0x18] sm:$0xf] %v1638
      %1655 = vst [vmem:[#allocation4 + $0x1c] sm:$0xf] %v1639
      %1656 = vst [vmem:[#allocation4 + $0x20] sm:$0xf] %v1640
      %1657 = vst [vmem:[#allocation4 + $0x24] sm:$0xf] %v1641
      %v1658 = vld [vmem:[#allocation4 + $0x4] sm:$0x8]
      %v1659 = vld [vmem:[#allocation4 + $0x8] sm:$0xf]
      %v1660 = vld [vmem:[#allocation4 + $0xc] sm:$0xf]
      %v1661 = vld [vmem:[#allocation4 + $0x10] sm:$0xf]
      %v1662 = vld [vmem:[#allocation4 + $0x14] sm:$0xf]
      %v1663 = vld [vmem:[#allocation4 + $0x18] sm:$0xf]
      %v1664 = vld [vmem:[#allocation4 + $0x1c] sm:$0xf]
      %v1665 = vld [vmem:[#allocation4 + $0x20] sm:$0xf]
      %v1666 = vld [vmem:[#allocation4 + $0x24] sm:$0xf]
      %v1667 = vld [vmem:[%s7] sm:$0xf]
      %v1668 = vld [vmem:[%s7 + $0x4] sm:$0xf]
      %v1669 = vld [vmem:[%s7 + $0x8] sm:$0xf]
      %v1670 = vld [vmem:[%s7 + $0xc] sm:$0xf]
      %v1671 = vld [vmem:[%s7 + $0x10] sm:$0xf]
      %v1672 = vld [vmem:[%s7 + $0x14] sm:$0xf]
      %v1673 = vld [vmem:[%s7 + $0x18] sm:$0xf]
      %v1674 = vld [vmem:[%s7 + $0x1c] sm:$0xf]
      %v1675 = vld [vmem:[%s7 + $0x20] sm:$0xf]
      %v1676 = vld [vmem:[%s7 + $0x24] sm:$0xf]
      %v1677 = vld [vmem:[%s7 + $0x28] sm:$0xf]
      %v1678 = vld [vmem:[%s7 + $0x2c] sm:$0xf]
      %v1679 = vld [vmem:[%s7 + $0x30] sm:$0xf]
      %v1680 = vld [vmem:[%s7 + $0x34] sm:$0xf]
      %v1681 = vld [vmem:[%s7 + $0x38] sm:$0xf]
      %v1682 = vld [vmem:[%s7 + $0x3c] sm:$0xf]
      %s1683 = scalar_lea.vmem %s7, 64
      %v1684 = vld [vmem:[%s1683] sm:$0xf]
      %v1685 = vld [vmem:[%s1683 + $0x4] sm:$0xf]
      %v1686 = vld [vmem:[%s1683 + $0x8] sm:$0xf]
      %v1687 = vld [vmem:[%s1683 + $0xc] sm:$0xf]
      %v1688 = vld [vmem:[%s1683 + $0x10] sm:$0xf]
      %v1689 = vld [vmem:[%s1683 + $0x14] sm:$0xf]
      %v1690 = vld [vmem:[%s1683 + $0x18] sm:$0xf]
      %v1691 = vld [vmem:[%s1683 + $0x1c] sm:$0xf]
      %v1692 = vld [vmem:[%s1683 + $0x20] sm:$0xf]
      %v1693 = vld [vmem:[%s1683 + $0x24] sm:$0xf]
      %v1694 = vld [vmem:[%s1683 + $0x28] sm:$0xf]
      %v1695 = vld [vmem:[%s1683 + $0x2c] sm:$0xf]
      %v1696 = vld [vmem:[%s1683 + $0x30] sm:$0xf]
      %v1697 = vld [vmem:[%s1683 + $0x34] sm:$0xf]
      %v1698 = vld [vmem:[%s1683 + $0x38] sm:$0xf]
      %v1699 = vld [vmem:[%s1683 + $0x3c] sm:$0xf]
      %v1708 = vunpack.c.l.b16 %v1659
      %v1709 = vunpack.c.l.b16 %v1660
      %v1710 = vunpack.c.l.b16 %v1661
      %v1711 = vunpack.c.l.b16 %v1662
      %v1712 = vunpack.c.l.b16 %v1663
      %v1713 = vunpack.c.l.b16 %v1664
      %v1714 = vunpack.c.l.b16 %v1665
      %v1715 = vunpack.c.l.b16 %v1666
      %v1716 = vpack.c.b16 %v1709, %v1708
      %v1717 = vpack.c.b16 %v1711, %v1710
      %v1718 = vpack.c.b16 %v1713, %v1712
      %v1719 = vpack.c.b16 %v1715, %v1714
      %v1740 = vunpack.c.l.b16 %v1684
      %v1741 = vunpack.c.l.b16 %v1685
      %v1742 = vunpack.c.l.b16 %v1686
      %v1743 = vunpack.c.l.b16 %v1687
      %v1744 = vunpack.c.l.b16 %v1688
      %v1745 = vunpack.c.l.b16 %v1689
      %v1746 = vunpack.c.l.b16 %v1690
      %v1747 = vunpack.c.l.b16 %v1691
      %v1748 = vunpack.c.l.b16 %v1692
      %v1749 = vunpack.c.l.b16 %v1693
      %v1750 = vunpack.c.l.b16 %v1694
      %v1751 = vunpack.c.l.b16 %v1695
      %v1752 = vunpack.c.l.b16 %v1696
      %v1753 = vunpack.c.l.b16 %v1697
      %v1754 = vunpack.c.l.b16 %v1698
      %v1755 = vunpack.c.l.b16 %v1699
      %v1756 = vpack.c.b16 %v1741, %v1740
      %v1757 = vpack.c.b16 %v1743, %v1742
      %v1758 = vpack.c.b16 %v1745, %v1744
      %v1759 = vpack.c.b16 %v1747, %v1746
      %v1760 = vpack.c.b16 %v1749, %v1748
      %v1761 = vpack.c.b16 %v1751, %v1750
      %v1762 = vpack.c.b16 %v1753, %v1752
      %v1763 = vpack.c.b16 %v1755, %v1754
      %1772 = vmatprep.subr.bf16.mxu0 0
      %1773 = vmatpush1.bf16.msra.mxu0 %v1756
      %1774 = vmatprep.subr.bf16.mxu0 0
      %1775 = vmatpush1.bf16.msra.mxu0 %v1757
      %1776 = vmatprep.subr.bf16.mxu0 0
      %1777 = vmatpush1.bf16.msra.mxu0 %v1758
      %1778 = vmatprep.subr.bf16.mxu0 0
      %1779 = vmatpush1.bf16.msra.mxu0 %v1759
      %1780 = vmatprep.subr.bf16.mxu0 0
      %1781 = vmatpush1.bf16.msra.mxu0 %v1760
      %1782 = vmatprep.subr.bf16.mxu0 0
      %1783 = vmatpush1.bf16.msra.mxu0 %v1761
      %1784 = vmatprep.subr.bf16.mxu0 0
      %1785 = vmatpush1.bf16.msra.mxu0 %v1762
      %1786 = vmatprep.subr.bf16.mxu0 0
      %1787 = vmatpush1.bf16.msra.mxu0 %v1763
      %1788 = vmatprep.subr.bf16.mxu0 0
      %1789 = vmatpush1.bf16.msra.mxu0 0
      %1790 = vmatprep.subr.bf16.mxu0 0
      %1791 = vmatpush1.bf16.msra.mxu0 0
      %1792 = vmatprep.subr.bf16.mxu0 0
      %1793 = vmatpush1.bf16.msra.mxu0 0
      %1794 = vmatprep.subr.bf16.mxu0 0
      %1795 = vmatpush1.bf16.msra.mxu0 0
      %1796 = vmatprep.subr.bf16.mxu0 0
      %1797 = vmatpush1.bf16.msra.mxu0 0
      %1798 = vmatprep.subr.bf16.mxu0 0
      %1799 = vmatpush1.bf16.msra.mxu0 0
      %1800 = vmatprep.subr.bf16.mxu0 0
      %1801 = vmatpush1.bf16.msra.mxu0 0
      %1802 = vmatprep.subr.bf16.mxu0 0
      %1803 = vmatpush1.bf16.msra.mxu0 0
      %1804 = vmatprep.mubr.bf16.mxu0 0
      %1805 = vmatmul.mubr.bf16.gmra.mrb[0].mxu0 %v1716
      %v1806 = vpop.f32.mrb[0].mxu0
      %v1807 = vadd.f32 0.0, %v1806
      %v1808 = vpop.f32.mrb[0].mxu0
      %v1809 = vpop.f32.mrb[0].mxu0
      %v1810 = vadd.f32 0.0, %v1809
      %v1811 = vpop.f32.mrb[0].mxu0
      %1812 = vmatprep.mubr.bf16.mxu0 0
      %1813 = vmatmul.mubr.bf16.gmra.mrb[0].mxu0 %v1717
      %v1814 = vpop.f32.mrb[0].mxu0
      %v1815 = vadd.f32 0.0, %v1814
      %v1816 = vpop.f32.mrb[0].mxu0
      %v1817 = vpop.f32.mrb[0].mxu0
      %v1818 = vadd.f32 0.0, %v1817
      %v1819 = vpop.f32.mrb[0].mxu0
      %1820 = vmatprep.mubr.bf16.mxu0 0
      %1821 = vmatmul.mubr.bf16.gmra.mrb[0].mxu0 %v1718
      %v1822 = vpop.f32.mrb[0].mxu0
      %v1823 = vadd.f32 0.0, %v1822
      %v1824 = vpop.f32.mrb[0].mxu0
      %v1825 = vpop.f32.mrb[0].mxu0
      %v1826 = vadd.f32 0.0, %v1825
      %v1827 = vpop.f32.mrb[0].mxu0
      %1828 = vmatprep.mubr.bf16.mxu0 0
      %1829 = vmatmul.mubr.bf16.gmra.mrb[0].mxu0 %v1719
      %v1830 = vpop.f32.mrb[0].mxu0
      %v1831 = vadd.f32 0.0, %v1830
      %v1832 = vpop.f32.mrb[0].mxu0
      %v1833 = vpop.f32.mrb[0].mxu0
      %v1834 = vadd.f32 0.0, %v1833
      %v1835 = vpop.f32.mrb[0].mxu0
      %1836 = vdwg.mxu0
      %v1838 = vunpack.c.l.b16 %v1658
      %v1839 = vpack.c.b16 %v1708, %v1838
      %v1840 = vpack.c.b16 %v1710, %v1709
      %v1841 = vpack.c.b16 %v1712, %v1711
      %v1842 = vpack.c.b16 %v1714, %v1713
      %v1843 = vpack.c.b16 %v1715, %v1715
      %v1845 = vshrl.u32 %v1839, 16
      %v1847 = vrot.slane %v1845, 3
      %v1848 = vshll.u32 %v1839, 16
      %v1850 = vrot.slane %v1848, 4
      %v1851 = vor.u32 %v1847, %v1850
      %v1853 = vshrl.u32 %v1840, 16
      %v1855 = vrot.slane %v1853, 3
      %v1856 = vshll.u32 %v1840, 16
      %v1858 = vrot.slane %v1856, 4
      %v1859 = vor.u32 %v1855, %v1858
      %v1860 = vsel %vm598, %v1851, %v1859
      %v1862 = vshrl.u32 %v1841, 16
      %v1864 = vrot.slane %v1862, 3
      %v1865 = vshll.u32 %v1841, 16
      %v1867 = vrot.slane %v1865, 4
      %v1868 = vor.u32 %v1864, %v1867
      %v1869 = vsel %vm598, %v1859, %v1868
      %v1871 = vshrl.u32 %v1842, 16
      %v1873 = vrot.slane %v1871, 3
      %v1874 = vshll.u32 %v1842, 16
      %v1876 = vrot.slane %v1874, 4
      %v1877 = vor.u32 %v1873, %v1876
      %v1878 = vsel %vm598, %v1868, %v1877
      %v1880 = vshrl.u32 %v1843, 16
      %v1882 = vrot.slane %v1880, 3
      %v1883 = vshll.u32 %v1843, 16
      %v1885 = vrot.slane %v1883, 4
      %v1886 = vor.u32 %v1882, %v1885
      %v1887 = vsel %vm598, %v1877, %v1886
      %v1908 = vunpack.c.l.b16 %v1667
      %v1909 = vunpack.c.l.b16 %v1668
      %v1910 = vunpack.c.l.b16 %v1669
      %v1911 = vunpack.c.l.b16 %v1670
      %v1912 = vunpack.c.l.b16 %v1671
      %v1913 = vunpack.c.l.b16 %v1672
      %v1914 = vunpack.c.l.b16 %v1673
      %v1915 = vunpack.c.l.b16 %v1674
      %v1916 = vunpack.c.l.b16 %v1675
      %v1917 = vunpack.c.l.b16 %v1676
      %v1918 = vunpack.c.l.b16 %v1677
      %v1919 = vunpack.c.l.b16 %v1678
      %v1920 = vunpack.c.l.b16 %v1679
      %v1921 = vunpack.c.l.b16 %v1680
      %v1922 = vunpack.c.l.b16 %v1681
      %v1923 = vunpack.c.l.b16 %v1682
      %v1924 = vpack.c.b16 %v1909, %v1908
      %v1925 = vpack.c.b16 %v1911, %v1910
      %v1926 = vpack.c.b16 %v1913, %v1912
      %v1927 = vpack.c.b16 %v1915, %v1914
      %v1928 = vpack.c.b16 %v1917, %v1916
      %v1929 = vpack.c.b16 %v1919, %v1918
      %v1930 = vpack.c.b16 %v1921, %v1920
      %v1931 = vpack.c.b16 %v1923, %v1922
      %1940 = vmatprep.subr.bf16.mxu0 0
      %1941 = vmatpush1.bf16.msra.mxu0 %v1924
      %1942 = vmatprep.subr.bf16.mxu0 0
      %1943 = vmatpush1.bf16.msra.mxu0 %v1925
      %1944 = vmatprep.subr.bf16.mxu0 0
      %1945 = vmatpush1.bf16.msra.mxu0 %v1926
      %1946 = vmatprep.subr.bf16.mxu0 0
      %1947 = vmatpush1.bf16.msra.mxu0 %v1927
      %1948 = vmatprep.subr.bf16.mxu0 0
      %1949 = vmatpush1.bf16.msra.mxu0 %v1928
      %1950 = vmatprep.subr.bf16.mxu0 0
      %1951 = vmatpush1.bf16.msra.mxu0 %v1929
      %1952 = vmatprep.subr.bf16.mxu0 0
      %1953 = vmatpush1.bf16.msra.mxu0 %v1930
      %1954 = vmatprep.subr.bf16.mxu0 0
      %1955 = vmatpush1.bf16.msra.mxu0 %v1931
      %1956 = vmatprep.subr.bf16.mxu0 0
      %1957 = vmatpush1.bf16.msra.mxu0 0
      %1958 = vmatprep.subr.bf16.mxu0 0
      %1959 = vmatpush1.bf16.msra.mxu0 0
      %1960 = vmatprep.subr.bf16.mxu0 0
      %1961 = vmatpush1.bf16.msra.mxu0 0
      %1962 = vmatprep.subr.bf16.mxu0 0
      %1963 = vmatpush1.bf16.msra.mxu0 0
      %1964 = vmatprep.subr.bf16.mxu0 0
      %1965 = vmatpush1.bf16.msra.mxu0 0
      %1966 = vmatprep.subr.bf16.mxu0 0
      %1967 = vmatpush1.bf16.msra.mxu0 0
      %1968 = vmatprep.subr.bf16.mxu0 0
      %1969 = vmatpush1.bf16.msra.mxu0 0
      %1970 = vmatprep.subr.bf16.mxu0 0
      %1971 = vmatpush1.bf16.msra.mxu0 0
      %1972 = vmatprep.mubr.bf16.mxu0 0
      %1973 = vmatmul.mubr.bf16.gmra.mrb[0].mxu0 %v1860
      %v1974 = vpop.f32.mrb[0].mxu0
      %v1975 = vadd.f32 %v1807, %v1974
      %v1976 = vpop.f32.mrb[0].mxu0
      %v1977 = vpop.f32.mrb[0].mxu0
      %v1978 = vadd.f32 %v1810, %v1977
      %v1979 = vpop.f32.mrb[0].mxu0
      %1980 = vmatprep.mubr.bf16.mxu0 0
      %1981 = vmatmul.mubr.bf16.gmra.mrb[0].mxu0 %v1869
      %v1982 = vpop.f32.mrb[0].mxu0
      %v1983 = vadd.f32 %v1815, %v1982
      %v1984 = vpop.f32.mrb[0].mxu0
      %v1985 = vpop.f32.mrb[0].mxu0
      %v1986 = vadd.f32 %v1818, %v1985
      %v1987 = vpop.f32.mrb[0].mxu0
      %1988 = vmatprep.mubr.bf16.mxu0 0
      %1989 = vmatmul.mubr.bf16.gmra.mrb[0].mxu0 %v1878
      %v1990 = vpop.f32.mrb[0].mxu0
      %v1991 = vadd.f32 %v1823, %v1990
      %v1992 = vpop.f32.mrb[0].mxu0
      %v1993 = vpop.f32.mrb[0].mxu0
      %v1994 = vadd.f32 %v1826, %v1993
      %v1995 = vpop.f32.mrb[0].mxu0
      %1996 = vmatprep.mubr.bf16.mxu0 0
      %1997 = vmatmul.mubr.bf16.gmra.mrb[0].mxu0 %v1887
      %v1998 = vpop.f32.mrb[0].mxu0
      %v1999 = vadd.f32 %v1831, %v1998
      %v2000 = vpop.f32.mrb[0].mxu0
      %v2001 = vpop.f32.mrb[0].mxu0
      %v2002 = vadd.f32 %v1834, %v2001
      %v2003 = vpop.f32.mrb[0].mxu0
      %2004 = vdwg.mxu0
      %v2005 = vld [vmem:[#allocation4 + $0x8] sm:$0xf]
      %v2006 = vld [vmem:[#allocation4 + $0xc] sm:$0xf]
      %v2007 = vld [vmem:[#allocation4 + $0x10] sm:$0xf]
      %v2008 = vld [vmem:[#allocation4 + $0x14] sm:$0xf]
      %v2009 = vld [vmem:[#allocation4 + $0x18] sm:$0xf]
      %v2010 = vld [vmem:[#allocation4 + $0x1c] sm:$0xf]
      %v2011 = vld [vmem:[#allocation4 + $0x20] sm:$0xf]
      %v2012 = vld [vmem:[#allocation4 + $0x24] sm:$0xf]
      %v2013 = vld [vmem:[#allocation4 + $0x28] sm:$0x1]
      %s2014 = scalar_lea.vmem %s7, 128
      %v2015 = vld [vmem:[%s2014] sm:$0xf]
      %v2016 = vld [vmem:[%s2014 + $0x4] sm:$0xf]
      %v2017 = vld [vmem:[%s2014 + $0x8] sm:$0xf]
      %v2018 = vld [vmem:[%s2014 + $0xc] sm:$0xf]
      %v2019 = vld [vmem:[%s2014 + $0x10] sm:$0xf]
      %v2020 = vld [vmem:[%s2014 + $0x14] sm:$0xf]
      %v2021 = vld [vmem:[%s2014 + $0x18] sm:$0xf]
      %v2022 = vld [vmem:[%s2014 + $0x1c] sm:$0xf]
      %v2023 = vld [vmem:[%s2014 + $0x20] sm:$0xf]
      %v2024 = vld [vmem:[%s2014 + $0x24] sm:$0xf]
      %v2025 = vld [vmem:[%s2014 + $0x28] sm:$0xf]
      %v2026 = vld [vmem:[%s2014 + $0x2c] sm:$0xf]
      %v2027 = vld [vmem:[%s2014 + $0x30] sm:$0xf]
      %v2028 = vld [vmem:[%s2014 + $0x34] sm:$0xf]
      %v2029 = vld [vmem:[%s2014 + $0x38] sm:$0xf]
      %v2030 = vld [vmem:[%s2014 + $0x3c] sm:$0xf]
      %v2040 = vunpack.c.l.b16 %v2005
      %v2041 = vunpack.c.l.b16 %v2006
      %v2042 = vunpack.c.l.b16 %v2007
      %v2043 = vunpack.c.l.b16 %v2008
      %v2044 = vunpack.c.l.b16 %v2009
      %v2045 = vunpack.c.l.b16 %v2010
      %v2046 = vunpack.c.l.b16 %v2011
      %v2047 = vunpack.c.l.b16 %v2012
      %v2048 = vunpack.c.l.b16 %v2013
      %v2049 = vpack.c.b16 %v2041, %v2040
      %v2050 = vpack.c.b16 %v2043, %v2042
      %v2051 = vpack.c.b16 %v2045, %v2044
      %v2052 = vpack.c.b16 %v2047, %v2046
      %v2053 = vpack.c.b16 %v2048, %v2048
      %v2055 = vshrl.u32 %v2049, 16
      %v2057 = vshll.u32 %v2049, 16
      %v2059 = vrot.slane %v2057, 1
      %v2060 = vor.u32 %v2055, %v2059
      %v2062 = vshll.u32 %v2050, 16
      %v2064 = vrot.slane %v2062, 1
      %v2065 = vsel %vm1407, %v2060, %v2064
      %v2066 = vshrl.u32 %v2050, 16
      %v2068 = vor.u32 %v2066, %v2064
      %v2070 = vshll.u32 %v2051, 16
      %v2072 = vrot.slane %v2070, 1
      %v2073 = vsel %vm1407, %v2068, %v2072
      %v2074 = vshrl.u32 %v2051, 16
      %v2076 = vor.u32 %v2074, %v2072
      %v2078 = vshll.u32 %v2052, 16
      %v2080 = vrot.slane %v2078, 1
      %v2081 = vsel %vm1407, %v2076, %v2080
      %v2082 = vshrl.u32 %v2052, 16
      %v2084 = vor.u32 %v2082, %v2080
      %v2086 = vshll.u32 %v2053, 16
      %v2088 = vrot.slane %v2086, 1
      %v2089 = vsel %vm1407, %v2084, %v2088
      %v2110 = vunpack.c.l.b16 %v2015
      %v2111 = vunpack.c.l.b16 %v2016
      %v2112 = vunpack.c.l.b16 %v2017
      %v2113 = vunpack.c.l.b16 %v2018
      %v2114 = vunpack.c.l.b16 %v2019
      %v2115 = vunpack.c.l.b16 %v2020
      %v2116 = vunpack.c.l.b16 %v2021
      %v2117 = vunpack.c.l.b16 %v2022
      %v2118 = vunpack.c.l.b16 %v2023
      %v2119 = vunpack.c.l.b16 %v2024
      %v2120 = vunpack.c.l.b16 %v2025
      %v2121 = vunpack.c.l.b16 %v2026
      %v2122 = vunpack.c.l.b16 %v2027
      %v2123 = vunpack.c.l.b16 %v2028
      %v2124 = vunpack.c.l.b16 %v2029
      %v2125 = vunpack.c.l.b16 %v2030
      %v2126 = vpack.c.b16 %v2111, %v2110
      %v2127 = vpack.c.b16 %v2113, %v2112
      %v2128 = vpack.c.b16 %v2115, %v2114
      %v2129 = vpack.c.b16 %v2117, %v2116
      %v2130 = vpack.c.b16 %v2119, %v2118
      %v2131 = vpack.c.b16 %v2121, %v2120
      %v2132 = vpack.c.b16 %v2123, %v2122
      %v2133 = vpack.c.b16 %v2125, %v2124
      %2142 = vmatprep.subr.bf16.mxu0 0
      %2143 = vmatpush1.bf16.msra.mxu0 %v2126
      %2144 = vmatprep.subr.bf16.mxu0 0
      %2145 = vmatpush1.bf16.msra.mxu0 %v2127
      %2146 = vmatprep.subr.bf16.mxu0 0
      %2147 = vmatpush1.bf16.msra.mxu0 %v2128
      %2148 = vmatprep.subr.bf16.mxu0 0
      %2149 = vmatpush1.bf16.msra.mxu0 %v2129
      %2150 = vmatprep.subr.bf16.mxu0 0
      %2151 = vmatpush1.bf16.msra.mxu0 %v2130
      %2152 = vmatprep.subr.bf16.mxu0 0
      %2153 = vmatpush1.bf16.msra.mxu0 %v2131
      %2154 = vmatprep.subr.bf16.mxu0 0
      %2155 = vmatpush1.bf16.msra.mxu0 %v2132
      %2156 = vmatprep.subr.bf16.mxu0 0
      %2157 = vmatpush1.bf16.msra.mxu0 %v2133
      %2158 = vmatprep.subr.bf16.mxu0 0
      %2159 = vmatpush1.bf16.msra.mxu0 0
      %2160 = vmatprep.subr.bf16.mxu0 0
      %2161 = vmatpush1.bf16.msra.mxu0 0
      %2162 = vmatprep.subr.bf16.mxu0 0
      %2163 = vmatpush1.bf16.msra.mxu0 0
      %2164 = vmatprep.subr.bf16.mxu0 0
      %2165 = vmatpush1.bf16.msra.mxu0 0
      %2166 = vmatprep.subr.bf16.mxu0 0
      %2167 = vmatpush1.bf16.msra.mxu0 0
      %2168 = vmatprep.subr.bf16.mxu0 0
      %2169 = vmatpush1.bf16.msra.mxu0 0
      %2170 = vmatprep.subr.bf16.mxu0 0
      %2171 = vmatpush1.bf16.msra.mxu0 0
      %2172 = vmatprep.subr.bf16.mxu0 0
      %2173 = vmatpush1.bf16.msra.mxu0 0
      %2174 = vmatprep.mubr.bf16.mxu0 0
      %2175 = vmatmul.mubr.bf16.gmra.mrb[0].mxu0 %v2065
      %v2176 = vpop.f32.mrb[0].mxu0
      %v2177 = vadd.f32 0.0, %v2176
      %v2178 = vpop.f32.mrb[0].mxu0
      %v2179 = vpop.f32.mrb[0].mxu0
      %v2180 = vadd.f32 0.0, %v2179
      %v2181 = vpop.f32.mrb[0].mxu0
      %2182 = vmatprep.mubr.bf16.mxu0 0
      %2183 = vmatmul.mubr.bf16.gmra.mrb[0].mxu0 %v2073
      %v2184 = vpop.f32.mrb[0].mxu0
      %v2185 = vadd.f32 0.0, %v2184
      %v2186 = vpop.f32.mrb[0].mxu0
      %v2187 = vpop.f32.mrb[0].mxu0
      %v2188 = vadd.f32 0.0, %v2187
      %v2189 = vpop.f32.mrb[0].mxu0
      %2190 = vmatprep.mubr.bf16.mxu0 0
      %2191 = vmatmul.mubr.bf16.gmra.mrb[0].mxu0 %v2081
      %v2192 = vpop.f32.mrb[0].mxu0
      %v2193 = vadd.f32 0.0, %v2192
      %v2194 = vpop.f32.mrb[0].mxu0
      %v2195 = vpop.f32.mrb[0].mxu0
      %v2196 = vadd.f32 0.0, %v2195
      %v2197 = vpop.f32.mrb[0].mxu0
      %2198 = vmatprep.mubr.bf16.mxu0 0
      %2199 = vmatmul.mubr.bf16.gmra.mrb[0].mxu0 %v2089
      %v2200 = vpop.f32.mrb[0].mxu0
      %v2201 = vadd.f32 0.0, %v2200
      %v2202 = vpop.f32.mrb[0].mxu0
      %v2203 = vpop.f32.mrb[0].mxu0
      %v2204 = vadd.f32 0.0, %v2203
      %v2205 = vpop.f32.mrb[0].mxu0
      %2206 = vdwg.mxu0
      %v2207 = vadd.f32 %v1975, %v2177
      %v2208 = vadd.f32 %v1978, %v2180
      %v2209 = vadd.f32 %v1983, %v2185
      %v2210 = vadd.f32 %v1986, %v2188
      %v2211 = vadd.f32 %v1991, %v2193
      %v2212 = vadd.f32 %v1994, %v2196
      %v2213 = vadd.f32 %v1999, %v2201
      %v2214 = vadd.f32 %v2002, %v2204
      %v2215 = vld [vmem:[%s8] sm:$0x1]
      %v2217 = vlaneseq
      %v2218 = vshrl.u32 %v2217, 7
      %v2219 = vsub.s32 0, %v2218
      %v2220 = vrot.slane %v2215, %v2219
      %v2222 = vmul.f32 %v2207, %v2220
      %v2223 = vmul.f32 %v2208, %v2220
      %v2224 = vmul.f32 %v2209, %v2220
      %v2225 = vmul.f32 %v2210, %v2220
      %v2226 = vmul.f32 %v2211, %v2220
      %v2227 = vmul.f32 %v2212, %v2220
      %v2228 = vmul.f32 %v2213, %v2220
      %v2229 = vmul.f32 %v2214, %v2220
      %v2230 = vld [vmem:[%s9] sm:$0x1]
      %v2232 = vlaneseq
      %v2233 = vshrl.u32 %v2232, 7
      %v2234 = vsub.s32 0, %v2233
      %v2235 = vrot.slane %v2230, %v2234
      %v2237 = vadd.f32 %v2222, %v2235
      %v2238 = vadd.f32 %v2223, %v2235
      %v2239 = vadd.f32 %v2224, %v2235
      %v2240 = vadd.f32 %v2225, %v2235
      %v2241 = vadd.f32 %v2226, %v2235
      %v2242 = vadd.f32 %v2227, %v2235
      %v2243 = vadd.f32 %v2228, %v2235
      %v2244 = vadd.f32 %v2229, %v2235
      %v2245 = vmax.f32 %v2237, 0.0
      %v2246 = vmax.f32 %v2238, 0.0
      %v2247 = vmax.f32 %v2239, 0.0
      %v2248 = vmax.f32 %v2240, 0.0
      %v2249 = vmax.f32 %v2241, 0.0
      %v2250 = vmax.f32 %v2242, 0.0
      %v2251 = vmax.f32 %v2243, 0.0
      %v2252 = vmax.f32 %v2244, 0.0
      %v2253 = vpack.c.bf16 %v2246, %v2245
      %v2254 = vpack.c.bf16 %v2248, %v2247
      %v2255 = vpack.c.bf16 %v2250, %v2249
      %v2256 = vpack.c.bf16 %v2252, %v2251
      %v2261 = vunpack.c.l.b16 %v2253
      %v2262 = vunpack.c.h.b16 %v2253
      %v2263 = vunpack.c.l.b16 %v2254
      %v2264 = vunpack.c.h.b16 %v2254
      %v2265 = vunpack.c.l.b16 %v2255
      %v2266 = vunpack.c.h.b16 %v2255
      %v2267 = vunpack.c.l.b16 %v2256
      %v2268 = vunpack.c.h.b16 %v2256
      %v2269 = vpack.c.b16 %v2261, %v2261
      %v2270 = vpack.c.b16 %v2262, %v2262
      %v2271 = vpack.c.b16 %v2263, %v2263
      %v2272 = vpack.c.b16 %v2264, %v2264
      %v2273 = vpack.c.b16 %v2265, %v2265
      %v2274 = vpack.c.b16 %v2266, %v2266
      %v2275 = vpack.c.b16 %v2267, %v2267
      %v2276 = vpack.c.b16 %v2268, %v2268
      %2285 = vst [vmem:[%s359] sm:$0xf] %v2269
      %2286 = vst [vmem:[%s359 + $0x4] sm:$0xf] %v2270
      %2287 = vst [vmem:[%s359 + $0x8] sm:$0xf] %v2271
      %2288 = vst [vmem:[%s359 + $0xc] sm:$0xf] %v2272
      %2289 = vst [vmem:[%s359 + $0x10] sm:$0xf] %v2273
      %2290 = vst [vmem:[%s359 + $0x14] sm:$0xf] %v2274
      %2291 = vst [vmem:[%s359 + $0x18] sm:$0xf] %v2275
      %2292 = vst [vmem:[%s359 + $0x1c] sm:$0xf] %v2276
      %p2293 = scmp.lt.s32.totalorder %s21, 1
      %s2294 = scalar_select %p2293, %s21, 1
      %s2295 = smul.addr %s2294, 8
      %s2296 = smul.addr %s2295, 4
      %s2297 = scalar_lea.vmem %s10, %s2296
      // Predicated region
      $region61: #{xrespool_forward.7} parent=59 // pred_check
        %p2298 = pneg %p254
      $region62: #{xrespool_forward.7} parent=59 // pred_check_branch
        %2300 = sbr.rel (%p2298) target = $region64
      $region63: #{xrespool_forward.7} parent=59 // pred_region
        _
      $region64: #{xrespool_forward.7} parent=59 // pred_fallthru
        _
    $region60: #{xrespool_forward.7} parent=5 // pred_fallthru
      _
    %p2301 = scmp.le.s32.totalorder 2, %s16
    // Predicated region
    $region65: #{xrespool_forward.7} parent=5 // pred_check
      %p2302 = pneg %p2301
    $region66: #{xrespool_forward.7} parent=5 // pred_check_branch
      %2304 = sbr.rel (%p2302) target = $region68
    $region67: #{xrespool_forward.7} parent=5 // pred_region
      %s2305 = ssub.s32 %s16, 2
      // Predicated region
      $region69: #{xrespool_forward.7} parent=67 // pred_check
        %p2306 = pneg %p260
      $region70: #{xrespool_forward.7} parent=67 // pred_check_branch
        %2308 = sbr.rel (%p2306) target = $region72
      $region71: #{xrespool_forward.7} parent=67 // pred_region
        %p2309 = scmp.lt.s32.totalorder %s22, 1
        %s2310 = scalar_select %p2309, %s22, 1
        %s2311 = smul.addr %s2310, 8
        %s2312 = smul.addr %s2311, 4
        %s2313 = scalar_lea.vmem %s10, %s2312
      $region72: #{xrespool_forward.7} parent=67 // pred_fallthru
        _
    $region68: #{xrespool_forward.7} parent=5 // pred_fallthru
      _
  $region6: #{xrespool_forward.7} parent=0 // loop_footer
    %s20 = sadd.s32 1, %s16
  $region7: #{xrespool_forward.7} parent=0 // loop_footer_branch
    %15 = sbr.rel target = $region3
  $region8: #{xrespool_forward.7} parent=0 // loop_exit
    _

// kernel: xrespool_forward.11
$region0: #{xrespool_forward.11}
  #allocation0 [shape = 'u32[]', space=smem, size = 0x4, offset = 0x4, fixed_abs, tag = 'smem constant byte address 0x4 - core index']
  #allocation1 [shape = 'u32[144,128]{1,0:T(1,128)}', space=vmem, size = 0x12000, scoped, tag = 'internal scratch']
  #allocation2 [shape = 'bf16[32,128]{1,0:T(16,128)(2,1)}', space=vmem, size = 0x2000, scoped, tag = 'scratch operand']
  %s0 = inlined_call_operand.vmem [shape: bf16[2,8,256], index: 0, kind: input, shape index: {}]
  %s1 = inlined_call_operand.vmem [shape: bf16[128,128], index: 1, kind: input, shape index: {}]
  %s2 = inlined_call_operand.vmem [shape: f32[1,128], index: 2, kind: input, shape index: {}]
  %s3 = inlined_call_operand.vmem [shape: f32[1,128], index: 3, kind: input, shape index: {}]
  %s4 = inlined_call_operand.vmem [shape: bf16[3,128,128], index: 4, kind: input, shape index: {}]
  %s5 = inlined_call_operand.vmem [shape: f32[1,128], index: 5, kind: input, shape index: {}]
  %s6 = inlined_call_operand.vmem [shape: f32[1,128], index: 6, kind: input, shape index: {}]
  %s7 = inlined_call_operand.vmem [shape: bf16[128,128], index: 7, kind: input, shape index: {}]
  %s8 = inlined_call_operand.vmem [shape: f32[1,128], index: 8, kind: input, shape index: {}]
  %s9 = inlined_call_operand.vmem [shape: f32[1,128], index: 9, kind: input, shape index: {}]
  %s10 = inlined_call_operand.vmem [shape: bf16[128,128], index: 10, kind: input, shape index: {}]
  %s11 = inlined_call_operand.vmem [shape: f32[1,128], index: 11, kind: input, shape index: {}]
  %s12 = inlined_call_operand.vmem [shape: f32[1,128], index: 12, kind: input, shape index: {}]
  %s13 = inlined_call_operand.vmem [shape: bf16[2,8,128], index: 13, kind: output, shape index: {}]
  %s14 = sld [smem:[#allocation0]]
  $region85: #{xrespool_forward.11} parent=0
    _
  %s16 = ssub.s32 1, %s14
  %s17 = scalar_select 0, %s16, %s14
  loop: start=0, step=1, limit=4
  $region2: #{xrespool_forward.11} parent=0 // loop_pre_header
    _
  $region3: #{xrespool_forward.11} parent=0 // loop_header
    %s19 = sphi 0, %s23
    %p20 = scmp.ge.s32.totalorder %s19, 4
    %s29 = sphi 0, %s31
    %s32 = sphi 0, %s29
    %s33 = sphi 0, %s32
    %s49 = sphi 0, %s33
    %s53 = sphi 0, %s53
    %s55 = sphi 0, %s53
    %s56 = sphi 0, %s55
    %s70 = sphi 0, %s56
    %s74 = sphi 0, %s74
    %s76 = sphi 0, %s74
    %s77 = sphi 0, %s76
    %s91 = sphi 0, %s77
    %s95 = sphi 0, %s95
    %s97 = sphi 0, %s95
    %s98 = sphi 0, %s97
    %s112 = sphi 0, %s98
    %s116 = sphi 0, %s116
    %s118 = sphi 0, %s116
    %s119 = sphi 0, %s118
    %s133 = sphi 0, %s119
    %s137 = sphi 0, %s137
    %s139 = sphi 0, %s137
    %s140 = sphi 0, %s139
    %s154 = sphi 0, %s140
    %s158 = sphi 0, %s158
    %s160 = sphi 0, %s158
    %s161 = sphi 0, %s160
    %s175 = sphi 0, %s161
    %s179 = sphi 0, %s179
    %s181 = sphi 0, %s179
    %s182 = sphi 0, %s181
    %s196 = sphi 0, %s182
    %s200 = sphi 0, %s200
    %s202 = sphi 0, %s200
    %s203 = sphi 0, %s202
    %s217 = sphi 0, %s203
    %s221 = sphi 0, %s221
    %s223 = sphi 0, %s221
    %s224 = sphi 0, %s223
    %s238 = sphi 0, %s224
    %s242 = sphi 0, %s242
    %s244 = sphi 0, %s242
    %s245 = sphi 0, %s244
    %s259 = sphi 0, %s245
    %s263 = sphi 0, %s263
    %s265 = sphi 0, %s263
    %s266 = sphi 0, %s265
    %s280 = sphi 0, %s266
    %s284 = sphi 0, %s284
    %s286 = sphi 0, %s284
    %s287 = sphi 0, %s286
    %s301 = sphi 0, %s287
    %s307 = sphi 0, %s309
    %s310 = sphi 0, %s307
    %s311 = sphi 0, %s310
    %s327 = sphi 0, %s311
  $region4: #{xrespool_forward.11} parent=0 // loop_header_branch
    %22 = sbr.rel (%p20) target = $region8
  $region5: #{xrespool_forward.11} parent=0 // loop_body
    %s24 = ssub.s32 %s19, 1
    %s25 = ssub.s32 %s19, 2
    %s26 = sadd.s32 %s19, 1
    %s27 = ssub.s32 %s19, %s26
    %p28 = scmp.eq.s32.totalorder %s27, 0
    %s30 = sadd.s32 %s29, 1
    %s31 = scalar_select %p28, %s29, %s30
    %p34 = pneg %p28
    %p35 = scmp.eq.s32.totalorder %s19, 1
    %p36 = por %p34, %p35
    %p37 = scmp.ne.s32.totalorder %s29, %s32
    %p38 = scmp.eq.s32.totalorder %s19, 0
    %p39 = por %p37, %p38
    %p40 = scmp.ne.s32.totalorder %s29, %s32
    %p41 = scmp.eq.s32.totalorder %s24, 1
    %p42 = por %p40, %p41
    %p43 = scmp.ne.s32.totalorder %s32, %s33
    %p44 = scmp.eq.s32.totalorder %s24, 0
    %p45 = por %p43, %p44
    %p46 = scmp.ne.s32.totalorder %s32, %s33
    %p47 = scmp.eq.s32.totalorder %s25, 1
    %p48 = por %p46, %p47
    %p50 = scmp.ne.s32.totalorder %s33, %s49
    %p51 = scmp.eq.s32.totalorder %s25, 0
    %p52 = por %p50, %p51
    %s54 = sadd.s32 %s53, 1
    %p57 = scmp.eq.s32.totalorder %s19, 1
    %p58 = scmp.ne.s32.totalorder %s53, %s55
    %p59 = scmp.eq.s32.totalorder %s19, 0
    %p60 = por %p58, %p59
    %p61 = scmp.ne.s32.totalorder %s53, %s55
    %p62 = scmp.eq.s32.totalorder %s24, 1
    %p63 = por %p61, %p62
    %p64 = scmp.ne.s32.totalorder %s55, %s56
    %p65 = scmp.eq.s32.totalorder %s24, 0
    %p66 = por %p64, %p65
    %p67 = scmp.ne.s32.totalorder %s55, %s56
    %p68 = scmp.eq.s32.totalorder %s25, 1
    %p69 = por %p67, %p68
    %p71 = scmp.ne.s32.totalorder %s56, %s70
    %p72 = scmp.eq.s32.totalorder %s25, 0
    %p73 = por %p71, %p72
    %s75 = sadd.s32 %s74, 1
    %p78 = scmp.eq.s32.totalorder %s19, 1
    %p79 = scmp.ne.s32.totalorder %s74, %s76
    %p80 = scmp.eq.s32.totalorder %s19, 0
    %p81 = por %p79, %p80
    %p82 = scmp.ne.s32.totalorder %s74, %s76
    %p83 = scmp.eq.s32.totalorder %s24, 1
    %p84 = por %p82, %p83
    %p85 = scmp.ne.s32.totalorder %s76, %s77
    %p86 = scmp.eq.s32.totalorder %s24, 0
    %p87 = por %p85, %p86
    %p88 = scmp.ne.s32.totalorder %s76, %s77
    %p89 = scmp.eq.s32.totalorder %s25, 1
    %p90 = por %p88, %p89
    %p92 = scmp.ne.s32.totalorder %s77, %s91
    %p93 = scmp.eq.s32.totalorder %s25, 0
    %p94 = por %p92, %p93
    %s96 = sadd.s32 %s95, 1
    %p99 = scmp.eq.s32.totalorder %s19, 1
    %p100 = scmp.ne.s32.totalorder %s95, %s97
    %p101 = scmp.eq.s32.totalorder %s19, 0
    %p102 = por %p100, %p101
    %p103 = scmp.ne.s32.totalorder %s95, %s97
    %p104 = scmp.eq.s32.totalorder %s24, 1
    %p105 = por %p103, %p104
    %p106 = scmp.ne.s32.totalorder %s97, %s98
    %p107 = scmp.eq.s32.totalorder %s24, 0
    %p108 = por %p106, %p107
    %p109 = scmp.ne.s32.totalorder %s97, %s98
    %p110 = scmp.eq.s32.totalorder %s25, 1
    %p111 = por %p109, %p110
    %p113 = scmp.ne.s32.totalorder %s98, %s112
    %p114 = scmp.eq.s32.totalorder %s25, 0
    %p115 = por %p113, %p114
    %s117 = sadd.s32 %s116, 1
    %p120 = scmp.eq.s32.totalorder %s19, 1
    %p121 = scmp.ne.s32.totalorder %s116, %s118
    %p122 = scmp.eq.s32.totalorder %s19, 0
    %p123 = por %p121, %p122
    %p124 = scmp.ne.s32.totalorder %s116, %s118
    %p125 = scmp.eq.s32.totalorder %s24, 1
    %p126 = por %p124, %p125
    %p127 = scmp.ne.s32.totalorder %s118, %s119
    %p128 = scmp.eq.s32.totalorder %s24, 0
    %p129 = por %p127, %p128
    %p130 = scmp.ne.s32.totalorder %s118, %s119
    %p131 = scmp.eq.s32.totalorder %s25, 1
    %p132 = por %p130, %p131
    %p134 = scmp.ne.s32.totalorder %s119, %s133
    %p135 = scmp.eq.s32.totalorder %s25, 0
    %p136 = por %p134, %p135
    %s138 = sadd.s32 %s137, 1
    %p141 = scmp.eq.s32.totalorder %s19, 1
    %p142 = scmp.ne.s32.totalorder %s137, %s139
    %p143 = scmp.eq.s32.totalorder %s19, 0
    %p144 = por %p142, %p143
    %p145 = scmp.ne.s32.totalorder %s137, %s139
    %p146 = scmp.eq.s32.totalorder %s24, 1
    %p147 = por %p145, %p146
    %p148 = scmp.ne.s32.totalorder %s139, %s140
    %p149 = scmp.eq.s32.totalorder %s24, 0
    %p150 = por %p148, %p149
    %p151 = scmp.ne.s32.totalorder %s139, %s140
    %p152 = scmp.eq.s32.totalorder %s25, 1
    %p153 = por %p151, %p152
    %p155 = scmp.ne.s32.totalorder %s140, %s154
    %p156 = scmp.eq.s32.totalorder %s25, 0
    %p157 = por %p155, %p156
    %s159 = sadd.s32 %s158, 1
    %p162 = scmp.eq.s32.totalorder %s19, 1
    %p163 = scmp.ne.s32.totalorder %s158, %s160
    %p164 = scmp.eq.s32.totalorder %s19, 0
    %p165 = por %p163, %p164
    %p166 = scmp.ne.s32.totalorder %s158, %s160
    %p167 = scmp.eq.s32.totalorder %s24, 1
    %p168 = por %p166, %p167
    %p169 = scmp.ne.s32.totalorder %s160, %s161
    %p170 = scmp.eq.s32.totalorder %s24, 0
    %p171 = por %p169, %p170
    %p172 = scmp.ne.s32.totalorder %s160, %s161
    %p173 = scmp.eq.s32.totalorder %s25, 1
    %p174 = por %p172, %p173
    %p176 = scmp.ne.s32.totalorder %s161, %s175
    %p177 = scmp.eq.s32.totalorder %s25, 0
    %p178 = por %p176, %p177
    %s180 = sadd.s32 %s179, 1
    %p183 = scmp.eq.s32.totalorder %s19, 1
    %p184 = scmp.ne.s32.totalorder %s179, %s181
    %p185 = scmp.eq.s32.totalorder %s19, 0
    %p186 = por %p184, %p185
    %p187 = scmp.ne.s32.totalorder %s179, %s181
    %p188 = scmp.eq.s32.totalorder %s24, 1
    %p189 = por %p187, %p188
    %p190 = scmp.ne.s32.totalorder %s181, %s182
    %p191 = scmp.eq.s32.totalorder %s24, 0
    %p192 = por %p190, %p191
    %p193 = scmp.ne.s32.totalorder %s181, %s182
    %p194 = scmp.eq.s32.totalorder %s25, 1
    %p195 = por %p193, %p194
    %p197 = scmp.ne.s32.totalorder %s182, %s196
    %p198 = scmp.eq.s32.totalorder %s25, 0
    %p199 = por %p197, %p198
    %s201 = sadd.s32 %s200, 1
    %p204 = scmp.eq.s32.totalorder %s19, 1
    %p205 = scmp.ne.s32.totalorder %s200, %s202
    %p206 = scmp.eq.s32.totalorder %s19, 0
    %p207 = por %p205, %p206
    %p208 = scmp.ne.s32.totalorder %s200, %s202
    %p209 = scmp.eq.s32.totalorder %s24, 1
    %p210 = por %p208, %p209
    %p211 = scmp.ne.s32.totalorder %s202, %s203
    %p212 = scmp.eq.s32.totalorder %s24, 0
    %p213 = por %p211, %p212
    %p214 = scmp.ne.s32.totalorder %s202, %s203
    %p215 = scmp.eq.s32.totalorder %s25, 1
    %p216 = por %p214, %p215
    %p218 = scmp.ne.s32.totalorder %s203, %s217
    %p219 = scmp.eq.s32.totalorder %s25, 0
    %p220 = por %p218, %p219
    %s222 = sadd.s32 %s221, 1
    %p225 = scmp.eq.s32.totalorder %s19, 1
    %p226 = scmp.ne.s32.totalorder %s221, %s223
    %p227 = scmp.eq.s32.totalorder %s19, 0
    %p228 = por %p226, %p227
    %p229 = scmp.ne.s32.totalorder %s221, %s223
    %p230 = scmp.eq.s32.totalorder %s24, 1
    %p231 = por %p229, %p230
    %p232 = scmp.ne.s32.totalorder %s223, %s224
    %p233 = scmp.eq.s32.totalorder %s24, 0
    %p234 = por %p232, %p233
    %p235 = scmp.ne.s32.totalorder %s223, %s224
    %p236 = scmp.eq.s32.totalorder %s25, 1
    %p237 = por %p235, %p236
    %p239 = scmp.ne.s32.totalorder %s224, %s238
    %p240 = scmp.eq.s32.totalorder %s25, 0
    %p241 = por %p239, %p240
    %s243 = sadd.s32 %s242, 1
    %p246 = scmp.eq.s32.totalorder %s19, 1
    %p247 = scmp.ne.s32.totalorder %s242, %s244
    %p248 = scmp.eq.s32.totalorder %s19, 0
    %p249 = por %p247, %p248
    %p250 = scmp.ne.s32.totalorder %s242, %s244
    %p251 = scmp.eq.s32.totalorder %s24, 1
    %p252 = por %p250, %p251
    %p253 = scmp.ne.s32.totalorder %s244, %s245
    %p254 = scmp.eq.s32.totalorder %s24, 0
    %p255 = por %p253, %p254
    %p256 = scmp.ne.s32.totalorder %s244, %s245
    %p257 = scmp.eq.s32.totalorder %s25, 1
    %p258 = por %p256, %p257
    %p260 = scmp.ne.s32.totalorder %s245, %s259
    %p261 = scmp.eq.s32.totalorder %s25, 0
    %p262 = por %p260, %p261
    %s264 = sadd.s32 %s263, 1
    %p267 = scmp.eq.s32.totalorder %s19, 1
    %p268 = scmp.ne.s32.totalorder %s263, %s265
    %p269 = scmp.eq.s32.totalorder %s19, 0
    %p270 = por %p268, %p269
    %p271 = scmp.ne.s32.totalorder %s263, %s265
    %p272 = scmp.eq.s32.totalorder %s24, 1
    %p273 = por %p271, %p272
    %p274 = scmp.ne.s32.totalorder %s265, %s266
    %p275 = scmp.eq.s32.totalorder %s24, 0
    %p276 = por %p274, %p275
    %p277 = scmp.ne.s32.totalorder %s265, %s266
    %p278 = scmp.eq.s32.totalorder %s25, 1
    %p279 = por %p277, %p278
    %p281 = scmp.ne.s32.totalorder %s266, %s280
    %p282 = scmp.eq.s32.totalorder %s25, 0
    %p283 = por %p281, %p282
    %s285 = sadd.s32 %s284, 1
    %p288 = scmp.eq.s32.totalorder %s19, 1
    %p289 = scmp.ne.s32.totalorder %s284, %s286
    %p290 = scmp.eq.s32.totalorder %s19, 0
    %p291 = por %p289, %p290
    %p292 = scmp.ne.s32.totalorder %s284, %s286
    %p293 = scmp.eq.s32.totalorder %s24, 1
    %p294 = por %p292, %p293
    %p295 = scmp.ne.s32.totalorder %s286, %s287
    %p296 = scmp.eq.s32.totalorder %s24, 0
    %p297 = por %p295, %p296
    %p298 = scmp.ne.s32.totalorder %s286, %s287
    %p299 = scmp.eq.s32.totalorder %s25, 1
    %p300 = por %p298, %p299
    %p302 = scmp.ne.s32.totalorder %s287, %s301
    %p303 = scmp.eq.s32.totalorder %s25, 0
    %p304 = por %p302, %p303
    %s305 = ssub.s32 %s19, %s26
    %p306 = scmp.eq.s32.totalorder %s305, 0
    %s308 = sadd.s32 %s307, 1
    %s309 = scalar_select %p306, %s307, %s308
    %p312 = pneg %p306
    %p313 = scmp.eq.s32.totalorder %s19, 1
    %p314 = por %p312, %p313
    %p315 = scmp.ne.s32.totalorder %s307, %s310
    %p316 = scmp.eq.s32.totalorder %s19, 0
    %p317 = por %p315, %p316
    %p318 = scmp.ne.s32.totalorder %s307, %s310
    %p319 = scmp.eq.s32.totalorder %s24, 1
    %p320 = por %p318, %p319
    %p321 = scmp.ne.s32.totalorder %s310, %s311
    %p322 = scmp.eq.s32.totalorder %s24, 0
    %p323 = por %p321, %p322
    %p324 = scmp.ne.s32.totalorder %s310, %s311
    %p325 = scmp.eq.s32.totalorder %s25, 1
    %p326 = por %p324, %p325
    %p328 = scmp.ne.s32.totalorder %s311, %s327
    %p329 = scmp.eq.s32.totalorder %s25, 0
    %p330 = por %p328, %p329
    %p331 = scmp.le.s32.totalorder 1, %s19
    %p332 = scmp.lt.s32.totalorder %s19, 3
    %p333 = pnand %p331, %p332
    %p334 = pneg %p333
    // Predicated region
    $region9: #{xrespool_forward.11} parent=5 // pred_check
      _
    $region10: #{xrespool_forward.11} parent=5 // pred_check_branch
      %336 = sbr.rel (%p333) target = $region12
    $region11: #{xrespool_forward.11} parent=5 // pred_region
      %s337 = ssub.s32 %s19, 1
      // Predicated region
      $region13: #{xrespool_forward.11} parent=11 // pred_check
        %p338 = pneg %p66
      $region14: #{xrespool_forward.11} parent=11 // pred_check_branch
        %340 = sbr.rel (%p338) target = $region16
      $region15: #{xrespool_forward.11} parent=11 // pred_region
        _
      $region16: #{xrespool_forward.11} parent=11 // pred_fallthru
        _
      // Predicated region
      $region17: #{xrespool_forward.11} parent=11 // pred_check
        %p341 = pneg %p87
      $region18: #{xrespool_forward.11} parent=11 // pred_check_branch
        %343 = sbr.rel (%p341) target = $region20
      $region19: #{xrespool_forward.11} parent=11 // pred_region
        _
      $region20: #{xrespool_forward.11} parent=11 // pred_fallthru
        _
      // Predicated region
      $region21: #{xrespool_forward.11} parent=11 // pred_check
        %p344 = pneg %p108
      $region22: #{xrespool_forward.11} parent=11 // pred_check_branch
        %346 = sbr.rel (%p344) target = $region24
      $region23: #{xrespool_forward.11} parent=11 // pred_region
        _
      $region24: #{xrespool_forward.11} parent=11 // pred_fallthru
        _
      // Predicated region
      $region25: #{xrespool_forward.11} parent=11 // pred_check
        %p347 = pneg %p129
      $region26: #{xrespool_forward.11} parent=11 // pred_check_branch
        %349 = sbr.rel (%p347) target = $region28
      $region27: #{xrespool_forward.11} parent=11 // pred_region
        _
      $region28: #{xrespool_forward.11} parent=11 // pred_fallthru
        _
      // Predicated region
      $region29: #{xrespool_forward.11} parent=11 // pred_check
        %p350 = pneg %p150
      $region30: #{xrespool_forward.11} parent=11 // pred_check_branch
        %352 = sbr.rel (%p350) target = $region32
      $region31: #{xrespool_forward.11} parent=11 // pred_region
        _
      $region32: #{xrespool_forward.11} parent=11 // pred_fallthru
        _
      // Predicated region
      $region33: #{xrespool_forward.11} parent=11 // pred_check
        %p353 = pneg %p171
      $region34: #{xrespool_forward.11} parent=11 // pred_check_branch
        %355 = sbr.rel (%p353) target = $region36
      $region35: #{xrespool_forward.11} parent=11 // pred_region
        _
      $region36: #{xrespool_forward.11} parent=11 // pred_fallthru
        _
      // Predicated region
      $region37: #{xrespool_forward.11} parent=11 // pred_check
        %p356 = pneg %p192
      $region38: #{xrespool_forward.11} parent=11 // pred_check_branch
        %358 = sbr.rel (%p356) target = $region40
      $region39: #{xrespool_forward.11} parent=11 // pred_region
        _
      $region40: #{xrespool_forward.11} parent=11 // pred_fallthru
        _
      // Predicated region
      $region41: #{xrespool_forward.11} parent=11 // pred_check
        %p359 = pneg %p213
      $region42: #{xrespool_forward.11} parent=11 // pred_check_branch
        %361 = sbr.rel (%p359) target = $region44
      $region43: #{xrespool_forward.11} parent=11 // pred_region
        _
      $region44: #{xrespool_forward.11} parent=11 // pred_fallthru
        _
      // Predicated region
      $region45: #{xrespool_forward.11} parent=11 // pred_check
        %p362 = pneg %p234
      $region46: #{xrespool_forward.11} parent=11 // pred_check_branch
        %364 = sbr.rel (%p362) target = $region48
      $region47: #{xrespool_forward.11} parent=11 // pred_region
        _
      $region48: #{xrespool_forward.11} parent=11 // pred_fallthru
        _
      // Predicated region
      $region49: #{xrespool_forward.11} parent=11 // pred_check
        %p365 = pneg %p255
      $region50: #{xrespool_forward.11} parent=11 // pred_check_branch
        %367 = sbr.rel (%p365) target = $region52
      $region51: #{xrespool_forward.11} parent=11 // pred_region
        _
      $region52: #{xrespool_forward.11} parent=11 // pred_fallthru
        _
      // Predicated region
      $region53: #{xrespool_forward.11} parent=11 // pred_check
        %p368 = pneg %p276
      $region54: #{xrespool_forward.11} parent=11 // pred_check_branch
        %370 = sbr.rel (%p368) target = $region56
      $region55: #{xrespool_forward.11} parent=11 // pred_region
        _
      $region56: #{xrespool_forward.11} parent=11 // pred_fallthru
        _
      // Predicated region
      $region57: #{xrespool_forward.11} parent=11 // pred_check
        %p371 = pneg %p297
      $region58: #{xrespool_forward.11} parent=11 // pred_check_branch
        %373 = sbr.rel (%p371) target = $region60
      $region59: #{xrespool_forward.11} parent=11 // pred_region
        _
      $region60: #{xrespool_forward.11} parent=11 // pred_fallthru
        _
    $region12: #{xrespool_forward.11} parent=5 // pred_fallthru
      _
    %p374 = scmp.lt.s32.totalorder %s19, 2
    // Predicated region
    $region61: #{xrespool_forward.11} parent=5 // pred_check
      %p375 = pneg %p374
    $region62: #{xrespool_forward.11} parent=5 // pred_check_branch
      %377 = sbr.rel (%p375) target = $region64
    $region63: #{xrespool_forward.11} parent=5 // pred_region
      // Predicated region
      $region65: #{xrespool_forward.11} parent=63 // pred_check
        %p378 = pneg %p39
      $region66: #{xrespool_forward.11} parent=63 // pred_check_branch
        %380 = sbr.rel (%p378) target = $region68
      $region67: #{xrespool_forward.11} parent=63 // pred_region
        %p381 = scmp.lt.s32.totalorder %s19, 1
        %s382 = scalar_select %p381, %s19, 1
        %s383 = smul.addr %s382, 2
        %s384 = smul.addr %s383, 4
        %s385 = scalar_lea.vmem %s0, %s384
      $region68: #{xrespool_forward.11} parent=63 // pred_fallthru
        _
    $region64: #{xrespool_forward.11} parent=5 // pred_fallthru
      _
    %p386 = scmp.le.s32.totalorder 1, %s19
    %p387 = scmp.lt.s32.totalorder %s19, 3
    %p388 = pnand %p386, %p387
    %p389 = pneg %p388
    // Predicated region
    $region69: #{xrespool_forward.11} parent=5 // pred_check
      _
    $region70: #{xrespool_forward.11} parent=5 // pred_check_branch
      %391 = sbr.rel (%p388) target = $region72
    $region71: #{xrespool_forward.11} parent=5 // pred_region
      %s392 = ssub.s32 %s19, 1
      %p393 = scmp.lt.s32.totalorder %s24, 1
      %s394 = scalar_select %p393, %s24, 1
      %s395 = smul.addr %s394, 2
      %s396 = smul.addr %s395, 4
      %s397 = scalar_lea.vmem %s0, %s396
      %p398 = pneg %p45
      %p399 = pneg %p42
      %p400 = pneg %p66
      %p401 = pneg %p63
      %p402 = pneg %p87
      %p403 = pneg %p84
      %p404 = pneg %p108
      %p405 = pneg %p105
      %p406 = pneg %p129
      %p407 = pneg %p126
      %p408 = pneg %p150
      %p409 = pneg %p147
      %p410 = pneg %p171
      %p411 = pneg %p168
      %p412 = pneg %p192
      %p413 = pneg %p189
      %p414 = pneg %p213
      %p415 = pneg %p210
      %p416 = pneg %p234
      %p417 = pneg %p231
      %p418 = pneg %p255
      %p419 = pneg %p252
      %p420 = pneg %p276
      %p421 = pneg %p273
      %p422 = pneg %p297
      %p423 = pneg %p294
      %p424 = pneg %p323
      %p425 = pneg %p320
      %p426 = scmp.lt.s32.totalorder %s24, 1
      %s427 = scalar_select %p426, %s24, 1
      %s428 = smul.addr %s427, 4
      %s429 = scalar_lea.vmem %s13, %s428
      %p430 = scmp.lt.s32.totalorder %s24, 1
      %s431 = scalar_select %p430, %s24, 1
      %s432 = smul.addr %s431, 2
      %s433 = smul.addr %s432, 4
      %s434 = scalar_lea.vmem %s0, %s433
      %p435 = scmp.lt.s32.totalorder %s24, 1
      %s436 = scalar_select %p435, %s24, 1
      %s437 = smul.addr %s436, 4
      %s438 = scalar_lea.vmem %s13, %s437
      %v440 = vld [vmem:[%s434] sm:$0xf]
      %v441 = vld [vmem:[%s434 + $0x4] sm:$0xf]
      %v442 = vld [vmem:[%s1] sm:$0xf]
      %v443 = vld [vmem:[%s1 + $0x4] sm:$0xf]
      %v444 = vld [vmem:[%s1 + $0x8] sm:$0xf]
      %v445 = vld [vmem:[%s1 + $0xc] sm:$0xf]
      %v446 = vld [vmem:[%s1 + $0x10] sm:$0xf]
      %v447 = vld [vmem:[%s1 + $0x14] sm:$0xf]
      %v448 = vld [vmem:[%s1 + $0x18] sm:$0xf]
      %v449 = vld [vmem:[%s1 + $0x1c] sm:$0xf]
      %v450 = vld [vmem:[%s1 + $0x20] sm:$0xf]
      %v451 = vld [vmem:[%s1 + $0x24] sm:$0xf]
      %v452 = vld [vmem:[%s1 + $0x28] sm:$0xf]
      %v453 = vld [vmem:[%s1 + $0x2c] sm:$0xf]
      %v454 = vld [vmem:[%s1 + $0x30] sm:$0xf]
      %v455 = vld [vmem:[%s1 + $0x34] sm:$0xf]
      %v456 = vld [vmem:[%s1 + $0x38] sm:$0xf]
      %v457 = vld [vmem:[%s1 + $0x3c] sm:$0xf]
      %v474 = vunpack.c.l.b16 %v442
      %v475 = vunpack.c.l.b16 %v443
      %v476 = vunpack.c.l.b16 %v444
      %v477 = vunpack.c.l.b16 %v445
      %v478 = vunpack.c.l.b16 %v446
      %v479 = vunpack.c.l.b16 %v447
      %v480 = vunpack.c.l.b16 %v448
      %v481 = vunpack.c.l.b16 %v449
      %v482 = vunpack.c.l.b16 %v450
      %v483 = vunpack.c.l.b16 %v451
      %v484 = vunpack.c.l.b16 %v452
      %v485 = vunpack.c.l.b16 %v453
      %v486 = vunpack.c.l.b16 %v454
      %v487 = vunpack.c.l.b16 %v455
      %v488 = vunpack.c.l.b16 %v456
      %v489 = vunpack.c.l.b16 %v457
      %v490 = vpack.c.b16 %v475, %v474
      %v491 = vpack.c.b16 %v477, %v476
      %v492 = vpack.c.b16 %v479, %v478
      %v493 = vpack.c.b16 %v481, %v480
      %v494 = vpack.c.b16 %v483, %v482
      %v495 = vpack.c.b16 %v485, %v484
      %v496 = vpack.c.b16 %v487, %v486
      %v497 = vpack.c.b16 %v489, %v488
      %506 = vmatprep.subr.bf16.mxu0 0
      %507 = vmatpush1.bf16.msra.mxu0 %v490
      %508 = vmatprep.subr.bf16.mxu0 0
      %509 = vmatpush1.bf16.msra.mxu0 %v491
      %510 = vmatprep.subr.bf16.mxu0 0
      %511 = vmatpush1.bf16.msra.mxu0 %v492
      %512 = vmatprep.subr.bf16.mxu0 0
      %513 = vmatpush1.bf16.msra.mxu0 %v493
      %514 = vmatprep.subr.bf16.mxu0 0
      %515 = vmatpush1.bf16.msra.mxu0 %v494
      %516 = vmatprep.subr.bf16.mxu0 0
      %517 = vmatpush1.bf16.msra.mxu0 %v495
      %518 = vmatprep.subr.bf16.mxu0 0
      %519 = vmatpush1.bf16.msra.mxu0 %v496
      %520 = vmatprep.subr.bf16.mxu0 0
      %521 = vmatpush1.bf16.msra.mxu0 %v497
      %522 = vmatprep.subr.bf16.mxu0 0
      %523 = vmatpush1.bf16.msra.mxu0 0
      %524 = vmatprep.subr.bf16.mxu0 0
      %525 = vmatpush1.bf16.msra.mxu0 0
      %526 = vmatprep.subr.bf16.mxu0 0
      %527 = vmatpush1.bf16.msra.mxu0 0
      %528 = vmatprep.subr.bf16.mxu0 0
      %529 = vmatpush1.bf16.msra.mxu0 0
      %530 = vmatprep.subr.bf16.mxu0 0
      %531 = vmatpush1.bf16.msra.mxu0 0
      %532 = vmatprep.subr.bf16.mxu0 0
      %533 = vmatpush1.bf16.msra.mxu0 0
      %534 = vmatprep.subr.bf16.mxu0 0
      %535 = vmatpush1.bf16.msra.mxu0 0
      %536 = vmatprep.subr.bf16.mxu0 0
      %537 = vmatpush1.bf16.msra.mxu0 0
      %538 = vmatprep.mubr.bf16.mxu0 0
      %539 = vmatmul.mubr.bf16.gmra.mrb[0].mxu0 %v440
      %v540 = vpop.f32.mrb[0].mxu0
      %v541 = vadd.f32 0.0, %v540
      %v542 = vpop.f32.mrb[0].mxu0
      %v543 = vpop.f32.mrb[0].mxu0
      %v544 = vpop.f32.mrb[0].mxu0
      %545 = vdwg.mxu0
      %v546 = vld [vmem:[%s2] sm:$0x1]
      %v548 = vlaneseq
      %v549 = vshrl.u32 %v548, 7
      %v550 = vsub.s32 0, %v549
      %v551 = vrot.slane %v546, %v550
      %v553 = vmul.f32 %v541, %v551
      %v554 = vld [vmem:[%s3] sm:$0x1]
      %v556 = vlaneseq
      %v557 = vshrl.u32 %v556, 7
      %v558 = vsub.s32 0, %v557
      %v559 = vrot.slane %v554, %v558
      %v561 = vadd.f32 %v553, %v559
      %v562 = vmax.f32 %v561, 0.0
      %v563 = vpack.c.bf16 %v562, %v562
      %564 = vmatprep.subr.bf16.mxu0 0
      %565 = vmatpush1.bf16.msra.mxu0 %v490
      %566 = vmatprep.subr.bf16.mxu0 0
      %567 = vmatpush1.bf16.msra.mxu0 %v491
      %568 = vmatprep.subr.bf16.mxu0 0
      %569 = vmatpush1.bf16.msra.mxu0 %v492
      %570 = vmatprep.subr.bf16.mxu0 0
      %571 = vmatpush1.bf16.msra.mxu0 %v493
      %572 = vmatprep.subr.bf16.mxu0 0
      %573 = vmatpush1.bf16.msra.mxu0 %v494
      %574 = vmatprep.subr.bf16.mxu0 0
      %575 = vmatpush1.bf16.msra.mxu0 %v495
      %576 = vmatprep.subr.bf16.mxu0 0
      %577 = vmatpush1.bf16.msra.mxu0 %v496
      %578 = vmatprep.subr.bf16.mxu0 0
      %579 = vmatpush1.bf16.msra.mxu0 %v497
      %580 = vmatprep.subr.bf16.mxu0 0
      %581 = vmatpush1.bf16.msra.mxu0 0
      %582 = vmatprep.subr.bf16.mxu0 0
      %583 = vmatpush1.bf16.msra.mxu0 0
      %584 = vmatprep.subr.bf16.mxu0 0
      %585 = vmatpush1.bf16.msra.mxu0 0
      %586 = vmatprep.subr.bf16.mxu0 0
      %587 = vmatpush1.bf16.msra.mxu0 0
      %588 = vmatprep.subr.bf16.mxu0 0
      %589 = vmatpush1.bf16.msra.mxu0 0
      %590 = vmatprep.subr.bf16.mxu0 0
      %591 = vmatpush1.bf16.msra.mxu0 0
      %592 = vmatprep.subr.bf16.mxu0 0
      %593 = vmatpush1.bf16.msra.mxu0 0
      %594 = vmatprep.subr.bf16.mxu0 0
      %595 = vmatpush1.bf16.msra.mxu0 0
      %596 = vmatprep.mubr.bf16.mxu0 0
      %597 = vmatmul.mubr.bf16.gmra.mrb[0].mxu0 %v441
      %v598 = vpop.f32.mrb[0].mxu0
      %v599 = vadd.f32 0.0, %v598
      %v600 = vpop.f32.mrb[0].mxu0
      %v601 = vpop.f32.mrb[0].mxu0
      %v602 = vpop.f32.mrb[0].mxu0
      %603 = vdwg.mxu0
      %v604 = vmul.f32 %v599, %v551
      %v605 = vadd.f32 %v604, %v559
      %v606 = vmax.f32 %v605, 0.0
      %v607 = vpack.c.bf16 %v606, %v606
      %608 = vst [vmem:[#allocation2] sm:$0xff] 0
      %609 = vst [vmem:[#allocation2 + $0x8] sm:$0xff] 0
      %610 = vst [vmem:[#allocation2 + $0x8] sm:$0xf] %v607
      %v611 = vld [vmem:[#allocation2] sm:$0x80]
      %v612 = vld [vmem:[#allocation2 + $0x8] sm:$0xf]
      %v613 = vld [vmem:[%s4] sm:$0xf]
      %v614 = vld [vmem:[%s4 + $0x4] sm:$0xf]
      %v615 = vld [vmem:[%s4 + $0x8] sm:$0xf]
      %v616 = vld [vmem:[%s4 + $0xc] sm:$0xf]
      %v617 = vld [vmem:[%s4 + $0x10] sm:$0xf]
      %v618 = vld [vmem:[%s4 + $0x14] sm:$0xf]
      %v619 = vld [vmem:[%s4 + $0x18] sm:$0xf]
      %v620 = vld [vmem:[%s4 + $0x1c] sm:$0xf]
      %v621 = vld [vmem:[%s4 + $0x20] sm:$0xf]
      %v622 = vld [vmem:[%s4 + $0x24] sm:$0xf]
      %v623 = vld [vmem:[%s4 + $0x28] sm:$0xf]
      %v624 = vld [vmem:[%s4 + $0x2c] sm:$0xf]
      %v625 = vld [vmem:[%s4 + $0x30] sm:$0xf]
      %v626 = vld [vmem:[%s4 + $0x34] sm:$0xf]
      %v627 = vld [vmem:[%s4 + $0x38] sm:$0xf]
      %v628 = vld [vmem:[%s4 + $0x3c] sm:$0xf]
      %s629 = scalar_lea.vmem %s4, 64
      %v630 = vld [vmem:[%s629] sm:$0xf]
      %v631 = vld [vmem:[%s629 + $0x4] sm:$0xf]
      %v632 = vld [vmem:[%s629 + $0x8] sm:$0xf]
      %v633 = vld [vmem:[%s629 + $0xc] sm:$0xf]
      %v634 = vld [vmem:[%s629 + $0x10] sm:$0xf]
      %v635 = vld [vmem:[%s629 + $0x14] sm:$0xf]
      %v636 = vld [vmem:[%s629 + $0x18] sm:$0xf]
      %v637 = vld [vmem:[%s629 + $0x1c] sm:$0xf]
      %v638 = vld [vmem:[%s629 + $0x20] sm:$0xf]
      %v639 = vld [vmem:[%s629 + $0x24] sm:$0xf]
      %v640 = vld [vmem:[%s629 + $0x28] sm:$0xf]
      %v641 = vld [vmem:[%s629 + $0x2c] sm:$0xf]
      %v642 = vld [vmem:[%s629 + $0x30] sm:$0xf]
      %v643 = vld [vmem:[%s629 + $0x34] sm:$0xf]
      %v644 = vld [vmem:[%s629 + $0x38] sm:$0xf]
      %v645 = vld [vmem:[%s629 + $0x3c] sm:$0xf]
      %v662 = vunpack.c.l.b16 %v630
      %v663 = vunpack.c.l.b16 %v631
      %v664 = vunpack.c.l.b16 %v632
      %v665 = vunpack.c.l.b16 %v633
      %v666 = vunpack.c.l.b16 %v634
      %v667 = vunpack.c.l.b16 %v635
      %v668 = vunpack.c.l.b16 %v636
      %v669 = vunpack.c.l.b16 %v637
      %v670 = vunpack.c.l.b16 %v638
      %v671 = vunpack.c.l.b16 %v639
      %v672 = vunpack.c.l.b16 %v640
      %v673 = vunpack.c.l.b16 %v641
      %v674 = vunpack.c.l.b16 %v642
      %v675 = vunpack.c.l.b16 %v643
      %v676 = vunpack.c.l.b16 %v644
      %v677 = vunpack.c.l.b16 %v645
      %v678 = vpack.c.b16 %v663, %v662
      %v679 = vpack.c.b16 %v665, %v664
      %v680 = vpack.c.b16 %v667, %v666
      %v681 = vpack.c.b16 %v669, %v668
      %v682 = vpack.c.b16 %v671, %v670
      %v683 = vpack.c.b16 %v673, %v672
      %v684 = vpack.c.b16 %v675, %v674
      %v685 = vpack.c.b16 %v677, %v676
      %694 = vmatprep.subr.bf16.mxu0 0
      %695 = vmatpush1.bf16.msra.mxu0 %v678
      %696 = vmatprep.subr.bf16.mxu0 0
      %697 = vmatpush1.bf16.msra.mxu0 %v679
      %698 = vmatprep.subr.bf16.mxu0 0
      %699 = vmatpush1.bf16.msra.mxu0 %v680
      %700 = vmatprep.subr.bf16.mxu0 0
      %701 = vmatpush1.bf16.msra.mxu0 %v681
      %702 = vmatprep.subr.bf16.mxu0 0
      %703 = vmatpush1.bf16.msra.mxu0 %v682
      %704 = vmatprep.subr.bf16.mxu0 0
      %705 = vmatpush1.bf16.msra.mxu0 %v683
      %706 = vmatprep.subr.bf16.mxu0 0
      %707 = vmatpush1.bf16.msra.mxu0 %v684
      %708 = vmatprep.subr.bf16.mxu0 0
      %709 = vmatpush1.bf16.msra.mxu0 %v685
      %710 = vmatprep.subr.bf16.mxu0 0
      %711 = vmatpush1.bf16.msra.mxu0 0
      %712 = vmatprep.subr.bf16.mxu0 0
      %713 = vmatpush1.bf16.msra.mxu0 0
      %714 = vmatprep.subr.bf16.mxu0 0
      %715 = vmatpush1.bf16.msra.mxu0 0
      %716 = vmatprep.subr.bf16.mxu0 0
      %717 = vmatpush1.bf16.msra.mxu0 0
      %718 = vmatprep.subr.bf16.mxu0 0
      %719 = vmatpush1.bf16.msra.mxu0 0
      %720 = vmatprep.subr.bf16.mxu0 0
      %721 = vmatpush1.bf16.msra.mxu0 0
      %722 = vmatprep.subr.bf16.mxu0 0
      %723 = vmatpush1.bf16.msra.mxu0 0
      %724 = vmatprep.subr.bf16.mxu0 0
      %725 = vmatpush1.bf16.msra.mxu0 0
      %726 = vmatprep.mubr.bf16.mxu0 0
      %727 = vmatmul.mubr.bf16.gmra.mrb[0].mxu0 %v563
      %v728 = vpop.f32.mrb[0].mxu0
      %v729 = vadd.f32 0.0, %v728
      %v730 = vpop.f32.mrb[0].mxu0
      %v731 = vpop.f32.mrb[0].mxu0
      %v732 = vpop.f32.mrb[0].mxu0
      %733 = vdwg.mxu0
      %vm734 = vsmask.f32 256
      %v736 = vshrl.u32 %v611, 16
      %v738 = vrot.slane %v736, 7
      %v740 = vshrl.u32 %v612, 16
      %v742 = vrot.slane %v740, 7
      %v743 = vshll.u32 %v612, 16
      %v745 = vor.u32 %v742, %v743
      %v746 = vsel %vm734, %v738, %v745
      %v764 = vunpack.c.l.b16 %v613
      %v765 = vunpack.c.l.b16 %v614
      %v766 = vunpack.c.l.b16 %v615
      %v767 = vunpack.c.l.b16 %v616
      %v768 = vunpack.c.l.b16 %v617
      %v769 = vunpack.c.l.b16 %v618
      %v770 = vunpack.c.l.b16 %v619
      %v771 = vunpack.c.l.b16 %v620
      %v772 = vunpack.c.l.b16 %v621
      %v773 = vunpack.c.l.b16 %v622
      %v774 = vunpack.c.l.b16 %v623
      %v775 = vunpack.c.l.b16 %v624
      %v776 = vunpack.c.l.b16 %v625
      %v777 = vunpack.c.l.b16 %v626
      %v778 = vunpack.c.l.b16 %v627
      %v779 = vunpack.c.l.b16 %v628
      %v780 = vpack.c.b16 %v765, %v764
      %v781 = vpack.c.b16 %v767, %v766
      %v782 = vpack.c.b16 %v769, %v768
      %v783 = vpack.c.b16 %v771, %v770
      %v784 = vpack.c.b16 %v773, %v772
      %v785 = vpack.c.b16 %v775, %v774
      %v786 = vpack.c.b16 %v777, %v776
      %v787 = vpack.c.b16 %v779, %v778
      %796 = vmatprep.subr.bf16.mxu0 0
      %797 = vmatpush1.bf16.msra.mxu0 %v780
      %798 = vmatprep.subr.bf16.mxu0 0
      %799 = vmatpush1.bf16.msra.mxu0 %v781
      %800 = vmatprep.subr.bf16.mxu0 0
      %801 = vmatpush1.bf16.msra.mxu0 %v782
      %802 = vmatprep.subr.bf16.mxu0 0
      %803 = vmatpush1.bf16.msra.mxu0 %v783
      %804 = vmatprep.subr.bf16.mxu0 0
      %805 = vmatpush1.bf16.msra.mxu0 %v784
      %806 = vmatprep.subr.bf16.mxu0 0
      %807 = vmatpush1.bf16.msra.mxu0 %v785
      %808 = vmatprep.subr.bf16.mxu0 0
      %809 = vmatpush1.bf16.msra.mxu0 %v786
      %810 = vmatprep.subr.bf16.mxu0 0
      %811 = vmatpush1.bf16.msra.mxu0 %v787
      %812 = vmatprep.subr.bf16.mxu0 0
      %813 = vmatpush1.bf16.msra.mxu0 0
      %814 = vmatprep.subr.bf16.mxu0 0
      %815 = vmatpush1.bf16.msra.mxu0 0
      %816 = vmatprep.subr.bf16.mxu0 0
      %817 = vmatpush1.bf16.msra.mxu0 0
      %818 = vmatprep.subr.bf16.mxu0 0
      %819 = vmatpush1.bf16.msra.mxu0 0
      %820 = vmatprep.subr.bf16.mxu0 0
      %821 = vmatpush1.bf16.msra.mxu0 0
      %822 = vmatprep.subr.bf16.mxu0 0
      %823 = vmatpush1.bf16.msra.mxu0 0
      %824 = vmatprep.subr.bf16.mxu0 0
      %825 = vmatpush1.bf16.msra.mxu0 0
      %826 = vmatprep.subr.bf16.mxu0 0
      %827 = vmatpush1.bf16.msra.mxu0 0
      %828 = vmatprep.mubr.bf16.mxu0 0
      %829 = vmatmul.mubr.bf16.gmra.mrb[0].mxu0 %v746
      %v830 = vpop.f32.mrb[0].mxu0
      %v831 = vadd.f32 %v729, %v830
      %v832 = vpop.f32.mrb[0].mxu0
      %v833 = vpop.f32.mrb[0].mxu0
      %v834 = vpop.f32.mrb[0].mxu0
      %835 = vdwg.mxu0
      %s836 = scalar_lea.vmem %s4, 128
      %v837 = vld [vmem:[%s836] sm:$0xf]
      %v838 = vld [vmem:[%s836 + $0x4] sm:$0xf]
      %v839 = vld [vmem:[%s836 + $0x8] sm:$0xf]
      %v840 = vld [vmem:[%s836 + $0xc] sm:$0xf]
      %v841 = vld [vmem:[%s836 + $0x10] sm:$0xf]
      %v842 = vld [vmem:[%s836 + $0x14] sm:$0xf]
      %v843 = vld [vmem:[%s836 + $0x18] sm:$0xf]
      %v844 = vld [vmem:[%s836 + $0x1c] sm:$0xf]
      %v845 = vld [vmem:[%s836 + $0x20] sm:$0xf]
      %v846 = vld [vmem:[%s836 + $0x24] sm:$0xf]
      %v847 = vld [vmem:[%s836 + $0x28] sm:$0xf]
      %v848 = vld [vmem:[%s836 + $0x2c] sm:$0xf]
      %v849 = vld [vmem:[%s836 + $0x30] sm:$0xf]
      %v850 = vld [vmem:[%s836 + $0x34] sm:$0xf]
      %v851 = vld [vmem:[%s836 + $0x38] sm:$0xf]
      %v852 = vld [vmem:[%s836 + $0x3c] sm:$0xf]
      %v869 = vunpack.c.l.b16 %v837
      %v870 = vunpack.c.l.b16 %v838
      %v871 = vunpack.c.l.b16 %v839
      %v872 = vunpack.c.l.b16 %v840
      %v873 = vunpack.c.l.b16 %v841
      %v874 = vunpack.c.l.b16 %v842
      %v875 = vunpack.c.l.b16 %v843
      %v876 = vunpack.c.l.b16 %v844
      %v877 = vunpack.c.l.b16 %v845
      %v878 = vunpack.c.l.b16 %v846
      %v879 = vunpack.c.l.b16 %v847
      %v880 = vunpack.c.l.b16 %v848
      %v881 = vunpack.c.l.b16 %v849
      %v882 = vunpack.c.l.b16 %v850
      %v883 = vunpack.c.l.b16 %v851
      %v884 = vunpack.c.l.b16 %v852
      %v885 = vpack.c.b16 %v870, %v869
      %v886 = vpack.c.b16 %v872, %v871
      %v887 = vpack.c.b16 %v874, %v873
      %v888 = vpack.c.b16 %v876, %v875
      %v889 = vpack.c.b16 %v878, %v877
      %v890 = vpack.c.b16 %v880, %v879
      %v891 = vpack.c.b16 %v882, %v881
      %v892 = vpack.c.b16 %v884, %v883
      %901 = vmatprep.subr.bf16.mxu0 0
      %902 = vmatpush1.bf16.msra.mxu0 %v885
      %903 = vmatprep.subr.bf16.mxu0 0
      %904 = vmatpush1.bf16.msra.mxu0 %v886
      %905 = vmatprep.subr.bf16.mxu0 0
      %906 = vmatpush1.bf16.msra.mxu0 %v887
      %907 = vmatprep.subr.bf16.mxu0 0
      %908 = vmatpush1.bf16.msra.mxu0 %v888
      %909 = vmatprep.subr.bf16.mxu0 0
      %910 = vmatpush1.bf16.msra.mxu0 %v889
      %911 = vmatprep.subr.bf16.mxu0 0
      %912 = vmatpush1.bf16.msra.mxu0 %v890
      %913 = vmatprep.subr.bf16.mxu0 0
      %914 = vmatpush1.bf16.msra.mxu0 %v891
      %915 = vmatprep.subr.bf16.mxu0 0
      %916 = vmatpush1.bf16.msra.mxu0 %v892
      %917 = vmatprep.subr.bf16.mxu0 0
      %918 = vmatpush1.bf16.msra.mxu0 0
      %919 = vmatprep.subr.bf16.mxu0 0
      %920 = vmatpush1.bf16.msra.mxu0 0
      %921 = vmatprep.subr.bf16.mxu0 0
      %922 = vmatpush1.bf16.msra.mxu0 0
      %923 = vmatprep.subr.bf16.mxu0 0
      %924 = vmatpush1.bf16.msra.mxu0 0
      %925 = vmatprep.subr.bf16.mxu0 0
      %926 = vmatpush1.bf16.msra.mxu0 0
      %927 = vmatprep.subr.bf16.mxu0 0
      %928 = vmatpush1.bf16.msra.mxu0 0
      %929 = vmatprep.subr.bf16.mxu0 0
      %930 = vmatpush1.bf16.msra.mxu0 0
      %931 = vmatprep.subr.bf16.mxu0 0
      %932 = vmatpush1.bf16.msra.mxu0 0
      %933 = vmatprep.mubr.bf16.mxu0 0
      %934 = vmatmul.mubr.bf16.gmra.mrb[0].mxu0 %v607
      %v935 = vpop.f32.mrb[0].mxu0
      %v936 = vadd.f32 0.0, %v935
      %v937 = vpop.f32.mrb[0].mxu0
      %v938 = vpop.f32.mrb[0].mxu0
      %v939 = vpop.f32.mrb[0].mxu0
      %940 = vdwg.mxu0
      %v941 = vadd.f32 %v831, %v936
      %v942 = vld [vmem:[%s5] sm:$0x1]
      %v944 = vlaneseq
      %v945 = vshrl.u32 %v944, 7
      %v946 = vsub.s32 0, %v945
      %v947 = vrot.slane %v942, %v946
      %v949 = vmul.f32 %v941, %v947
      %v950 = vld [vmem:[%s6] sm:$0x1]
      %v952 = vlaneseq
      %v953 = vshrl.u32 %v952, 7
      %v954 = vsub.s32 0, %v953
      %v955 = vrot.slane %v950, %v954
      %v957 = vadd.f32 %v949, %v955
      %v958 = vmax.f32 %v957, 0.0
      %v959 = vpack.c.bf16 %v958, %v958
      %v960 = vld [vmem:[%s7] sm:$0xf]
      %v961 = vld [vmem:[%s7 + $0x4] sm:$0xf]
      %v962 = vld [vmem:[%s7 + $0x8] sm:$0xf]
      %v963 = vld [vmem:[%s7 + $0xc] sm:$0xf]
      %v964 = vld [vmem:[%s7 + $0x10] sm:$0xf]
      %v965 = vld [vmem:[%s7 + $0x14] sm:$0xf]
      %v966 = vld [vmem:[%s7 + $0x18] sm:$0xf]
      %v967 = vld [vmem:[%s7 + $0x1c] sm:$0xf]
      %v968 = vld [vmem:[%s7 + $0x20] sm:$0xf]
      %v969 = vld [vmem:[%s7 + $0x24] sm:$0xf]
      %v970 = vld [vmem:[%s7 + $0x28] sm:$0xf]
      %v971 = vld [vmem:[%s7 + $0x2c] sm:$0xf]
      %v972 = vld [vmem:[%s7 + $0x30] sm:$0xf]
      %v973 = vld [vmem:[%s7 + $0x34] sm:$0xf]
      %v974 = vld [vmem:[%s7 + $0x38] sm:$0xf]
      %v975 = vld [vmem:[%s7 + $0x3c] sm:$0xf]
      %v992 = vunpack.c.l.b16 %v960
      %v993 = vunpack.c.l.b16 %v961
      %v994 = vunpack.c.l.b16 %v962
      %v995 = vunpack.c.l.b16 %v963
      %v996 = vunpack.c.l.b16 %v964
      %v997 = vunpack.c.l.b16 %v965
      %v998 = vunpack.c.l.b16 %v966
      %v999 = vunpack.c.l.b16 %v967
      %v1000 = vunpack.c.l.b16 %v968
      %v1001 = vunpack.c.l.b16 %v969
      %v1002 = vunpack.c.l.b16 %v970
      %v1003 = vunpack.c.l.b16 %v971
      %v1004 = vunpack.c.l.b16 %v972
      %v1005 = vunpack.c.l.b16 %v973
      %v1006 = vunpack.c.l.b16 %v974
      %v1007 = vunpack.c.l.b16 %v975
      %v1008 = vpack.c.b16 %v993, %v992
      %v1009 = vpack.c.b16 %v995, %v994
      %v1010 = vpack.c.b16 %v997, %v996
      %v1011 = vpack.c.b16 %v999, %v998
      %v1012 = vpack.c.b16 %v1001, %v1000
      %v1013 = vpack.c.b16 %v1003, %v1002
      %v1014 = vpack.c.b16 %v1005, %v1004
      %v1015 = vpack.c.b16 %v1007, %v1006
      %1024 = vmatprep.subr.bf16.mxu0 0
      %1025 = vmatpush1.bf16.msra.mxu0 %v1008
      %1026 = vmatprep.subr.bf16.mxu0 0
      %1027 = vmatpush1.bf16.msra.mxu0 %v1009
      %1028 = vmatprep.subr.bf16.mxu0 0
      %1029 = vmatpush1.bf16.msra.mxu0 %v1010
      %1030 = vmatprep.subr.bf16.mxu0 0
      %1031 = vmatpush1.bf16.msra.mxu0 %v1011
      %1032 = vmatprep.subr.bf16.mxu0 0
      %1033 = vmatpush1.bf16.msra.mxu0 %v1012
      %1034 = vmatprep.subr.bf16.mxu0 0
      %1035 = vmatpush1.bf16.msra.mxu0 %v1013
      %1036 = vmatprep.subr.bf16.mxu0 0
      %1037 = vmatpush1.bf16.msra.mxu0 %v1014
      %1038 = vmatprep.subr.bf16.mxu0 0
      %1039 = vmatpush1.bf16.msra.mxu0 %v1015
      %1040 = vmatprep.subr.bf16.mxu0 0
      %1041 = vmatpush1.bf16.msra.mxu0 0
      %1042 = vmatprep.subr.bf16.mxu0 0
      %1043 = vmatpush1.bf16.msra.mxu0 0
      %1044 = vmatprep.subr.bf16.mxu0 0
      %1045 = vmatpush1.bf16.msra.mxu0 0
      %1046 = vmatprep.subr.bf16.mxu0 0
      %1047 = vmatpush1.bf16.msra.mxu0 0
      %1048 = vmatprep.subr.bf16.mxu0 0
      %1049 = vmatpush1.bf16.msra.mxu0 0
      %1050 = vmatprep.subr.bf16.mxu0 0
      %1051 = vmatpush1.bf16.msra.mxu0 0
      %1052 = vmatprep.subr.bf16.mxu0 0
      %1053 = vmatpush1.bf16.msra.mxu0 0
      %1054 = vmatprep.subr.bf16.mxu0 0
      %1055 = vmatpush1.bf16.msra.mxu0 0
      %1056 = vmatprep.mubr.bf16.mxu0 0
      %1057 = vmatmul.mubr.bf16.gmra.mrb[0].mxu0 %v959
      %v1058 = vpop.f32.mrb[0].mxu0
      %v1059 = vadd.f32 0.0, %v1058
      %v1060 = vpop.f32.mrb[0].mxu0
      %v1061 = vpop.f32.mrb[0].mxu0
      %v1062 = vpop.f32.mrb[0].mxu0
      %1063 = vdwg.mxu0
      %v1064 = vld [vmem:[%s8] sm:$0x1]
      %v1066 = vlaneseq
      %v1067 = vshrl.u32 %v1066, 7
      %v1068 = vsub.s32 0, %v1067
      %v1069 = vrot.slane %v1064, %v1068
      %v1071 = vmul.f32 %v1059, %v1069
      %v1072 = vld [vmem:[%s9] sm:$0x1]
      %v1074 = vlaneseq
      %v1075 = vshrl.u32 %v1074, 7
      %v1076 = vsub.s32 0, %v1075
      %v1077 = vrot.slane %v1072, %v1076
      %v1079 = vadd.f32 %v1071, %v1077
      %v1080 = vunpack.c.l.bf16 %v440
      %v1081 = vunpack.c.l.bf16 %v441
      %v1082 = vadd.f32 %v1080, %v1081
      %v1083 = vmul.f32 %v1082, 0.5
      %v1084 = vpack.c.bf16 %v1083, %v1083
      %v1085 = vld [vmem:[%s10] sm:$0xf]
      %v1086 = vld [vmem:[%s10 + $0x4] sm:$0xf]
      %v1087 = vld [vmem:[%s10 + $0x8] sm:$0xf]
      %v1088 = vld [vmem:[%s10 + $0xc] sm:$0xf]
      %v1089 = vld [vmem:[%s10 + $0x10] sm:$0xf]
      %v1090 = vld [vmem:[%s10 + $0x14] sm:$0xf]
      %v1091 = vld [vmem:[%s10 + $0x18] sm:$0xf]
      %v1092 = vld [vmem:[%s10 + $0x1c] sm:$0xf]
      %v1093 = vld [vmem:[%s10 + $0x20] sm:$0xf]
      %v1094 = vld [vmem:[%s10 + $0x24] sm:$0xf]
      %v1095 = vld [vmem:[%s10 + $0x28] sm:$0xf]
      %v1096 = vld [vmem:[%s10 + $0x2c] sm:$0xf]
      %v1097 = vld [vmem:[%s10 + $0x30] sm:$0xf]
      %v1098 = vld [vmem:[%s10 + $0x34] sm:$0xf]
      %v1099 = vld [vmem:[%s10 + $0x38] sm:$0xf]
      %v1100 = vld [vmem:[%s10 + $0x3c] sm:$0xf]
      %v1117 = vunpack.c.l.b16 %v1085
      %v1118 = vunpack.c.l.b16 %v1086
      %v1119 = vunpack.c.l.b16 %v1087
      %v1120 = vunpack.c.l.b16 %v1088
      %v1121 = vunpack.c.l.b16 %v1089
      %v1122 = vunpack.c.l.b16 %v1090
      %v1123 = vunpack.c.l.b16 %v1091
      %v1124 = vunpack.c.l.b16 %v1092
      %v1125 = vunpack.c.l.b16 %v1093
      %v1126 = vunpack.c.l.b16 %v1094
      %v1127 = vunpack.c.l.b16 %v1095
      %v1128 = vunpack.c.l.b16 %v1096
      %v1129 = vunpack.c.l.b16 %v1097
      %v1130 = vunpack.c.l.b16 %v1098
      %v1131 = vunpack.c.l.b16 %v1099
      %v1132 = vunpack.c.l.b16 %v1100
      %v1133 = vpack.c.b16 %v1118, %v1117
      %v1134 = vpack.c.b16 %v1120, %v1119
      %v1135 = vpack.c.b16 %v1122, %v1121
      %v1136 = vpack.c.b16 %v1124, %v1123
      %v1137 = vpack.c.b16 %v1126, %v1125
      %v1138 = vpack.c.b16 %v1128, %v1127
      %v1139 = vpack.c.b16 %v1130, %v1129
      %v1140 = vpack.c.b16 %v1132, %v1131
      %1149 = vmatprep.subr.bf16.mxu0 0
      %1150 = vmatpush1.bf16.msra.mxu0 %v1133
      %1151 = vmatprep.subr.bf16.mxu0 0
      %1152 = vmatpush1.bf16.msra.mxu0 %v1134
      %1153 = vmatprep.subr.bf16.mxu0 0
      %1154 = vmatpush1.bf16.msra.mxu0 %v1135
      %1155 = vmatprep.subr.bf16.mxu0 0
      %1156 = vmatpush1.bf16.msra.mxu0 %v1136
      %1157 = vmatprep.subr.bf16.mxu0 0
      %1158 = vmatpush1.bf16.msra.mxu0 %v1137
      %1159 = vmatprep.subr.bf16.mxu0 0
      %1160 = vmatpush1.bf16.msra.mxu0 %v1138
      %1161 = vmatprep.subr.bf16.mxu0 0
      %1162 = vmatpush1.bf16.msra.mxu0 %v1139
      %1163 = vmatprep.subr.bf16.mxu0 0
      %1164 = vmatpush1.bf16.msra.mxu0 %v1140
      %1165 = vmatprep.subr.bf16.mxu0 0
      %1166 = vmatpush1.bf16.msra.mxu0 0
      %1167 = vmatprep.subr.bf16.mxu0 0
      %1168 = vmatpush1.bf16.msra.mxu0 0
      %1169 = vmatprep.subr.bf16.mxu0 0
      %1170 = vmatpush1.bf16.msra.mxu0 0
      %1171 = vmatprep.subr.bf16.mxu0 0
      %1172 = vmatpush1.bf16.msra.mxu0 0
      %1173 = vmatprep.subr.bf16.mxu0 0
      %1174 = vmatpush1.bf16.msra.mxu0 0
      %1175 = vmatprep.subr.bf16.mxu0 0
      %1176 = vmatpush1.bf16.msra.mxu0 0
      %1177 = vmatprep.subr.bf16.mxu0 0
      %1178 = vmatpush1.bf16.msra.mxu0 0
      %1179 = vmatprep.subr.bf16.mxu0 0
      %1180 = vmatpush1.bf16.msra.mxu0 0
      %1181 = vmatprep.mubr.bf16.mxu0 0
      %1182 = vmatmul.mubr.bf16.gmra.mrb[0].mxu0 %v1084
      %v1183 = vpop.f32.mrb[0].mxu0
      %v1184 = vadd.f32 0.0, %v1183
      %v1185 = vpop.f32.mrb[0].mxu0
      %v1186 = vpop.f32.mrb[0].mxu0
      %v1187 = vpop.f32.mrb[0].mxu0
      %1188 = vdwg.mxu0
      %v1189 = vld [vmem:[%s11] sm:$0x1]
      %v1191 = vlaneseq
      %v1192 = vshrl.u32 %v1191, 7
      %v1193 = vsub.s32 0, %v1192
      %v1194 = vrot.slane %v1189, %v1193
      %v1196 = vmul.f32 %v1184, %v1194
      %v1197 = vld [vmem:[%s12] sm:$0x1]
      %v1199 = vlaneseq
      %v1200 = vshrl.u32 %v1199, 7
      %v1201 = vsub.s32 0, %v1200
      %v1202 = vrot.slane %v1197, %v1201
      %v1204 = vadd.f32 %v1196, %v1202
      %v1205 = vadd.f32 %v1079, %v1204
      %v1206 = vmax.f32 %v1205, 0.0
      %v1207 = vpack.c.bf16 %v1206, %v1206
      %1208 = vst [vmem:[%s438] sm:$0xf] %v1207
      %p1209 = scmp.lt.s32.totalorder %s24, 1
      %s1210 = scalar_select %p1209, %s24, 1
      %s1211 = smul.addr %s1210, 4
      %s1212 = scalar_lea.vmem %s13, %s1211
      // Predicated region
      $region73: #{xrespool_forward.11} parent=71 // pred_check
        %p1213 = pneg %p320
      $region74: #{xrespool_forward.11} parent=71 // pred_check_branch
        %1215 = sbr.rel (%p1213) target = $region76
      $region75: #{xrespool_forward.11} parent=71 // pred_region
        _
      $region76: #{xrespool_forward.11} parent=71 // pred_fallthru
        _
    $region72: #{xrespool_forward.11} parent=5 // pred_fallthru
      _
    %p1216 = scmp.le.s32.totalorder 2, %s19
    // Predicated region
    $region77: #{xrespool_forward.11} parent=5 // pred_check
      %p1217 = pneg %p1216
    $region78: #{xrespool_forward.11} parent=5 // pred_check_branch
      %1219 = sbr.rel (%p1217) target = $region80
    $region79: #{xrespool_forward.11} parent=5 // pred_region
      %s1220 = ssub.s32 %s19, 2
      // Predicated region
      $region81: #{xrespool_forward.11} parent=79 // pred_check
        %p1221 = pneg %p326
      $region82: #{xrespool_forward.11} parent=79 // pred_check_branch
        %1223 = sbr.rel (%p1221) target = $region84
      $region83: #{xrespool_forward.11} parent=79 // pred_region
        %p1224 = scmp.lt.s32.totalorder %s25, 1
        %s1225 = scalar_select %p1224, %s25, 1
        %s1226 = smul.addr %s1225, 4
        %s1227 = scalar_lea.vmem %s13, %s1226
      $region84: #{xrespool_forward.11} parent=79 // pred_fallthru
        _
    $region80: #{xrespool_forward.11} parent=5 // pred_fallthru
      _
  $region6: #{xrespool_forward.11} parent=0 // loop_footer
    %s23 = sadd.s32 1, %s19
  $region7: #{xrespool_forward.11} parent=0 // loop_footer_branch
    %18 = sbr.rel target = $region3
  $region8: #{xrespool_forward.11} parent=0 // loop_exit
    _

// kernel: xrespool_forward.13
$region0: #{xrespool_forward.13}
  #allocation0 [shape = 'u32[]', space=smem, size = 0x4, offset = 0x4, fixed_abs, tag = 'smem constant byte address 0x4 - core index']
  #allocation1 [shape = 'u32[144,128]{1,0:T(1,128)}', space=vmem, size = 0x12000, scoped, tag = 'internal scratch']
  %s0 = inlined_call_operand.vmem [shape: bf16[2,4,128], index: 0, kind: input, shape index: {}]
  %s1 = inlined_call_operand.vmem [shape: bf16[2,128,128], index: 1, kind: input, shape index: {}]
  %s2 = inlined_call_operand.vmem [shape: f32[1,128], index: 2, kind: input, shape index: {}]
  %s3 = inlined_call_operand.hbm [shape: f32[2,1,128], index: 3, kind: output, shape index: {}]
  %s4 = sld [smem:[#allocation0]]
  $region45: #{xrespool_forward.13} parent=0
    _
  %s6 = ssub.s32 1, %s4
  %s7 = scalar_select 0, %s6, %s4
  $region1: #{xrespool_forward.13} parent=0
    #allocation2 [shape = 'u8[1024]{0}', space=vmem, size = 0x400, scoped, tag = 'output window, operand 0']
    #allocation3 [shape = 's32[2]{0}', space=sflag, size = 0x8, scoped, tag = 'scoped memory for xrespool_forward.13']
    %8 = vsyncpa [#allocation3], 0
    %s9 = scalar_lea.sflag [#allocation3], 1
    %10 = vsyncpa %s9, 0
    loop: start=0, step=1, limit=4
    $region2: #{xrespool_forward.13} parent=1 // loop_pre_header
      _
    $region3: #{xrespool_forward.13} parent=1 // loop_header
      %s12 = sphi 0, %s16
      %p13 = scmp.ge.s32.totalorder %s12, 4
      %s22 = sphi 0, %s24
      %s25 = sphi 0, %s22
      %s26 = sphi 0, %s25
      %s42 = sphi 0, %s26
      %s46 = sphi 0, %s46
      %s48 = sphi 0, %s46
      %s49 = sphi 0, %s48
      %s63 = sphi 0, %s49
      %s67 = sphi 0, %s67
      %s69 = sphi 0, %s67
      %s70 = sphi 0, %s69
      %s84 = sphi 0, %s70
      %s90 = sphi 0, %s92
      %s93 = sphi 0, %s90
      %s94 = sphi 0, %s93
      %s110 = sphi 0, %s94
    $region4: #{xrespool_forward.13} parent=1 // loop_header_branch
      %15 = sbr.rel (%p13) target = $region8
    $region5: #{xrespool_forward.13} parent=1 // loop_body
      %s17 = ssub.s32 %s12, 1
      %s18 = ssub.s32 %s12, 2
      %s19 = sadd.s32 %s12, 1
      %s20 = ssub.s32 %s12, %s19
      %p21 = scmp.eq.s32.totalorder %s20, 0
      %s23 = sadd.s32 %s22, 1
      %s24 = scalar_select %p21, %s22, %s23
      %p27 = pneg %p21
      %p28 = scmp.eq.s32.totalorder %s12, 1
      %p29 = por %p27, %p28
      %p30 = scmp.ne.s32.totalorder %s22, %s25
      %p31 = scmp.eq.s32.totalorder %s12, 0
      %p32 = por %p30, %p31
      %p33 = scmp.ne.s32.totalorder %s22, %s25
      %p34 = scmp.eq.s32.totalorder %s17, 1
      %p35 = por %p33, %p34
      %p36 = scmp.ne.s32.totalorder %s25, %s26
      %p37 = scmp.eq.s32.totalorder %s17, 0
      %p38 = por %p36, %p37
      %p39 = scmp.ne.s32.totalorder %s25, %s26
      %p40 = scmp.eq.s32.totalorder %s18, 1
      %p41 = por %p39, %p40
      %p43 = scmp.ne.s32.totalorder %s26, %s42
      %p44 = scmp.eq.s32.totalorder %s18, 0
      %p45 = por %p43, %p44
      %s47 = sadd.s32 %s46, 1
      %p50 = scmp.eq.s32.totalorder %s12, 1
      %p51 = scmp.ne.s32.totalorder %s46, %s48
      %p52 = scmp.eq.s32.totalorder %s12, 0
      %p53 = por %p51, %p52
      %p54 = scmp.ne.s32.totalorder %s46, %s48
      %p55 = scmp.eq.s32.totalorder %s17, 1
      %p56 = por %p54, %p55
      %p57 = scmp.ne.s32.totalorder %s48, %s49
      %p58 = scmp.eq.s32.totalorder %s17, 0
      %p59 = por %p57, %p58
      %p60 = scmp.ne.s32.totalorder %s48, %s49
      %p61 = scmp.eq.s32.totalorder %s18, 1
      %p62 = por %p60, %p61
      %p64 = scmp.ne.s32.totalorder %s49, %s63
      %p65 = scmp.eq.s32.totalorder %s18, 0
      %p66 = por %p64, %p65
      %s68 = sadd.s32 %s67, 1
      %p71 = scmp.eq.s32.totalorder %s12, 1
      %p72 = scmp.ne.s32.totalorder %s67, %s69
      %p73 = scmp.eq.s32.totalorder %s12, 0
      %p74 = por %p72, %p73
      %p75 = scmp.ne.s32.totalorder %s67, %s69
      %p76 = scmp.eq.s32.totalorder %s17, 1
      %p77 = por %p75, %p76
      %p78 = scmp.ne.s32.totalorder %s69, %s70
      %p79 = scmp.eq.s32.totalorder %s17, 0
      %p80 = por %p78, %p79
      %p81 = scmp.ne.s32.totalorder %s69, %s70
      %p82 = scmp.eq.s32.totalorder %s18, 1
      %p83 = por %p81, %p82
      %p85 = scmp.ne.s32.totalorder %s70, %s84
      %p86 = scmp.eq.s32.totalorder %s18, 0
      %p87 = por %p85, %p86
      %s88 = ssub.s32 %s12, %s19
      %p89 = scmp.eq.s32.totalorder %s88, 0
      %s91 = sadd.s32 %s90, 1
      %s92 = scalar_select %p89, %s90, %s91
      %p95 = pneg %p89
      %p96 = scmp.eq.s32.totalorder %s12, 1
      %p97 = por %p95, %p96
      %p98 = scmp.ne.s32.totalorder %s90, %s93
      %p99 = scmp.eq.s32.totalorder %s12, 0
      %p100 = por %p98, %p99
      %p101 = scmp.ne.s32.totalorder %s90, %s93
      %p102 = scmp.eq.s32.totalorder %s17, 1
      %p103 = por %p101, %p102
      %p104 = scmp.ne.s32.totalorder %s93, %s94
      %p105 = scmp.eq.s32.totalorder %s17, 0
      %p106 = por %p104, %p105
      %p107 = scmp.ne.s32.totalorder %s93, %s94
      %p108 = scmp.eq.s32.totalorder %s18, 1
      %p109 = por %p107, %p108
      %p111 = scmp.ne.s32.totalorder %s94, %s110
      %p112 = scmp.eq.s32.totalorder %s18, 0
      %p113 = por %p111, %p112
      %p114 = scmp.le.s32.totalorder 1, %s12
      %p115 = scmp.lt.s32.totalorder %s12, 3
      %p116 = pnand %p114, %p115
      %p117 = pneg %p116
      // Predicated region
      $region9: #{xrespool_forward.13} parent=5 // pred_check
        _
      $region10: #{xrespool_forward.13} parent=5 // pred_check_branch
        %119 = sbr.rel (%p116) target = $region12
      $region11: #{xrespool_forward.13} parent=5 // pred_region
        %s120 = ssub.s32 %s12, 1
        // Predicated region
        $region13: #{xrespool_forward.13} parent=11 // pred_check
          %p121 = pneg %p59
        $region14: #{xrespool_forward.13} parent=11 // pred_check_branch
          %123 = sbr.rel (%p121) target = $region16
        $region15: #{xrespool_forward.13} parent=11 // pred_region
          _
        $region16: #{xrespool_forward.13} parent=11 // pred_fallthru
          _
        // Predicated region
        $region17: #{xrespool_forward.13} parent=11 // pred_check
          %p124 = pneg %p80
        $region18: #{xrespool_forward.13} parent=11 // pred_check_branch
          %126 = sbr.rel (%p124) target = $region20
        $region19: #{xrespool_forward.13} parent=11 // pred_region
          _
        $region20: #{xrespool_forward.13} parent=11 // pred_fallthru
          _
      $region12: #{xrespool_forward.13} parent=5 // pred_fallthru
        _
      %p127 = scmp.lt.s32.totalorder %s12, 2
      // Predicated region
      $region21: #{xrespool_forward.13} parent=5 // pred_check
        %p128 = pneg %p127
      $region22: #{xrespool_forward.13} parent=5 // pred_check_branch
        %130 = sbr.rel (%p128) target = $region24
      $region23: #{xrespool_forward.13} parent=5 // pred_region
        // Predicated region
        $region25: #{xrespool_forward.13} parent=23 // pred_check
          %p131 = pneg %p32
        $region26: #{xrespool_forward.13} parent=23 // pred_check_branch
          %133 = sbr.rel (%p131) target = $region28
        $region27: #{xrespool_forward.13} parent=23 // pred_region
          %p134 = scmp.lt.s32.totalorder %s12, 1
          %s135 = scalar_select %p134, %s12, 1
          %s136 = smul.addr %s135, 2
          %s137 = scalar_lea.vmem %s0, %s136
        $region28: #{xrespool_forward.13} parent=23 // pred_fallthru
          _
      $region24: #{xrespool_forward.13} parent=5 // pred_fallthru
        _
      %p138 = scmp.le.s32.totalorder 1, %s12
      %p139 = scmp.lt.s32.totalorder %s12, 3
      %p140 = pnand %p138, %p139
      %p141 = pneg %p140
      // Predicated region
      $region29: #{xrespool_forward.13} parent=5 // pred_check
        _
      $region30: #{xrespool_forward.13} parent=5 // pred_check_branch
        %143 = sbr.rel (%p140) target = $region32
      $region31: #{xrespool_forward.13} parent=5 // pred_region
        %s144 = ssub.s32 %s12, 1
        %p145 = scmp.lt.s32.totalorder %s17, 1
        %s146 = scalar_select %p145, %s17, 1
        %s147 = smul.addr %s146, 2
        %s148 = scalar_lea.vmem %s0, %s147
        %p149 = pneg %p38
        %p150 = pneg %p35
        %p151 = pneg %p59
        %p152 = pneg %p56
        %p153 = pneg %p80
        %p154 = pneg %p77
        %p155 = pneg %p106
        %p156 = pneg %p103
        %s157 = sand.u32 %s93, 1
        %s158 = scalar_lea.sflag [#allocation3], %s157
        %s159 = sand.u32 %s93, 1
        %s160 = scalar_lea.vmem [#allocation2], %s159
        %p161 = scmp.lt.s32.totalorder %s17, 1
        %s162 = scalar_select %p161, %s17, 1
        %s163 = smul.addr %s162, 2
        %s164 = scalar_lea.vmem %s0, %s163
        %v167 = vld [vmem:[%s164] sm:$0x3]
        %vm168 = vcmask 1041408
        %v171 = vsel %vm168, %v167, 4286644096
        %v173 = vunpack.i.l.bf16 %v171
        %v174 = vunpack.i.h.bf16 %v171
        %v175 = vmax.f32 %v173, %v174
        %v176 = vrot.slane %v175, 4
        %v177 = vmax.f32 %v175, %v176
        %v178 = vrot.slane %v177, 2
        %v179 = vmax.f32 %v177, %v178
        %v180 = vrot.slane %v179, 1
        %v181 = vmax.f32 %v179, %v180
        %v182 = vpack.i.bf16 %v181, %v181
        %v183 = vunpack.c.l.bf16 %v167
        %vm184 = vcmask 1043456
        %v185 = vsel %vm184, %v183, 0.0
        %v186 = vrot.slane %v185, 4
        %v187 = vadd.f32 %v185, %v186
        %v188 = vrot.slane %v187, 2
        %v189 = vadd.f32 %v187, %v188
        %v190 = vrot.slane %v189, 1
        %v191 = vadd.f32 %v189, %v190
        %v192 = vmul.f32 %v191, 0.25
        %v193 = vpack.c.bf16 %v192, %v192
        %v194 = vld [vmem:[%s1] sm:$0xf]
        %v195 = vld [vmem:[%s1 + $0x4] sm:$0xf]
        %v196 = vld [vmem:[%s1 + $0x8] sm:$0xf]
        %v197 = vld [vmem:[%s1 + $0xc] sm:$0xf]
        %v198 = vld [vmem:[%s1 + $0x10] sm:$0xf]
        %v199 = vld [vmem:[%s1 + $0x14] sm:$0xf]
        %v200 = vld [vmem:[%s1 + $0x18] sm:$0xf]
        %v201 = vld [vmem:[%s1 + $0x1c] sm:$0xf]
        %v202 = vld [vmem:[%s1 + $0x20] sm:$0xf]
        %v203 = vld [vmem:[%s1 + $0x24] sm:$0xf]
        %v204 = vld [vmem:[%s1 + $0x28] sm:$0xf]
        %v205 = vld [vmem:[%s1 + $0x2c] sm:$0xf]
        %v206 = vld [vmem:[%s1 + $0x30] sm:$0xf]
        %v207 = vld [vmem:[%s1 + $0x34] sm:$0xf]
        %v208 = vld [vmem:[%s1 + $0x38] sm:$0xf]
        %v209 = vld [vmem:[%s1 + $0x3c] sm:$0xf]
        %s210 = scalar_lea.vmem %s1, 64
        %v211 = vld [vmem:[%s210] sm:$0xf]
        %v212 = vld [vmem:[%s210 + $0x4] sm:$0xf]
        %v213 = vld [vmem:[%s210 + $0x8] sm:$0xf]
        %v214 = vld [vmem:[%s210 + $0xc] sm:$0xf]
        %v215 = vld [vmem:[%s210 + $0x10] sm:$0xf]
        %v216 = vld [vmem:[%s210 + $0x14] sm:$0xf]
        %v217 = vld [vmem:[%s210 + $0x18] sm:$0xf]
        %v218 = vld [vmem:[%s210 + $0x1c] sm:$0xf]
        %v219 = vld [vmem:[%s210 + $0x20] sm:$0xf]
        %v220 = vld [vmem:[%s210 + $0x24] sm:$0xf]
        %v221 = vld [vmem:[%s210 + $0x28] sm:$0xf]
        %v222 = vld [vmem:[%s210 + $0x2c] sm:$0xf]
        %v223 = vld [vmem:[%s210 + $0x30] sm:$0xf]
        %v224 = vld [vmem:[%s210 + $0x34] sm:$0xf]
        %v225 = vld [vmem:[%s210 + $0x38] sm:$0xf]
        %v226 = vld [vmem:[%s210 + $0x3c] sm:$0xf]
        %v243 = vunpack.c.l.b16 %v211
        %v244 = vunpack.c.l.b16 %v212
        %v245 = vunpack.c.l.b16 %v213
        %v246 = vunpack.c.l.b16 %v214
        %v247 = vunpack.c.l.b16 %v215
        %v248 = vunpack.c.l.b16 %v216
        %v249 = vunpack.c.l.b16 %v217
        %v250 = vunpack.c.l.b16 %v218
        %v251 = vunpack.c.l.b16 %v219
        %v252 = vunpack.c.l.b16 %v220
        %v253 = vunpack.c.l.b16 %v221
        %v254 = vunpack.c.l.b16 %v222
        %v255 = vunpack.c.l.b16 %v223
        %v256 = vunpack.c.l.b16 %v224
        %v257 = vunpack.c.l.b16 %v225
        %v258 = vunpack.c.l.b16 %v226
        %v259 = vpack.c.b16 %v244, %v243
        %v260 = vpack.c.b16 %v246, %v245
        %v261 = vpack.c.b16 %v248, %v247
        %v262 = vpack.c.b16 %v250, %v249
        %v263 = vpack.c.b16 %v252, %v251
        %v264 = vpack.c.b16 %v254, %v253
        %v265 = vpack.c.b16 %v256, %v255
        %v266 = vpack.c.b16 %v258, %v257
        %275 = vmatprep.subr.bf16.mxu0 0
        %276 = vmatpush1.bf16.msra.mxu0 %v259
        %277 = vmatprep.subr.bf16.mxu0 0
        %278 = vmatpush1.bf16.msra.mxu0 %v260
        %279 = vmatprep.subr.bf16.mxu0 0
        %280 = vmatpush1.bf16.msra.mxu0 %v261
        %281 = vmatprep.subr.bf16.mxu0 0
        %282 = vmatpush1.bf16.msra.mxu0 %v262
        %283 = vmatprep.subr.bf16.mxu0 0
        %284 = vmatpush1.bf16.msra.mxu0 %v263
        %285 = vmatprep.subr.bf16.mxu0 0
        %286 = vmatpush1.bf16.msra.mxu0 %v264
        %287 = vmatprep.subr.bf16.mxu0 0
        %288 = vmatpush1.bf16.msra.mxu0 %v265
        %289 = vmatprep.subr.bf16.mxu0 0
        %290 = vmatpush1.bf16.msra.mxu0 %v266
        %291 = vmatprep.subr.bf16.mxu0 0
        %292 = vmatpush1.bf16.msra.mxu0 0
        %293 = vmatprep.subr.bf16.mxu0 0
        %294 = vmatpush1.bf16.msra.mxu0 0
        %295 = vmatprep.subr.bf16.mxu0 0
        %296 = vmatpush1.bf16.msra.mxu0 0
        %297 = vmatprep.subr.bf16.mxu0 0
        %298 = vmatpush1.bf16.msra.mxu0 0
        %299 = vmatprep.subr.bf16.mxu0 0
        %300 = vmatpush1.bf16.msra.mxu0 0
        %301 = vmatprep.subr.bf16.mxu0 0
        %302 = vmatpush1.bf16.msra.mxu0 0
        %303 = vmatprep.subr.bf16.mxu0 0
        %304 = vmatpush1.bf16.msra.mxu0 0
        %305 = vmatprep.subr.bf16.mxu0 0
        %306 = vmatpush1.bf16.msra.mxu0 0
        %307 = vmatprep.mubr.bf16.mxu0 0
        %308 = vmatmul.mubr.bf16.gmra.mrb[0].mxu0 %v193
        %v309 = vpop.f32.mrb[0].mxu0
        %v310 = vadd.f32 0.0, %v309
        %v311 = vpop.f32.mrb[0].mxu0
        %v312 = vpop.f32.mrb[0].mxu0
        %v313 = vpop.f32.mrb[0].mxu0
        %314 = vdwg.mxu0
        %v331 = vunpack.c.l.b16 %v194
        %v332 = vunpack.c.l.b16 %v195
        %v333 = vunpack.c.l.b16 %v196
        %v334 = vunpack.c.l.b16 %v197
        %v335 = vunpack.c.l.b16 %v198
        %v336 = vunpack.c.l.b16 %v199
        %v337 = vunpack.c.l.b16 %v200
        %v338 = vunpack.c.l.b16 %v201
        %v339 = vunpack.c.l.b16 %v202
        %v340 = vunpack.c.l.b16 %v203
        %v341 = vunpack.c.l.b16 %v204
        %v342 = vunpack.c.l.b16 %v205
        %v343 = vunpack.c.l.b16 %v206
        %v344 = vunpack.c.l.b16 %v207
        %v345 = vunpack.c.l.b16 %v208
        %v346 = vunpack.c.l.b16 %v209
        %v347 = vpack.c.b16 %v332, %v331
        %v348 = vpack.c.b16 %v334, %v333
        %v349 = vpack.c.b16 %v336, %v335
        %v350 = vpack.c.b16 %v338, %v337
        %v351 = vpack.c.b16 %v340, %v339
        %v352 = vpack.c.b16 %v342, %v341
        %v353 = vpack.c.b16 %v344, %v343
        %v354 = vpack.c.b16 %v346, %v345
        %363 = vmatprep.subr.bf16.mxu0 0
        %364 = vmatpush1.bf16.msra.mxu0 %v347
        %365 = vmatprep.subr.bf16.mxu0 0
        %366 = vmatpush1.bf16.msra.mxu0 %v348
        %367 = vmatprep.subr.bf16.mxu0 0
        %368 = vmatpush1.bf16.msra.mxu0 %v349
        %369 = vmatprep.subr.bf16.mxu0 0
        %370 = vmatpush1.bf16.msra.mxu0 %v350
        %371 = vmatprep.subr.bf16.mxu0 0
        %372 = vmatpush1.bf16.msra.mxu0 %v351
        %373 = vmatprep.subr.bf16.mxu0 0
        %374 = vmatpush1.bf16.msra.mxu0 %v352
        %375 = vmatprep.subr.bf16.mxu0 0
        %376 = vmatpush1.bf16.msra.mxu0 %v353
        %377 = vmatprep.subr.bf16.mxu0 0
        %378 = vmatpush1.bf16.msra.mxu0 %v354
        %379 = vmatprep.subr.bf16.mxu0 0
        %380 = vmatpush1.bf16.msra.mxu0 0
        %381 = vmatprep.subr.bf16.mxu0 0
        %382 = vmatpush1.bf16.msra.mxu0 0
        %383 = vmatprep.subr.bf16.mxu0 0
        %384 = vmatpush1.bf16.msra.mxu0 0
        %385 = vmatprep.subr.bf16.mxu0 0
        %386 = vmatpush1.bf16.msra.mxu0 0
        %387 = vmatprep.subr.bf16.mxu0 0
        %388 = vmatpush1.bf16.msra.mxu0 0
        %389 = vmatprep.subr.bf16.mxu0 0
        %390 = vmatpush1.bf16.msra.mxu0 0
        %391 = vmatprep.subr.bf16.mxu0 0
        %392 = vmatpush1.bf16.msra.mxu0 0
        %393 = vmatprep.subr.bf16.mxu0 0
        %394 = vmatpush1.bf16.msra.mxu0 0
        %395 = vmatprep.mubr.bf16.mxu0 0
        %396 = vmatmul.mubr.bf16.gmra.mrb[0].mxu0 %v182
        %v397 = vpop.f32.mrb[0].mxu0
        %v398 = vadd.f32 %v310, %v397
        %v399 = vpop.f32.mrb[0].mxu0
        %v400 = vpop.f32.mrb[0].mxu0
        %v401 = vpop.f32.mrb[0].mxu0
        %402 = vdwg.mxu0
        %v403 = vld [vmem:[%s2] sm:$0x1]
        %v404 = vadd.f32 %v398, %v403
        %405 = vst [vmem:[%s160] sm:$0x1] %v404
        %s406 = sand.u32 %s93, 1
        %s407 = scalar_lea.sflag [#allocation3], %s406
        %s408 = sand.u32 %s93, 1
        %s409 = scalar_lea.vmem [#allocation2], %s408
        // Predicated region
        $region33: #{xrespool_forward.13} parent=31 // pred_check
          %p410 = pneg %p103
        $region34: #{xrespool_forward.13} parent=31 // pred_check_branch
          %412 = sbr.rel (%p410) target = $region36
        $region35: #{xrespool_forward.13} parent=31 // pred_region
          %s414 = ssub.s32 16, 16
          %415 = vsyncadd %s407, %s414
          %s416 = smul.addr %s17, 16
          %s417 = scalar_lea.hbm %s3, %s416
          %s419 = sshll.u32 %s409, 4
          %s420 = int_to_ptr.vmem [resolvable:$true] %s419
          %422 = dma.vmem_to_hbm [thread:$0]  %s420, 16, %s417, %s407
        $region36: #{xrespool_forward.13} parent=31 // pred_fallthru
          _
      $region32: #{xrespool_forward.13} parent=5 // pred_fallthru
        _
      %p423 = scmp.le.s32.totalorder 2, %s12
      // Predicated region
      $region37: #{xrespool_forward.13} parent=5 // pred_check
        %p424 = pneg %p423
      $region38: #{xrespool_forward.13} parent=5 // pred_check_branch
        %426 = sbr.rel (%p424) target = $region40
      $region39: #{xrespool_forward.13} parent=5 // pred_region
        %s427 = ssub.s32 %s12, 2
        // Predicated region
        $region41: #{xrespool_forward.13} parent=39 // pred_check
          %p428 = pneg %p109
        $region42: #{xrespool_forward.13} parent=39 // pred_check_branch
          %430 = sbr.rel (%p428) target = $region44
        $region43: #{xrespool_forward.13} parent=39 // pred_region
          %s431 = sand.u32 %s94, 1
          %s432 = scalar_lea.sflag [#allocation3], %s431
          %s433 = sand.u32 %s94, 1
          %s434 = scalar_lea.vmem [#allocation2], %s433
          %435 = dma.done %s432, 16
        $region44: #{xrespool_forward.13} parent=39 // pred_fallthru
          _
      $region40: #{xrespool_forward.13} parent=5 // pred_fallthru
        _
    $region6: #{xrespool_forward.13} parent=1 // loop_footer
      %s16 = sadd.s32 1, %s12
    $region7: #{xrespool_forward.13} parent=1 // loop_footer_branch
      %11 = sbr.rel target = $region3
    $region8: #{xrespool_forward.13} parent=1 // loop_exit
      _
    %436 = vsyncpa [#allocation3], 1
    %s437 = scalar_lea.sflag [#allocation3], 1
    %438 = vsyncpa %s437, 1

// kernel: xrespool_forward.12
$region0: #{xrespool_forward.12}
  #allocation0 [shape = 'u32[]', space=smem, size = 0x4, offset = 0x4, fixed_abs, tag = 'smem constant byte address 0x4 - core index']
  #allocation1 [shape = 'u32[144,128]{1,0:T(1,128)}', space=vmem, size = 0x12000, scoped, tag = 'internal scratch']
  #allocation2 [shape = 'bf16[28,128]{1,0:T(8,128)(2,1)}', space=vmem, size = 0x2000, scoped, tag = 'scratch operand']
  %s0 = inlined_call_operand.vmem [shape: bf16[2,4,256], index: 0, kind: input, shape index: {}]
  %s1 = inlined_call_operand.vmem [shape: bf16[128,128], index: 1, kind: input, shape index: {}]
  %s2 = inlined_call_operand.vmem [shape: f32[1,128], index: 2, kind: input, shape index: {}]
  %s3 = inlined_call_operand.vmem [shape: f32[1,128], index: 3, kind: input, shape index: {}]
  %s4 = inlined_call_operand.vmem [shape: bf16[3,128,128], index: 4, kind: input, shape index: {}]
  %s5 = inlined_call_operand.vmem [shape: f32[1,128], index: 5, kind: input, shape index: {}]
  %s6 = inlined_call_operand.vmem [shape: f32[1,128], index: 6, kind: input, shape index: {}]
  %s7 = inlined_call_operand.vmem [shape: bf16[128,128], index: 7, kind: input, shape index: {}]
  %s8 = inlined_call_operand.vmem [shape: f32[1,128], index: 8, kind: input, shape index: {}]
  %s9 = inlined_call_operand.vmem [shape: f32[1,128], index: 9, kind: input, shape index: {}]
  %s10 = inlined_call_operand.vmem [shape: bf16[2,4,128], index: 10, kind: output, shape index: {}]
  %s11 = sld [smem:[#allocation0]]
  $region73: #{xrespool_forward.12} parent=0
    _
  %s13 = ssub.s32 1, %s11
  %s14 = scalar_select 0, %s13, %s11
  loop: start=0, step=1, limit=4
  $region2: #{xrespool_forward.12} parent=0 // loop_pre_header
    _
  $region3: #{xrespool_forward.12} parent=0 // loop_header
    %s16 = sphi 0, %s20
    %p17 = scmp.ge.s32.totalorder %s16, 4
    %s26 = sphi 0, %s28
    %s29 = sphi 0, %s26
    %s30 = sphi 0, %s29
    %s46 = sphi 0, %s30
    %s50 = sphi 0, %s50
    %s52 = sphi 0, %s50
    %s53 = sphi 0, %s52
    %s67 = sphi 0, %s53
    %s71 = sphi 0, %s71
    %s73 = sphi 0, %s71
    %s74 = sphi 0, %s73
    %s88 = sphi 0, %s74
    %s92 = sphi 0, %s92
    %s94 = sphi 0, %s92
    %s95 = sphi 0, %s94
    %s109 = sphi 0, %s95
    %s113 = sphi 0, %s113
    %s115 = sphi 0, %s113
    %s116 = sphi 0, %s115
    %s130 = sphi 0, %s116
    %s134 = sphi 0, %s134
    %s136 = sphi 0, %s134
    %s137 = sphi 0, %s136
    %s151 = sphi 0, %s137
    %s155 = sphi 0, %s155
    %s157 = sphi 0, %s155
    %s158 = sphi 0, %s157
    %s172 = sphi 0, %s158
    %s176 = sphi 0, %s176
    %s178 = sphi 0, %s176
    %s179 = sphi 0, %s178
    %s193 = sphi 0, %s179
    %s197 = sphi 0, %s197
    %s199 = sphi 0, %s197
    %s200 = sphi 0, %s199
    %s214 = sphi 0, %s200
    %s218 = sphi 0, %s218
    %s220 = sphi 0, %s218
    %s221 = sphi 0, %s220
    %s235 = sphi 0, %s221
    %s241 = sphi 0, %s243
    %s244 = sphi 0, %s241
    %s245 = sphi 0, %s244
    %s261 = sphi 0, %s245
  $region4: #{xrespool_forward.12} parent=0 // loop_header_branch
    %19 = sbr.rel (%p17) target = $region8
  $region5: #{xrespool_forward.12} parent=0 // loop_body
    %s21 = ssub.s32 %s16, 1
    %s22 = ssub.s32 %s16, 2
    %s23 = sadd.s32 %s16, 1
    %s24 = ssub.s32 %s16, %s23
    %p25 = scmp.eq.s32.totalorder %s24, 0
    %s27 = sadd.s32 %s26, 1
    %s28 = scalar_select %p25, %s26, %s27
    %p31 = pneg %p25
    %p32 = scmp.eq.s32.totalorder %s16, 1
    %p33 = por %p31, %p32
    %p34 = scmp.ne.s32.totalorder %s26, %s29
    %p35 = scmp.eq.s32.totalorder %s16, 0
    %p36 = por %p34, %p35
    %p37 = scmp.ne.s32.totalorder %s26, %s29
    %p38 = scmp.eq.s32.totalorder %s21, 1
    %p39 = por %p37, %p38
    %p40 = scmp.ne.s32.totalorder %s29, %s30
    %p41 = scmp.eq.s32.totalorder %s21, 0
    %p42 = por %p40, %p41
    %p43 = scmp.ne.s32.totalorder %s29, %s30
    %p44 = scmp.eq.s32.totalorder %s22, 1
    %p45 = por %p43, %p44
    %p47 = scmp.ne.s32.totalorder %s30, %s46
    %p48 = scmp.eq.s32.totalorder %s22, 0
    %p49 = por %p47, %p48
    %s51 = sadd.s32 %s50, 1
    %p54 = scmp.eq.s32.totalorder %s16, 1
    %p55 = scmp.ne.s32.totalorder %s50, %s52
    %p56 = scmp.eq.s32.totalorder %s16, 0
    %p57 = por %p55, %p56
    %p58 = scmp.ne.s32.totalorder %s50, %s52
    %p59 = scmp.eq.s32.totalorder %s21, 1
    %p60 = por %p58, %p59
    %p61 = scmp.ne.s32.totalorder %s52, %s53
    %p62 = scmp.eq.s32.totalorder %s21, 0
    %p63 = por %p61, %p62
    %p64 = scmp.ne.s32.totalorder %s52, %s53
    %p65 = scmp.eq.s32.totalorder %s22, 1
    %p66 = por %p64, %p65
    %p68 = scmp.ne.s32.totalorder %s53, %s67
    %p69 = scmp.eq.s32.totalorder %s22, 0
    %p70 = por %p68, %p69
    %s72 = sadd.s32 %s71, 1
    %p75 = scmp.eq.s32.totalorder %s16, 1
    %p76 = scmp.ne.s32.totalorder %s71, %s73
    %p77 = scmp.eq.s32.totalorder %s16, 0
    %p78 = por %p76, %p77
    %p79 = scmp.ne.s32.totalorder %s71, %s73
    %p80 = scmp.eq.s32.totalorder %s21, 1
    %p81 = por %p79, %p80
    %p82 = scmp.ne.s32.totalorder %s73, %s74
    %p83 = scmp.eq.s32.totalorder %s21, 0
    %p84 = por %p82, %p83
    %p85 = scmp.ne.s32.totalorder %s73, %s74
    %p86 = scmp.eq.s32.totalorder %s22, 1
    %p87 = por %p85, %p86
    %p89 = scmp.ne.s32.totalorder %s74, %s88
    %p90 = scmp.eq.s32.totalorder %s22, 0
    %p91 = por %p89, %p90
    %s93 = sadd.s32 %s92, 1
    %p96 = scmp.eq.s32.totalorder %s16, 1
    %p97 = scmp.ne.s32.totalorder %s92, %s94
    %p98 = scmp.eq.s32.totalorder %s16, 0
    %p99 = por %p97, %p98
    %p100 = scmp.ne.s32.totalorder %s92, %s94
    %p101 = scmp.eq.s32.totalorder %s21, 1
    %p102 = por %p100, %p101
    %p103 = scmp.ne.s32.totalorder %s94, %s95
    %p104 = scmp.eq.s32.totalorder %s21, 0
    %p105 = por %p103, %p104
    %p106 = scmp.ne.s32.totalorder %s94, %s95
    %p107 = scmp.eq.s32.totalorder %s22, 1
    %p108 = por %p106, %p107
    %p110 = scmp.ne.s32.totalorder %s95, %s109
    %p111 = scmp.eq.s32.totalorder %s22, 0
    %p112 = por %p110, %p111
    %s114 = sadd.s32 %s113, 1
    %p117 = scmp.eq.s32.totalorder %s16, 1
    %p118 = scmp.ne.s32.totalorder %s113, %s115
    %p119 = scmp.eq.s32.totalorder %s16, 0
    %p120 = por %p118, %p119
    %p121 = scmp.ne.s32.totalorder %s113, %s115
    %p122 = scmp.eq.s32.totalorder %s21, 1
    %p123 = por %p121, %p122
    %p124 = scmp.ne.s32.totalorder %s115, %s116
    %p125 = scmp.eq.s32.totalorder %s21, 0
    %p126 = por %p124, %p125
    %p127 = scmp.ne.s32.totalorder %s115, %s116
    %p128 = scmp.eq.s32.totalorder %s22, 1
    %p129 = por %p127, %p128
    %p131 = scmp.ne.s32.totalorder %s116, %s130
    %p132 = scmp.eq.s32.totalorder %s22, 0
    %p133 = por %p131, %p132
    %s135 = sadd.s32 %s134, 1
    %p138 = scmp.eq.s32.totalorder %s16, 1
    %p139 = scmp.ne.s32.totalorder %s134, %s136
    %p140 = scmp.eq.s32.totalorder %s16, 0
    %p141 = por %p139, %p140
    %p142 = scmp.ne.s32.totalorder %s134, %s136
    %p143 = scmp.eq.s32.totalorder %s21, 1
    %p144 = por %p142, %p143
    %p145 = scmp.ne.s32.totalorder %s136, %s137
    %p146 = scmp.eq.s32.totalorder %s21, 0
    %p147 = por %p145, %p146
    %p148 = scmp.ne.s32.totalorder %s136, %s137
    %p149 = scmp.eq.s32.totalorder %s22, 1
    %p150 = por %p148, %p149
    %p152 = scmp.ne.s32.totalorder %s137, %s151
    %p153 = scmp.eq.s32.totalorder %s22, 0
    %p154 = por %p152, %p153
    %s156 = sadd.s32 %s155, 1
    %p159 = scmp.eq.s32.totalorder %s16, 1
    %p160 = scmp.ne.s32.totalorder %s155, %s157
    %p161 = scmp.eq.s32.totalorder %s16, 0
    %p162 = por %p160, %p161
    %p163 = scmp.ne.s32.totalorder %s155, %s157
    %p164 = scmp.eq.s32.totalorder %s21, 1
    %p165 = por %p163, %p164
    %p166 = scmp.ne.s32.totalorder %s157, %s158
    %p167 = scmp.eq.s32.totalorder %s21, 0
    %p168 = por %p166, %p167
    %p169 = scmp.ne.s32.totalorder %s157, %s158
    %p170 = scmp.eq.s32.totalorder %s22, 1
    %p171 = por %p169, %p170
    %p173 = scmp.ne.s32.totalorder %s158, %s172
    %p174 = scmp.eq.s32.totalorder %s22, 0
    %p175 = por %p173, %p174
    %s177 = sadd.s32 %s176, 1
    %p180 = scmp.eq.s32.totalorder %s16, 1
    %p181 = scmp.ne.s32.totalorder %s176, %s178
    %p182 = scmp.eq.s32.totalorder %s16, 0
    %p183 = por %p181, %p182
    %p184 = scmp.ne.s32.totalorder %s176, %s178
    %p185 = scmp.eq.s32.totalorder %s21, 1
    %p186 = por %p184, %p185
    %p187 = scmp.ne.s32.totalorder %s178, %s179
    %p188 = scmp.eq.s32.totalorder %s21, 0
    %p189 = por %p187, %p188
    %p190 = scmp.ne.s32.totalorder %s178, %s179
    %p191 = scmp.eq.s32.totalorder %s22, 1
    %p192 = por %p190, %p191
    %p194 = scmp.ne.s32.totalorder %s179, %s193
    %p195 = scmp.eq.s32.totalorder %s22, 0
    %p196 = por %p194, %p195
    %s198 = sadd.s32 %s197, 1
    %p201 = scmp.eq.s32.totalorder %s16, 1
    %p202 = scmp.ne.s32.totalorder %s197, %s199
    %p203 = scmp.eq.s32.totalorder %s16, 0
    %p204 = por %p202, %p203
    %p205 = scmp.ne.s32.totalorder %s197, %s199
    %p206 = scmp.eq.s32.totalorder %s21, 1
    %p207 = por %p205, %p206
    %p208 = scmp.ne.s32.totalorder %s199, %s200
    %p209 = scmp.eq.s32.totalorder %s21, 0
    %p210 = por %p208, %p209
    %p211 = scmp.ne.s32.totalorder %s199, %s200
    %p212 = scmp.eq.s32.totalorder %s22, 1
    %p213 = por %p211, %p212
    %p215 = scmp.ne.s32.totalorder %s200, %s214
    %p216 = scmp.eq.s32.totalorder %s22, 0
    %p217 = por %p215, %p216
    %s219 = sadd.s32 %s218, 1
    %p222 = scmp.eq.s32.totalorder %s16, 1
    %p223 = scmp.ne.s32.totalorder %s218, %s220
    %p224 = scmp.eq.s32.totalorder %s16, 0
    %p225 = por %p223, %p224
    %p226 = scmp.ne.s32.totalorder %s218, %s220
    %p227 = scmp.eq.s32.totalorder %s21, 1
    %p228 = por %p226, %p227
    %p229 = scmp.ne.s32.totalorder %s220, %s221
    %p230 = scmp.eq.s32.totalorder %s21, 0
    %p231 = por %p229, %p230
    %p232 = scmp.ne.s32.totalorder %s220, %s221
    %p233 = scmp.eq.s32.totalorder %s22, 1
    %p234 = por %p232, %p233
    %p236 = scmp.ne.s32.totalorder %s221, %s235
    %p237 = scmp.eq.s32.totalorder %s22, 0
    %p238 = por %p236, %p237
    %s239 = ssub.s32 %s16, %s23
    %p240 = scmp.eq.s32.totalorder %s239, 0
    %s242 = sadd.s32 %s241, 1
    %s243 = scalar_select %p240, %s241, %s242
    %p246 = pneg %p240
    %p247 = scmp.eq.s32.totalorder %s16, 1
    %p248 = por %p246, %p247
    %p249 = scmp.ne.s32.totalorder %s241, %s244
    %p250 = scmp.eq.s32.totalorder %s16, 0
    %p251 = por %p249, %p250
    %p252 = scmp.ne.s32.totalorder %s241, %s244
    %p253 = scmp.eq.s32.totalorder %s21, 1
    %p254 = por %p252, %p253
    %p255 = scmp.ne.s32.totalorder %s244, %s245
    %p256 = scmp.eq.s32.totalorder %s21, 0
    %p257 = por %p255, %p256
    %p258 = scmp.ne.s32.totalorder %s244, %s245
    %p259 = scmp.eq.s32.totalorder %s22, 1
    %p260 = por %p258, %p259
    %p262 = scmp.ne.s32.totalorder %s245, %s261
    %p263 = scmp.eq.s32.totalorder %s22, 0
    %p264 = por %p262, %p263
    %p265 = scmp.le.s32.totalorder 1, %s16
    %p266 = scmp.lt.s32.totalorder %s16, 3
    %p267 = pnand %p265, %p266
    %p268 = pneg %p267
    // Predicated region
    $region9: #{xrespool_forward.12} parent=5 // pred_check
      _
    $region10: #{xrespool_forward.12} parent=5 // pred_check_branch
      %270 = sbr.rel (%p267) target = $region12
    $region11: #{xrespool_forward.12} parent=5 // pred_region
      %s271 = ssub.s32 %s16, 1
      // Predicated region
      $region13: #{xrespool_forward.12} parent=11 // pred_check
        %p272 = pneg %p63
      $region14: #{xrespool_forward.12} parent=11 // pred_check_branch
        %274 = sbr.rel (%p272) target = $region16
      $region15: #{xrespool_forward.12} parent=11 // pred_region
        _
      $region16: #{xrespool_forward.12} parent=11 // pred_fallthru
        _
      // Predicated region
      $region17: #{xrespool_forward.12} parent=11 // pred_check
        %p275 = pneg %p84
      $region18: #{xrespool_forward.12} parent=11 // pred_check_branch
        %277 = sbr.rel (%p275) target = $region20
      $region19: #{xrespool_forward.12} parent=11 // pred_region
        _
      $region20: #{xrespool_forward.12} parent=11 // pred_fallthru
        _
      // Predicated region
      $region21: #{xrespool_forward.12} parent=11 // pred_check
        %p278 = pneg %p105
      $region22: #{xrespool_forward.12} parent=11 // pred_check_branch
        %280 = sbr.rel (%p278) target = $region24
      $region23: #{xrespool_forward.12} parent=11 // pred_region
        _
      $region24: #{xrespool_forward.12} parent=11 // pred_fallthru
        _
      // Predicated region
      $region25: #{xrespool_forward.12} parent=11 // pred_check
        %p281 = pneg %p126
      $region26: #{xrespool_forward.12} parent=11 // pred_check_branch
        %283 = sbr.rel (%p281) target = $region28
      $region27: #{xrespool_forward.12} parent=11 // pred_region
        _
      $region28: #{xrespool_forward.12} parent=11 // pred_fallthru
        _
      // Predicated region
      $region29: #{xrespool_forward.12} parent=11 // pred_check
        %p284 = pneg %p147
      $region30: #{xrespool_forward.12} parent=11 // pred_check_branch
        %286 = sbr.rel (%p284) target = $region32
      $region31: #{xrespool_forward.12} parent=11 // pred_region
        _
      $region32: #{xrespool_forward.12} parent=11 // pred_fallthru
        _
      // Predicated region
      $region33: #{xrespool_forward.12} parent=11 // pred_check
        %p287 = pneg %p168
      $region34: #{xrespool_forward.12} parent=11 // pred_check_branch
        %289 = sbr.rel (%p287) target = $region36
      $region35: #{xrespool_forward.12} parent=11 // pred_region
        _
      $region36: #{xrespool_forward.12} parent=11 // pred_fallthru
        _
      // Predicated region
      $region37: #{xrespool_forward.12} parent=11 // pred_check
        %p290 = pneg %p189
      $region38: #{xrespool_forward.12} parent=11 // pred_check_branch
        %292 = sbr.rel (%p290) target = $region40
      $region39: #{xrespool_forward.12} parent=11 // pred_region
        _
      $region40: #{xrespool_forward.12} parent=11 // pred_fallthru
        _
      // Predicated region
      $region41: #{xrespool_forward.12} parent=11 // pred_check
        %p293 = pneg %p210
      $region42: #{xrespool_forward.12} parent=11 // pred_check_branch
        %295 = sbr.rel (%p293) target = $region44
      $region43: #{xrespool_forward.12} parent=11 // pred_region
        _
      $region44: #{xrespool_forward.12} parent=11 // pred_fallthru
        _
      // Predicated region
      $region45: #{xrespool_forward.12} parent=11 // pred_check
        %p296 = pneg %p231
      $region46: #{xrespool_forward.12} parent=11 // pred_check_branch
        %298 = sbr.rel (%p296) target = $region48
      $region47: #{xrespool_forward.12} parent=11 // pred_region
        _
      $region48: #{xrespool_forward.12} parent=11 // pred_fallthru
        _
    $region12: #{xrespool_forward.12} parent=5 // pred_fallthru
      _
    %p299 = scmp.lt.s32.totalorder %s16, 2
    // Predicated region
    $region49: #{xrespool_forward.12} parent=5 // pred_check
      %p300 = pneg %p299
    $region50: #{xrespool_forward.12} parent=5 // pred_check_branch
      %302 = sbr.rel (%p300) target = $region52
    $region51: #{xrespool_forward.12} parent=5 // pred_region
      // Predicated region
      $region53: #{xrespool_forward.12} parent=51 // pred_check
        %p303 = pneg %p36
      $region54: #{xrespool_forward.12} parent=51 // pred_check_branch
        %305 = sbr.rel (%p303) target = $region56
      $region55: #{xrespool_forward.12} parent=51 // pred_region
        %p306 = scmp.lt.s32.totalorder %s16, 1
        %s307 = scalar_select %p306, %s16, 1
        %s308 = smul.addr %s307, 2
        %s309 = smul.addr %s308, 2
        %s310 = scalar_lea.vmem %s0, %s309
      $region56: #{xrespool_forward.12} parent=51 // pred_fallthru
        _
    $region52: #{xrespool_forward.12} parent=5 // pred_fallthru
      _
    %p311 = scmp.le.s32.totalorder 1, %s16
    %p312 = scmp.lt.s32.totalorder %s16, 3
    %p313 = pnand %p311, %p312
    %p314 = pneg %p313
    // Predicated region
    $region57: #{xrespool_forward.12} parent=5 // pred_check
      _
    $region58: #{xrespool_forward.12} parent=5 // pred_check_branch
      %316 = sbr.rel (%p313) target = $region60
    $region59: #{xrespool_forward.12} parent=5 // pred_region
      %s317 = ssub.s32 %s16, 1
      %p318 = scmp.lt.s32.totalorder %s21, 1
      %s319 = scalar_select %p318, %s21, 1
      %s320 = smul.addr %s319, 2
      %s321 = smul.addr %s320, 2
      %s322 = scalar_lea.vmem %s0, %s321
      %p323 = pneg %p42
      %p324 = pneg %p39
      %p325 = pneg %p63
      %p326 = pneg %p60
      %p327 = pneg %p84
      %p328 = pneg %p81
      %p329 = pneg %p105
      %p330 = pneg %p102
      %p331 = pneg %p126
      %p332 = pneg %p123
      %p333 = pneg %p147
      %p334 = pneg %p144
      %p335 = pneg %p168
      %p336 = pneg %p165
      %p337 = pneg %p189
      %p338 = pneg %p186
      %p339 = pneg %p210
      %p340 = pneg %p207
      %p341 = pneg %p231
      %p342 = pneg %p228
      %p343 = pneg %p257
      %p344 = pneg %p254
      %p345 = scmp.lt.s32.totalorder %s21, 1
      %s346 = scalar_select %p345, %s21, 1
      %s347 = smul.addr %s346, 2
      %s348 = scalar_lea.vmem %s10, %s347
      %p349 = scmp.lt.s32.totalorder %s21, 1
      %s350 = scalar_select %p349, %s21, 1
      %s351 = smul.addr %s350, 2
      %s352 = smul.addr %s351, 2
      %s353 = scalar_lea.vmem %s0, %s352
      %p354 = scmp.lt.s32.totalorder %s21, 1
      %s355 = scalar_select %p354, %s21, 1
      %s356 = smul.addr %s355, 2
      %s357 = scalar_lea.vmem %s10, %s356
      %v359 = vld [vmem:[%s353] sm:$0x3]
      %v360 = vld [vmem:[%s353 + $0x2] sm:$0x3]
      %v361 = vld [vmem:[%s1] sm:$0xf]
      %v362 = vld [vmem:[%s1 + $0x4] sm:$0xf]
      %v363 = vld [vmem:[%s1 + $0x8] sm:$0xf]
      %v364 = vld [vmem:[%s1 + $0xc] sm:$0xf]
      %v365 = vld [vmem:[%s1 + $0x10] sm:$0xf]
      %v366 = vld [vmem:[%s1 + $0x14] sm:$0xf]
      %v367 = vld [vmem:[%s1 + $0x18] sm:$0xf]
      %v368 = vld [vmem:[%s1 + $0x1c] sm:$0xf]
      %v369 = vld [vmem:[%s1 + $0x20] sm:$0xf]
      %v370 = vld [vmem:[%s1 + $0x24] sm:$0xf]
      %v371 = vld [vmem:[%s1 + $0x28] sm:$0xf]
      %v372 = vld [vmem:[%s1 + $0x2c] sm:$0xf]
      %v373 = vld [vmem:[%s1 + $0x30] sm:$0xf]
      %v374 = vld [vmem:[%s1 + $0x34] sm:$0xf]
      %v375 = vld [vmem:[%s1 + $0x38] sm:$0xf]
      %v376 = vld [vmem:[%s1 + $0x3c] sm:$0xf]
      %v393 = vunpack.c.l.b16 %v361
      %v394 = vunpack.c.l.b16 %v362
      %v395 = vunpack.c.l.b16 %v363
      %v396 = vunpack.c.l.b16 %v364
      %v397 = vunpack.c.l.b16 %v365
      %v398 = vunpack.c.l.b16 %v366
      %v399 = vunpack.c.l.b16 %v367
      %v400 = vunpack.c.l.b16 %v368
      %v401 = vunpack.c.l.b16 %v369
      %v402 = vunpack.c.l.b16 %v370
      %v403 = vunpack.c.l.b16 %v371
      %v404 = vunpack.c.l.b16 %v372
      %v405 = vunpack.c.l.b16 %v373
      %v406 = vunpack.c.l.b16 %v374
      %v407 = vunpack.c.l.b16 %v375
      %v408 = vunpack.c.l.b16 %v376
      %v409 = vpack.c.b16 %v394, %v393
      %v410 = vpack.c.b16 %v396, %v395
      %v411 = vpack.c.b16 %v398, %v397
      %v412 = vpack.c.b16 %v400, %v399
      %v413 = vpack.c.b16 %v402, %v401
      %v414 = vpack.c.b16 %v404, %v403
      %v415 = vpack.c.b16 %v406, %v405
      %v416 = vpack.c.b16 %v408, %v407
      %425 = vmatprep.subr.bf16.mxu0 0
      %426 = vmatpush1.bf16.msra.mxu0 %v409
      %427 = vmatprep.subr.bf16.mxu0 0
      %428 = vmatpush1.bf16.msra.mxu0 %v410
      %429 = vmatprep.subr.bf16.mxu0 0
      %430 = vmatpush1.bf16.msra.mxu0 %v411
      %431 = vmatprep.subr.bf16.mxu0 0
      %432 = vmatpush1.bf16.msra.mxu0 %v412
      %433 = vmatprep.subr.bf16.mxu0 0
      %434 = vmatpush1.bf16.msra.mxu0 %v413
      %435 = vmatprep.subr.bf16.mxu0 0
      %436 = vmatpush1.bf16.msra.mxu0 %v414
      %437 = vmatprep.subr.bf16.mxu0 0
      %438 = vmatpush1.bf16.msra.mxu0 %v415
      %439 = vmatprep.subr.bf16.mxu0 0
      %440 = vmatpush1.bf16.msra.mxu0 %v416
      %441 = vmatprep.subr.bf16.mxu0 0
      %442 = vmatpush1.bf16.msra.mxu0 0
      %443 = vmatprep.subr.bf16.mxu0 0
      %444 = vmatpush1.bf16.msra.mxu0 0
      %445 = vmatprep.subr.bf16.mxu0 0
      %446 = vmatpush1.bf16.msra.mxu0 0
      %447 = vmatprep.subr.bf16.mxu0 0
      %448 = vmatpush1.bf16.msra.mxu0 0
      %449 = vmatprep.subr.bf16.mxu0 0
      %450 = vmatpush1.bf16.msra.mxu0 0
      %451 = vmatprep.subr.bf16.mxu0 0
      %452 = vmatpush1.bf16.msra.mxu0 0
      %453 = vmatprep.subr.bf16.mxu0 0
      %454 = vmatpush1.bf16.msra.mxu0 0
      %455 = vmatprep.subr.bf16.mxu0 0
      %456 = vmatpush1.bf16.msra.mxu0 0
      %457 = vmatprep.mubr.bf16.mxu0 0
      %458 = vmatmul.mubr.bf16.gmra.mrb[0].mxu0 %v359
      %v459 = vpop.f32.mrb[0].mxu0
      %v460 = vadd.f32 0.0, %v459
      %v461 = vpop.f32.mrb[0].mxu0
      %v462 = vpop.f32.mrb[0].mxu0
      %v463 = vpop.f32.mrb[0].mxu0
      %464 = vdwg.mxu0
      %v465 = vld [vmem:[%s2] sm:$0x1]
      %v467 = vlaneseq
      %v468 = vshrl.u32 %v467, 7
      %v469 = vsub.s32 0, %v468
      %v470 = vrot.slane %v465, %v469
      %v472 = vmul.f32 %v460, %v470
      %v473 = vld [vmem:[%s3] sm:$0x1]
      %v475 = vlaneseq
      %v476 = vshrl.u32 %v475, 7
      %v477 = vsub.s32 0, %v476
      %v478 = vrot.slane %v473, %v477
      %v480 = vadd.f32 %v472, %v478
      %v481 = vmax.f32 %v480, 0.0
      %v482 = vpack.c.bf16 %v481, %v481
      %483 = vmatprep.subr.bf16.mxu0 0
      %484 = vmatpush1.bf16.msra.mxu0 %v409
      %485 = vmatprep.subr.bf16.mxu0 0
      %486 = vmatpush1.bf16.msra.mxu0 %v410
      %487 = vmatprep.subr.bf16.mxu0 0
      %488 = vmatpush1.bf16.msra.mxu0 %v411
      %489 = vmatprep.subr.bf16.mxu0 0
      %490 = vmatpush1.bf16.msra.mxu0 %v412
      %491 = vmatprep.subr.bf16.mxu0 0
      %492 = vmatpush1.bf16.msra.mxu0 %v413
      %493 = vmatprep.subr.bf16.mxu0 0
      %494 = vmatpush1.bf16.msra.mxu0 %v414
      %495 = vmatprep.subr.bf16.mxu0 0
      %496 = vmatpush1.bf16.msra.mxu0 %v415
      %497 = vmatprep.subr.bf16.mxu0 0
      %498 = vmatpush1.bf16.msra.mxu0 %v416
      %499 = vmatprep.subr.bf16.mxu0 0
      %500 = vmatpush1.bf16.msra.mxu0 0
      %501 = vmatprep.subr.bf16.mxu0 0
      %502 = vmatpush1.bf16.msra.mxu0 0
      %503 = vmatprep.subr.bf16.mxu0 0
      %504 = vmatpush1.bf16.msra.mxu0 0
      %505 = vmatprep.subr.bf16.mxu0 0
      %506 = vmatpush1.bf16.msra.mxu0 0
      %507 = vmatprep.subr.bf16.mxu0 0
      %508 = vmatpush1.bf16.msra.mxu0 0
      %509 = vmatprep.subr.bf16.mxu0 0
      %510 = vmatpush1.bf16.msra.mxu0 0
      %511 = vmatprep.subr.bf16.mxu0 0
      %512 = vmatpush1.bf16.msra.mxu0 0
      %513 = vmatprep.subr.bf16.mxu0 0
      %514 = vmatpush1.bf16.msra.mxu0 0
      %515 = vmatprep.mubr.bf16.mxu0 0
      %516 = vmatmul.mubr.bf16.gmra.mrb[0].mxu0 %v360
      %v517 = vpop.f32.mrb[0].mxu0
      %v518 = vadd.f32 0.0, %v517
      %v519 = vpop.f32.mrb[0].mxu0
      %v520 = vpop.f32.mrb[0].mxu0
      %v521 = vpop.f32.mrb[0].mxu0
      %522 = vdwg.mxu0
      %v523 = vmul.f32 %v518, %v470
      %v524 = vadd.f32 %v523, %v478
      %v525 = vmax.f32 %v524, 0.0
      %v526 = vpack.c.bf16 %v525, %v525
      %527 = vst [vmem:[#allocation2] sm:$0xf] 0
      %528 = vst [vmem:[#allocation2 + $0x4] sm:$0xf] 0
      %529 = vst [vmem:[#allocation2 + $0x8] sm:$0xf] 0
      %530 = vst [vmem:[#allocation2 + $0xc] sm:$0x3] 0
      %531 = vst [vmem:[#allocation2 + $0x8] sm:$0x3] %v526
      %v532 = vld [vmem:[#allocation2 + $0x4] sm:$0x8]
      %v533 = vld [vmem:[#allocation2 + $0x8] sm:$0x3]
      %v534 = vld [vmem:[%s4] sm:$0xf]
      %v535 = vld [vmem:[%s4 + $0x4] sm:$0xf]
      %v536 = vld [vmem:[%s4 + $0x8] sm:$0xf]
      %v537 = vld [vmem:[%s4 + $0xc] sm:$0xf]
      %v538 = vld [vmem:[%s4 + $0x10] sm:$0xf]
      %v539 = vld [vmem:[%s4 + $0x14] sm:$0xf]
      %v540 = vld [vmem:[%s4 + $0x18] sm:$0xf]
      %v541 = vld [vmem:[%s4 + $0x1c] sm:$0xf]
      %v542 = vld [vmem:[%s4 + $0x20] sm:$0xf]
      %v543 = vld [vmem:[%s4 + $0x24] sm:$0xf]
      %v544 = vld [vmem:[%s4 + $0x28] sm:$0xf]
      %v545 = vld [vmem:[%s4 + $0x2c] sm:$0xf]
      %v546 = vld [vmem:[%s4 + $0x30] sm:$0xf]
      %v547 = vld [vmem:[%s4 + $0x34] sm:$0xf]
      %v548 = vld [vmem:[%s4 + $0x38] sm:$0xf]
      %v549 = vld [vmem:[%s4 + $0x3c] sm:$0xf]
      %s550 = scalar_lea.vmem %s4, 64
      %v551 = vld [vmem:[%s550] sm:$0xf]
      %v552 = vld [vmem:[%s550 + $0x4] sm:$0xf]
      %v553 = vld [vmem:[%s550 + $0x8] sm:$0xf]
      %v554 = vld [vmem:[%s550 + $0xc] sm:$0xf]
      %v555 = vld [vmem:[%s550 + $0x10] sm:$0xf]
      %v556 = vld [vmem:[%s550 + $0x14] sm:$0xf]
      %v557 = vld [vmem:[%s550 + $0x18] sm:$0xf]
      %v558 = vld [vmem:[%s550 + $0x1c] sm:$0xf]
      %v559 = vld [vmem:[%s550 + $0x20] sm:$0xf]
      %v560 = vld [vmem:[%s550 + $0x24] sm:$0xf]
      %v561 = vld [vmem:[%s550 + $0x28] sm:$0xf]
      %v562 = vld [vmem:[%s550 + $0x2c] sm:$0xf]
      %v563 = vld [vmem:[%s550 + $0x30] sm:$0xf]
      %v564 = vld [vmem:[%s550 + $0x34] sm:$0xf]
      %v565 = vld [vmem:[%s550 + $0x38] sm:$0xf]
      %v566 = vld [vmem:[%s550 + $0x3c] sm:$0xf]
      %v583 = vunpack.c.l.b16 %v551
      %v584 = vunpack.c.l.b16 %v552
      %v585 = vunpack.c.l.b16 %v553
      %v586 = vunpack.c.l.b16 %v554
      %v587 = vunpack.c.l.b16 %v555
      %v588 = vunpack.c.l.b16 %v556
      %v589 = vunpack.c.l.b16 %v557
      %v590 = vunpack.c.l.b16 %v558
      %v591 = vunpack.c.l.b16 %v559
      %v592 = vunpack.c.l.b16 %v560
      %v593 = vunpack.c.l.b16 %v561
      %v594 = vunpack.c.l.b16 %v562
      %v595 = vunpack.c.l.b16 %v563
      %v596 = vunpack.c.l.b16 %v564
      %v597 = vunpack.c.l.b16 %v565
      %v598 = vunpack.c.l.b16 %v566
      %v599 = vpack.c.b16 %v584, %v583
      %v600 = vpack.c.b16 %v586, %v585
      %v601 = vpack.c.b16 %v588, %v587
      %v602 = vpack.c.b16 %v590, %v589
      %v603 = vpack.c.b16 %v592, %v591
      %v604 = vpack.c.b16 %v594, %v593
      %v605 = vpack.c.b16 %v596, %v595
      %v606 = vpack.c.b16 %v598, %v597
      %615 = vmatprep.subr.bf16.mxu0 0
      %616 = vmatpush1.bf16.msra.mxu0 %v599
      %617 = vmatprep.subr.bf16.mxu0 0
      %618 = vmatpush1.bf16.msra.mxu0 %v600
      %619 = vmatprep.subr.bf16.mxu0 0
      %620 = vmatpush1.bf16.msra.mxu0 %v601
      %621 = vmatprep.subr.bf16.mxu0 0
      %622 = vmatpush1.bf16.msra.mxu0 %v602
      %623 = vmatprep.subr.bf16.mxu0 0
      %624 = vmatpush1.bf16.msra.mxu0 %v603
      %625 = vmatprep.subr.bf16.mxu0 0
      %626 = vmatpush1.bf16.msra.mxu0 %v604
      %627 = vmatprep.subr.bf16.mxu0 0
      %628 = vmatpush1.bf16.msra.mxu0 %v605
      %629 = vmatprep.subr.bf16.mxu0 0
      %630 = vmatpush1.bf16.msra.mxu0 %v606
      %631 = vmatprep.subr.bf16.mxu0 0
      %632 = vmatpush1.bf16.msra.mxu0 0
      %633 = vmatprep.subr.bf16.mxu0 0
      %634 = vmatpush1.bf16.msra.mxu0 0
      %635 = vmatprep.subr.bf16.mxu0 0
      %636 = vmatpush1.bf16.msra.mxu0 0
      %637 = vmatprep.subr.bf16.mxu0 0
      %638 = vmatpush1.bf16.msra.mxu0 0
      %639 = vmatprep.subr.bf16.mxu0 0
      %640 = vmatpush1.bf16.msra.mxu0 0
      %641 = vmatprep.subr.bf16.mxu0 0
      %642 = vmatpush1.bf16.msra.mxu0 0
      %643 = vmatprep.subr.bf16.mxu0 0
      %644 = vmatpush1.bf16.msra.mxu0 0
      %645 = vmatprep.subr.bf16.mxu0 0
      %646 = vmatpush1.bf16.msra.mxu0 0
      %647 = vmatprep.mubr.bf16.mxu0 0
      %648 = vmatmul.mubr.bf16.gmra.mrb[0].mxu0 %v482
      %v649 = vpop.f32.mrb[0].mxu0
      %v650 = vadd.f32 0.0, %v649
      %v651 = vpop.f32.mrb[0].mxu0
      %v652 = vpop.f32.mrb[0].mxu0
      %v653 = vpop.f32.mrb[0].mxu0
      %654 = vdwg.mxu0
      %v657 = vunpack.c.l.b16 %v532
      %v658 = vunpack.c.l.b16 %v533
      %v659 = vpack.c.b16 %v658, %v657
      %v661 = vshrl.u32 %v659, 16
      %v663 = vrot.slane %v661, 3
      %v664 = vshll.u32 %v659, 16
      %v666 = vrot.slane %v664, 4
      %v667 = vor.u32 %v663, %v666
      %v685 = vunpack.c.l.b16 %v534
      %v686 = vunpack.c.l.b16 %v535
      %v687 = vunpack.c.l.b16 %v536
      %v688 = vunpack.c.l.b16 %v537
      %v689 = vunpack.c.l.b16 %v538
      %v690 = vunpack.c.l.b16 %v539
      %v691 = vunpack.c.l.b16 %v540
      %v692 = vunpack.c.l.b16 %v541
      %v693 = vunpack.c.l.b16 %v542
      %v694 = vunpack.c.l.b16 %v543
      %v695 = vunpack.c.l.b16 %v544
      %v696 = vunpack.c.l.b16 %v545
      %v697 = vunpack.c.l.b16 %v546
      %v698 = vunpack.c.l.b16 %v547
      %v699 = vunpack.c.l.b16 %v548
      %v700 = vunpack.c.l.b16 %v549
      %v701 = vpack.c.b16 %v686, %v685
      %v702 = vpack.c.b16 %v688, %v687
      %v703 = vpack.c.b16 %v690, %v689
      %v704 = vpack.c.b16 %v692, %v691
      %v705 = vpack.c.b16 %v694, %v693
      %v706 = vpack.c.b16 %v696, %v695
      %v707 = vpack.c.b16 %v698, %v697
      %v708 = vpack.c.b16 %v700, %v699
      %717 = vmatprep.subr.bf16.mxu0 0
      %718 = vmatpush1.bf16.msra.mxu0 %v701
      %719 = vmatprep.subr.bf16.mxu0 0
      %720 = vmatpush1.bf16.msra.mxu0 %v702
      %721 = vmatprep.subr.bf16.mxu0 0
      %722 = vmatpush1.bf16.msra.mxu0 %v703
      %723 = vmatprep.subr.bf16.mxu0 0
      %724 = vmatpush1.bf16.msra.mxu0 %v704
      %725 = vmatprep.subr.bf16.mxu0 0
      %726 = vmatpush1.bf16.msra.mxu0 %v705
      %727 = vmatprep.subr.bf16.mxu0 0
      %728 = vmatpush1.bf16.msra.mxu0 %v706
      %729 = vmatprep.subr.bf16.mxu0 0
      %730 = vmatpush1.bf16.msra.mxu0 %v707
      %731 = vmatprep.subr.bf16.mxu0 0
      %732 = vmatpush1.bf16.msra.mxu0 %v708
      %733 = vmatprep.subr.bf16.mxu0 0
      %734 = vmatpush1.bf16.msra.mxu0 0
      %735 = vmatprep.subr.bf16.mxu0 0
      %736 = vmatpush1.bf16.msra.mxu0 0
      %737 = vmatprep.subr.bf16.mxu0 0
      %738 = vmatpush1.bf16.msra.mxu0 0
      %739 = vmatprep.subr.bf16.mxu0 0
      %740 = vmatpush1.bf16.msra.mxu0 0
      %741 = vmatprep.subr.bf16.mxu0 0
      %742 = vmatpush1.bf16.msra.mxu0 0
      %743 = vmatprep.subr.bf16.mxu0 0
      %744 = vmatpush1.bf16.msra.mxu0 0
      %745 = vmatprep.subr.bf16.mxu0 0
      %746 = vmatpush1.bf16.msra.mxu0 0
      %747 = vmatprep.subr.bf16.mxu0 0
      %748 = vmatpush1.bf16.msra.mxu0 0
      %749 = vmatprep.mubr.bf16.mxu0 0
      %750 = vmatmul.mubr.bf16.gmra.mrb[0].mxu0 %v667
      %v751 = vpop.f32.mrb[0].mxu0
      %v752 = vadd.f32 %v650, %v751
      %v753 = vpop.f32.mrb[0].mxu0
      %v754 = vpop.f32.mrb[0].mxu0
      %v755 = vpop.f32.mrb[0].mxu0
      %756 = vdwg.mxu0
      %s757 = scalar_lea.vmem %s4, 128
      %v758 = vld [vmem:[%s757] sm:$0xf]
      %v759 = vld [vmem:[%s757 + $0x4] sm:$0xf]
      %v760 = vld [vmem:[%s757 + $0x8] sm:$0xf]
      %v761 = vld [vmem:[%s757 + $0xc] sm:$0xf]
      %v762 = vld [vmem:[%s757 + $0x10] sm:$0xf]
      %v763 = vld [vmem:[%s757 + $0x14] sm:$0xf]
      %v764 = vld [vmem:[%s757 + $0x18] sm:$0xf]
      %v765 = vld [vmem:[%s757 + $0x1c] sm:$0xf]
      %v766 = vld [vmem:[%s757 + $0x20] sm:$0xf]
      %v767 = vld [vmem:[%s757 + $0x24] sm:$0xf]
      %v768 = vld [vmem:[%s757 + $0x28] sm:$0xf]
      %v769 = vld [vmem:[%s757 + $0x2c] sm:$0xf]
      %v770 = vld [vmem:[%s757 + $0x30] sm:$0xf]
      %v771 = vld [vmem:[%s757 + $0x34] sm:$0xf]
      %v772 = vld [vmem:[%s757 + $0x38] sm:$0xf]
      %v773 = vld [vmem:[%s757 + $0x3c] sm:$0xf]
      %v790 = vunpack.c.l.b16 %v758
      %v791 = vunpack.c.l.b16 %v759
      %v792 = vunpack.c.l.b16 %v760
      %v793 = vunpack.c.l.b16 %v761
      %v794 = vunpack.c.l.b16 %v762
      %v795 = vunpack.c.l.b16 %v763
      %v796 = vunpack.c.l.b16 %v764
      %v797 = vunpack.c.l.b16 %v765
      %v798 = vunpack.c.l.b16 %v766
      %v799 = vunpack.c.l.b16 %v767
      %v800 = vunpack.c.l.b16 %v768
      %v801 = vunpack.c.l.b16 %v769
      %v802 = vunpack.c.l.b16 %v770
      %v803 = vunpack.c.l.b16 %v771
      %v804 = vunpack.c.l.b16 %v772
      %v805 = vunpack.c.l.b16 %v773
      %v806 = vpack.c.b16 %v791, %v790
      %v807 = vpack.c.b16 %v793, %v792
      %v808 = vpack.c.b16 %v795, %v794
      %v809 = vpack.c.b16 %v797, %v796
      %v810 = vpack.c.b16 %v799, %v798
      %v811 = vpack.c.b16 %v801, %v800
      %v812 = vpack.c.b16 %v803, %v802
      %v813 = vpack.c.b16 %v805, %v804
      %822 = vmatprep.subr.bf16.mxu0 0
      %823 = vmatpush1.bf16.msra.mxu0 %v806
      %824 = vmatprep.subr.bf16.mxu0 0
      %825 = vmatpush1.bf16.msra.mxu0 %v807
      %826 = vmatprep.subr.bf16.mxu0 0
      %827 = vmatpush1.bf16.msra.mxu0 %v808
      %828 = vmatprep.subr.bf16.mxu0 0
      %829 = vmatpush1.bf16.msra.mxu0 %v809
      %830 = vmatprep.subr.bf16.mxu0 0
      %831 = vmatpush1.bf16.msra.mxu0 %v810
      %832 = vmatprep.subr.bf16.mxu0 0
      %833 = vmatpush1.bf16.msra.mxu0 %v811
      %834 = vmatprep.subr.bf16.mxu0 0
      %835 = vmatpush1.bf16.msra.mxu0 %v812
      %836 = vmatprep.subr.bf16.mxu0 0
      %837 = vmatpush1.bf16.msra.mxu0 %v813
      %838 = vmatprep.subr.bf16.mxu0 0
      %839 = vmatpush1.bf16.msra.mxu0 0
      %840 = vmatprep.subr.bf16.mxu0 0
      %841 = vmatpush1.bf16.msra.mxu0 0
      %842 = vmatprep.subr.bf16.mxu0 0
      %843 = vmatpush1.bf16.msra.mxu0 0
      %844 = vmatprep.subr.bf16.mxu0 0
      %845 = vmatpush1.bf16.msra.mxu0 0
      %846 = vmatprep.subr.bf16.mxu0 0
      %847 = vmatpush1.bf16.msra.mxu0 0
      %848 = vmatprep.subr.bf16.mxu0 0
      %849 = vmatpush1.bf16.msra.mxu0 0
      %850 = vmatprep.subr.bf16.mxu0 0
      %851 = vmatpush1.bf16.msra.mxu0 0
      %852 = vmatprep.subr.bf16.mxu0 0
      %853 = vmatpush1.bf16.msra.mxu0 0
      %854 = vmatprep.mubr.bf16.mxu0 0
      %855 = vmatmul.mubr.bf16.gmra.mrb[0].mxu0 %v526
      %v856 = vpop.f32.mrb[0].mxu0
      %v857 = vadd.f32 0.0, %v856
      %v858 = vpop.f32.mrb[0].mxu0
      %v859 = vpop.f32.mrb[0].mxu0
      %v860 = vpop.f32.mrb[0].mxu0
      %861 = vdwg.mxu0
      %v862 = vadd.f32 %v752, %v857
      %v863 = vld [vmem:[%s5] sm:$0x1]
      %v865 = vlaneseq
      %v866 = vshrl.u32 %v865, 7
      %v867 = vsub.s32 0, %v866
      %v868 = vrot.slane %v863, %v867
      %v870 = vmul.f32 %v862, %v868
      %v871 = vld [vmem:[%s6] sm:$0x1]
      %v873 = vlaneseq
      %v874 = vshrl.u32 %v873, 7
      %v875 = vsub.s32 0, %v874
      %v876 = vrot.slane %v871, %v875
      %v878 = vadd.f32 %v870, %v876
      %v879 = vmax.f32 %v878, 0.0
      %v880 = vpack.c.bf16 %v879, %v879
      %v881 = vld [vmem:[%s7] sm:$0xf]
      %v882 = vld [vmem:[%s7 + $0x4] sm:$0xf]
      %v883 = vld [vmem:[%s7 + $0x8] sm:$0xf]
      %v884 = vld [vmem:[%s7 + $0xc] sm:$0xf]
      %v885 = vld [vmem:[%s7 + $0x10] sm:$0xf]
      %v886 = vld [vmem:[%s7 + $0x14] sm:$0xf]
      %v887 = vld [vmem:[%s7 + $0x18] sm:$0xf]
      %v888 = vld [vmem:[%s7 + $0x1c] sm:$0xf]
      %v889 = vld [vmem:[%s7 + $0x20] sm:$0xf]
      %v890 = vld [vmem:[%s7 + $0x24] sm:$0xf]
      %v891 = vld [vmem:[%s7 + $0x28] sm:$0xf]
      %v892 = vld [vmem:[%s7 + $0x2c] sm:$0xf]
      %v893 = vld [vmem:[%s7 + $0x30] sm:$0xf]
      %v894 = vld [vmem:[%s7 + $0x34] sm:$0xf]
      %v895 = vld [vmem:[%s7 + $0x38] sm:$0xf]
      %v896 = vld [vmem:[%s7 + $0x3c] sm:$0xf]
      %v913 = vunpack.c.l.b16 %v881
      %v914 = vunpack.c.l.b16 %v882
      %v915 = vunpack.c.l.b16 %v883
      %v916 = vunpack.c.l.b16 %v884
      %v917 = vunpack.c.l.b16 %v885
      %v918 = vunpack.c.l.b16 %v886
      %v919 = vunpack.c.l.b16 %v887
      %v920 = vunpack.c.l.b16 %v888
      %v921 = vunpack.c.l.b16 %v889
      %v922 = vunpack.c.l.b16 %v890
      %v923 = vunpack.c.l.b16 %v891
      %v924 = vunpack.c.l.b16 %v892
      %v925 = vunpack.c.l.b16 %v893
      %v926 = vunpack.c.l.b16 %v894
      %v927 = vunpack.c.l.b16 %v895
      %v928 = vunpack.c.l.b16 %v896
      %v929 = vpack.c.b16 %v914, %v913
      %v930 = vpack.c.b16 %v916, %v915
      %v931 = vpack.c.b16 %v918, %v917
      %v932 = vpack.c.b16 %v920, %v919
      %v933 = vpack.c.b16 %v922, %v921
      %v934 = vpack.c.b16 %v924, %v923
      %v935 = vpack.c.b16 %v926, %v925
      %v936 = vpack.c.b16 %v928, %v927
      %945 = vmatprep.subr.bf16.mxu0 0
      %946 = vmatpush1.bf16.msra.mxu0 %v929
      %947 = vmatprep.subr.bf16.mxu0 0
      %948 = vmatpush1.bf16.msra.mxu0 %v930
      %949 = vmatprep.subr.bf16.mxu0 0
      %950 = vmatpush1.bf16.msra.mxu0 %v931
      %951 = vmatprep.subr.bf16.mxu0 0
      %952 = vmatpush1.bf16.msra.mxu0 %v932
      %953 = vmatprep.subr.bf16.mxu0 0
      %954 = vmatpush1.bf16.msra.mxu0 %v933
      %955 = vmatprep.subr.bf16.mxu0 0
      %956 = vmatpush1.bf16.msra.mxu0 %v934
      %957 = vmatprep.subr.bf16.mxu0 0
      %958 = vmatpush1.bf16.msra.mxu0 %v935
      %959 = vmatprep.subr.bf16.mxu0 0
      %960 = vmatpush1.bf16.msra.mxu0 %v936
      %961 = vmatprep.subr.bf16.mxu0 0
      %962 = vmatpush1.bf16.msra.mxu0 0
      %963 = vmatprep.subr.bf16.mxu0 0
      %964 = vmatpush1.bf16.msra.mxu0 0
      %965 = vmatprep.subr.bf16.mxu0 0
      %966 = vmatpush1.bf16.msra.mxu0 0
      %967 = vmatprep.subr.bf16.mxu0 0
      %968 = vmatpush1.bf16.msra.mxu0 0
      %969 = vmatprep.subr.bf16.mxu0 0
      %970 = vmatpush1.bf16.msra.mxu0 0
      %971 = vmatprep.subr.bf16.mxu0 0
      %972 = vmatpush1.bf16.msra.mxu0 0
      %973 = vmatprep.subr.bf16.mxu0 0
      %974 = vmatpush1.bf16.msra.mxu0 0
      %975 = vmatprep.subr.bf16.mxu0 0
      %976 = vmatpush1.bf16.msra.mxu0 0
      %977 = vmatprep.mubr.bf16.mxu0 0
      %978 = vmatmul.mubr.bf16.gmra.mrb[0].mxu0 %v880
      %v979 = vpop.f32.mrb[0].mxu0
      %v980 = vadd.f32 0.0, %v979
      %v981 = vpop.f32.mrb[0].mxu0
      %v982 = vpop.f32.mrb[0].mxu0
      %v983 = vpop.f32.mrb[0].mxu0
      %984 = vdwg.mxu0
      %v985 = vld [vmem:[%s8] sm:$0x1]
      %v987 = vlaneseq
      %v988 = vshrl.u32 %v987, 7
      %v989 = vsub.s32 0, %v988
      %v990 = vrot.slane %v985, %v989
      %v992 = vmul.f32 %v980, %v990
      %v993 = vld [vmem:[%s9] sm:$0x1]
      %v995 = vlaneseq
      %v996 = vshrl.u32 %v995, 7
      %v997 = vsub.s32 0, %v996
      %v998 = vrot.slane %v993, %v997
      %v1000 = vadd.f32 %v992, %v998
      %v1001 = vunpack.c.l.bf16 %v359
      %v1002 = vunpack.c.l.bf16 %v360
      %v1003 = vadd.f32 %v1001, %v1002
      %v1004 = vmul.f32 %v1003, 0.5
      %v1005 = vadd.f32 %v1000, %v1004
      %v1006 = vmax.f32 %v1005, 0.0
      %v1007 = vpack.c.bf16 %v1006, %v1006
      %1008 = vst [vmem:[%s357] sm:$0x3] %v1007
      %p1009 = scmp.lt.s32.totalorder %s21, 1
      %s1010 = scalar_select %p1009, %s21, 1
      %s1011 = smul.addr %s1010, 2
      %s1012 = scalar_lea.vmem %s10, %s1011
      // Predicated region
      $region61: #{xrespool_forward.12} parent=59 // pred_check
        %p1013 = pneg %p254
      $region62: #{xrespool_forward.12} parent=59 // pred_check_branch
        %1015 = sbr.rel (%p1013) target = $region64
      $region63: #{xrespool_forward.12} parent=59 // pred_region
        _
      $region64: #{xrespool_forward.12} parent=59 // pred_fallthru
        _
    $region60: #{xrespool_forward.12} parent=5 // pred_fallthru
      _
    %p1016 = scmp.le.s32.totalorder 2, %s16
    // Predicated region
    $region65: #{xrespool_forward.12} parent=5 // pred_check
      %p1017 = pneg %p1016
    $region66: #{xrespool_forward.12} parent=5 // pred_check_branch
      %1019 = sbr.rel (%p1017) target = $region68
    $region67: #{xrespool_forward.12} parent=5 // pred_region
      %s1020 = ssub.s32 %s16, 2
      // Predicated region
      $region69: #{xrespool_forward.12} parent=67 // pred_check
        %p1021 = pneg %p260
      $region70: #{xrespool_forward.12} parent=67 // pred_check_branch
        %1023 = sbr.rel (%p1021) target = $region72
      $region71: #{xrespool_forward.12} parent=67 // pred_region
        %p1024 = scmp.lt.s32.totalorder %s22, 1
        %s1025 = scalar_select %p1024, %s22, 1
        %s1026 = smul.addr %s1025, 2
        %s1027 = scalar_lea.vmem %s10, %s1026
      $region72: #{xrespool_forward.12} parent=67 // pred_fallthru
        _
    $region68: #{xrespool_forward.12} parent=5 // pred_fallthru
      _
  $region6: #{xrespool_forward.12} parent=0 // loop_footer
    %s20 = sadd.s32 1, %s16
  $region7: #{xrespool_forward.12} parent=0 // loop_footer_branch
    %15 = sbr.rel target = $region3
  $region8: #{xrespool_forward.12} parent=0 // loop_exit
    _

</llo_original>
